<compile_context>
chip_gen: v5e
topology: v5e:2x2
jax: 0.10.0
libtpu: 0.0.40
codegen_flags: <defaults>
</compile_context>

<pallas_src>
import functools

import jax
import jax.numpy as jnp
from jax.experimental import pallas as pl
from jax.experimental.pallas import tpu as pltpu


def _basic_block_kernel(xpad_ref, w1_ref, w2_ref, o_ref, *, H, W, eps):
    # xpad_ref : (B, S, C)     f32  -- spatially pre-padded input, rows flattened,
    #                                  S >= Hp*Wp + 2 (extra zero rows for the last taps)
    # w1_ref   : (9*C,  Cp)    bf16 -- rows ordered (kh, kw, cin)
    # w2_ref   : (9*Cp, Cp)    bf16
    # o_ref    : (B, M, Cp)    f32  -- output on the H x Wp grid (2 junk cols per row)
    B, S, C = xpad_ref.shape
    Cp = w1_ref.shape[1]
    Wp = W + 2
    M = H * Wp  # output-grid rows: r = h*Wp + w ; columns w >= W are junk, dropped later

    # 3x3 tap offsets in the flattened grids (row stride Wp).
    offs1 = [kh * Wp + kw for kh in range(3) for kw in range(3)]            # on padded slab
    offs2 = [(kh - 1) * Wp + (kw - 1) for kh in range(3) for kw in range(3)]  # on act1 grid

    # Hoisted validity mask (junk columns w >= W -> 0), materialized once as f32 0/1.
    col = jax.lax.broadcasted_iota(jnp.int32, (M, Cp), 0) % Wp
    mask = (col < W).astype(jnp.float32)
    inv_cnt = 1.0 / float(H * W)

    def instance_norm(y):                                                   # y: (M, Cp) f32
        mean = jnp.sum(y * mask, axis=0, keepdims=True) * inv_cnt
        d = y - mean
        var = jnp.sum(d * d * mask, axis=0, keepdims=True) * inv_cnt
        return d * jax.lax.rsqrt(var + eps)

    def shift_rows(x, o):
        # y[r] = x[r + o] for 0 <= r + o < M, else 0 (top/bottom halo); left/right halo
        # is supplied by the already-zeroed junk columns of x.
        if o == 0:
            return x
        if o > 0:
            return jnp.concatenate([x[o:, :], jnp.zeros((o, Cp), x.dtype)], axis=0)
        return jnp.concatenate([jnp.zeros((-o, Cp), x.dtype), x[:M + o, :]], axis=0)

    w1 = w1_ref[...]
    w2 = w2_ref[...]

    # Static unroll over the images of this block (per-image InstanceNorm statistics).
    for b in range(B):
        # ---- conv1: one im2col matmul (M, 9C) @ (9C, Cp), f32 accumulation ----------
        patch1 = jnp.concatenate(
            [xpad_ref[b, o:o + M, :] for o in offs1], axis=1).astype(jnp.bfloat16)
        out1 = jnp.dot(patch1, w1, preferred_element_type=jnp.float32)      # (M, Cp) f32

        # IN + ReLU; masking zeroes the junk columns, which become conv2's L/R zero halo.
        act1 = jnp.maximum(instance_norm(out1), 0.0) * mask

        # ---- conv2: taps built by sublane shifts of act1 (no VMEM scratch) -----------
        patch2 = jnp.concatenate(
            [shift_rows(act1, o) for o in offs2], axis=1).astype(jnp.bfloat16)
        out2 = jnp.dot(patch2, w2, preferred_element_type=jnp.float32)      # (M, Cp) f32

        # ---- InstanceNorm + f32 residual + ReLU --------------------------------------
        # output-grid row r = h*Wp + w corresponds to padded-slab row r + Wp + 1.
        identity = xpad_ref[b, Wp + 1:Wp + 1 + M, :]                        # (M, C) f32
        o_ref[b] = jnp.maximum(instance_norm(out2) + identity, 0.0)


def basic_block_forward(x_nchw, w1, w2, *, block_n=2):
    """x_nchw: (N, C, H, W) f32; w1, w2: (Cout, Cin, 3, 3) f32 (PyTorch OIHW)."""
    N, C, H, W = x_nchw.shape
    Cp = w1.shape[0]
    assert w1.shape == (Cp, C, 3, 3) and w2.shape == (Cp, Cp, 3, 3)
    assert Cp == C, "residual add requires inplanes == planes (downsample is None)"
    if N % block_n != 0:
        block_n = 1
    B = block_n
    Hp, Wp = H + 2, W + 2
    M = H * Wp
    # Flat padded slab with a few extra zero rows so the largest tap offset (2*Wp+2)
    # stays in bounds even for the junk columns; rounded up to a sublane multiple.
    S = ((Hp * Wp + 2 + 7) // 8) * 8

    # NCHW -> NHWC, pre-pad the halo in XLA, flatten the padded spatial grid. Kept f32 so
    # the residual is added at full precision; matmul operands are cast to bf16 in-kernel.
    x_nhwc = jnp.transpose(x_nchw, (0, 2, 3, 1)).astype(jnp.float32)
    xpad = jnp.pad(x_nhwc, ((0, 0), (1, 1), (1, 1), (0, 0))).reshape(N, Hp * Wp, C)
    xpad = jnp.pad(xpad, ((0, 0), (0, S - Hp * Wp), (0, 0)))

    # OIHW -> (kh, kw, cin, cout) -> (9*Cin, Cout); matches the kernel's tap order.
    w1r = jnp.transpose(w1, (2, 3, 1, 0)).reshape(9 * C, Cp).astype(jnp.bfloat16)
    w2r = jnp.transpose(w2, (2, 3, 1, 0)).reshape(9 * Cp, Cp).astype(jnp.bfloat16)

    kernel = functools.partial(_basic_block_kernel, H=H, W=W, eps=1e-5)

    out_rows = pl.pallas_call(
        kernel,
        out_shape=jax.ShapeDtypeStruct((N, M, Cp), jnp.float32),
        grid_spec=pltpu.PrefetchScalarGridSpec(
            num_scalar_prefetch=0,
            grid=(N // B,),                     # B images per step; grid stays even for v7x
            in_specs=[
                pl.BlockSpec((B, S, C), lambda n: (n, 0, 0)),
                pl.BlockSpec((9 * C, Cp), lambda n: (0, 0)),
                pl.BlockSpec((9 * Cp, Cp), lambda n: (0, 0)),
            ],
            out_specs=pl.BlockSpec((B, M, Cp), lambda n: (n, 0, 0)),
        ),
        compiler_params=pltpu.CompilerParams(
            dimension_semantics=("parallel",),   # grid steps are independent images
            vmem_limit_bytes=32 * 1024 * 1024,   # re-budget to <=~48 MiB if scaled on v7x
        ),
    )(xpad, w1r, w2r)

    # Drop the 2 junk columns per row and go back to NCHW (XLA side).
    out_nhwc = out_rows.reshape(N, H, Wp, Cp)[:, :, :W, :]
    return jnp.transpose(out_nhwc, (0, 3, 1, 2))


def basic_block_reference(x, w1, w2):
    """Pure-JAX f32 reference of the PyTorch forward (NCHW)."""
    dn = jax.lax.conv_dimension_numbers(x.shape, w1.shape, ("NCHW", "OIHW", "NCHW"))

    def inorm(y):
        m = jnp.mean(y, axis=(2, 3), keepdims=True)
        v = jnp.mean((y - m) ** 2, axis=(2, 3), keepdims=True)
        return (y - m) / jnp.sqrt(v + 1e-5)

    out = jax.lax.conv_general_dilated(x, w1, (1, 1), ((1, 1), (1, 1)),
                                       dimension_numbers=dn)
    out = jax.nn.relu(inorm(out))
    out = jax.lax.conv_general_dilated(out, w2, (1, 1), ((1, 1), (1, 1)),
                                       dimension_numbers=dn)
    return jax.nn.relu(inorm(out) + x)


if __name__ == "__main__":
    N, C, H, W = 4, 8, 16, 16          # inplanes = planes = 8, stride = 1
    key = jax.random.PRNGKey(0)
    kx, k1, k2 = jax.random.split(key, 3)
    x = jax.random.normal(kx, (N, C, H, W), dtype=jnp.float32)
    w1 = jax.random.normal(k1, (C, C, 3, 3), dtype=jnp.float32) * 0.1
    w2 = jax.random.normal(k2, (C, C, 3, 3), dtype=jnp.float32) * 0.1

    forward = jax.jit(basic_block_forward)
    out = jax.block_until_ready(forward(x, w1, w2))
    ref = jax.block_until_ready(basic_block_reference(x, w1, w2))

    # bf16 MXU operands -> compare against the f32 reference at a bf16-appropriate tolerance.
    if not jnp.allclose(out, ref, atol=5e-2, rtol=5e-2):
        max_err = float(jnp.max(jnp.abs(out - ref)))
        raise AssertionError(
            f"Pallas BasicBlock output mismatch vs reference (max abs err={max_err})")

    print("KERNEL_OK")
</pallas_src>

<mosaic_0001>
module attributes {stable_mosaic.version = 11 : i64} {
  func.func @_basic_block_kernel(%arg0: i32, %arg1: memref<2x328x8xf32, #tpu.memory_space<vmem>>, %arg2: memref<72x8xbf16, #tpu.memory_space<vmem>>, %arg3: memref<72x8xbf16, #tpu.memory_space<vmem>>, %arg4: memref<2x288x8xf32, #tpu.memory_space<vmem>>) attributes {dimension_semantics = [#tpu.dimension_semantics<parallel>], iteration_bounds = array<i64: 2>, scalar_prefetch = 0 : i64, scratch_operands = 0 : i64, tpu.core_type = #tpu.core_type<tc>, window_params = [{transform_indices = @transform_0, window_bounds = array<i64: 2, 328, 8>}, {pipeline_mode = #tpu.pipeline_mode<synchronous>, transform_indices = @transform_1, window_bounds = array<i64: 72, 8>}, {pipeline_mode = #tpu.pipeline_mode<synchronous>, transform_indices = @transform_2, window_bounds = array<i64: 72, 8>}, {transform_indices = @transform_3, window_bounds = array<i64: 2, 288, 8>}]} {
    %0 = tpu.iota {dimensions = array<i32: 0>} : vector<288x8xi32>
    %c18_i32 = arith.constant 18 : i32
    %c0_i32 = arith.constant 0 : i32
    %1 = arith.cmpi eq, %c18_i32, %c0_i32 : i32
    %c1_i32 = arith.constant 1 : i32
    %2 = arith.select %1, %c1_i32, %c18_i32 : i32
    %3 = vector.broadcast %2 : i32 to vector<288x8xi32>
    %4 = arith.remsi %0, %3 : vector<288x8xi32>
    %c0_i32_0 = arith.constant 0 : i32
    %5 = vector.broadcast %c0_i32_0 : i32 to vector<288x8xi32>
    %6 = arith.cmpi ne, %4, %5 : vector<288x8xi32>
    %c0_i32_1 = arith.constant 0 : i32
    %7 = vector.broadcast %c0_i32_1 : i32 to vector<288x8xi32>
    %8 = arith.cmpi slt, %4, %7 : vector<288x8xi32>
    %c0_i32_2 = arith.constant 0 : i32
    %9 = arith.cmpi slt, %2, %c0_i32_2 : i32
    %10 = vector.broadcast %9 : i1 to vector<288x8xi1>
    %11 = vector.broadcast %10 : vector<288x8xi1> to vector<288x8xi1>
    %12 = arith.xori %8, %11 : vector<288x8xi1>
    %13 = arith.andi %12, %6 : vector<288x8xi1>
    %14 = vector.broadcast %2 : i32 to vector<288x8xi32>
    %15 = arith.addi %4, %14 : vector<288x8xi32>
    %16 = arith.select %13, %15, %4 : vector<288x8xi1>, vector<288x8xi32>
    %c16_i32 = arith.constant 16 : i32
    %17 = vector.broadcast %c16_i32 : i32 to vector<288x8xi32>
    %18 = arith.cmpi slt, %16, %17 : vector<288x8xi32>
    %19 = arith.extui %18 : vector<288x8xi1> to vector<288x8xi32>
    %20 = arith.sitofp %19 : vector<288x8xi32> to vector<288x8xf32>
    %c0 = arith.constant 0 : index
    %c0_3 = arith.constant 0 : index
    %21 = vector.load %arg2[%c0, %c0_3] : memref<72x8xbf16, #tpu.memory_space<vmem>>, vector<72x8xbf16>
    %c0_4 = arith.constant 0 : index
    %c0_5 = arith.constant 0 : index
    %22 = vector.load %arg3[%c0_4, %c0_5] : memref<72x8xbf16, #tpu.memory_space<vmem>>, vector<72x8xbf16>
    %c0_6 = arith.constant 0 : index
    %c0_7 = arith.constant 0 : index
    %c0_8 = arith.constant 0 : index
    %23 = vector.load %arg1[%c0_6, %c0_7, %c0_8] : memref<2x328x8xf32, #tpu.memory_space<vmem>>, vector<1x288x8xf32>
    %24 = vector.shape_cast %23 : vector<1x288x8xf32> to vector<288x8xf32>
    %c0_9 = arith.constant 0 : index
    %c1 = arith.constant 1 : index
    %c0_10 = arith.constant 0 : index
    %25 = vector.load %arg1[%c0_9, %c1, %c0_10] : memref<2x328x8xf32, #tpu.memory_space<vmem>>, vector<1x288x8xf32>
    %26 = vector.shape_cast %25 : vector<1x288x8xf32> to vector<288x8xf32>
    %c0_11 = arith.constant 0 : index
    %c2 = arith.constant 2 : index
    %c0_12 = arith.constant 0 : index
    %27 = vector.load %arg1[%c0_11, %c2, %c0_12] : memref<2x328x8xf32, #tpu.memory_space<vmem>>, vector<1x288x8xf32>
    %28 = vector.shape_cast %27 : vector<1x288x8xf32> to vector<288x8xf32>
    %c0_13 = arith.constant 0 : index
    %c18 = arith.constant 18 : index
    %c0_14 = arith.constant 0 : index
    %29 = vector.load %arg1[%c0_13, %c18, %c0_14] : memref<2x328x8xf32, #tpu.memory_space<vmem>>, vector<1x288x8xf32>
    %30 = vector.shape_cast %29 : vector<1x288x8xf32> to vector<288x8xf32>
    %c0_15 = arith.constant 0 : index
    %c19 = arith.constant 19 : index
    %c0_16 = arith.constant 0 : index
    %31 = vector.load %arg1[%c0_15, %c19, %c0_16] : memref<2x328x8xf32, #tpu.memory_space<vmem>>, vector<1x288x8xf32>
    %32 = vector.shape_cast %31 : vector<1x288x8xf32> to vector<288x8xf32>
    %c0_17 = arith.constant 0 : index
    %c20 = arith.constant 20 : index
    %c0_18 = arith.constant 0 : index
    %33 = vector.load %arg1[%c0_17, %c20, %c0_18] : memref<2x328x8xf32, #tpu.memory_space<vmem>>, vector<1x288x8xf32>
    %34 = vector.shape_cast %33 : vector<1x288x8xf32> to vector<288x8xf32>
    %c0_19 = arith.constant 0 : index
    %c36 = arith.constant 36 : index
    %c0_20 = arith.constant 0 : index
    %35 = vector.load %arg1[%c0_19, %c36, %c0_20] : memref<2x328x8xf32, #tpu.memory_space<vmem>>, vector<1x288x8xf32>
    %36 = vector.shape_cast %35 : vector<1x288x8xf32> to vector<288x8xf32>
    %c0_21 = arith.constant 0 : index
    %c37 = arith.constant 37 : index
    %c0_22 = arith.constant 0 : index
    %37 = vector.load %arg1[%c0_21, %c37, %c0_22] : memref<2x328x8xf32, #tpu.memory_space<vmem>>, vector<1x288x8xf32>
    %38 = vector.shape_cast %37 : vector<1x288x8xf32> to vector<288x8xf32>
    %c0_23 = arith.constant 0 : index
    %c38 = arith.constant 38 : index
    %c0_24 = arith.constant 0 : index
    %39 = vector.load %arg1[%c0_23, %c38, %c0_24] : memref<2x328x8xf32, #tpu.memory_space<vmem>>, vector<1x288x8xf32>
    %40 = vector.shape_cast %39 : vector<1x288x8xf32> to vector<288x8xf32>
    %41 = tpu.concatenate %24, %26, %28, %30, %32, %34, %36, %38, %40 in 1 : vector<288x8xf32>, vector<288x8xf32>, vector<288x8xf32>, vector<288x8xf32>, vector<288x8xf32>, vector<288x8xf32>, vector<288x8xf32>, vector<288x8xf32>, vector<288x8xf32> -> vector<288x72xf32>
    %42 = arith.truncf %41 : vector<288x72xf32> to vector<288x72xbf16>
    %cst = arith.constant dense<0.000000e+00> : vector<288x8xf32>
    %43 = tpu.matmul %42, %21, %cst {dimension_numbers = #tpu.dot_dimension_numbers<[1], [0], [0], [1], [0, 0, 1, 1], [], []>} : vector<288x72xbf16>, vector<72x8xbf16>, vector<288x8xf32> -> vector<288x8xf32>
    %44 = arith.mulf %43, %20 : vector<288x8xf32>
    %cst_25 = arith.constant dense<0.000000e+00> : vector<8xf32>
    %45 = vector.multi_reduction <add>, %44, %cst_25 [0] : vector<288x8xf32> to vector<8xf32>
    %46 = vector.shape_cast %45 : vector<8xf32> to vector<1x8xf32>
    %cst_26 = arith.constant 3.906250e-03 : f32
    %47 = vector.broadcast %cst_26 : f32 to vector<1x8xf32>
    %48 = arith.mulf %46, %47 : vector<1x8xf32>
    %49 = vector.broadcast %48 : vector<1x8xf32> to vector<288x8xf32>
    %50 = arith.subf %43, %49 : vector<288x8xf32>
    %51 = arith.mulf %50, %50 : vector<288x8xf32>
    %52 = arith.mulf %51, %20 : vector<288x8xf32>
    %cst_27 = arith.constant dense<0.000000e+00> : vector<8xf32>
    %53 = vector.multi_reduction <add>, %52, %cst_27 [0] : vector<288x8xf32> to vector<8xf32>
    %54 = vector.shape_cast %53 : vector<8xf32> to vector<1x8xf32>
    %cst_28 = arith.constant 3.906250e-03 : f32
    %55 = vector.broadcast %cst_28 : f32 to vector<1x8xf32>
    %56 = arith.mulf %54, %55 : vector<1x8xf32>
    %cst_29 = arith.constant 9.99999974E-6 : f32
    %57 = vector.broadcast %cst_29 : f32 to vector<1x8xf32>
    %58 = arith.addf %56, %57 : vector<1x8xf32>
    %59 = math.rsqrt %58 : vector<1x8xf32>
    %60 = vector.broadcast %59 : vector<1x8xf32> to vector<288x8xf32>
    %61 = arith.mulf %50, %60 : vector<288x8xf32>
    %cst_30 = arith.constant 0.000000e+00 : f32
    %62 = vector.broadcast %cst_30 : f32 to vector<288x8xf32>
    %63 = arith.maximumf %61, %62 : vector<288x8xf32>
    %64 = arith.mulf %63, %20 : vector<288x8xf32>
    %cst_31 = arith.constant 0.000000e+00 : f32
    %65 = vector.broadcast %cst_31 : f32 to vector<19x8xf32>
    %66 = vector.extract_strided_slice %64 {offsets = [0, 0], sizes = [269, 8], strides = [1, 1]} : vector<288x8xf32> to vector<269x8xf32>
    %67 = tpu.concatenate %65, %66 in 0 : vector<19x8xf32>, vector<269x8xf32> -> vector<288x8xf32>
    %cst_32 = arith.constant 0.000000e+00 : f32
    %68 = vector.broadcast %cst_32 : f32 to vector<18x8xf32>
    %69 = vector.extract_strided_slice %64 {offsets = [0, 0], sizes = [270, 8], strides = [1, 1]} : vector<288x8xf32> to vector<270x8xf32>
    %70 = tpu.concatenate %68, %69 in 0 : vector<18x8xf32>, vector<270x8xf32> -> vector<288x8xf32>
    %cst_33 = arith.constant 0.000000e+00 : f32
    %71 = vector.broadcast %cst_33 : f32 to vector<17x8xf32>
    %72 = vector.extract_strided_slice %64 {offsets = [0, 0], sizes = [271, 8], strides = [1, 1]} : vector<288x8xf32> to vector<271x8xf32>
    %73 = tpu.concatenate %71, %72 in 0 : vector<17x8xf32>, vector<271x8xf32> -> vector<288x8xf32>
    %cst_34 = arith.constant 0.000000e+00 : f32
    %74 = vector.broadcast %cst_34 : f32 to vector<1x8xf32>
    %75 = vector.extract_strided_slice %64 {offsets = [0, 0], sizes = [287, 8], strides = [1, 1]} : vector<288x8xf32> to vector<287x8xf32>
    %76 = tpu.concatenate %74, %75 in 0 : vector<1x8xf32>, vector<287x8xf32> -> vector<288x8xf32>
    %77 = vector.extract_strided_slice %64 {offsets = [1, 0], sizes = [287, 8], strides = [1, 1]} : vector<288x8xf32> to vector<287x8xf32>
    %cst_35 = arith.constant 0.000000e+00 : f32
    %78 = vector.broadcast %cst_35 : f32 to vector<1x8xf32>
    %79 = tpu.concatenate %77, %78 in 0 : vector<287x8xf32>, vector<1x8xf32> -> vector<288x8xf32>
    %80 = vector.extract_strided_slice %64 {offsets = [17, 0], sizes = [271, 8], strides = [1, 1]} : vector<288x8xf32> to vector<271x8xf32>
    %cst_36 = arith.constant 0.000000e+00 : f32
    %81 = vector.broadcast %cst_36 : f32 to vector<17x8xf32>
    %82 = tpu.concatenate %80, %81 in 0 : vector<271x8xf32>, vector<17x8xf32> -> vector<288x8xf32>
    %83 = vector.extract_strided_slice %64 {offsets = [18, 0], sizes = [270, 8], strides = [1, 1]} : vector<288x8xf32> to vector<270x8xf32>
    %cst_37 = arith.constant 0.000000e+00 : f32
    %84 = vector.broadcast %cst_37 : f32 to vector<18x8xf32>
    %85 = tpu.concatenate %83, %84 in 0 : vector<270x8xf32>, vector<18x8xf32> -> vector<288x8xf32>
    %86 = vector.extract_strided_slice %64 {offsets = [19, 0], sizes = [269, 8], strides = [1, 1]} : vector<288x8xf32> to vector<269x8xf32>
    %cst_38 = arith.constant 0.000000e+00 : f32
    %87 = vector.broadcast %cst_38 : f32 to vector<19x8xf32>
    %88 = tpu.concatenate %86, %87 in 0 : vector<269x8xf32>, vector<19x8xf32> -> vector<288x8xf32>
    %89 = tpu.concatenate %67, %70, %73, %76, %64, %79, %82, %85, %88 in 1 : vector<288x8xf32>, vector<288x8xf32>, vector<288x8xf32>, vector<288x8xf32>, vector<288x8xf32>, vector<288x8xf32>, vector<288x8xf32>, vector<288x8xf32>, vector<288x8xf32> -> vector<288x72xf32>
    %90 = arith.truncf %89 : vector<288x72xf32> to vector<288x72xbf16>
    %cst_39 = arith.constant dense<0.000000e+00> : vector<288x8xf32>
    %91 = tpu.matmul %90, %22, %cst_39 {dimension_numbers = #tpu.dot_dimension_numbers<[1], [0], [0], [1], [0, 0, 1, 1], [], []>} : vector<288x72xbf16>, vector<72x8xbf16>, vector<288x8xf32> -> vector<288x8xf32>
    %c0_40 = arith.constant 0 : index
    %c19_41 = arith.constant 19 : index
    %c0_42 = arith.constant 0 : index
    %92 = vector.load %arg1[%c0_40, %c19_41, %c0_42] : memref<2x328x8xf32, #tpu.memory_space<vmem>>, vector<1x288x8xf32>
    %93 = vector.shape_cast %92 : vector<1x288x8xf32> to vector<288x8xf32>
    %94 = arith.mulf %91, %20 : vector<288x8xf32>
    %cst_43 = arith.constant dense<0.000000e+00> : vector<8xf32>
    %95 = vector.multi_reduction <add>, %94, %cst_43 [0] : vector<288x8xf32> to vector<8xf32>
    %96 = vector.shape_cast %95 : vector<8xf32> to vector<1x8xf32>
    %cst_44 = arith.constant 3.906250e-03 : f32
    %97 = vector.broadcast %cst_44 : f32 to vector<1x8xf32>
    %98 = arith.mulf %96, %97 : vector<1x8xf32>
    %99 = vector.broadcast %98 : vector<1x8xf32> to vector<288x8xf32>
    %100 = arith.subf %91, %99 : vector<288x8xf32>
    %101 = arith.mulf %100, %100 : vector<288x8xf32>
    %102 = arith.mulf %101, %20 : vector<288x8xf32>
    %cst_45 = arith.constant dense<0.000000e+00> : vector<8xf32>
    %103 = vector.multi_reduction <add>, %102, %cst_45 [0] : vector<288x8xf32> to vector<8xf32>
    %104 = vector.shape_cast %103 : vector<8xf32> to vector<1x8xf32>
    %cst_46 = arith.constant 3.906250e-03 : f32
    %105 = vector.broadcast %cst_46 : f32 to vector<1x8xf32>
    %106 = arith.mulf %104, %105 : vector<1x8xf32>
    %cst_47 = arith.constant 9.99999974E-6 : f32
    %107 = vector.broadcast %cst_47 : f32 to vector<1x8xf32>
    %108 = arith.addf %106, %107 : vector<1x8xf32>
    %109 = math.rsqrt %108 : vector<1x8xf32>
    %110 = vector.broadcast %109 : vector<1x8xf32> to vector<288x8xf32>
    %111 = arith.mulf %100, %110 : vector<288x8xf32>
    %112 = arith.addf %111, %93 : vector<288x8xf32>
    %cst_48 = arith.constant 0.000000e+00 : f32
    %113 = vector.broadcast %cst_48 : f32 to vector<288x8xf32>
    %114 = arith.maximumf %112, %113 : vector<288x8xf32>
    %c0_49 = arith.constant 0 : index
    %c0_50 = arith.constant 0 : index
    %c0_51 = arith.constant 0 : index
    %115 = vector.load %arg4[%c0_49, %c0_50, %c0_51] : memref<2x288x8xf32, #tpu.memory_space<vmem>>, vector<1x288x8xf32>
    %116 = vector.shape_cast %115 : vector<1x288x8xf32> to vector<288x8xf32>
    %117 = vector.shape_cast %114 : vector<288x8xf32> to vector<1x288x8xf32>
    tpu.vector_store %arg4[%c0_49, %c0_50, %c0_51], %117 {strides = array<i32>} : memref<2x288x8xf32, #tpu.memory_space<vmem>>, vector<1x288x8xf32>,
    %c1_52 = arith.constant 1 : index
    %c0_53 = arith.constant 0 : index
    %c0_54 = arith.constant 0 : index
    %118 = vector.load %arg1[%c1_52, %c0_53, %c0_54] : memref<2x328x8xf32, #tpu.memory_space<vmem>>, vector<1x288x8xf32>
    %119 = vector.shape_cast %118 : vector<1x288x8xf32> to vector<288x8xf32>
    %c1_55 = arith.constant 1 : index
    %c1_56 = arith.constant 1 : index
    %c0_57 = arith.constant 0 : index
    %120 = vector.load %arg1[%c1_55, %c1_56, %c0_57] : memref<2x328x8xf32, #tpu.memory_space<vmem>>, vector<1x288x8xf32>
    %121 = vector.shape_cast %120 : vector<1x288x8xf32> to vector<288x8xf32>
    %c1_58 = arith.constant 1 : index
    %c2_59 = arith.constant 2 : index
    %c0_60 = arith.constant 0 : index
    %122 = vector.load %arg1[%c1_58, %c2_59, %c0_60] : memref<2x328x8xf32, #tpu.memory_space<vmem>>, vector<1x288x8xf32>
    %123 = vector.shape_cast %122 : vector<1x288x8xf32> to vector<288x8xf32>
    %c1_61 = arith.constant 1 : index
    %c18_62 = arith.constant 18 : index
    %c0_63 = arith.constant 0 : index
    %124 = vector.load %arg1[%c1_61, %c18_62, %c0_63] : memref<2x328x8xf32, #tpu.memory_space<vmem>>, vector<1x288x8xf32>
    %125 = vector.shape_cast %124 : vector<1x288x8xf32> to vector<288x8xf32>
    %c1_64 = arith.constant 1 : index
    %c19_65 = arith.constant 19 : index
    %c0_66 = arith.constant 0 : index
    %126 = vector.load %arg1[%c1_64, %c19_65, %c0_66] : memref<2x328x8xf32, #tpu.memory_space<vmem>>, vector<1x288x8xf32>
    %127 = vector.shape_cast %126 : vector<1x288x8xf32> to vector<288x8xf32>
    %c1_67 = arith.constant 1 : index
    %c20_68 = arith.constant 20 : index
    %c0_69 = arith.constant 0 : index
    %128 = vector.load %arg1[%c1_67, %c20_68, %c0_69] : memref<2x328x8xf32, #tpu.memory_space<vmem>>, vector<1x288x8xf32>
    %129 = vector.shape_cast %128 : vector<1x288x8xf32> to vector<288x8xf32>
    %c1_70 = arith.constant 1 : index
    %c36_71 = arith.constant 36 : index
    %c0_72 = arith.constant 0 : index
    %130 = vector.load %arg1[%c1_70, %c36_71, %c0_72] : memref<2x328x8xf32, #tpu.memory_space<vmem>>, vector<1x288x8xf32>
    %131 = vector.shape_cast %130 : vector<1x288x8xf32> to vector<288x8xf32>
    %c1_73 = arith.constant 1 : index
    %c37_74 = arith.constant 37 : index
    %c0_75 = arith.constant 0 : index
    %132 = vector.load %arg1[%c1_73, %c37_74, %c0_75] : memref<2x328x8xf32, #tpu.memory_space<vmem>>, vector<1x288x8xf32>
    %133 = vector.shape_cast %132 : vector<1x288x8xf32> to vector<288x8xf32>
    %c1_76 = arith.constant 1 : index
    %c38_77 = arith.constant 38 : index
    %c0_78 = arith.constant 0 : index
    %134 = vector.load %arg1[%c1_76, %c38_77, %c0_78] : memref<2x328x8xf32, #tpu.memory_space<vmem>>, vector<1x288x8xf32>
    %135 = vector.shape_cast %134 : vector<1x288x8xf32> to vector<288x8xf32>
    %136 = tpu.concatenate %119, %121, %123, %125, %127, %129, %131, %133, %135 in 1 : vector<288x8xf32>, vector<288x8xf32>, vector<288x8xf32>, vector<288x8xf32>, vector<288x8xf32>, vector<288x8xf32>, vector<288x8xf32>, vector<288x8xf32>, vector<288x8xf32> -> vector<288x72xf32>
    %137 = arith.truncf %136 : vector<288x72xf32> to vector<288x72xbf16>
    %cst_79 = arith.constant dense<0.000000e+00> : vector<288x8xf32>
    %138 = tpu.matmul %137, %21, %cst_79 {dimension_numbers = #tpu.dot_dimension_numbers<[1], [0], [0], [1], [0, 0, 1, 1], [], []>} : vector<288x72xbf16>, vector<72x8xbf16>, vector<288x8xf32> -> vector<288x8xf32>
    %139 = arith.mulf %138, %20 : vector<288x8xf32>
    %cst_80 = arith.constant dense<0.000000e+00> : vector<8xf32>
    %140 = vector.multi_reduction <add>, %139, %cst_80 [0] : vector<288x8xf32> to vector<8xf32>
    %141 = vector.shape_cast %140 : vector<8xf32> to vector<1x8xf32>
    %cst_81 = arith.constant 3.906250e-03 : f32
    %142 = vector.broadcast %cst_81 : f32 to vector<1x8xf32>
    %143 = arith.mulf %141, %142 : vector<1x8xf32>
    %144 = vector.broadcast %143 : vector<1x8xf32> to vector<288x8xf32>
    %145 = arith.subf %138, %144 : vector<288x8xf32>
    %146 = arith.mulf %145, %145 : vector<288x8xf32>
    %147 = arith.mulf %146, %20 : vector<288x8xf32>
    %cst_82 = arith.constant dense<0.000000e+00> : vector<8xf32>
    %148 = vector.multi_reduction <add>, %147, %cst_82 [0] : vector<288x8xf32> to vector<8xf32>
    %149 = vector.shape_cast %148 : vector<8xf32> to vector<1x8xf32>
    %cst_83 = arith.constant 3.906250e-03 : f32
    %150 = vector.broadcast %cst_83 : f32 to vector<1x8xf32>
    %151 = arith.mulf %149, %150 : vector<1x8xf32>
    %cst_84 = arith.constant 9.99999974E-6 : f32
    %152 = vector.broadcast %cst_84 : f32 to vector<1x8xf32>
    %153 = arith.addf %151, %152 : vector<1x8xf32>
    %154 = math.rsqrt %153 : vector<1x8xf32>
    %155 = vector.broadcast %154 : vector<1x8xf32> to vector<288x8xf32>
    %156 = arith.mulf %145, %155 : vector<288x8xf32>
    %cst_85 = arith.constant 0.000000e+00 : f32
    %157 = vector.broadcast %cst_85 : f32 to vector<288x8xf32>
    %158 = arith.maximumf %156, %157 : vector<288x8xf32>
    %159 = arith.mulf %158, %20 : vector<288x8xf32>
    %cst_86 = arith.constant 0.000000e+00 : f32
    %160 = vector.broadcast %cst_86 : f32 to vector<19x8xf32>
    %161 = vector.extract_strided_slice %159 {offsets = [0, 0], sizes = [269, 8], strides = [1, 1]} : vector<288x8xf32> to vector<269x8xf32>
    %162 = tpu.concatenate %160, %161 in 0 : vector<19x8xf32>, vector<269x8xf32> -> vector<288x8xf32>
    %cst_87 = arith.constant 0.000000e+00 : f32
    %163 = vector.broadcast %cst_87 : f32 to vector<18x8xf32>
    %164 = vector.extract_strided_slice %159 {offsets = [0, 0], sizes = [270, 8], strides = [1, 1]} : vector<288x8xf32> to vector<270x8xf32>
    %165 = tpu.concatenate %163, %164 in 0 : vector<18x8xf32>, vector<270x8xf32> -> vector<288x8xf32>
    %cst_88 = arith.constant 0.000000e+00 : f32
    %166 = vector.broadcast %cst_88 : f32 to vector<17x8xf32>
    %167 = vector.extract_strided_slice %159 {offsets = [0, 0], sizes = [271, 8], strides = [1, 1]} : vector<288x8xf32> to vector<271x8xf32>
    %168 = tpu.concatenate %166, %167 in 0 : vector<17x8xf32>, vector<271x8xf32> -> vector<288x8xf32>
    %cst_89 = arith.constant 0.000000e+00 : f32
    %169 = vector.broadcast %cst_89 : f32 to vector<1x8xf32>
    %170 = vector.extract_strided_slice %159 {offsets = [0, 0], sizes = [287, 8], strides = [1, 1]} : vector<288x8xf32> to vector<287x8xf32>
    %171 = tpu.concatenate %169, %170 in 0 : vector<1x8xf32>, vector<287x8xf32> -> vector<288x8xf32>
    %172 = vector.extract_strided_slice %159 {offsets = [1, 0], sizes = [287, 8], strides = [1, 1]} : vector<288x8xf32> to vector<287x8xf32>
    %cst_90 = arith.constant 0.000000e+00 : f32
    %173 = vector.broadcast %cst_90 : f32 to vector<1x8xf32>
    %174 = tpu.concatenate %172, %173 in 0 : vector<287x8xf32>, vector<1x8xf32> -> vector<288x8xf32>
    %175 = vector.extract_strided_slice %159 {offsets = [17, 0], sizes = [271, 8], strides = [1, 1]} : vector<288x8xf32> to vector<271x8xf32>
    %cst_91 = arith.constant 0.000000e+00 : f32
    %176 = vector.broadcast %cst_91 : f32 to vector<17x8xf32>
    %177 = tpu.concatenate %175, %176 in 0 : vector<271x8xf32>, vector<17x8xf32> -> vector<288x8xf32>
    %178 = vector.extract_strided_slice %159 {offsets = [18, 0], sizes = [270, 8], strides = [1, 1]} : vector<288x8xf32> to vector<270x8xf32>
    %cst_92 = arith.constant 0.000000e+00 : f32
    %179 = vector.broadcast %cst_92 : f32 to vector<18x8xf32>
    %180 = tpu.concatenate %178, %179 in 0 : vector<270x8xf32>, vector<18x8xf32> -> vector<288x8xf32>
    %181 = vector.extract_strided_slice %159 {offsets = [19, 0], sizes = [269, 8], strides = [1, 1]} : vector<288x8xf32> to vector<269x8xf32>
    %cst_93 = arith.constant 0.000000e+00 : f32
    %182 = vector.broadcast %cst_93 : f32 to vector<19x8xf32>
    %183 = tpu.concatenate %181, %182 in 0 : vector<269x8xf32>, vector<19x8xf32> -> vector<288x8xf32>
    %184 = tpu.concatenate %162, %165, %168, %171, %159, %174, %177, %180, %183 in 1 : vector<288x8xf32>, vector<288x8xf32>, vector<288x8xf32>, vector<288x8xf32>, vector<288x8xf32>, vector<288x8xf32>, vector<288x8xf32>, vector<288x8xf32>, vector<288x8xf32> -> vector<288x72xf32>
    %185 = arith.truncf %184 : vector<288x72xf32> to vector<288x72xbf16>
    %cst_94 = arith.constant dense<0.000000e+00> : vector<288x8xf32>
    %186 = tpu.matmul %185, %22, %cst_94 {dimension_numbers = #tpu.dot_dimension_numbers<[1], [0], [0], [1], [0, 0, 1, 1], [], []>} : vector<288x72xbf16>, vector<72x8xbf16>, vector<288x8xf32> -> vector<288x8xf32>
    %c1_95 = arith.constant 1 : index
    %c19_96 = arith.constant 19 : index
    %c0_97 = arith.constant 0 : index
    %187 = vector.load %arg1[%c1_95, %c19_96, %c0_97] : memref<2x328x8xf32, #tpu.memory_space<vmem>>, vector<1x288x8xf32>
    %188 = vector.shape_cast %187 : vector<1x288x8xf32> to vector<288x8xf32>
    %189 = arith.mulf %186, %20 : vector<288x8xf32>
    %cst_98 = arith.constant dense<0.000000e+00> : vector<8xf32>
    %190 = vector.multi_reduction <add>, %189, %cst_98 [0] : vector<288x8xf32> to vector<8xf32>
    %191 = vector.shape_cast %190 : vector<8xf32> to vector<1x8xf32>
    %cst_99 = arith.constant 3.906250e-03 : f32
    %192 = vector.broadcast %cst_99 : f32 to vector<1x8xf32>
    %193 = arith.mulf %191, %192 : vector<1x8xf32>
    %194 = vector.broadcast %193 : vector<1x8xf32> to vector<288x8xf32>
    %195 = arith.subf %186, %194 : vector<288x8xf32>
    %196 = arith.mulf %195, %195 : vector<288x8xf32>
    %197 = arith.mulf %196, %20 : vector<288x8xf32>
    %cst_100 = arith.constant dense<0.000000e+00> : vector<8xf32>
    %198 = vector.multi_reduction <add>, %197, %cst_100 [0] : vector<288x8xf32> to vector<8xf32>
    %199 = vector.shape_cast %198 : vector<8xf32> to vector<1x8xf32>
    %cst_101 = arith.constant 3.906250e-03 : f32
    %200 = vector.broadcast %cst_101 : f32 to vector<1x8xf32>
    %201 = arith.mulf %199, %200 : vector<1x8xf32>
    %cst_102 = arith.constant 9.99999974E-6 : f32
    %202 = vector.broadcast %cst_102 : f32 to vector<1x8xf32>
    %203 = arith.addf %201, %202 : vector<1x8xf32>
    %204 = math.rsqrt %203 : vector<1x8xf32>
    %205 = vector.broadcast %204 : vector<1x8xf32> to vector<288x8xf32>
    %206 = arith.mulf %195, %205 : vector<288x8xf32>
    %207 = arith.addf %206, %188 : vector<288x8xf32>
    %cst_103 = arith.constant 0.000000e+00 : f32
    %208 = vector.broadcast %cst_103 : f32 to vector<288x8xf32>
    %209 = arith.maximumf %207, %208 : vector<288x8xf32>
    %c1_104 = arith.constant 1 : index
    %c0_105 = arith.constant 0 : index
    %c0_106 = arith.constant 0 : index
    %210 = vector.load %arg4[%c1_104, %c0_105, %c0_106] : memref<2x288x8xf32, #tpu.memory_space<vmem>>, vector<1x288x8xf32>
    %211 = vector.shape_cast %210 : vector<1x288x8xf32> to vector<288x8xf32>
    %212 = vector.shape_cast %209 : vector<288x8xf32> to vector<1x288x8xf32>
    tpu.vector_store %arg4[%c1_104, %c0_105, %c0_106], %212 {strides = array<i32>} : memref<2x288x8xf32, #tpu.memory_space<vmem>>, vector<1x288x8xf32>,
    return
  }
  func.func @transform_0(%arg0: i32) -> (i32, i32, i32) {
    %c0_i32 = arith.constant 0 : i32
    %c0_i32_0 = arith.constant 0 : i32
    %c0_i32_1 = arith.constant 0 : i32
    return %arg0, %c0_i32, %c0_i32_0 : i32, i32, i32
  }
  func.func @transform_1(%arg0: i32) -> (i32, i32) {
    %c0_i32 = arith.constant 0 : i32
    %c0_i32_0 = arith.constant 0 : i32
    %c0_i32_1 = arith.constant 0 : i32
    return %c0_i32, %c0_i32_0 : i32, i32
  }
  func.func @transform_2(%arg0: i32) -> (i32, i32) {
    %c0_i32 = arith.constant 0 : i32
    %c0_i32_0 = arith.constant 0 : i32
    %c0_i32_1 = arith.constant 0 : i32
    return %c0_i32, %c0_i32_0 : i32, i32
  }
  func.func @transform_3(%arg0: i32) -> (i32, i32, i32) {
    %c0_i32 = arith.constant 0 : i32
    %c0_i32_0 = arith.constant 0 : i32
    %c0_i32_1 = arith.constant 0 : i32
    return %arg0, %c0_i32, %c0_i32_0 : i32, i32, i32
  }
}

</mosaic_0001>

<llo_original>
// kernel: basic_block_forward.1
$region0: #{basic_block_forward.1}
  #allocation0 [shape = 'u32[]', space=smem, size = 0x4, offset = 0x4, fixed_abs, tag = 'smem constant byte address 0x4 - core index']
  #allocation1 [shape = 'u32[72,128]{1,0:T(1,128)}', space=vmem, size = 0x9000, scoped, tag = 'internal scratch']
  %s0 = inlined_call_operand.vmem [shape: f32[4,328,8], index: 0, kind: input, shape index: {}]
  %s1 = inlined_call_operand.vmem [shape: bf16[72,8], index: 1, kind: input, shape index: {}]
  %s2 = inlined_call_operand.vmem [shape: bf16[72,8], index: 2, kind: input, shape index: {}]
  %s3 = inlined_call_operand.vmem [shape: f32[4,288,8], index: 3, kind: output, shape index: {}]
  %s4 = sld [smem:[#allocation0]]
  $region45: #{basic_block_forward.1} parent=0
    _
  %s6 = ssub.s32 1, %s4
  %s7 = scalar_select 0, %s6, %s4
  loop: start=0, step=1, limit=4
  $region2: #{basic_block_forward.1} parent=0 // loop_pre_header
    _
  $region3: #{basic_block_forward.1} parent=0 // loop_header
    %s9 = sphi 0, %s13
    %p10 = scmp.ge.s32.totalorder %s9, 4
    %s19 = sphi 0, %s21
    %s22 = sphi 0, %s19
    %s23 = sphi 0, %s22
    %s39 = sphi 0, %s23
    %s43 = sphi 0, %s43
    %s45 = sphi 0, %s43
    %s46 = sphi 0, %s45
    %s60 = sphi 0, %s46
    %s64 = sphi 0, %s64
    %s66 = sphi 0, %s64
    %s67 = sphi 0, %s66
    %s81 = sphi 0, %s67
    %s87 = sphi 0, %s89
    %s90 = sphi 0, %s87
    %s91 = sphi 0, %s90
    %s107 = sphi 0, %s91
  $region4: #{basic_block_forward.1} parent=0 // loop_header_branch
    %12 = sbr.rel (%p10) target = $region8
  $region5: #{basic_block_forward.1} parent=0 // loop_body
    %s14 = ssub.s32 %s9, 1
    %s15 = ssub.s32 %s9, 2
    %s16 = sadd.s32 %s9, 1
    %s17 = ssub.s32 %s9, %s16
    %p18 = scmp.eq.s32.totalorder %s17, 0
    %s20 = sadd.s32 %s19, 1
    %s21 = scalar_select %p18, %s19, %s20
    %p24 = pneg %p18
    %p25 = scmp.eq.s32.totalorder %s9, 1
    %p26 = por %p24, %p25
    %p27 = scmp.ne.s32.totalorder %s19, %s22
    %p28 = scmp.eq.s32.totalorder %s9, 0
    %p29 = por %p27, %p28
    %p30 = scmp.ne.s32.totalorder %s19, %s22
    %p31 = scmp.eq.s32.totalorder %s14, 1
    %p32 = por %p30, %p31
    %p33 = scmp.ne.s32.totalorder %s22, %s23
    %p34 = scmp.eq.s32.totalorder %s14, 0
    %p35 = por %p33, %p34
    %p36 = scmp.ne.s32.totalorder %s22, %s23
    %p37 = scmp.eq.s32.totalorder %s15, 1
    %p38 = por %p36, %p37
    %p40 = scmp.ne.s32.totalorder %s23, %s39
    %p41 = scmp.eq.s32.totalorder %s15, 0
    %p42 = por %p40, %p41
    %s44 = sadd.s32 %s43, 1
    %p47 = scmp.eq.s32.totalorder %s9, 1
    %p48 = scmp.ne.s32.totalorder %s43, %s45
    %p49 = scmp.eq.s32.totalorder %s9, 0
    %p50 = por %p48, %p49
    %p51 = scmp.ne.s32.totalorder %s43, %s45
    %p52 = scmp.eq.s32.totalorder %s14, 1
    %p53 = por %p51, %p52
    %p54 = scmp.ne.s32.totalorder %s45, %s46
    %p55 = scmp.eq.s32.totalorder %s14, 0
    %p56 = por %p54, %p55
    %p57 = scmp.ne.s32.totalorder %s45, %s46
    %p58 = scmp.eq.s32.totalorder %s15, 1
    %p59 = por %p57, %p58
    %p61 = scmp.ne.s32.totalorder %s46, %s60
    %p62 = scmp.eq.s32.totalorder %s15, 0
    %p63 = por %p61, %p62
    %s65 = sadd.s32 %s64, 1
    %p68 = scmp.eq.s32.totalorder %s9, 1
    %p69 = scmp.ne.s32.totalorder %s64, %s66
    %p70 = scmp.eq.s32.totalorder %s9, 0
    %p71 = por %p69, %p70
    %p72 = scmp.ne.s32.totalorder %s64, %s66
    %p73 = scmp.eq.s32.totalorder %s14, 1
    %p74 = por %p72, %p73
    %p75 = scmp.ne.s32.totalorder %s66, %s67
    %p76 = scmp.eq.s32.totalorder %s14, 0
    %p77 = por %p75, %p76
    %p78 = scmp.ne.s32.totalorder %s66, %s67
    %p79 = scmp.eq.s32.totalorder %s15, 1
    %p80 = por %p78, %p79
    %p82 = scmp.ne.s32.totalorder %s67, %s81
    %p83 = scmp.eq.s32.totalorder %s15, 0
    %p84 = por %p82, %p83
    %s85 = ssub.s32 %s9, %s16
    %p86 = scmp.eq.s32.totalorder %s85, 0
    %s88 = sadd.s32 %s87, 1
    %s89 = scalar_select %p86, %s87, %s88
    %p92 = pneg %p86
    %p93 = scmp.eq.s32.totalorder %s9, 1
    %p94 = por %p92, %p93
    %p95 = scmp.ne.s32.totalorder %s87, %s90
    %p96 = scmp.eq.s32.totalorder %s9, 0
    %p97 = por %p95, %p96
    %p98 = scmp.ne.s32.totalorder %s87, %s90
    %p99 = scmp.eq.s32.totalorder %s14, 1
    %p100 = por %p98, %p99
    %p101 = scmp.ne.s32.totalorder %s90, %s91
    %p102 = scmp.eq.s32.totalorder %s14, 0
    %p103 = por %p101, %p102
    %p104 = scmp.ne.s32.totalorder %s90, %s91
    %p105 = scmp.eq.s32.totalorder %s15, 1
    %p106 = por %p104, %p105
    %p108 = scmp.ne.s32.totalorder %s91, %s107
    %p109 = scmp.eq.s32.totalorder %s15, 0
    %p110 = por %p108, %p109
    %p111 = scmp.le.s32.totalorder 1, %s9
    %p112 = scmp.lt.s32.totalorder %s9, 3
    %p113 = pnand %p111, %p112
    %p114 = pneg %p113
    // Predicated region
    $region9: #{basic_block_forward.1} parent=5 // pred_check
      _
    $region10: #{basic_block_forward.1} parent=5 // pred_check_branch
      %116 = sbr.rel (%p113) target = $region12
    $region11: #{basic_block_forward.1} parent=5 // pred_region
      %s117 = ssub.s32 %s9, 1
      // Predicated region
      $region13: #{basic_block_forward.1} parent=11 // pred_check
        %p118 = pneg %p56
      $region14: #{basic_block_forward.1} parent=11 // pred_check_branch
        %120 = sbr.rel (%p118) target = $region16
      $region15: #{basic_block_forward.1} parent=11 // pred_region
        _
      $region16: #{basic_block_forward.1} parent=11 // pred_fallthru
        _
      // Predicated region
      $region17: #{basic_block_forward.1} parent=11 // pred_check
        %p121 = pneg %p77
      $region18: #{basic_block_forward.1} parent=11 // pred_check_branch
        %123 = sbr.rel (%p121) target = $region20
      $region19: #{basic_block_forward.1} parent=11 // pred_region
        _
      $region20: #{basic_block_forward.1} parent=11 // pred_fallthru
        _
    $region12: #{basic_block_forward.1} parent=5 // pred_fallthru
      _
    %p124 = scmp.lt.s32.totalorder %s9, 2
    // Predicated region
    $region21: #{basic_block_forward.1} parent=5 // pred_check
      %p125 = pneg %p124
    $region22: #{basic_block_forward.1} parent=5 // pred_check_branch
      %127 = sbr.rel (%p125) target = $region24
    $region23: #{basic_block_forward.1} parent=5 // pred_region
      // Predicated region
      $region25: #{basic_block_forward.1} parent=23 // pred_check
        %p128 = pneg %p29
      $region26: #{basic_block_forward.1} parent=23 // pred_check_branch
        %130 = sbr.rel (%p128) target = $region28
      $region27: #{basic_block_forward.1} parent=23 // pred_region
        %s131 = smul.u32 2, %s9
        %p132 = scmp.lt.s32.totalorder %s131, 3
        %s133 = scalar_select %p132, %s131, 3
        %s134 = smul.addr %s133, 41
        %s135 = smul.addr %s134, 8
        %s136 = scalar_lea.vmem %s0, %s135
        %s137 = smul.u32 2, %s9
      $region28: #{basic_block_forward.1} parent=23 // pred_fallthru
        _
    $region24: #{basic_block_forward.1} parent=5 // pred_fallthru
      _
    %p138 = scmp.le.s32.totalorder 1, %s9
    %p139 = scmp.lt.s32.totalorder %s9, 3
    %p140 = pnand %p138, %p139
    %p141 = pneg %p140
    // Predicated region
    $region29: #{basic_block_forward.1} parent=5 // pred_check
      _
    $region30: #{basic_block_forward.1} parent=5 // pred_check_branch
      %143 = sbr.rel (%p140) target = $region32
    $region31: #{basic_block_forward.1} parent=5 // pred_region
      %s144 = ssub.s32 %s9, 1
      %s145 = smul.u32 2, %s14
      %p146 = scmp.lt.s32.totalorder %s145, 3
      %s147 = scalar_select %p146, %s145, 3
      %s148 = smul.addr %s147, 41
      %s149 = smul.addr %s148, 8
      %s150 = scalar_lea.vmem %s0, %s149
      %p151 = pneg %p35
      %p152 = pneg %p32
      %p153 = pneg %p56
      %p154 = pneg %p53
      %p155 = pneg %p77
      %p156 = pneg %p74
      %p157 = pneg %p103
      %p158 = pneg %p100
      %s159 = smul.u32 2, %s14
      %p160 = scmp.lt.s32.totalorder %s159, 3
      %s161 = scalar_select %p160, %s159, 3
      %s162 = smul.addr %s161, 36
      %s163 = smul.addr %s162, 8
      %s164 = scalar_lea.vmem %s3, %s163
      %s165 = smul.u32 2, %s14
      %p166 = scmp.lt.s32.totalorder %s165, 3
      %s167 = scalar_select %p166, %s165, 3
      %s168 = smul.addr %s167, 41
      %s169 = smul.addr %s168, 8
      %s170 = scalar_lea.vmem %s0, %s169
      %s171 = smul.u32 2, %s14
      %s172 = smul.u32 2, %s14
      %p173 = scmp.lt.s32.totalorder %s172, 3
      %s174 = scalar_select %p173, %s172, 3
      %s175 = smul.addr %s174, 36
      %s176 = smul.addr %s175, 8
      %s177 = scalar_lea.vmem %s3, %s176
      %s178 = smul.u32 2, %s14
      %v180 = vlaneseq
      %v181 = vshrl.u32 %v180, 7
      %v182 = vadd.s32 %v181, 8
      %v183 = vadd.s32 %v181, 16
      %v184 = vadd.s32 %v181, 24
      %v185 = vadd.s32 %v181, 32
      %v186 = vadd.s32 %v181, 40
      %v187 = vadd.s32 %v181, 48
      %v188 = vadd.s32 %v181, 56
      %v189 = vadd.s32 %v181, 64
      %v190 = vadd.s32 %v181, 72
      %v191 = vadd.s32 %v181, 80
      %v192 = vadd.s32 %v181, 88
      %v193 = vadd.s32 %v181, 96
      %v194 = vadd.s32 %v181, 104
      %v195 = vadd.s32 %v181, 112
      %v196 = vadd.s32 %v181, 120
      %v197 = vadd.s32 %v181, 128
      %v198 = vadd.s32 %v181, 136
      %v199 = vadd.s32 %v181, 144
      %v200 = vadd.s32 %v181, 152
      %v201 = vadd.s32 %v181, 160
      %v202 = vadd.s32 %v181, 168
      %v203 = vadd.s32 %v181, 176
      %v204 = vadd.s32 %v181, 184
      %v205 = vadd.s32 %v181, 192
      %v206 = vadd.s32 %v181, 200
      %v207 = vadd.s32 %v181, 208
      %v208 = vadd.s32 %v181, 216
      %v209 = vadd.s32 %v181, 224
      %v210 = vadd.s32 %v181, 232
      %v211 = vadd.s32 %v181, 240
      %v212 = vadd.s32 %v181, 248
      %v213 = vadd.s32 %v181, 256
      %v214 = vadd.s32 %v181, 264
      %v215 = vadd.s32 %v181, 272
      %v216 = vadd.s32 %v181, 280
      %vm217 = vcmp.lt.s32.totalorder %v181, 0
      %v218 = vsub.s32 0, %v181
      %v219 = vsel %vm217, %v218, %v181
      %v220 = vand.u32 %v219, 65535
      %v221 = vshrl.u32 %v219, 16
      %v223 = vmul.u32 %v220, 14564
      %v224 = vmul.u32 %v220, 58254
      %v225 = vmul.u32 %v221, 14564
      %v226 = vmul.u32 %v221, 58254
      %v227 = vshll.u32 %v224, 16
      %v228 = vshrl.u32 %v224, 16
      %v229 = vshll.u32 %v225, 16
      %v230 = vshrl.u32 %v225, 16
      %vm231 = vc.u32 %v223, %v227
      %v232 = vsel %vm231, 1, 0
      %v233 = vadd.s32 %v223, %v227
      %v234 = vadd.s32 %v226, %v232
      %vm235 = vc.u32 %v233, %v229
      %v236 = vsel %vm235, 1, 0
      %v237 = vadd.s32 %v233, %v229
      %v238 = vadd.s32 %v234, %v236
      %v239 = vadd.s32 %v238, %v228
      %v240 = vadd.s32 %v239, %v230
      %v241 = vshrl.u32 %v240, 4
      %v242 = vmul.u32 %v241, 18
      %v243 = vsub.s32 %v219, %v242
      %v244 = vsub.s32 0, %v243
      %v245 = vsel %vm217, %v244, %v243
      %vm246 = vcmp.lt.s32.totalorder %v182, 0
      %v247 = vsub.s32 0, %v182
      %v248 = vsel %vm246, %v247, %v182
      %v249 = vand.u32 %v248, 65535
      %v250 = vshrl.u32 %v248, 16
      %v252 = vmul.u32 %v249, 14564
      %v253 = vmul.u32 %v249, 58254
      %v254 = vmul.u32 %v250, 14564
      %v255 = vmul.u32 %v250, 58254
      %v256 = vshll.u32 %v253, 16
      %v257 = vshrl.u32 %v253, 16
      %v258 = vshll.u32 %v254, 16
      %v259 = vshrl.u32 %v254, 16
      %vm260 = vc.u32 %v252, %v256
      %v261 = vsel %vm260, 1, 0
      %v262 = vadd.s32 %v252, %v256
      %v263 = vadd.s32 %v255, %v261
      %vm264 = vc.u32 %v262, %v258
      %v265 = vsel %vm264, 1, 0
      %v266 = vadd.s32 %v262, %v258
      %v267 = vadd.s32 %v263, %v265
      %v268 = vadd.s32 %v267, %v257
      %v269 = vadd.s32 %v268, %v259
      %v270 = vshrl.u32 %v269, 4
      %v271 = vmul.u32 %v270, 18
      %v272 = vsub.s32 %v248, %v271
      %v273 = vsub.s32 0, %v272
      %v274 = vsel %vm246, %v273, %v272
      %vm275 = vcmp.lt.s32.totalorder %v183, 0
      %v276 = vsub.s32 0, %v183
      %v277 = vsel %vm275, %v276, %v183
      %v278 = vand.u32 %v277, 65535
      %v279 = vshrl.u32 %v277, 16
      %v281 = vmul.u32 %v278, 14564
      %v282 = vmul.u32 %v278, 58254
      %v283 = vmul.u32 %v279, 14564
      %v284 = vmul.u32 %v279, 58254
      %v285 = vshll.u32 %v282, 16
      %v286 = vshrl.u32 %v282, 16
      %v287 = vshll.u32 %v283, 16
      %v288 = vshrl.u32 %v283, 16
      %vm289 = vc.u32 %v281, %v285
      %v290 = vsel %vm289, 1, 0
      %v291 = vadd.s32 %v281, %v285
      %v292 = vadd.s32 %v284, %v290
      %vm293 = vc.u32 %v291, %v287
      %v294 = vsel %vm293, 1, 0
      %v295 = vadd.s32 %v291, %v287
      %v296 = vadd.s32 %v292, %v294
      %v297 = vadd.s32 %v296, %v286
      %v298 = vadd.s32 %v297, %v288
      %v299 = vshrl.u32 %v298, 4
      %v300 = vmul.u32 %v299, 18
      %v301 = vsub.s32 %v277, %v300
      %v302 = vsub.s32 0, %v301
      %v303 = vsel %vm275, %v302, %v301
      %vm304 = vcmp.lt.s32.totalorder %v184, 0
      %v305 = vsub.s32 0, %v184
      %v306 = vsel %vm304, %v305, %v184
      %v307 = vand.u32 %v306, 65535
      %v308 = vshrl.u32 %v306, 16
      %v310 = vmul.u32 %v307, 14564
      %v311 = vmul.u32 %v307, 58254
      %v312 = vmul.u32 %v308, 14564
      %v313 = vmul.u32 %v308, 58254
      %v314 = vshll.u32 %v311, 16
      %v315 = vshrl.u32 %v311, 16
      %v316 = vshll.u32 %v312, 16
      %v317 = vshrl.u32 %v312, 16
      %vm318 = vc.u32 %v310, %v314
      %v319 = vsel %vm318, 1, 0
      %v320 = vadd.s32 %v310, %v314
      %v321 = vadd.s32 %v313, %v319
      %vm322 = vc.u32 %v320, %v316
      %v323 = vsel %vm322, 1, 0
      %v324 = vadd.s32 %v320, %v316
      %v325 = vadd.s32 %v321, %v323
      %v326 = vadd.s32 %v325, %v315
      %v327 = vadd.s32 %v326, %v317
      %v328 = vshrl.u32 %v327, 4
      %v329 = vmul.u32 %v328, 18
      %v330 = vsub.s32 %v306, %v329
      %v331 = vsub.s32 0, %v330
      %v332 = vsel %vm304, %v331, %v330
      %vm333 = vcmp.lt.s32.totalorder %v185, 0
      %v334 = vsub.s32 0, %v185
      %v335 = vsel %vm333, %v334, %v185
      %v336 = vand.u32 %v335, 65535
      %v337 = vshrl.u32 %v335, 16
      %v339 = vmul.u32 %v336, 14564
      %v340 = vmul.u32 %v336, 58254
      %v341 = vmul.u32 %v337, 14564
      %v342 = vmul.u32 %v337, 58254
      %v343 = vshll.u32 %v340, 16
      %v344 = vshrl.u32 %v340, 16
      %v345 = vshll.u32 %v341, 16
      %v346 = vshrl.u32 %v341, 16
      %vm347 = vc.u32 %v339, %v343
      %v348 = vsel %vm347, 1, 0
      %v349 = vadd.s32 %v339, %v343
      %v350 = vadd.s32 %v342, %v348
      %vm351 = vc.u32 %v349, %v345
      %v352 = vsel %vm351, 1, 0
      %v353 = vadd.s32 %v349, %v345
      %v354 = vadd.s32 %v350, %v352
      %v355 = vadd.s32 %v354, %v344
      %v356 = vadd.s32 %v355, %v346
      %v357 = vshrl.u32 %v356, 4
      %v358 = vmul.u32 %v357, 18
      %v359 = vsub.s32 %v335, %v358
      %v360 = vsub.s32 0, %v359
      %v361 = vsel %vm333, %v360, %v359
      %vm362 = vcmp.lt.s32.totalorder %v186, 0
      %v363 = vsub.s32 0, %v186
      %v364 = vsel %vm362, %v363, %v186
      %v365 = vand.u32 %v364, 65535
      %v366 = vshrl.u32 %v364, 16
      %v368 = vmul.u32 %v365, 14564
      %v369 = vmul.u32 %v365, 58254
      %v370 = vmul.u32 %v366, 14564
      %v371 = vmul.u32 %v366, 58254
      %v372 = vshll.u32 %v369, 16
      %v373 = vshrl.u32 %v369, 16
      %v374 = vshll.u32 %v370, 16
      %v375 = vshrl.u32 %v370, 16
      %vm376 = vc.u32 %v368, %v372
      %v377 = vsel %vm376, 1, 0
      %v378 = vadd.s32 %v368, %v372
      %v379 = vadd.s32 %v371, %v377
      %vm380 = vc.u32 %v378, %v374
      %v381 = vsel %vm380, 1, 0
      %v382 = vadd.s32 %v378, %v374
      %v383 = vadd.s32 %v379, %v381
      %v384 = vadd.s32 %v383, %v373
      %v385 = vadd.s32 %v384, %v375
      %v386 = vshrl.u32 %v385, 4
      %v387 = vmul.u32 %v386, 18
      %v388 = vsub.s32 %v364, %v387
      %v389 = vsub.s32 0, %v388
      %v390 = vsel %vm362, %v389, %v388
      %vm391 = vcmp.lt.s32.totalorder %v187, 0
      %v392 = vsub.s32 0, %v187
      %v393 = vsel %vm391, %v392, %v187
      %v394 = vand.u32 %v393, 65535
      %v395 = vshrl.u32 %v393, 16
      %v397 = vmul.u32 %v394, 14564
      %v398 = vmul.u32 %v394, 58254
      %v399 = vmul.u32 %v395, 14564
      %v400 = vmul.u32 %v395, 58254
      %v401 = vshll.u32 %v398, 16
      %v402 = vshrl.u32 %v398, 16
      %v403 = vshll.u32 %v399, 16
      %v404 = vshrl.u32 %v399, 16
      %vm405 = vc.u32 %v397, %v401
      %v406 = vsel %vm405, 1, 0
      %v407 = vadd.s32 %v397, %v401
      %v408 = vadd.s32 %v400, %v406
      %vm409 = vc.u32 %v407, %v403
      %v410 = vsel %vm409, 1, 0
      %v411 = vadd.s32 %v407, %v403
      %v412 = vadd.s32 %v408, %v410
      %v413 = vadd.s32 %v412, %v402
      %v414 = vadd.s32 %v413, %v404
      %v415 = vshrl.u32 %v414, 4
      %v416 = vmul.u32 %v415, 18
      %v417 = vsub.s32 %v393, %v416
      %v418 = vsub.s32 0, %v417
      %v419 = vsel %vm391, %v418, %v417
      %vm420 = vcmp.lt.s32.totalorder %v188, 0
      %v421 = vsub.s32 0, %v188
      %v422 = vsel %vm420, %v421, %v188
      %v423 = vand.u32 %v422, 65535
      %v424 = vshrl.u32 %v422, 16
      %v426 = vmul.u32 %v423, 14564
      %v427 = vmul.u32 %v423, 58254
      %v428 = vmul.u32 %v424, 14564
      %v429 = vmul.u32 %v424, 58254
      %v430 = vshll.u32 %v427, 16
      %v431 = vshrl.u32 %v427, 16
      %v432 = vshll.u32 %v428, 16
      %v433 = vshrl.u32 %v428, 16
      %vm434 = vc.u32 %v426, %v430
      %v435 = vsel %vm434, 1, 0
      %v436 = vadd.s32 %v426, %v430
      %v437 = vadd.s32 %v429, %v435
      %vm438 = vc.u32 %v436, %v432
      %v439 = vsel %vm438, 1, 0
      %v440 = vadd.s32 %v436, %v432
      %v441 = vadd.s32 %v437, %v439
      %v442 = vadd.s32 %v441, %v431
      %v443 = vadd.s32 %v442, %v433
      %v444 = vshrl.u32 %v443, 4
      %v445 = vmul.u32 %v444, 18
      %v446 = vsub.s32 %v422, %v445
      %v447 = vsub.s32 0, %v446
      %v448 = vsel %vm420, %v447, %v446
      %vm449 = vcmp.lt.s32.totalorder %v189, 0
      %v450 = vsub.s32 0, %v189
      %v451 = vsel %vm449, %v450, %v189
      %v452 = vand.u32 %v451, 65535
      %v453 = vshrl.u32 %v451, 16
      %v455 = vmul.u32 %v452, 14564
      %v456 = vmul.u32 %v452, 58254
      %v457 = vmul.u32 %v453, 14564
      %v458 = vmul.u32 %v453, 58254
      %v459 = vshll.u32 %v456, 16
      %v460 = vshrl.u32 %v456, 16
      %v461 = vshll.u32 %v457, 16
      %v462 = vshrl.u32 %v457, 16
      %vm463 = vc.u32 %v455, %v459
      %v464 = vsel %vm463, 1, 0
      %v465 = vadd.s32 %v455, %v459
      %v466 = vadd.s32 %v458, %v464
      %vm467 = vc.u32 %v465, %v461
      %v468 = vsel %vm467, 1, 0
      %v469 = vadd.s32 %v465, %v461
      %v470 = vadd.s32 %v466, %v468
      %v471 = vadd.s32 %v470, %v460
      %v472 = vadd.s32 %v471, %v462
      %v473 = vshrl.u32 %v472, 4
      %v474 = vmul.u32 %v473, 18
      %v475 = vsub.s32 %v451, %v474
      %v476 = vsub.s32 0, %v475
      %v477 = vsel %vm449, %v476, %v475
      %vm478 = vcmp.lt.s32.totalorder %v190, 0
      %v479 = vsub.s32 0, %v190
      %v480 = vsel %vm478, %v479, %v190
      %v481 = vand.u32 %v480, 65535
      %v482 = vshrl.u32 %v480, 16
      %v484 = vmul.u32 %v481, 14564
      %v485 = vmul.u32 %v481, 58254
      %v486 = vmul.u32 %v482, 14564
      %v487 = vmul.u32 %v482, 58254
      %v488 = vshll.u32 %v485, 16
      %v489 = vshrl.u32 %v485, 16
      %v490 = vshll.u32 %v486, 16
      %v491 = vshrl.u32 %v486, 16
      %vm492 = vc.u32 %v484, %v488
      %v493 = vsel %vm492, 1, 0
      %v494 = vadd.s32 %v484, %v488
      %v495 = vadd.s32 %v487, %v493
      %vm496 = vc.u32 %v494, %v490
      %v497 = vsel %vm496, 1, 0
      %v498 = vadd.s32 %v494, %v490
      %v499 = vadd.s32 %v495, %v497
      %v500 = vadd.s32 %v499, %v489
      %v501 = vadd.s32 %v500, %v491
      %v502 = vshrl.u32 %v501, 4
      %v503 = vmul.u32 %v502, 18
      %v504 = vsub.s32 %v480, %v503
      %v505 = vsub.s32 0, %v504
      %v506 = vsel %vm478, %v505, %v504
      %vm507 = vcmp.lt.s32.totalorder %v191, 0
      %v508 = vsub.s32 0, %v191
      %v509 = vsel %vm507, %v508, %v191
      %v510 = vand.u32 %v509, 65535
      %v511 = vshrl.u32 %v509, 16
      %v513 = vmul.u32 %v510, 14564
      %v514 = vmul.u32 %v510, 58254
      %v515 = vmul.u32 %v511, 14564
      %v516 = vmul.u32 %v511, 58254
      %v517 = vshll.u32 %v514, 16
      %v518 = vshrl.u32 %v514, 16
      %v519 = vshll.u32 %v515, 16
      %v520 = vshrl.u32 %v515, 16
      %vm521 = vc.u32 %v513, %v517
      %v522 = vsel %vm521, 1, 0
      %v523 = vadd.s32 %v513, %v517
      %v524 = vadd.s32 %v516, %v522
      %vm525 = vc.u32 %v523, %v519
      %v526 = vsel %vm525, 1, 0
      %v527 = vadd.s32 %v523, %v519
      %v528 = vadd.s32 %v524, %v526
      %v529 = vadd.s32 %v528, %v518
      %v530 = vadd.s32 %v529, %v520
      %v531 = vshrl.u32 %v530, 4
      %v532 = vmul.u32 %v531, 18
      %v533 = vsub.s32 %v509, %v532
      %v534 = vsub.s32 0, %v533
      %v535 = vsel %vm507, %v534, %v533
      %vm536 = vcmp.lt.s32.totalorder %v192, 0
      %v537 = vsub.s32 0, %v192
      %v538 = vsel %vm536, %v537, %v192
      %v539 = vand.u32 %v538, 65535
      %v540 = vshrl.u32 %v538, 16
      %v542 = vmul.u32 %v539, 14564
      %v543 = vmul.u32 %v539, 58254
      %v544 = vmul.u32 %v540, 14564
      %v545 = vmul.u32 %v540, 58254
      %v546 = vshll.u32 %v543, 16
      %v547 = vshrl.u32 %v543, 16
      %v548 = vshll.u32 %v544, 16
      %v549 = vshrl.u32 %v544, 16
      %vm550 = vc.u32 %v542, %v546
      %v551 = vsel %vm550, 1, 0
      %v552 = vadd.s32 %v542, %v546
      %v553 = vadd.s32 %v545, %v551
      %vm554 = vc.u32 %v552, %v548
      %v555 = vsel %vm554, 1, 0
      %v556 = vadd.s32 %v552, %v548
      %v557 = vadd.s32 %v553, %v555
      %v558 = vadd.s32 %v557, %v547
      %v559 = vadd.s32 %v558, %v549
      %v560 = vshrl.u32 %v559, 4
      %v561 = vmul.u32 %v560, 18
      %v562 = vsub.s32 %v538, %v561
      %v563 = vsub.s32 0, %v562
      %v564 = vsel %vm536, %v563, %v562
      %vm565 = vcmp.lt.s32.totalorder %v193, 0
      %v566 = vsub.s32 0, %v193
      %v567 = vsel %vm565, %v566, %v193
      %v568 = vand.u32 %v567, 65535
      %v569 = vshrl.u32 %v567, 16
      %v571 = vmul.u32 %v568, 14564
      %v572 = vmul.u32 %v568, 58254
      %v573 = vmul.u32 %v569, 14564
      %v574 = vmul.u32 %v569, 58254
      %v575 = vshll.u32 %v572, 16
      %v576 = vshrl.u32 %v572, 16
      %v577 = vshll.u32 %v573, 16
      %v578 = vshrl.u32 %v573, 16
      %vm579 = vc.u32 %v571, %v575
      %v580 = vsel %vm579, 1, 0
      %v581 = vadd.s32 %v571, %v575
      %v582 = vadd.s32 %v574, %v580
      %vm583 = vc.u32 %v581, %v577
      %v584 = vsel %vm583, 1, 0
      %v585 = vadd.s32 %v581, %v577
      %v586 = vadd.s32 %v582, %v584
      %v587 = vadd.s32 %v586, %v576
      %v588 = vadd.s32 %v587, %v578
      %v589 = vshrl.u32 %v588, 4
      %v590 = vmul.u32 %v589, 18
      %v591 = vsub.s32 %v567, %v590
      %v592 = vsub.s32 0, %v591
      %v593 = vsel %vm565, %v592, %v591
      %vm594 = vcmp.lt.s32.totalorder %v194, 0
      %v595 = vsub.s32 0, %v194
      %v596 = vsel %vm594, %v595, %v194
      %v597 = vand.u32 %v596, 65535
      %v598 = vshrl.u32 %v596, 16
      %v600 = vmul.u32 %v597, 14564
      %v601 = vmul.u32 %v597, 58254
      %v602 = vmul.u32 %v598, 14564
      %v603 = vmul.u32 %v598, 58254
      %v604 = vshll.u32 %v601, 16
      %v605 = vshrl.u32 %v601, 16
      %v606 = vshll.u32 %v602, 16
      %v607 = vshrl.u32 %v602, 16
      %vm608 = vc.u32 %v600, %v604
      %v609 = vsel %vm608, 1, 0
      %v610 = vadd.s32 %v600, %v604
      %v611 = vadd.s32 %v603, %v609
      %vm612 = vc.u32 %v610, %v606
      %v613 = vsel %vm612, 1, 0
      %v614 = vadd.s32 %v610, %v606
      %v615 = vadd.s32 %v611, %v613
      %v616 = vadd.s32 %v615, %v605
      %v617 = vadd.s32 %v616, %v607
      %v618 = vshrl.u32 %v617, 4
      %v619 = vmul.u32 %v618, 18
      %v620 = vsub.s32 %v596, %v619
      %v621 = vsub.s32 0, %v620
      %v622 = vsel %vm594, %v621, %v620
      %vm623 = vcmp.lt.s32.totalorder %v195, 0
      %v624 = vsub.s32 0, %v195
      %v625 = vsel %vm623, %v624, %v195
      %v626 = vand.u32 %v625, 65535
      %v627 = vshrl.u32 %v625, 16
      %v629 = vmul.u32 %v626, 14564
      %v630 = vmul.u32 %v626, 58254
      %v631 = vmul.u32 %v627, 14564
      %v632 = vmul.u32 %v627, 58254
      %v633 = vshll.u32 %v630, 16
      %v634 = vshrl.u32 %v630, 16
      %v635 = vshll.u32 %v631, 16
      %v636 = vshrl.u32 %v631, 16
      %vm637 = vc.u32 %v629, %v633
      %v638 = vsel %vm637, 1, 0
      %v639 = vadd.s32 %v629, %v633
      %v640 = vadd.s32 %v632, %v638
      %vm641 = vc.u32 %v639, %v635
      %v642 = vsel %vm641, 1, 0
      %v643 = vadd.s32 %v639, %v635
      %v644 = vadd.s32 %v640, %v642
      %v645 = vadd.s32 %v644, %v634
      %v646 = vadd.s32 %v645, %v636
      %v647 = vshrl.u32 %v646, 4
      %v648 = vmul.u32 %v647, 18
      %v649 = vsub.s32 %v625, %v648
      %v650 = vsub.s32 0, %v649
      %v651 = vsel %vm623, %v650, %v649
      %vm652 = vcmp.lt.s32.totalorder %v196, 0
      %v653 = vsub.s32 0, %v196
      %v654 = vsel %vm652, %v653, %v196
      %v655 = vand.u32 %v654, 65535
      %v656 = vshrl.u32 %v654, 16
      %v658 = vmul.u32 %v655, 14564
      %v659 = vmul.u32 %v655, 58254
      %v660 = vmul.u32 %v656, 14564
      %v661 = vmul.u32 %v656, 58254
      %v662 = vshll.u32 %v659, 16
      %v663 = vshrl.u32 %v659, 16
      %v664 = vshll.u32 %v660, 16
      %v665 = vshrl.u32 %v660, 16
      %vm666 = vc.u32 %v658, %v662
      %v667 = vsel %vm666, 1, 0
      %v668 = vadd.s32 %v658, %v662
      %v669 = vadd.s32 %v661, %v667
      %vm670 = vc.u32 %v668, %v664
      %v671 = vsel %vm670, 1, 0
      %v672 = vadd.s32 %v668, %v664
      %v673 = vadd.s32 %v669, %v671
      %v674 = vadd.s32 %v673, %v663
      %v675 = vadd.s32 %v674, %v665
      %v676 = vshrl.u32 %v675, 4
      %v677 = vmul.u32 %v676, 18
      %v678 = vsub.s32 %v654, %v677
      %v679 = vsub.s32 0, %v678
      %v680 = vsel %vm652, %v679, %v678
      %vm681 = vcmp.lt.s32.totalorder %v197, 0
      %v682 = vsub.s32 0, %v197
      %v683 = vsel %vm681, %v682, %v197
      %v684 = vand.u32 %v683, 65535
      %v685 = vshrl.u32 %v683, 16
      %v687 = vmul.u32 %v684, 14564
      %v688 = vmul.u32 %v684, 58254
      %v689 = vmul.u32 %v685, 14564
      %v690 = vmul.u32 %v685, 58254
      %v691 = vshll.u32 %v688, 16
      %v692 = vshrl.u32 %v688, 16
      %v693 = vshll.u32 %v689, 16
      %v694 = vshrl.u32 %v689, 16
      %vm695 = vc.u32 %v687, %v691
      %v696 = vsel %vm695, 1, 0
      %v697 = vadd.s32 %v687, %v691
      %v698 = vadd.s32 %v690, %v696
      %vm699 = vc.u32 %v697, %v693
      %v700 = vsel %vm699, 1, 0
      %v701 = vadd.s32 %v697, %v693
      %v702 = vadd.s32 %v698, %v700
      %v703 = vadd.s32 %v702, %v692
      %v704 = vadd.s32 %v703, %v694
      %v705 = vshrl.u32 %v704, 4
      %v706 = vmul.u32 %v705, 18
      %v707 = vsub.s32 %v683, %v706
      %v708 = vsub.s32 0, %v707
      %v709 = vsel %vm681, %v708, %v707
      %vm710 = vcmp.lt.s32.totalorder %v198, 0
      %v711 = vsub.s32 0, %v198
      %v712 = vsel %vm710, %v711, %v198
      %v713 = vand.u32 %v712, 65535
      %v714 = vshrl.u32 %v712, 16
      %v716 = vmul.u32 %v713, 14564
      %v717 = vmul.u32 %v713, 58254
      %v718 = vmul.u32 %v714, 14564
      %v719 = vmul.u32 %v714, 58254
      %v720 = vshll.u32 %v717, 16
      %v721 = vshrl.u32 %v717, 16
      %v722 = vshll.u32 %v718, 16
      %v723 = vshrl.u32 %v718, 16
      %vm724 = vc.u32 %v716, %v720
      %v725 = vsel %vm724, 1, 0
      %v726 = vadd.s32 %v716, %v720
      %v727 = vadd.s32 %v719, %v725
      %vm728 = vc.u32 %v726, %v722
      %v729 = vsel %vm728, 1, 0
      %v730 = vadd.s32 %v726, %v722
      %v731 = vadd.s32 %v727, %v729
      %v732 = vadd.s32 %v731, %v721
      %v733 = vadd.s32 %v732, %v723
      %v734 = vshrl.u32 %v733, 4
      %v735 = vmul.u32 %v734, 18
      %v736 = vsub.s32 %v712, %v735
      %v737 = vsub.s32 0, %v736
      %v738 = vsel %vm710, %v737, %v736
      %vm739 = vcmp.lt.s32.totalorder %v199, 0
      %v740 = vsub.s32 0, %v199
      %v741 = vsel %vm739, %v740, %v199
      %v742 = vand.u32 %v741, 65535
      %v743 = vshrl.u32 %v741, 16
      %v745 = vmul.u32 %v742, 14564
      %v746 = vmul.u32 %v742, 58254
      %v747 = vmul.u32 %v743, 14564
      %v748 = vmul.u32 %v743, 58254
      %v749 = vshll.u32 %v746, 16
      %v750 = vshrl.u32 %v746, 16
      %v751 = vshll.u32 %v747, 16
      %v752 = vshrl.u32 %v747, 16
      %vm753 = vc.u32 %v745, %v749
      %v754 = vsel %vm753, 1, 0
      %v755 = vadd.s32 %v745, %v749
      %v756 = vadd.s32 %v748, %v754
      %vm757 = vc.u32 %v755, %v751
      %v758 = vsel %vm757, 1, 0
      %v759 = vadd.s32 %v755, %v751
      %v760 = vadd.s32 %v756, %v758
      %v761 = vadd.s32 %v760, %v750
      %v762 = vadd.s32 %v761, %v752
      %v763 = vshrl.u32 %v762, 4
      %v764 = vmul.u32 %v763, 18
      %v765 = vsub.s32 %v741, %v764
      %v766 = vsub.s32 0, %v765
      %v767 = vsel %vm739, %v766, %v765
      %vm768 = vcmp.lt.s32.totalorder %v200, 0
      %v769 = vsub.s32 0, %v200
      %v770 = vsel %vm768, %v769, %v200
      %v771 = vand.u32 %v770, 65535
      %v772 = vshrl.u32 %v770, 16
      %v774 = vmul.u32 %v771, 14564
      %v775 = vmul.u32 %v771, 58254
      %v776 = vmul.u32 %v772, 14564
      %v777 = vmul.u32 %v772, 58254
      %v778 = vshll.u32 %v775, 16
      %v779 = vshrl.u32 %v775, 16
      %v780 = vshll.u32 %v776, 16
      %v781 = vshrl.u32 %v776, 16
      %vm782 = vc.u32 %v774, %v778
      %v783 = vsel %vm782, 1, 0
      %v784 = vadd.s32 %v774, %v778
      %v785 = vadd.s32 %v777, %v783
      %vm786 = vc.u32 %v784, %v780
      %v787 = vsel %vm786, 1, 0
      %v788 = vadd.s32 %v784, %v780
      %v789 = vadd.s32 %v785, %v787
      %v790 = vadd.s32 %v789, %v779
      %v791 = vadd.s32 %v790, %v781
      %v792 = vshrl.u32 %v791, 4
      %v793 = vmul.u32 %v792, 18
      %v794 = vsub.s32 %v770, %v793
      %v795 = vsub.s32 0, %v794
      %v796 = vsel %vm768, %v795, %v794
      %vm797 = vcmp.lt.s32.totalorder %v201, 0
      %v798 = vsub.s32 0, %v201
      %v799 = vsel %vm797, %v798, %v201
      %v800 = vand.u32 %v799, 65535
      %v801 = vshrl.u32 %v799, 16
      %v803 = vmul.u32 %v800, 14564
      %v804 = vmul.u32 %v800, 58254
      %v805 = vmul.u32 %v801, 14564
      %v806 = vmul.u32 %v801, 58254
      %v807 = vshll.u32 %v804, 16
      %v808 = vshrl.u32 %v804, 16
      %v809 = vshll.u32 %v805, 16
      %v810 = vshrl.u32 %v805, 16
      %vm811 = vc.u32 %v803, %v807
      %v812 = vsel %vm811, 1, 0
      %v813 = vadd.s32 %v803, %v807
      %v814 = vadd.s32 %v806, %v812
      %vm815 = vc.u32 %v813, %v809
      %v816 = vsel %vm815, 1, 0
      %v817 = vadd.s32 %v813, %v809
      %v818 = vadd.s32 %v814, %v816
      %v819 = vadd.s32 %v818, %v808
      %v820 = vadd.s32 %v819, %v810
      %v821 = vshrl.u32 %v820, 4
      %v822 = vmul.u32 %v821, 18
      %v823 = vsub.s32 %v799, %v822
      %v824 = vsub.s32 0, %v823
      %v825 = vsel %vm797, %v824, %v823
      %vm826 = vcmp.lt.s32.totalorder %v202, 0
      %v827 = vsub.s32 0, %v202
      %v828 = vsel %vm826, %v827, %v202
      %v829 = vand.u32 %v828, 65535
      %v830 = vshrl.u32 %v828, 16
      %v832 = vmul.u32 %v829, 14564
      %v833 = vmul.u32 %v829, 58254
      %v834 = vmul.u32 %v830, 14564
      %v835 = vmul.u32 %v830, 58254
      %v836 = vshll.u32 %v833, 16
      %v837 = vshrl.u32 %v833, 16
      %v838 = vshll.u32 %v834, 16
      %v839 = vshrl.u32 %v834, 16
      %vm840 = vc.u32 %v832, %v836
      %v841 = vsel %vm840, 1, 0
      %v842 = vadd.s32 %v832, %v836
      %v843 = vadd.s32 %v835, %v841
      %vm844 = vc.u32 %v842, %v838
      %v845 = vsel %vm844, 1, 0
      %v846 = vadd.s32 %v842, %v838
      %v847 = vadd.s32 %v843, %v845
      %v848 = vadd.s32 %v847, %v837
      %v849 = vadd.s32 %v848, %v839
      %v850 = vshrl.u32 %v849, 4
      %v851 = vmul.u32 %v850, 18
      %v852 = vsub.s32 %v828, %v851
      %v853 = vsub.s32 0, %v852
      %v854 = vsel %vm826, %v853, %v852
      %vm855 = vcmp.lt.s32.totalorder %v203, 0
      %v856 = vsub.s32 0, %v203
      %v857 = vsel %vm855, %v856, %v203
      %v858 = vand.u32 %v857, 65535
      %v859 = vshrl.u32 %v857, 16
      %v861 = vmul.u32 %v858, 14564
      %v862 = vmul.u32 %v858, 58254
      %v863 = vmul.u32 %v859, 14564
      %v864 = vmul.u32 %v859, 58254
      %v865 = vshll.u32 %v862, 16
      %v866 = vshrl.u32 %v862, 16
      %v867 = vshll.u32 %v863, 16
      %v868 = vshrl.u32 %v863, 16
      %vm869 = vc.u32 %v861, %v865
      %v870 = vsel %vm869, 1, 0
      %v871 = vadd.s32 %v861, %v865
      %v872 = vadd.s32 %v864, %v870
      %vm873 = vc.u32 %v871, %v867
      %v874 = vsel %vm873, 1, 0
      %v875 = vadd.s32 %v871, %v867
      %v876 = vadd.s32 %v872, %v874
      %v877 = vadd.s32 %v876, %v866
      %v878 = vadd.s32 %v877, %v868
      %v879 = vshrl.u32 %v878, 4
      %v880 = vmul.u32 %v879, 18
      %v881 = vsub.s32 %v857, %v880
      %v882 = vsub.s32 0, %v881
      %v883 = vsel %vm855, %v882, %v881
      %vm884 = vcmp.lt.s32.totalorder %v204, 0
      %v885 = vsub.s32 0, %v204
      %v886 = vsel %vm884, %v885, %v204
      %v887 = vand.u32 %v886, 65535
      %v888 = vshrl.u32 %v886, 16
      %v890 = vmul.u32 %v887, 14564
      %v891 = vmul.u32 %v887, 58254
      %v892 = vmul.u32 %v888, 14564
      %v893 = vmul.u32 %v888, 58254
      %v894 = vshll.u32 %v891, 16
      %v895 = vshrl.u32 %v891, 16
      %v896 = vshll.u32 %v892, 16
      %v897 = vshrl.u32 %v892, 16
      %vm898 = vc.u32 %v890, %v894
      %v899 = vsel %vm898, 1, 0
      %v900 = vadd.s32 %v890, %v894
      %v901 = vadd.s32 %v893, %v899
      %vm902 = vc.u32 %v900, %v896
      %v903 = vsel %vm902, 1, 0
      %v904 = vadd.s32 %v900, %v896
      %v905 = vadd.s32 %v901, %v903
      %v906 = vadd.s32 %v905, %v895
      %v907 = vadd.s32 %v906, %v897
      %v908 = vshrl.u32 %v907, 4
      %v909 = vmul.u32 %v908, 18
      %v910 = vsub.s32 %v886, %v909
      %v911 = vsub.s32 0, %v910
      %v912 = vsel %vm884, %v911, %v910
      %vm913 = vcmp.lt.s32.totalorder %v205, 0
      %v914 = vsub.s32 0, %v205
      %v915 = vsel %vm913, %v914, %v205
      %v916 = vand.u32 %v915, 65535
      %v917 = vshrl.u32 %v915, 16
      %v919 = vmul.u32 %v916, 14564
      %v920 = vmul.u32 %v916, 58254
      %v921 = vmul.u32 %v917, 14564
      %v922 = vmul.u32 %v917, 58254
      %v923 = vshll.u32 %v920, 16
      %v924 = vshrl.u32 %v920, 16
      %v925 = vshll.u32 %v921, 16
      %v926 = vshrl.u32 %v921, 16
      %vm927 = vc.u32 %v919, %v923
      %v928 = vsel %vm927, 1, 0
      %v929 = vadd.s32 %v919, %v923
      %v930 = vadd.s32 %v922, %v928
      %vm931 = vc.u32 %v929, %v925
      %v932 = vsel %vm931, 1, 0
      %v933 = vadd.s32 %v929, %v925
      %v934 = vadd.s32 %v930, %v932
      %v935 = vadd.s32 %v934, %v924
      %v936 = vadd.s32 %v935, %v926
      %v937 = vshrl.u32 %v936, 4
      %v938 = vmul.u32 %v937, 18
      %v939 = vsub.s32 %v915, %v938
      %v940 = vsub.s32 0, %v939
      %v941 = vsel %vm913, %v940, %v939
      %vm942 = vcmp.lt.s32.totalorder %v206, 0
      %v943 = vsub.s32 0, %v206
      %v944 = vsel %vm942, %v943, %v206
      %v945 = vand.u32 %v944, 65535
      %v946 = vshrl.u32 %v944, 16
      %v948 = vmul.u32 %v945, 14564
      %v949 = vmul.u32 %v945, 58254
      %v950 = vmul.u32 %v946, 14564
      %v951 = vmul.u32 %v946, 58254
      %v952 = vshll.u32 %v949, 16
      %v953 = vshrl.u32 %v949, 16
      %v954 = vshll.u32 %v950, 16
      %v955 = vshrl.u32 %v950, 16
      %vm956 = vc.u32 %v948, %v952
      %v957 = vsel %vm956, 1, 0
      %v958 = vadd.s32 %v948, %v952
      %v959 = vadd.s32 %v951, %v957
      %vm960 = vc.u32 %v958, %v954
      %v961 = vsel %vm960, 1, 0
      %v962 = vadd.s32 %v958, %v954
      %v963 = vadd.s32 %v959, %v961
      %v964 = vadd.s32 %v963, %v953
      %v965 = vadd.s32 %v964, %v955
      %v966 = vshrl.u32 %v965, 4
      %v967 = vmul.u32 %v966, 18
      %v968 = vsub.s32 %v944, %v967
      %v969 = vsub.s32 0, %v968
      %v970 = vsel %vm942, %v969, %v968
      %vm971 = vcmp.lt.s32.totalorder %v207, 0
      %v972 = vsub.s32 0, %v207
      %v973 = vsel %vm971, %v972, %v207
      %v974 = vand.u32 %v973, 65535
      %v975 = vshrl.u32 %v973, 16
      %v977 = vmul.u32 %v974, 14564
      %v978 = vmul.u32 %v974, 58254
      %v979 = vmul.u32 %v975, 14564
      %v980 = vmul.u32 %v975, 58254
      %v981 = vshll.u32 %v978, 16
      %v982 = vshrl.u32 %v978, 16
      %v983 = vshll.u32 %v979, 16
      %v984 = vshrl.u32 %v979, 16
      %vm985 = vc.u32 %v977, %v981
      %v986 = vsel %vm985, 1, 0
      %v987 = vadd.s32 %v977, %v981
      %v988 = vadd.s32 %v980, %v986
      %vm989 = vc.u32 %v987, %v983
      %v990 = vsel %vm989, 1, 0
      %v991 = vadd.s32 %v987, %v983
      %v992 = vadd.s32 %v988, %v990
      %v993 = vadd.s32 %v992, %v982
      %v994 = vadd.s32 %v993, %v984
      %v995 = vshrl.u32 %v994, 4
      %v996 = vmul.u32 %v995, 18
      %v997 = vsub.s32 %v973, %v996
      %v998 = vsub.s32 0, %v997
      %v999 = vsel %vm971, %v998, %v997
      %vm1000 = vcmp.lt.s32.totalorder %v208, 0
      %v1001 = vsub.s32 0, %v208
      %v1002 = vsel %vm1000, %v1001, %v208
      %v1003 = vand.u32 %v1002, 65535
      %v1004 = vshrl.u32 %v1002, 16
      %v1006 = vmul.u32 %v1003, 14564
      %v1007 = vmul.u32 %v1003, 58254
      %v1008 = vmul.u32 %v1004, 14564
      %v1009 = vmul.u32 %v1004, 58254
      %v1010 = vshll.u32 %v1007, 16
      %v1011 = vshrl.u32 %v1007, 16
      %v1012 = vshll.u32 %v1008, 16
      %v1013 = vshrl.u32 %v1008, 16
      %vm1014 = vc.u32 %v1006, %v1010
      %v1015 = vsel %vm1014, 1, 0
      %v1016 = vadd.s32 %v1006, %v1010
      %v1017 = vadd.s32 %v1009, %v1015
      %vm1018 = vc.u32 %v1016, %v1012
      %v1019 = vsel %vm1018, 1, 0
      %v1020 = vadd.s32 %v1016, %v1012
      %v1021 = vadd.s32 %v1017, %v1019
      %v1022 = vadd.s32 %v1021, %v1011
      %v1023 = vadd.s32 %v1022, %v1013
      %v1024 = vshrl.u32 %v1023, 4
      %v1025 = vmul.u32 %v1024, 18
      %v1026 = vsub.s32 %v1002, %v1025
      %v1027 = vsub.s32 0, %v1026
      %v1028 = vsel %vm1000, %v1027, %v1026
      %vm1029 = vcmp.lt.s32.totalorder %v209, 0
      %v1030 = vsub.s32 0, %v209
      %v1031 = vsel %vm1029, %v1030, %v209
      %v1032 = vand.u32 %v1031, 65535
      %v1033 = vshrl.u32 %v1031, 16
      %v1035 = vmul.u32 %v1032, 14564
      %v1036 = vmul.u32 %v1032, 58254
      %v1037 = vmul.u32 %v1033, 14564
      %v1038 = vmul.u32 %v1033, 58254
      %v1039 = vshll.u32 %v1036, 16
      %v1040 = vshrl.u32 %v1036, 16
      %v1041 = vshll.u32 %v1037, 16
      %v1042 = vshrl.u32 %v1037, 16
      %vm1043 = vc.u32 %v1035, %v1039
      %v1044 = vsel %vm1043, 1, 0
      %v1045 = vadd.s32 %v1035, %v1039
      %v1046 = vadd.s32 %v1038, %v1044
      %vm1047 = vc.u32 %v1045, %v1041
      %v1048 = vsel %vm1047, 1, 0
      %v1049 = vadd.s32 %v1045, %v1041
      %v1050 = vadd.s32 %v1046, %v1048
      %v1051 = vadd.s32 %v1050, %v1040
      %v1052 = vadd.s32 %v1051, %v1042
      %v1053 = vshrl.u32 %v1052, 4
      %v1054 = vmul.u32 %v1053, 18
      %v1055 = vsub.s32 %v1031, %v1054
      %v1056 = vsub.s32 0, %v1055
      %v1057 = vsel %vm1029, %v1056, %v1055
      %vm1058 = vcmp.lt.s32.totalorder %v210, 0
      %v1059 = vsub.s32 0, %v210
      %v1060 = vsel %vm1058, %v1059, %v210
      %v1061 = vand.u32 %v1060, 65535
      %v1062 = vshrl.u32 %v1060, 16
      %v1064 = vmul.u32 %v1061, 14564
      %v1065 = vmul.u32 %v1061, 58254
      %v1066 = vmul.u32 %v1062, 14564
      %v1067 = vmul.u32 %v1062, 58254
      %v1068 = vshll.u32 %v1065, 16
      %v1069 = vshrl.u32 %v1065, 16
      %v1070 = vshll.u32 %v1066, 16
      %v1071 = vshrl.u32 %v1066, 16
      %vm1072 = vc.u32 %v1064, %v1068
      %v1073 = vsel %vm1072, 1, 0
      %v1074 = vadd.s32 %v1064, %v1068
      %v1075 = vadd.s32 %v1067, %v1073
      %vm1076 = vc.u32 %v1074, %v1070
      %v1077 = vsel %vm1076, 1, 0
      %v1078 = vadd.s32 %v1074, %v1070
      %v1079 = vadd.s32 %v1075, %v1077
      %v1080 = vadd.s32 %v1079, %v1069
      %v1081 = vadd.s32 %v1080, %v1071
      %v1082 = vshrl.u32 %v1081, 4
      %v1083 = vmul.u32 %v1082, 18
      %v1084 = vsub.s32 %v1060, %v1083
      %v1085 = vsub.s32 0, %v1084
      %v1086 = vsel %vm1058, %v1085, %v1084
      %vm1087 = vcmp.lt.s32.totalorder %v211, 0
      %v1088 = vsub.s32 0, %v211
      %v1089 = vsel %vm1087, %v1088, %v211
      %v1090 = vand.u32 %v1089, 65535
      %v1091 = vshrl.u32 %v1089, 16
      %v1093 = vmul.u32 %v1090, 14564
      %v1094 = vmul.u32 %v1090, 58254
      %v1095 = vmul.u32 %v1091, 14564
      %v1096 = vmul.u32 %v1091, 58254
      %v1097 = vshll.u32 %v1094, 16
      %v1098 = vshrl.u32 %v1094, 16
      %v1099 = vshll.u32 %v1095, 16
      %v1100 = vshrl.u32 %v1095, 16
      %vm1101 = vc.u32 %v1093, %v1097
      %v1102 = vsel %vm1101, 1, 0
      %v1103 = vadd.s32 %v1093, %v1097
      %v1104 = vadd.s32 %v1096, %v1102
      %vm1105 = vc.u32 %v1103, %v1099
      %v1106 = vsel %vm1105, 1, 0
      %v1107 = vadd.s32 %v1103, %v1099
      %v1108 = vadd.s32 %v1104, %v1106
      %v1109 = vadd.s32 %v1108, %v1098
      %v1110 = vadd.s32 %v1109, %v1100
      %v1111 = vshrl.u32 %v1110, 4
      %v1112 = vmul.u32 %v1111, 18
      %v1113 = vsub.s32 %v1089, %v1112
      %v1114 = vsub.s32 0, %v1113
      %v1115 = vsel %vm1087, %v1114, %v1113
      %vm1116 = vcmp.lt.s32.totalorder %v212, 0
      %v1117 = vsub.s32 0, %v212
      %v1118 = vsel %vm1116, %v1117, %v212
      %v1119 = vand.u32 %v1118, 65535
      %v1120 = vshrl.u32 %v1118, 16
      %v1122 = vmul.u32 %v1119, 14564
      %v1123 = vmul.u32 %v1119, 58254
      %v1124 = vmul.u32 %v1120, 14564
      %v1125 = vmul.u32 %v1120, 58254
      %v1126 = vshll.u32 %v1123, 16
      %v1127 = vshrl.u32 %v1123, 16
      %v1128 = vshll.u32 %v1124, 16
      %v1129 = vshrl.u32 %v1124, 16
      %vm1130 = vc.u32 %v1122, %v1126
      %v1131 = vsel %vm1130, 1, 0
      %v1132 = vadd.s32 %v1122, %v1126
      %v1133 = vadd.s32 %v1125, %v1131
      %vm1134 = vc.u32 %v1132, %v1128
      %v1135 = vsel %vm1134, 1, 0
      %v1136 = vadd.s32 %v1132, %v1128
      %v1137 = vadd.s32 %v1133, %v1135
      %v1138 = vadd.s32 %v1137, %v1127
      %v1139 = vadd.s32 %v1138, %v1129
      %v1140 = vshrl.u32 %v1139, 4
      %v1141 = vmul.u32 %v1140, 18
      %v1142 = vsub.s32 %v1118, %v1141
      %v1143 = vsub.s32 0, %v1142
      %v1144 = vsel %vm1116, %v1143, %v1142
      %vm1145 = vcmp.lt.s32.totalorder %v213, 0
      %v1146 = vsub.s32 0, %v213
      %v1147 = vsel %vm1145, %v1146, %v213
      %v1148 = vand.u32 %v1147, 65535
      %v1149 = vshrl.u32 %v1147, 16
      %v1151 = vmul.u32 %v1148, 14564
      %v1152 = vmul.u32 %v1148, 58254
      %v1153 = vmul.u32 %v1149, 14564
      %v1154 = vmul.u32 %v1149, 58254
      %v1155 = vshll.u32 %v1152, 16
      %v1156 = vshrl.u32 %v1152, 16
      %v1157 = vshll.u32 %v1153, 16
      %v1158 = vshrl.u32 %v1153, 16
      %vm1159 = vc.u32 %v1151, %v1155
      %v1160 = vsel %vm1159, 1, 0
      %v1161 = vadd.s32 %v1151, %v1155
      %v1162 = vadd.s32 %v1154, %v1160
      %vm1163 = vc.u32 %v1161, %v1157
      %v1164 = vsel %vm1163, 1, 0
      %v1165 = vadd.s32 %v1161, %v1157
      %v1166 = vadd.s32 %v1162, %v1164
      %v1167 = vadd.s32 %v1166, %v1156
      %v1168 = vadd.s32 %v1167, %v1158
      %v1169 = vshrl.u32 %v1168, 4
      %v1170 = vmul.u32 %v1169, 18
      %v1171 = vsub.s32 %v1147, %v1170
      %v1172 = vsub.s32 0, %v1171
      %v1173 = vsel %vm1145, %v1172, %v1171
      %vm1174 = vcmp.lt.s32.totalorder %v214, 0
      %v1175 = vsub.s32 0, %v214
      %v1176 = vsel %vm1174, %v1175, %v214
      %v1177 = vand.u32 %v1176, 65535
      %v1178 = vshrl.u32 %v1176, 16
      %v1180 = vmul.u32 %v1177, 14564
      %v1181 = vmul.u32 %v1177, 58254
      %v1182 = vmul.u32 %v1178, 14564
      %v1183 = vmul.u32 %v1178, 58254
      %v1184 = vshll.u32 %v1181, 16
      %v1185 = vshrl.u32 %v1181, 16
      %v1186 = vshll.u32 %v1182, 16
      %v1187 = vshrl.u32 %v1182, 16
      %vm1188 = vc.u32 %v1180, %v1184
      %v1189 = vsel %vm1188, 1, 0
      %v1190 = vadd.s32 %v1180, %v1184
      %v1191 = vadd.s32 %v1183, %v1189
      %vm1192 = vc.u32 %v1190, %v1186
      %v1193 = vsel %vm1192, 1, 0
      %v1194 = vadd.s32 %v1190, %v1186
      %v1195 = vadd.s32 %v1191, %v1193
      %v1196 = vadd.s32 %v1195, %v1185
      %v1197 = vadd.s32 %v1196, %v1187
      %v1198 = vshrl.u32 %v1197, 4
      %v1199 = vmul.u32 %v1198, 18
      %v1200 = vsub.s32 %v1176, %v1199
      %v1201 = vsub.s32 0, %v1200
      %v1202 = vsel %vm1174, %v1201, %v1200
      %vm1203 = vcmp.lt.s32.totalorder %v215, 0
      %v1204 = vsub.s32 0, %v215
      %v1205 = vsel %vm1203, %v1204, %v215
      %v1206 = vand.u32 %v1205, 65535
      %v1207 = vshrl.u32 %v1205, 16
      %v1209 = vmul.u32 %v1206, 14564
      %v1210 = vmul.u32 %v1206, 58254
      %v1211 = vmul.u32 %v1207, 14564
      %v1212 = vmul.u32 %v1207, 58254
      %v1213 = vshll.u32 %v1210, 16
      %v1214 = vshrl.u32 %v1210, 16
      %v1215 = vshll.u32 %v1211, 16
      %v1216 = vshrl.u32 %v1211, 16
      %vm1217 = vc.u32 %v1209, %v1213
      %v1218 = vsel %vm1217, 1, 0
      %v1219 = vadd.s32 %v1209, %v1213
      %v1220 = vadd.s32 %v1212, %v1218
      %vm1221 = vc.u32 %v1219, %v1215
      %v1222 = vsel %vm1221, 1, 0
      %v1223 = vadd.s32 %v1219, %v1215
      %v1224 = vadd.s32 %v1220, %v1222
      %v1225 = vadd.s32 %v1224, %v1214
      %v1226 = vadd.s32 %v1225, %v1216
      %v1227 = vshrl.u32 %v1226, 4
      %v1228 = vmul.u32 %v1227, 18
      %v1229 = vsub.s32 %v1205, %v1228
      %v1230 = vsub.s32 0, %v1229
      %v1231 = vsel %vm1203, %v1230, %v1229
      %vm1232 = vcmp.lt.s32.totalorder %v216, 0
      %v1233 = vsub.s32 0, %v216
      %v1234 = vsel %vm1232, %v1233, %v216
      %v1235 = vand.u32 %v1234, 65535
      %v1236 = vshrl.u32 %v1234, 16
      %v1238 = vmul.u32 %v1235, 14564
      %v1239 = vmul.u32 %v1235, 58254
      %v1240 = vmul.u32 %v1236, 14564
      %v1241 = vmul.u32 %v1236, 58254
      %v1242 = vshll.u32 %v1239, 16
      %v1243 = vshrl.u32 %v1239, 16
      %v1244 = vshll.u32 %v1240, 16
      %v1245 = vshrl.u32 %v1240, 16
      %vm1246 = vc.u32 %v1238, %v1242
      %v1247 = vsel %vm1246, 1, 0
      %v1248 = vadd.s32 %v1238, %v1242
      %v1249 = vadd.s32 %v1241, %v1247
      %vm1250 = vc.u32 %v1248, %v1244
      %v1251 = vsel %vm1250, 1, 0
      %v1252 = vadd.s32 %v1248, %v1244
      %v1253 = vadd.s32 %v1249, %v1251
      %v1254 = vadd.s32 %v1253, %v1243
      %v1255 = vadd.s32 %v1254, %v1245
      %v1256 = vshrl.u32 %v1255, 4
      %v1257 = vmul.u32 %v1256, 18
      %v1258 = vsub.s32 %v1234, %v1257
      %v1259 = vsub.s32 0, %v1258
      %v1260 = vsel %vm1232, %v1259, %v1258
      %vm1261 = vcmp.ne.s32.totalorder %v245, 0
      %vm1262 = vcmp.ne.s32.totalorder %v274, 0
      %vm1263 = vcmp.ne.s32.totalorder %v303, 0
      %vm1264 = vcmp.ne.s32.totalorder %v332, 0
      %vm1265 = vcmp.ne.s32.totalorder %v361, 0
      %vm1266 = vcmp.ne.s32.totalorder %v390, 0
      %vm1267 = vcmp.ne.s32.totalorder %v419, 0
      %vm1268 = vcmp.ne.s32.totalorder %v448, 0
      %vm1269 = vcmp.ne.s32.totalorder %v477, 0
      %vm1270 = vcmp.ne.s32.totalorder %v506, 0
      %vm1271 = vcmp.ne.s32.totalorder %v535, 0
      %vm1272 = vcmp.ne.s32.totalorder %v564, 0
      %vm1273 = vcmp.ne.s32.totalorder %v593, 0
      %vm1274 = vcmp.ne.s32.totalorder %v622, 0
      %vm1275 = vcmp.ne.s32.totalorder %v651, 0
      %vm1276 = vcmp.ne.s32.totalorder %v680, 0
      %vm1277 = vcmp.ne.s32.totalorder %v709, 0
      %vm1278 = vcmp.ne.s32.totalorder %v738, 0
      %vm1279 = vcmp.ne.s32.totalorder %v767, 0
      %vm1280 = vcmp.ne.s32.totalorder %v796, 0
      %vm1281 = vcmp.ne.s32.totalorder %v825, 0
      %vm1282 = vcmp.ne.s32.totalorder %v854, 0
      %vm1283 = vcmp.ne.s32.totalorder %v883, 0
      %vm1284 = vcmp.ne.s32.totalorder %v912, 0
      %vm1285 = vcmp.ne.s32.totalorder %v941, 0
      %vm1286 = vcmp.ne.s32.totalorder %v970, 0
      %vm1287 = vcmp.ne.s32.totalorder %v999, 0
      %vm1288 = vcmp.ne.s32.totalorder %v1028, 0
      %vm1289 = vcmp.ne.s32.totalorder %v1057, 0
      %vm1290 = vcmp.ne.s32.totalorder %v1086, 0
      %vm1291 = vcmp.ne.s32.totalorder %v1115, 0
      %vm1292 = vcmp.ne.s32.totalorder %v1144, 0
      %vm1293 = vcmp.ne.s32.totalorder %v1173, 0
      %vm1294 = vcmp.ne.s32.totalorder %v1202, 0
      %vm1295 = vcmp.ne.s32.totalorder %v1231, 0
      %vm1296 = vcmp.ne.s32.totalorder %v1260, 0
      %vm1297 = vcmp.lt.s32.totalorder %v245, 0
      %vm1298 = vcmp.lt.s32.totalorder %v274, 0
      %vm1299 = vcmp.lt.s32.totalorder %v303, 0
      %vm1300 = vcmp.lt.s32.totalorder %v332, 0
      %vm1301 = vcmp.lt.s32.totalorder %v361, 0
      %vm1302 = vcmp.lt.s32.totalorder %v390, 0
      %vm1303 = vcmp.lt.s32.totalorder %v419, 0
      %vm1304 = vcmp.lt.s32.totalorder %v448, 0
      %vm1305 = vcmp.lt.s32.totalorder %v477, 0
      %vm1306 = vcmp.lt.s32.totalorder %v506, 0
      %vm1307 = vcmp.lt.s32.totalorder %v535, 0
      %vm1308 = vcmp.lt.s32.totalorder %v564, 0
      %vm1309 = vcmp.lt.s32.totalorder %v593, 0
      %vm1310 = vcmp.lt.s32.totalorder %v622, 0
      %vm1311 = vcmp.lt.s32.totalorder %v651, 0
      %vm1312 = vcmp.lt.s32.totalorder %v680, 0
      %vm1313 = vcmp.lt.s32.totalorder %v709, 0
      %vm1314 = vcmp.lt.s32.totalorder %v738, 0
      %vm1315 = vcmp.lt.s32.totalorder %v767, 0
      %vm1316 = vcmp.lt.s32.totalorder %v796, 0
      %vm1317 = vcmp.lt.s32.totalorder %v825, 0
      %vm1318 = vcmp.lt.s32.totalorder %v854, 0
      %vm1319 = vcmp.lt.s32.totalorder %v883, 0
      %vm1320 = vcmp.lt.s32.totalorder %v912, 0
      %vm1321 = vcmp.lt.s32.totalorder %v941, 0
      %vm1322 = vcmp.lt.s32.totalorder %v970, 0
      %vm1323 = vcmp.lt.s32.totalorder %v999, 0
      %vm1324 = vcmp.lt.s32.totalorder %v1028, 0
      %vm1325 = vcmp.lt.s32.totalorder %v1057, 0
      %vm1326 = vcmp.lt.s32.totalorder %v1086, 0
      %vm1327 = vcmp.lt.s32.totalorder %v1115, 0
      %vm1328 = vcmp.lt.s32.totalorder %v1144, 0
      %vm1329 = vcmp.lt.s32.totalorder %v1173, 0
      %vm1330 = vcmp.lt.s32.totalorder %v1202, 0
      %vm1331 = vcmp.lt.s32.totalorder %v1231, 0
      %vm1332 = vcmp.lt.s32.totalorder %v1260, 0
      %vm1333 = vmand %vm1297, %vm1261
      %vm1334 = vmand %vm1298, %vm1262
      %vm1335 = vmand %vm1299, %vm1263
      %vm1336 = vmand %vm1300, %vm1264
      %vm1337 = vmand %vm1301, %vm1265
      %vm1338 = vmand %vm1302, %vm1266
      %vm1339 = vmand %vm1303, %vm1267
      %vm1340 = vmand %vm1304, %vm1268
      %vm1341 = vmand %vm1305, %vm1269
      %vm1342 = vmand %vm1306, %vm1270
      %vm1343 = vmand %vm1307, %vm1271
      %vm1344 = vmand %vm1308, %vm1272
      %vm1345 = vmand %vm1309, %vm1273
      %vm1346 = vmand %vm1310, %vm1274
      %vm1347 = vmand %vm1311, %vm1275
      %vm1348 = vmand %vm1312, %vm1276
      %vm1349 = vmand %vm1313, %vm1277
      %vm1350 = vmand %vm1314, %vm1278
      %vm1351 = vmand %vm1315, %vm1279
      %vm1352 = vmand %vm1316, %vm1280
      %vm1353 = vmand %vm1317, %vm1281
      %vm1354 = vmand %vm1318, %vm1282
      %vm1355 = vmand %vm1319, %vm1283
      %vm1356 = vmand %vm1320, %vm1284
      %vm1357 = vmand %vm1321, %vm1285
      %vm1358 = vmand %vm1322, %vm1286
      %vm1359 = vmand %vm1323, %vm1287
      %vm1360 = vmand %vm1324, %vm1288
      %vm1361 = vmand %vm1325, %vm1289
      %vm1362 = vmand %vm1326, %vm1290
      %vm1363 = vmand %vm1327, %vm1291
      %vm1364 = vmand %vm1328, %vm1292
      %vm1365 = vmand %vm1329, %vm1293
      %vm1366 = vmand %vm1330, %vm1294
      %vm1367 = vmand %vm1331, %vm1295
      %vm1368 = vmand %vm1332, %vm1296
      %v1369 = vadd.s32 %v245, 18
      %v1370 = vadd.s32 %v274, 18
      %v1371 = vadd.s32 %v303, 18
      %v1372 = vadd.s32 %v332, 18
      %v1373 = vadd.s32 %v361, 18
      %v1374 = vadd.s32 %v390, 18
      %v1375 = vadd.s32 %v419, 18
      %v1376 = vadd.s32 %v448, 18
      %v1377 = vadd.s32 %v477, 18
      %v1378 = vadd.s32 %v506, 18
      %v1379 = vadd.s32 %v535, 18
      %v1380 = vadd.s32 %v564, 18
      %v1381 = vadd.s32 %v593, 18
      %v1382 = vadd.s32 %v622, 18
      %v1383 = vadd.s32 %v651, 18
      %v1384 = vadd.s32 %v680, 18
      %v1385 = vadd.s32 %v709, 18
      %v1386 = vadd.s32 %v738, 18
      %v1387 = vadd.s32 %v767, 18
      %v1388 = vadd.s32 %v796, 18
      %v1389 = vadd.s32 %v825, 18
      %v1390 = vadd.s32 %v854, 18
      %v1391 = vadd.s32 %v883, 18
      %v1392 = vadd.s32 %v912, 18
      %v1393 = vadd.s32 %v941, 18
      %v1394 = vadd.s32 %v970, 18
      %v1395 = vadd.s32 %v999, 18
      %v1396 = vadd.s32 %v1028, 18
      %v1397 = vadd.s32 %v1057, 18
      %v1398 = vadd.s32 %v1086, 18
      %v1399 = vadd.s32 %v1115, 18
      %v1400 = vadd.s32 %v1144, 18
      %v1401 = vadd.s32 %v1173, 18
      %v1402 = vadd.s32 %v1202, 18
      %v1403 = vadd.s32 %v1231, 18
      %v1404 = vadd.s32 %v1260, 18
      %v1405 = vsel %vm1333, %v1369, %v245
      %v1406 = vsel %vm1334, %v1370, %v274
      %v1407 = vsel %vm1335, %v1371, %v303
      %v1408 = vsel %vm1336, %v1372, %v332
      %v1409 = vsel %vm1337, %v1373, %v361
      %v1410 = vsel %vm1338, %v1374, %v390
      %v1411 = vsel %vm1339, %v1375, %v419
      %v1412 = vsel %vm1340, %v1376, %v448
      %v1413 = vsel %vm1341, %v1377, %v477
      %v1414 = vsel %vm1342, %v1378, %v506
      %v1415 = vsel %vm1343, %v1379, %v535
      %v1416 = vsel %vm1344, %v1380, %v564
      %v1417 = vsel %vm1345, %v1381, %v593
      %v1418 = vsel %vm1346, %v1382, %v622
      %v1419 = vsel %vm1347, %v1383, %v651
      %v1420 = vsel %vm1348, %v1384, %v680
      %v1421 = vsel %vm1349, %v1385, %v709
      %v1422 = vsel %vm1350, %v1386, %v738
      %v1423 = vsel %vm1351, %v1387, %v767
      %v1424 = vsel %vm1352, %v1388, %v796
      %v1425 = vsel %vm1353, %v1389, %v825
      %v1426 = vsel %vm1354, %v1390, %v854
      %v1427 = vsel %vm1355, %v1391, %v883
      %v1428 = vsel %vm1356, %v1392, %v912
      %v1429 = vsel %vm1357, %v1393, %v941
      %v1430 = vsel %vm1358, %v1394, %v970
      %v1431 = vsel %vm1359, %v1395, %v999
      %v1432 = vsel %vm1360, %v1396, %v1028
      %v1433 = vsel %vm1361, %v1397, %v1057
      %v1434 = vsel %vm1362, %v1398, %v1086
      %v1435 = vsel %vm1363, %v1399, %v1115
      %v1436 = vsel %vm1364, %v1400, %v1144
      %v1437 = vsel %vm1365, %v1401, %v1173
      %v1438 = vsel %vm1366, %v1402, %v1202
      %v1439 = vsel %vm1367, %v1403, %v1231
      %v1440 = vsel %vm1368, %v1404, %v1260
      %vm1441 = vcmp.lt.s32.totalorder %v1405, 16
      %vm1442 = vcmp.lt.s32.totalorder %v1406, 16
      %vm1443 = vcmp.lt.s32.totalorder %v1407, 16
      %vm1444 = vcmp.lt.s32.totalorder %v1408, 16
      %vm1445 = vcmp.lt.s32.totalorder %v1409, 16
      %vm1446 = vcmp.lt.s32.totalorder %v1410, 16
      %vm1447 = vcmp.lt.s32.totalorder %v1411, 16
      %vm1448 = vcmp.lt.s32.totalorder %v1412, 16
      %vm1449 = vcmp.lt.s32.totalorder %v1413, 16
      %vm1450 = vcmp.lt.s32.totalorder %v1414, 16
      %vm1451 = vcmp.lt.s32.totalorder %v1415, 16
      %vm1452 = vcmp.lt.s32.totalorder %v1416, 16
      %vm1453 = vcmp.lt.s32.totalorder %v1417, 16
      %vm1454 = vcmp.lt.s32.totalorder %v1418, 16
      %vm1455 = vcmp.lt.s32.totalorder %v1419, 16
      %vm1456 = vcmp.lt.s32.totalorder %v1420, 16
      %vm1457 = vcmp.lt.s32.totalorder %v1421, 16
      %vm1458 = vcmp.lt.s32.totalorder %v1422, 16
      %vm1459 = vcmp.lt.s32.totalorder %v1423, 16
      %vm1460 = vcmp.lt.s32.totalorder %v1424, 16
      %vm1461 = vcmp.lt.s32.totalorder %v1425, 16
      %vm1462 = vcmp.lt.s32.totalorder %v1426, 16
      %vm1463 = vcmp.lt.s32.totalorder %v1427, 16
      %vm1464 = vcmp.lt.s32.totalorder %v1428, 16
      %vm1465 = vcmp.lt.s32.totalorder %v1429, 16
      %vm1466 = vcmp.lt.s32.totalorder %v1430, 16
      %vm1467 = vcmp.lt.s32.totalorder %v1431, 16
      %vm1468 = vcmp.lt.s32.totalorder %v1432, 16
      %vm1469 = vcmp.lt.s32.totalorder %v1433, 16
      %vm1470 = vcmp.lt.s32.totalorder %v1434, 16
      %vm1471 = vcmp.lt.s32.totalorder %v1435, 16
      %vm1472 = vcmp.lt.s32.totalorder %v1436, 16
      %vm1473 = vcmp.lt.s32.totalorder %v1437, 16
      %vm1474 = vcmp.lt.s32.totalorder %v1438, 16
      %vm1475 = vcmp.lt.s32.totalorder %v1439, 16
      %vm1476 = vcmp.lt.s32.totalorder %v1440, 16
      %v1477 = vsel %vm1441, 1, 0
      %v1478 = vsel %vm1442, 1, 0
      %v1479 = vsel %vm1443, 1, 0
      %v1480 = vsel %vm1444, 1, 0
      %v1481 = vsel %vm1445, 1, 0
      %v1482 = vsel %vm1446, 1, 0
      %v1483 = vsel %vm1447, 1, 0
      %v1484 = vsel %vm1448, 1, 0
      %v1485 = vsel %vm1449, 1, 0
      %v1486 = vsel %vm1450, 1, 0
      %v1487 = vsel %vm1451, 1, 0
      %v1488 = vsel %vm1452, 1, 0
      %v1489 = vsel %vm1453, 1, 0
      %v1490 = vsel %vm1454, 1, 0
      %v1491 = vsel %vm1455, 1, 0
      %v1492 = vsel %vm1456, 1, 0
      %v1493 = vsel %vm1457, 1, 0
      %v1494 = vsel %vm1458, 1, 0
      %v1495 = vsel %vm1459, 1, 0
      %v1496 = vsel %vm1460, 1, 0
      %v1497 = vsel %vm1461, 1, 0
      %v1498 = vsel %vm1462, 1, 0
      %v1499 = vsel %vm1463, 1, 0
      %v1500 = vsel %vm1464, 1, 0
      %v1501 = vsel %vm1465, 1, 0
      %v1502 = vsel %vm1466, 1, 0
      %v1503 = vsel %vm1467, 1, 0
      %v1504 = vsel %vm1468, 1, 0
      %v1505 = vsel %vm1469, 1, 0
      %v1506 = vsel %vm1470, 1, 0
      %v1507 = vsel %vm1471, 1, 0
      %v1508 = vsel %vm1472, 1, 0
      %v1509 = vsel %vm1473, 1, 0
      %v1510 = vsel %vm1474, 1, 0
      %v1511 = vsel %vm1475, 1, 0
      %v1512 = vsel %vm1476, 1, 0
      %v1513 = vcvt.s32.f32 %v1477
      %v1514 = vcvt.s32.f32 %v1478
      %v1515 = vcvt.s32.f32 %v1479
      %v1516 = vcvt.s32.f32 %v1480
      %v1517 = vcvt.s32.f32 %v1481
      %v1518 = vcvt.s32.f32 %v1482
      %v1519 = vcvt.s32.f32 %v1483
      %v1520 = vcvt.s32.f32 %v1484
      %v1521 = vcvt.s32.f32 %v1485
      %v1522 = vcvt.s32.f32 %v1486
      %v1523 = vcvt.s32.f32 %v1487
      %v1524 = vcvt.s32.f32 %v1488
      %v1525 = vcvt.s32.f32 %v1489
      %v1526 = vcvt.s32.f32 %v1490
      %v1527 = vcvt.s32.f32 %v1491
      %v1528 = vcvt.s32.f32 %v1492
      %v1529 = vcvt.s32.f32 %v1493
      %v1530 = vcvt.s32.f32 %v1494
      %v1531 = vcvt.s32.f32 %v1495
      %v1532 = vcvt.s32.f32 %v1496
      %v1533 = vcvt.s32.f32 %v1497
      %v1534 = vcvt.s32.f32 %v1498
      %v1535 = vcvt.s32.f32 %v1499
      %v1536 = vcvt.s32.f32 %v1500
      %v1537 = vcvt.s32.f32 %v1501
      %v1538 = vcvt.s32.f32 %v1502
      %v1539 = vcvt.s32.f32 %v1503
      %v1540 = vcvt.s32.f32 %v1504
      %v1541 = vcvt.s32.f32 %v1505
      %v1542 = vcvt.s32.f32 %v1506
      %v1543 = vcvt.s32.f32 %v1507
      %v1544 = vcvt.s32.f32 %v1508
      %v1545 = vcvt.s32.f32 %v1509
      %v1546 = vcvt.s32.f32 %v1510
      %v1547 = vcvt.s32.f32 %v1511
      %v1548 = vcvt.s32.f32 %v1512
      %v1549 = vld [vmem:[%s1] sm:$0xf]
      %v1550 = vld [vmem:[%s1 + $0x4] sm:$0xf]
      %v1551 = vld [vmem:[%s1 + $0x8] sm:$0xf]
      %v1552 = vld [vmem:[%s1 + $0xc] sm:$0xf]
      %v1553 = vld [vmem:[%s1 + $0x10] sm:$0xf]
      %v1554 = vld [vmem:[%s1 + $0x14] sm:$0xf]
      %v1555 = vld [vmem:[%s1 + $0x18] sm:$0xf]
      %v1556 = vld [vmem:[%s1 + $0x1c] sm:$0xf]
      %v1557 = vld [vmem:[%s1 + $0x20] sm:$0xf]
      %v1558 = vld [vmem:[%s2] sm:$0xf]
      %v1559 = vld [vmem:[%s2 + $0x4] sm:$0xf]
      %v1560 = vld [vmem:[%s2 + $0x8] sm:$0xf]
      %v1561 = vld [vmem:[%s2 + $0xc] sm:$0xf]
      %v1562 = vld [vmem:[%s2 + $0x10] sm:$0xf]
      %v1563 = vld [vmem:[%s2 + $0x14] sm:$0xf]
      %v1564 = vld [vmem:[%s2 + $0x18] sm:$0xf]
      %v1565 = vld [vmem:[%s2 + $0x1c] sm:$0xf]
      %v1566 = vld [vmem:[%s2 + $0x20] sm:$0xf]
      %v1567 = vld [vmem:[%s170] sm:$0xff]
      %v1568 = vld [vmem:[%s170 + $0x8] sm:$0xff]
      %v1569 = vld [vmem:[%s170 + $0x10] sm:$0xff]
      %v1570 = vld [vmem:[%s170 + $0x18] sm:$0xff]
      %v1571 = vld [vmem:[%s170 + $0x20] sm:$0xff]
      %v1572 = vld [vmem:[%s170 + $0x28] sm:$0xff]
      %v1573 = vld [vmem:[%s170 + $0x30] sm:$0xff]
      %v1574 = vld [vmem:[%s170 + $0x38] sm:$0xff]
      %v1575 = vld [vmem:[%s170 + $0x40] sm:$0xff]
      %v1576 = vld [vmem:[%s170 + $0x48] sm:$0xff]
      %v1577 = vld [vmem:[%s170 + $0x50] sm:$0xff]
      %v1578 = vld [vmem:[%s170 + $0x58] sm:$0xff]
      %v1579 = vld [vmem:[%s170 + $0x60] sm:$0xff]
      %v1580 = vld [vmem:[%s170 + $0x68] sm:$0xff]
      %v1581 = vld [vmem:[%s170 + $0x70] sm:$0xff]
      %v1582 = vld [vmem:[%s170 + $0x78] sm:$0xff]
      %v1583 = vld [vmem:[%s170 + $0x80] sm:$0xff]
      %v1584 = vld [vmem:[%s170 + $0x88] sm:$0xff]
      %v1585 = vld [vmem:[%s170 + $0x90] sm:$0xff]
      %v1586 = vld [vmem:[%s170 + $0x98] sm:$0xff]
      %v1587 = vld [vmem:[%s170 + $0xa0] sm:$0xff]
      %v1588 = vld [vmem:[%s170 + $0xa8] sm:$0xff]
      %v1589 = vld [vmem:[%s170 + $0xb0] sm:$0xff]
      %v1590 = vld [vmem:[%s170 + $0xb8] sm:$0xff]
      %v1591 = vld [vmem:[%s170 + $0xc0] sm:$0xff]
      %v1592 = vld [vmem:[%s170 + $0xc8] sm:$0xff]
      %v1593 = vld [vmem:[%s170 + $0xd0] sm:$0xff]
      %v1594 = vld [vmem:[%s170 + $0xd8] sm:$0xff]
      %v1595 = vld [vmem:[%s170 + $0xe0] sm:$0xff]
      %v1596 = vld [vmem:[%s170 + $0xe8] sm:$0xff]
      %v1597 = vld [vmem:[%s170 + $0xf0] sm:$0xff]
      %v1598 = vld [vmem:[%s170 + $0xf8] sm:$0xff]
      %v1599 = vld [vmem:[%s170 + $0x100] sm:$0xff]
      %v1600 = vld [vmem:[%s170 + $0x108] sm:$0xff]
      %v1601 = vld [vmem:[%s170 + $0x110] sm:$0xff]
      %v1602 = vld [vmem:[%s170 + $0x118] sm:$0xff]
      %v1603 = vld [vmem:[%s170 + $0x1] sm:$0xff]
      %v1604 = vld [vmem:[%s170 + $0x9] sm:$0xff]
      %v1605 = vld [vmem:[%s170 + $0x11] sm:$0xff]
      %v1606 = vld [vmem:[%s170 + $0x19] sm:$0xff]
      %v1607 = vld [vmem:[%s170 + $0x21] sm:$0xff]
      %v1608 = vld [vmem:[%s170 + $0x29] sm:$0xff]
      %v1609 = vld [vmem:[%s170 + $0x31] sm:$0xff]
      %v1610 = vld [vmem:[%s170 + $0x39] sm:$0xff]
      %v1611 = vld [vmem:[%s170 + $0x41] sm:$0xff]
      %v1612 = vld [vmem:[%s170 + $0x49] sm:$0xff]
      %v1613 = vld [vmem:[%s170 + $0x51] sm:$0xff]
      %v1614 = vld [vmem:[%s170 + $0x59] sm:$0xff]
      %v1615 = vld [vmem:[%s170 + $0x61] sm:$0xff]
      %v1616 = vld [vmem:[%s170 + $0x69] sm:$0xff]
      %v1617 = vld [vmem:[%s170 + $0x71] sm:$0xff]
      %v1618 = vld [vmem:[%s170 + $0x79] sm:$0xff]
      %v1619 = vld [vmem:[%s170 + $0x81] sm:$0xff]
      %v1620 = vld [vmem:[%s170 + $0x89] sm:$0xff]
      %v1621 = vld [vmem:[%s170 + $0x91] sm:$0xff]
      %v1622 = vld [vmem:[%s170 + $0x99] sm:$0xff]
      %v1623 = vld [vmem:[%s170 + $0xa1] sm:$0xff]
      %v1624 = vld [vmem:[%s170 + $0xa9] sm:$0xff]
      %v1625 = vld [vmem:[%s170 + $0xb1] sm:$0xff]
      %v1626 = vld [vmem:[%s170 + $0xb9] sm:$0xff]
      %v1627 = vld [vmem:[%s170 + $0xc1] sm:$0xff]
      %v1628 = vld [vmem:[%s170 + $0xc9] sm:$0xff]
      %v1629 = vld [vmem:[%s170 + $0xd1] sm:$0xff]
      %v1630 = vld [vmem:[%s170 + $0xd9] sm:$0xff]
      %v1631 = vld [vmem:[%s170 + $0xe1] sm:$0xff]
      %v1632 = vld [vmem:[%s170 + $0xe9] sm:$0xff]
      %v1633 = vld [vmem:[%s170 + $0xf1] sm:$0xff]
      %v1634 = vld [vmem:[%s170 + $0xf9] sm:$0xff]
      %v1635 = vld [vmem:[%s170 + $0x101] sm:$0xff]
      %v1636 = vld [vmem:[%s170 + $0x109] sm:$0xff]
      %v1637 = vld [vmem:[%s170 + $0x111] sm:$0xff]
      %v1638 = vld [vmem:[%s170 + $0x119] sm:$0xff]
      %v1639 = vld [vmem:[%s170 + $0x2] sm:$0xff]
      %v1640 = vld [vmem:[%s170 + $0xa] sm:$0xff]
      %v1641 = vld [vmem:[%s170 + $0x12] sm:$0xff]
      %v1642 = vld [vmem:[%s170 + $0x1a] sm:$0xff]
      %v1643 = vld [vmem:[%s170 + $0x22] sm:$0xff]
      %v1644 = vld [vmem:[%s170 + $0x2a] sm:$0xff]
      %v1645 = vld [vmem:[%s170 + $0x32] sm:$0xff]
      %v1646 = vld [vmem:[%s170 + $0x3a] sm:$0xff]
      %v1647 = vld [vmem:[%s170 + $0x42] sm:$0xff]
      %v1648 = vld [vmem:[%s170 + $0x4a] sm:$0xff]
      %v1649 = vld [vmem:[%s170 + $0x52] sm:$0xff]
      %v1650 = vld [vmem:[%s170 + $0x5a] sm:$0xff]
      %v1651 = vld [vmem:[%s170 + $0x62] sm:$0xff]
      %v1652 = vld [vmem:[%s170 + $0x6a] sm:$0xff]
      %v1653 = vld [vmem:[%s170 + $0x72] sm:$0xff]
      %v1654 = vld [vmem:[%s170 + $0x7a] sm:$0xff]
      %v1655 = vld [vmem:[%s170 + $0x82] sm:$0xff]
      %v1656 = vld [vmem:[%s170 + $0x8a] sm:$0xff]
      %v1657 = vld [vmem:[%s170 + $0x92] sm:$0xff]
      %v1658 = vld [vmem:[%s170 + $0x9a] sm:$0xff]
      %v1659 = vld [vmem:[%s170 + $0xa2] sm:$0xff]
      %v1660 = vld [vmem:[%s170 + $0xaa] sm:$0xff]
      %v1661 = vld [vmem:[%s170 + $0xb2] sm:$0xff]
      %v1662 = vld [vmem:[%s170 + $0xba] sm:$0xff]
      %v1663 = vld [vmem:[%s170 + $0xc2] sm:$0xff]
      %v1664 = vld [vmem:[%s170 + $0xca] sm:$0xff]
      %v1665 = vld [vmem:[%s170 + $0xd2] sm:$0xff]
      %v1666 = vld [vmem:[%s170 + $0xda] sm:$0xff]
      %v1667 = vld [vmem:[%s170 + $0xe2] sm:$0xff]
      %v1668 = vld [vmem:[%s170 + $0xea] sm:$0xff]
      %v1669 = vld [vmem:[%s170 + $0xf2] sm:$0xff]
      %v1670 = vld [vmem:[%s170 + $0xfa] sm:$0xff]
      %v1671 = vld [vmem:[%s170 + $0x102] sm:$0xff]
      %v1672 = vld [vmem:[%s170 + $0x10a] sm:$0xff]
      %v1673 = vld [vmem:[%s170 + $0x112] sm:$0xff]
      %v1674 = vld [vmem:[%s170 + $0x11a] sm:$0xff]
      %v1675 = vld [vmem:[%s170 + $0x122] sm:$0xff]
      %v1676 = vld [vmem:[%s170 + $0x12a] sm:$0xff]
      %v1677 = vld [vmem:[%s170 + $0x13] sm:$0xff]
      %v1678 = vld [vmem:[%s170 + $0x1b] sm:$0xff]
      %v1679 = vld [vmem:[%s170 + $0x23] sm:$0xff]
      %v1680 = vld [vmem:[%s170 + $0x2b] sm:$0xff]
      %v1681 = vld [vmem:[%s170 + $0x33] sm:$0xff]
      %v1682 = vld [vmem:[%s170 + $0x3b] sm:$0xff]
      %v1683 = vld [vmem:[%s170 + $0x43] sm:$0xff]
      %v1684 = vld [vmem:[%s170 + $0x4b] sm:$0xff]
      %v1685 = vld [vmem:[%s170 + $0x53] sm:$0xff]
      %v1686 = vld [vmem:[%s170 + $0x5b] sm:$0xff]
      %v1687 = vld [vmem:[%s170 + $0x63] sm:$0xff]
      %v1688 = vld [vmem:[%s170 + $0x6b] sm:$0xff]
      %v1689 = vld [vmem:[%s170 + $0x73] sm:$0xff]
      %v1690 = vld [vmem:[%s170 + $0x7b] sm:$0xff]
      %v1691 = vld [vmem:[%s170 + $0x83] sm:$0xff]
      %v1692 = vld [vmem:[%s170 + $0x8b] sm:$0xff]
      %v1693 = vld [vmem:[%s170 + $0x93] sm:$0xff]
      %v1694 = vld [vmem:[%s170 + $0x9b] sm:$0xff]
      %v1695 = vld [vmem:[%s170 + $0xa3] sm:$0xff]
      %v1696 = vld [vmem:[%s170 + $0xab] sm:$0xff]
      %v1697 = vld [vmem:[%s170 + $0xb3] sm:$0xff]
      %v1698 = vld [vmem:[%s170 + $0xbb] sm:$0xff]
      %v1699 = vld [vmem:[%s170 + $0xc3] sm:$0xff]
      %v1700 = vld [vmem:[%s170 + $0xcb] sm:$0xff]
      %v1701 = vld [vmem:[%s170 + $0xd3] sm:$0xff]
      %v1702 = vld [vmem:[%s170 + $0xdb] sm:$0xff]
      %v1703 = vld [vmem:[%s170 + $0xe3] sm:$0xff]
      %v1704 = vld [vmem:[%s170 + $0xeb] sm:$0xff]
      %v1705 = vld [vmem:[%s170 + $0xf3] sm:$0xff]
      %v1706 = vld [vmem:[%s170 + $0xfb] sm:$0xff]
      %v1707 = vld [vmem:[%s170 + $0x103] sm:$0xff]
      %v1708 = vld [vmem:[%s170 + $0x10b] sm:$0xff]
      %v1709 = vld [vmem:[%s170 + $0x113] sm:$0xff]
      %v1710 = vld [vmem:[%s170 + $0x11b] sm:$0xff]
      %v1711 = vld [vmem:[%s170 + $0x123] sm:$0xff]
      %v1712 = vld [vmem:[%s170 + $0x12b] sm:$0xff]
      %v1713 = vld [vmem:[%s170 + $0x14] sm:$0xff]
      %v1714 = vld [vmem:[%s170 + $0x1c] sm:$0xff]
      %v1715 = vld [vmem:[%s170 + $0x24] sm:$0xff]
      %v1716 = vld [vmem:[%s170 + $0x2c] sm:$0xff]
      %v1717 = vld [vmem:[%s170 + $0x34] sm:$0xff]
      %v1718 = vld [vmem:[%s170 + $0x3c] sm:$0xff]
      %v1719 = vld [vmem:[%s170 + $0x44] sm:$0xff]
      %v1720 = vld [vmem:[%s170 + $0x4c] sm:$0xff]
      %v1721 = vld [vmem:[%s170 + $0x54] sm:$0xff]
      %v1722 = vld [vmem:[%s170 + $0x5c] sm:$0xff]
      %v1723 = vld [vmem:[%s170 + $0x64] sm:$0xff]
      %v1724 = vld [vmem:[%s170 + $0x6c] sm:$0xff]
      %v1725 = vld [vmem:[%s170 + $0x74] sm:$0xff]
      %v1726 = vld [vmem:[%s170 + $0x7c] sm:$0xff]
      %v1727 = vld [vmem:[%s170 + $0x84] sm:$0xff]
      %v1728 = vld [vmem:[%s170 + $0x8c] sm:$0xff]
      %v1729 = vld [vmem:[%s170 + $0x94] sm:$0xff]
      %v1730 = vld [vmem:[%s170 + $0x9c] sm:$0xff]
      %v1731 = vld [vmem:[%s170 + $0xa4] sm:$0xff]
      %v1732 = vld [vmem:[%s170 + $0xac] sm:$0xff]
      %v1733 = vld [vmem:[%s170 + $0xb4] sm:$0xff]
      %v1734 = vld [vmem:[%s170 + $0xbc] sm:$0xff]
      %v1735 = vld [vmem:[%s170 + $0xc4] sm:$0xff]
      %v1736 = vld [vmem:[%s170 + $0xcc] sm:$0xff]
      %v1737 = vld [vmem:[%s170 + $0xd4] sm:$0xff]
      %v1738 = vld [vmem:[%s170 + $0xdc] sm:$0xff]
      %v1739 = vld [vmem:[%s170 + $0xe4] sm:$0xff]
      %v1740 = vld [vmem:[%s170 + $0xec] sm:$0xff]
      %v1741 = vld [vmem:[%s170 + $0xf4] sm:$0xff]
      %v1742 = vld [vmem:[%s170 + $0xfc] sm:$0xff]
      %v1743 = vld [vmem:[%s170 + $0x104] sm:$0xff]
      %v1744 = vld [vmem:[%s170 + $0x10c] sm:$0xff]
      %v1745 = vld [vmem:[%s170 + $0x114] sm:$0xff]
      %v1746 = vld [vmem:[%s170 + $0x11c] sm:$0xff]
      %v1747 = vld [vmem:[%s170 + $0x124] sm:$0xff]
      %v1748 = vld [vmem:[%s170 + $0x12c] sm:$0xff]
      %v1749 = vld [vmem:[%s170 + $0x134] sm:$0xff]
      %v1750 = vld [vmem:[%s170 + $0x13c] sm:$0xff]
      %v1751 = vld [vmem:[%s170 + $0x25] sm:$0xff]
      %v1752 = vld [vmem:[%s170 + $0x2d] sm:$0xff]
      %v1753 = vld [vmem:[%s170 + $0x35] sm:$0xff]
      %v1754 = vld [vmem:[%s170 + $0x3d] sm:$0xff]
      %v1755 = vld [vmem:[%s170 + $0x45] sm:$0xff]
      %v1756 = vld [vmem:[%s170 + $0x4d] sm:$0xff]
      %v1757 = vld [vmem:[%s170 + $0x55] sm:$0xff]
      %v1758 = vld [vmem:[%s170 + $0x5d] sm:$0xff]
      %v1759 = vld [vmem:[%s170 + $0x65] sm:$0xff]
      %v1760 = vld [vmem:[%s170 + $0x6d] sm:$0xff]
      %v1761 = vld [vmem:[%s170 + $0x75] sm:$0xff]
      %v1762 = vld [vmem:[%s170 + $0x7d] sm:$0xff]
      %v1763 = vld [vmem:[%s170 + $0x85] sm:$0xff]
      %v1764 = vld [vmem:[%s170 + $0x8d] sm:$0xff]
      %v1765 = vld [vmem:[%s170 + $0x95] sm:$0xff]
      %v1766 = vld [vmem:[%s170 + $0x9d] sm:$0xff]
      %v1767 = vld [vmem:[%s170 + $0xa5] sm:$0xff]
      %v1768 = vld [vmem:[%s170 + $0xad] sm:$0xff]
      %v1769 = vld [vmem:[%s170 + $0xb5] sm:$0xff]
      %v1770 = vld [vmem:[%s170 + $0xbd] sm:$0xff]
      %v1771 = vld [vmem:[%s170 + $0xc5] sm:$0xff]
      %v1772 = vld [vmem:[%s170 + $0xcd] sm:$0xff]
      %v1773 = vld [vmem:[%s170 + $0xd5] sm:$0xff]
      %v1774 = vld [vmem:[%s170 + $0xdd] sm:$0xff]
      %v1775 = vld [vmem:[%s170 + $0xe5] sm:$0xff]
      %v1776 = vld [vmem:[%s170 + $0xed] sm:$0xff]
      %v1777 = vld [vmem:[%s170 + $0xf5] sm:$0xff]
      %v1778 = vld [vmem:[%s170 + $0xfd] sm:$0xff]
      %v1779 = vld [vmem:[%s170 + $0x105] sm:$0xff]
      %v1780 = vld [vmem:[%s170 + $0x10d] sm:$0xff]
      %v1781 = vld [vmem:[%s170 + $0x115] sm:$0xff]
      %v1782 = vld [vmem:[%s170 + $0x11d] sm:$0xff]
      %v1783 = vld [vmem:[%s170 + $0x125] sm:$0xff]
      %v1784 = vld [vmem:[%s170 + $0x12d] sm:$0xff]
      %v1785 = vld [vmem:[%s170 + $0x135] sm:$0xff]
      %v1786 = vld [vmem:[%s170 + $0x13d] sm:$0xff]
      %v1787 = vld [vmem:[%s170 + $0x26] sm:$0xff]
      %v1788 = vld [vmem:[%s170 + $0x2e] sm:$0xff]
      %v1789 = vld [vmem:[%s170 + $0x36] sm:$0xff]
      %v1790 = vld [vmem:[%s170 + $0x3e] sm:$0xff]
      %v1791 = vld [vmem:[%s170 + $0x46] sm:$0xff]
      %v1792 = vld [vmem:[%s170 + $0x4e] sm:$0xff]
      %v1793 = vld [vmem:[%s170 + $0x56] sm:$0xff]
      %v1794 = vld [vmem:[%s170 + $0x5e] sm:$0xff]
      %v1795 = vld [vmem:[%s170 + $0x66] sm:$0xff]
      %v1796 = vld [vmem:[%s170 + $0x6e] sm:$0xff]
      %v1797 = vld [vmem:[%s170 + $0x76] sm:$0xff]
      %v1798 = vld [vmem:[%s170 + $0x7e] sm:$0xff]
      %v1799 = vld [vmem:[%s170 + $0x86] sm:$0xff]
      %v1800 = vld [vmem:[%s170 + $0x8e] sm:$0xff]
      %v1801 = vld [vmem:[%s170 + $0x96] sm:$0xff]
      %v1802 = vld [vmem:[%s170 + $0x9e] sm:$0xff]
      %v1803 = vld [vmem:[%s170 + $0xa6] sm:$0xff]
      %v1804 = vld [vmem:[%s170 + $0xae] sm:$0xff]
      %v1805 = vld [vmem:[%s170 + $0xb6] sm:$0xff]
      %v1806 = vld [vmem:[%s170 + $0xbe] sm:$0xff]
      %v1807 = vld [vmem:[%s170 + $0xc6] sm:$0xff]
      %v1808 = vld [vmem:[%s170 + $0xce] sm:$0xff]
      %v1809 = vld [vmem:[%s170 + $0xd6] sm:$0xff]
      %v1810 = vld [vmem:[%s170 + $0xde] sm:$0xff]
      %v1811 = vld [vmem:[%s170 + $0xe6] sm:$0xff]
      %v1812 = vld [vmem:[%s170 + $0xee] sm:$0xff]
      %v1813 = vld [vmem:[%s170 + $0xf6] sm:$0xff]
      %v1814 = vld [vmem:[%s170 + $0xfe] sm:$0xff]
      %v1815 = vld [vmem:[%s170 + $0x106] sm:$0xff]
      %v1816 = vld [vmem:[%s170 + $0x10e] sm:$0xff]
      %v1817 = vld [vmem:[%s170 + $0x116] sm:$0xff]
      %v1818 = vld [vmem:[%s170 + $0x11e] sm:$0xff]
      %v1819 = vld [vmem:[%s170 + $0x126] sm:$0xff]
      %v1820 = vld [vmem:[%s170 + $0x12e] sm:$0xff]
      %v1821 = vld [vmem:[%s170 + $0x136] sm:$0xff]
      %v1822 = vld [vmem:[%s170 + $0x13e] sm:$0xff]
      %1859 = vrot.lane.b32.xlu0 %v1603, 8
      %v1860 = vpop.permute.xlu0 %1859
      %1861 = vrot.lane.b32.xlu0 %v1604, 8
      %v1862 = vpop.permute.xlu0 %1861
      %1863 = vrot.lane.b32.xlu0 %v1605, 8
      %v1864 = vpop.permute.xlu0 %1863
      %1865 = vrot.lane.b32.xlu0 %v1606, 8
      %v1866 = vpop.permute.xlu0 %1865
      %1867 = vrot.lane.b32.xlu0 %v1607, 8
      %v1868 = vpop.permute.xlu0 %1867
      %1869 = vrot.lane.b32.xlu0 %v1608, 8
      %v1870 = vpop.permute.xlu0 %1869
      %1871 = vrot.lane.b32.xlu0 %v1609, 8
      %v1872 = vpop.permute.xlu0 %1871
      %1873 = vrot.lane.b32.xlu0 %v1610, 8
      %v1874 = vpop.permute.xlu0 %1873
      %1875 = vrot.lane.b32.xlu0 %v1611, 8
      %v1876 = vpop.permute.xlu0 %1875
      %1877 = vrot.lane.b32.xlu0 %v1612, 8
      %v1878 = vpop.permute.xlu0 %1877
      %1879 = vrot.lane.b32.xlu0 %v1613, 8
      %v1880 = vpop.permute.xlu0 %1879
      %1881 = vrot.lane.b32.xlu0 %v1614, 8
      %v1882 = vpop.permute.xlu0 %1881
      %1883 = vrot.lane.b32.xlu0 %v1615, 8
      %v1884 = vpop.permute.xlu0 %1883
      %1885 = vrot.lane.b32.xlu0 %v1616, 8
      %v1886 = vpop.permute.xlu0 %1885
      %1887 = vrot.lane.b32.xlu0 %v1617, 8
      %v1888 = vpop.permute.xlu0 %1887
      %1889 = vrot.lane.b32.xlu0 %v1618, 8
      %v1890 = vpop.permute.xlu0 %1889
      %1891 = vrot.lane.b32.xlu0 %v1619, 8
      %v1892 = vpop.permute.xlu0 %1891
      %1893 = vrot.lane.b32.xlu0 %v1620, 8
      %v1894 = vpop.permute.xlu0 %1893
      %1895 = vrot.lane.b32.xlu0 %v1621, 8
      %v1896 = vpop.permute.xlu0 %1895
      %1897 = vrot.lane.b32.xlu0 %v1622, 8
      %v1898 = vpop.permute.xlu0 %1897
      %1899 = vrot.lane.b32.xlu0 %v1623, 8
      %v1900 = vpop.permute.xlu0 %1899
      %1901 = vrot.lane.b32.xlu0 %v1624, 8
      %v1902 = vpop.permute.xlu0 %1901
      %1903 = vrot.lane.b32.xlu0 %v1625, 8
      %v1904 = vpop.permute.xlu0 %1903
      %1905 = vrot.lane.b32.xlu0 %v1626, 8
      %v1906 = vpop.permute.xlu0 %1905
      %1907 = vrot.lane.b32.xlu0 %v1627, 8
      %v1908 = vpop.permute.xlu0 %1907
      %1909 = vrot.lane.b32.xlu0 %v1628, 8
      %v1910 = vpop.permute.xlu0 %1909
      %1911 = vrot.lane.b32.xlu0 %v1629, 8
      %v1912 = vpop.permute.xlu0 %1911
      %1913 = vrot.lane.b32.xlu0 %v1630, 8
      %v1914 = vpop.permute.xlu0 %1913
      %1915 = vrot.lane.b32.xlu0 %v1631, 8
      %v1916 = vpop.permute.xlu0 %1915
      %1917 = vrot.lane.b32.xlu0 %v1632, 8
      %v1918 = vpop.permute.xlu0 %1917
      %1919 = vrot.lane.b32.xlu0 %v1633, 8
      %v1920 = vpop.permute.xlu0 %1919
      %1921 = vrot.lane.b32.xlu0 %v1634, 8
      %v1922 = vpop.permute.xlu0 %1921
      %1923 = vrot.lane.b32.xlu0 %v1635, 8
      %v1924 = vpop.permute.xlu0 %1923
      %1925 = vrot.lane.b32.xlu0 %v1636, 8
      %v1926 = vpop.permute.xlu0 %1925
      %1927 = vrot.lane.b32.xlu0 %v1637, 8
      %v1928 = vpop.permute.xlu0 %1927
      %1929 = vrot.lane.b32.xlu0 %v1638, 8
      %v1930 = vpop.permute.xlu0 %1929
      %2003 = vrot.lane.b32.xlu0 %v1639, 16
      %v2004 = vpop.permute.xlu0 %2003
      %2005 = vrot.lane.b32.xlu0 %v1640, 16
      %v2006 = vpop.permute.xlu0 %2005
      %2007 = vrot.lane.b32.xlu0 %v1641, 16
      %v2008 = vpop.permute.xlu0 %2007
      %2009 = vrot.lane.b32.xlu0 %v1642, 16
      %v2010 = vpop.permute.xlu0 %2009
      %2011 = vrot.lane.b32.xlu0 %v1643, 16
      %v2012 = vpop.permute.xlu0 %2011
      %2013 = vrot.lane.b32.xlu0 %v1644, 16
      %v2014 = vpop.permute.xlu0 %2013
      %2015 = vrot.lane.b32.xlu0 %v1645, 16
      %v2016 = vpop.permute.xlu0 %2015
      %2017 = vrot.lane.b32.xlu0 %v1646, 16
      %v2018 = vpop.permute.xlu0 %2017
      %2019 = vrot.lane.b32.xlu0 %v1647, 16
      %v2020 = vpop.permute.xlu0 %2019
      %2021 = vrot.lane.b32.xlu0 %v1648, 16
      %v2022 = vpop.permute.xlu0 %2021
      %2023 = vrot.lane.b32.xlu0 %v1649, 16
      %v2024 = vpop.permute.xlu0 %2023
      %2025 = vrot.lane.b32.xlu0 %v1650, 16
      %v2026 = vpop.permute.xlu0 %2025
      %2027 = vrot.lane.b32.xlu0 %v1651, 16
      %v2028 = vpop.permute.xlu0 %2027
      %2029 = vrot.lane.b32.xlu0 %v1652, 16
      %v2030 = vpop.permute.xlu0 %2029
      %2031 = vrot.lane.b32.xlu0 %v1653, 16
      %v2032 = vpop.permute.xlu0 %2031
      %2033 = vrot.lane.b32.xlu0 %v1654, 16
      %v2034 = vpop.permute.xlu0 %2033
      %2035 = vrot.lane.b32.xlu0 %v1655, 16
      %v2036 = vpop.permute.xlu0 %2035
      %2037 = vrot.lane.b32.xlu0 %v1656, 16
      %v2038 = vpop.permute.xlu0 %2037
      %2039 = vrot.lane.b32.xlu0 %v1657, 16
      %v2040 = vpop.permute.xlu0 %2039
      %2041 = vrot.lane.b32.xlu0 %v1658, 16
      %v2042 = vpop.permute.xlu0 %2041
      %2043 = vrot.lane.b32.xlu0 %v1659, 16
      %v2044 = vpop.permute.xlu0 %2043
      %2045 = vrot.lane.b32.xlu0 %v1660, 16
      %v2046 = vpop.permute.xlu0 %2045
      %2047 = vrot.lane.b32.xlu0 %v1661, 16
      %v2048 = vpop.permute.xlu0 %2047
      %2049 = vrot.lane.b32.xlu0 %v1662, 16
      %v2050 = vpop.permute.xlu0 %2049
      %2051 = vrot.lane.b32.xlu0 %v1663, 16
      %v2052 = vpop.permute.xlu0 %2051
      %2053 = vrot.lane.b32.xlu0 %v1664, 16
      %v2054 = vpop.permute.xlu0 %2053
      %2055 = vrot.lane.b32.xlu0 %v1665, 16
      %v2056 = vpop.permute.xlu0 %2055
      %2057 = vrot.lane.b32.xlu0 %v1666, 16
      %v2058 = vpop.permute.xlu0 %2057
      %2059 = vrot.lane.b32.xlu0 %v1667, 16
      %v2060 = vpop.permute.xlu0 %2059
      %2061 = vrot.lane.b32.xlu0 %v1668, 16
      %v2062 = vpop.permute.xlu0 %2061
      %2063 = vrot.lane.b32.xlu0 %v1669, 16
      %v2064 = vpop.permute.xlu0 %2063
      %2065 = vrot.lane.b32.xlu0 %v1670, 16
      %v2066 = vpop.permute.xlu0 %2065
      %2067 = vrot.lane.b32.xlu0 %v1671, 16
      %v2068 = vpop.permute.xlu0 %2067
      %2069 = vrot.lane.b32.xlu0 %v1672, 16
      %v2070 = vpop.permute.xlu0 %2069
      %2071 = vrot.lane.b32.xlu0 %v1673, 16
      %v2072 = vpop.permute.xlu0 %2071
      %2073 = vrot.lane.b32.xlu0 %v1674, 16
      %v2074 = vpop.permute.xlu0 %2073
      %2113 = vrot.lane.b32.xlu0 %v1641, 24
      %v2114 = vpop.permute.xlu0 %2113
      %2115 = vrot.lane.b32.xlu0 %v1642, 24
      %v2116 = vpop.permute.xlu0 %2115
      %2117 = vrot.lane.b32.xlu0 %v1643, 24
      %v2118 = vpop.permute.xlu0 %2117
      %2119 = vrot.lane.b32.xlu0 %v1644, 24
      %v2120 = vpop.permute.xlu0 %2119
      %2121 = vrot.lane.b32.xlu0 %v1645, 24
      %v2122 = vpop.permute.xlu0 %2121
      %2123 = vrot.lane.b32.xlu0 %v1646, 24
      %v2124 = vpop.permute.xlu0 %2123
      %2125 = vrot.lane.b32.xlu0 %v1647, 24
      %v2126 = vpop.permute.xlu0 %2125
      %2127 = vrot.lane.b32.xlu0 %v1648, 24
      %v2128 = vpop.permute.xlu0 %2127
      %2129 = vrot.lane.b32.xlu0 %v1649, 24
      %v2130 = vpop.permute.xlu0 %2129
      %2131 = vrot.lane.b32.xlu0 %v1650, 24
      %v2132 = vpop.permute.xlu0 %2131
      %2133 = vrot.lane.b32.xlu0 %v1651, 24
      %v2134 = vpop.permute.xlu0 %2133
      %2135 = vrot.lane.b32.xlu0 %v1652, 24
      %v2136 = vpop.permute.xlu0 %2135
      %2137 = vrot.lane.b32.xlu0 %v1653, 24
      %v2138 = vpop.permute.xlu0 %2137
      %2139 = vrot.lane.b32.xlu0 %v1654, 24
      %v2140 = vpop.permute.xlu0 %2139
      %2141 = vrot.lane.b32.xlu0 %v1655, 24
      %v2142 = vpop.permute.xlu0 %2141
      %2143 = vrot.lane.b32.xlu0 %v1656, 24
      %v2144 = vpop.permute.xlu0 %2143
      %2145 = vrot.lane.b32.xlu0 %v1657, 24
      %v2146 = vpop.permute.xlu0 %2145
      %2147 = vrot.lane.b32.xlu0 %v1658, 24
      %v2148 = vpop.permute.xlu0 %2147
      %2149 = vrot.lane.b32.xlu0 %v1659, 24
      %v2150 = vpop.permute.xlu0 %2149
      %2151 = vrot.lane.b32.xlu0 %v1660, 24
      %v2152 = vpop.permute.xlu0 %2151
      %2153 = vrot.lane.b32.xlu0 %v1661, 24
      %v2154 = vpop.permute.xlu0 %2153
      %2155 = vrot.lane.b32.xlu0 %v1662, 24
      %v2156 = vpop.permute.xlu0 %2155
      %2157 = vrot.lane.b32.xlu0 %v1663, 24
      %v2158 = vpop.permute.xlu0 %2157
      %2159 = vrot.lane.b32.xlu0 %v1664, 24
      %v2160 = vpop.permute.xlu0 %2159
      %2161 = vrot.lane.b32.xlu0 %v1665, 24
      %v2162 = vpop.permute.xlu0 %2161
      %2163 = vrot.lane.b32.xlu0 %v1666, 24
      %v2164 = vpop.permute.xlu0 %2163
      %2165 = vrot.lane.b32.xlu0 %v1667, 24
      %v2166 = vpop.permute.xlu0 %2165
      %2167 = vrot.lane.b32.xlu0 %v1668, 24
      %v2168 = vpop.permute.xlu0 %2167
      %2169 = vrot.lane.b32.xlu0 %v1669, 24
      %v2170 = vpop.permute.xlu0 %2169
      %2171 = vrot.lane.b32.xlu0 %v1670, 24
      %v2172 = vpop.permute.xlu0 %2171
      %2173 = vrot.lane.b32.xlu0 %v1671, 24
      %v2174 = vpop.permute.xlu0 %2173
      %2175 = vrot.lane.b32.xlu0 %v1672, 24
      %v2176 = vpop.permute.xlu0 %2175
      %2177 = vrot.lane.b32.xlu0 %v1673, 24
      %v2178 = vpop.permute.xlu0 %2177
      %2179 = vrot.lane.b32.xlu0 %v1674, 24
      %v2180 = vpop.permute.xlu0 %2179
      %2181 = vrot.lane.b32.xlu0 %v1675, 24
      %v2182 = vpop.permute.xlu0 %2181
      %2183 = vrot.lane.b32.xlu0 %v1676, 24
      %v2184 = vpop.permute.xlu0 %2183
      %2257 = vrot.lane.b32.xlu0 %v1677, 32
      %v2258 = vpop.permute.xlu0 %2257
      %2259 = vrot.lane.b32.xlu0 %v1678, 32
      %v2260 = vpop.permute.xlu0 %2259
      %2261 = vrot.lane.b32.xlu0 %v1679, 32
      %v2262 = vpop.permute.xlu0 %2261
      %2263 = vrot.lane.b32.xlu0 %v1680, 32
      %v2264 = vpop.permute.xlu0 %2263
      %2265 = vrot.lane.b32.xlu0 %v1681, 32
      %v2266 = vpop.permute.xlu0 %2265
      %2267 = vrot.lane.b32.xlu0 %v1682, 32
      %v2268 = vpop.permute.xlu0 %2267
      %2269 = vrot.lane.b32.xlu0 %v1683, 32
      %v2270 = vpop.permute.xlu0 %2269
      %2271 = vrot.lane.b32.xlu0 %v1684, 32
      %v2272 = vpop.permute.xlu0 %2271
      %2273 = vrot.lane.b32.xlu0 %v1685, 32
      %v2274 = vpop.permute.xlu0 %2273
      %2275 = vrot.lane.b32.xlu0 %v1686, 32
      %v2276 = vpop.permute.xlu0 %2275
      %2277 = vrot.lane.b32.xlu0 %v1687, 32
      %v2278 = vpop.permute.xlu0 %2277
      %2279 = vrot.lane.b32.xlu0 %v1688, 32
      %v2280 = vpop.permute.xlu0 %2279
      %2281 = vrot.lane.b32.xlu0 %v1689, 32
      %v2282 = vpop.permute.xlu0 %2281
      %2283 = vrot.lane.b32.xlu0 %v1690, 32
      %v2284 = vpop.permute.xlu0 %2283
      %2285 = vrot.lane.b32.xlu0 %v1691, 32
      %v2286 = vpop.permute.xlu0 %2285
      %2287 = vrot.lane.b32.xlu0 %v1692, 32
      %v2288 = vpop.permute.xlu0 %2287
      %2289 = vrot.lane.b32.xlu0 %v1693, 32
      %v2290 = vpop.permute.xlu0 %2289
      %2291 = vrot.lane.b32.xlu0 %v1694, 32
      %v2292 = vpop.permute.xlu0 %2291
      %2293 = vrot.lane.b32.xlu0 %v1695, 32
      %v2294 = vpop.permute.xlu0 %2293
      %2295 = vrot.lane.b32.xlu0 %v1696, 32
      %v2296 = vpop.permute.xlu0 %2295
      %2297 = vrot.lane.b32.xlu0 %v1697, 32
      %v2298 = vpop.permute.xlu0 %2297
      %2299 = vrot.lane.b32.xlu0 %v1698, 32
      %v2300 = vpop.permute.xlu0 %2299
      %2301 = vrot.lane.b32.xlu0 %v1699, 32
      %v2302 = vpop.permute.xlu0 %2301
      %2303 = vrot.lane.b32.xlu0 %v1700, 32
      %v2304 = vpop.permute.xlu0 %2303
      %2305 = vrot.lane.b32.xlu0 %v1701, 32
      %v2306 = vpop.permute.xlu0 %2305
      %2307 = vrot.lane.b32.xlu0 %v1702, 32
      %v2308 = vpop.permute.xlu0 %2307
      %2309 = vrot.lane.b32.xlu0 %v1703, 32
      %v2310 = vpop.permute.xlu0 %2309
      %2311 = vrot.lane.b32.xlu0 %v1704, 32
      %v2312 = vpop.permute.xlu0 %2311
      %2313 = vrot.lane.b32.xlu0 %v1705, 32
      %v2314 = vpop.permute.xlu0 %2313
      %2315 = vrot.lane.b32.xlu0 %v1706, 32
      %v2316 = vpop.permute.xlu0 %2315
      %2317 = vrot.lane.b32.xlu0 %v1707, 32
      %v2318 = vpop.permute.xlu0 %2317
      %2319 = vrot.lane.b32.xlu0 %v1708, 32
      %v2320 = vpop.permute.xlu0 %2319
      %2321 = vrot.lane.b32.xlu0 %v1709, 32
      %v2322 = vpop.permute.xlu0 %2321
      %2323 = vrot.lane.b32.xlu0 %v1710, 32
      %v2324 = vpop.permute.xlu0 %2323
      %2325 = vrot.lane.b32.xlu0 %v1711, 32
      %v2326 = vpop.permute.xlu0 %2325
      %2327 = vrot.lane.b32.xlu0 %v1712, 32
      %v2328 = vpop.permute.xlu0 %2327
      %2401 = vrot.lane.b32.xlu0 %v1713, 40
      %v2402 = vpop.permute.xlu0 %2401
      %2403 = vrot.lane.b32.xlu0 %v1714, 40
      %v2404 = vpop.permute.xlu0 %2403
      %2405 = vrot.lane.b32.xlu0 %v1715, 40
      %v2406 = vpop.permute.xlu0 %2405
      %2407 = vrot.lane.b32.xlu0 %v1716, 40
      %v2408 = vpop.permute.xlu0 %2407
      %2409 = vrot.lane.b32.xlu0 %v1717, 40
      %v2410 = vpop.permute.xlu0 %2409
      %2411 = vrot.lane.b32.xlu0 %v1718, 40
      %v2412 = vpop.permute.xlu0 %2411
      %2413 = vrot.lane.b32.xlu0 %v1719, 40
      %v2414 = vpop.permute.xlu0 %2413
      %2415 = vrot.lane.b32.xlu0 %v1720, 40
      %v2416 = vpop.permute.xlu0 %2415
      %2417 = vrot.lane.b32.xlu0 %v1721, 40
      %v2418 = vpop.permute.xlu0 %2417
      %2419 = vrot.lane.b32.xlu0 %v1722, 40
      %v2420 = vpop.permute.xlu0 %2419
      %2421 = vrot.lane.b32.xlu0 %v1723, 40
      %v2422 = vpop.permute.xlu0 %2421
      %2423 = vrot.lane.b32.xlu0 %v1724, 40
      %v2424 = vpop.permute.xlu0 %2423
      %2425 = vrot.lane.b32.xlu0 %v1725, 40
      %v2426 = vpop.permute.xlu0 %2425
      %2427 = vrot.lane.b32.xlu0 %v1726, 40
      %v2428 = vpop.permute.xlu0 %2427
      %2429 = vrot.lane.b32.xlu0 %v1727, 40
      %v2430 = vpop.permute.xlu0 %2429
      %2431 = vrot.lane.b32.xlu0 %v1728, 40
      %v2432 = vpop.permute.xlu0 %2431
      %2433 = vrot.lane.b32.xlu0 %v1729, 40
      %v2434 = vpop.permute.xlu0 %2433
      %2435 = vrot.lane.b32.xlu0 %v1730, 40
      %v2436 = vpop.permute.xlu0 %2435
      %2437 = vrot.lane.b32.xlu0 %v1731, 40
      %v2438 = vpop.permute.xlu0 %2437
      %2439 = vrot.lane.b32.xlu0 %v1732, 40
      %v2440 = vpop.permute.xlu0 %2439
      %2441 = vrot.lane.b32.xlu0 %v1733, 40
      %v2442 = vpop.permute.xlu0 %2441
      %2443 = vrot.lane.b32.xlu0 %v1734, 40
      %v2444 = vpop.permute.xlu0 %2443
      %2445 = vrot.lane.b32.xlu0 %v1735, 40
      %v2446 = vpop.permute.xlu0 %2445
      %2447 = vrot.lane.b32.xlu0 %v1736, 40
      %v2448 = vpop.permute.xlu0 %2447
      %2449 = vrot.lane.b32.xlu0 %v1737, 40
      %v2450 = vpop.permute.xlu0 %2449
      %2451 = vrot.lane.b32.xlu0 %v1738, 40
      %v2452 = vpop.permute.xlu0 %2451
      %2453 = vrot.lane.b32.xlu0 %v1739, 40
      %v2454 = vpop.permute.xlu0 %2453
      %2455 = vrot.lane.b32.xlu0 %v1740, 40
      %v2456 = vpop.permute.xlu0 %2455
      %2457 = vrot.lane.b32.xlu0 %v1741, 40
      %v2458 = vpop.permute.xlu0 %2457
      %2459 = vrot.lane.b32.xlu0 %v1742, 40
      %v2460 = vpop.permute.xlu0 %2459
      %2461 = vrot.lane.b32.xlu0 %v1743, 40
      %v2462 = vpop.permute.xlu0 %2461
      %2463 = vrot.lane.b32.xlu0 %v1744, 40
      %v2464 = vpop.permute.xlu0 %2463
      %2465 = vrot.lane.b32.xlu0 %v1745, 40
      %v2466 = vpop.permute.xlu0 %2465
      %2467 = vrot.lane.b32.xlu0 %v1746, 40
      %v2468 = vpop.permute.xlu0 %2467
      %2469 = vrot.lane.b32.xlu0 %v1747, 40
      %v2470 = vpop.permute.xlu0 %2469
      %2471 = vrot.lane.b32.xlu0 %v1748, 40
      %v2472 = vpop.permute.xlu0 %2471
      %2511 = vrot.lane.b32.xlu0 %v1715, 48
      %v2512 = vpop.permute.xlu0 %2511
      %2513 = vrot.lane.b32.xlu0 %v1716, 48
      %v2514 = vpop.permute.xlu0 %2513
      %2515 = vrot.lane.b32.xlu0 %v1717, 48
      %v2516 = vpop.permute.xlu0 %2515
      %2517 = vrot.lane.b32.xlu0 %v1718, 48
      %v2518 = vpop.permute.xlu0 %2517
      %2519 = vrot.lane.b32.xlu0 %v1719, 48
      %v2520 = vpop.permute.xlu0 %2519
      %2521 = vrot.lane.b32.xlu0 %v1720, 48
      %v2522 = vpop.permute.xlu0 %2521
      %2523 = vrot.lane.b32.xlu0 %v1721, 48
      %v2524 = vpop.permute.xlu0 %2523
      %2525 = vrot.lane.b32.xlu0 %v1722, 48
      %v2526 = vpop.permute.xlu0 %2525
      %2527 = vrot.lane.b32.xlu0 %v1723, 48
      %v2528 = vpop.permute.xlu0 %2527
      %2529 = vrot.lane.b32.xlu0 %v1724, 48
      %v2530 = vpop.permute.xlu0 %2529
      %2531 = vrot.lane.b32.xlu0 %v1725, 48
      %v2532 = vpop.permute.xlu0 %2531
      %2533 = vrot.lane.b32.xlu0 %v1726, 48
      %v2534 = vpop.permute.xlu0 %2533
      %2535 = vrot.lane.b32.xlu0 %v1727, 48
      %v2536 = vpop.permute.xlu0 %2535
      %2537 = vrot.lane.b32.xlu0 %v1728, 48
      %v2538 = vpop.permute.xlu0 %2537
      %2539 = vrot.lane.b32.xlu0 %v1729, 48
      %v2540 = vpop.permute.xlu0 %2539
      %2541 = vrot.lane.b32.xlu0 %v1730, 48
      %v2542 = vpop.permute.xlu0 %2541
      %2543 = vrot.lane.b32.xlu0 %v1731, 48
      %v2544 = vpop.permute.xlu0 %2543
      %2545 = vrot.lane.b32.xlu0 %v1732, 48
      %v2546 = vpop.permute.xlu0 %2545
      %2547 = vrot.lane.b32.xlu0 %v1733, 48
      %v2548 = vpop.permute.xlu0 %2547
      %2549 = vrot.lane.b32.xlu0 %v1734, 48
      %v2550 = vpop.permute.xlu0 %2549
      %2551 = vrot.lane.b32.xlu0 %v1735, 48
      %v2552 = vpop.permute.xlu0 %2551
      %2553 = vrot.lane.b32.xlu0 %v1736, 48
      %v2554 = vpop.permute.xlu0 %2553
      %2555 = vrot.lane.b32.xlu0 %v1737, 48
      %v2556 = vpop.permute.xlu0 %2555
      %2557 = vrot.lane.b32.xlu0 %v1738, 48
      %v2558 = vpop.permute.xlu0 %2557
      %2559 = vrot.lane.b32.xlu0 %v1739, 48
      %v2560 = vpop.permute.xlu0 %2559
      %2561 = vrot.lane.b32.xlu0 %v1740, 48
      %v2562 = vpop.permute.xlu0 %2561
      %2563 = vrot.lane.b32.xlu0 %v1741, 48
      %v2564 = vpop.permute.xlu0 %2563
      %2565 = vrot.lane.b32.xlu0 %v1742, 48
      %v2566 = vpop.permute.xlu0 %2565
      %2567 = vrot.lane.b32.xlu0 %v1743, 48
      %v2568 = vpop.permute.xlu0 %2567
      %2569 = vrot.lane.b32.xlu0 %v1744, 48
      %v2570 = vpop.permute.xlu0 %2569
      %2571 = vrot.lane.b32.xlu0 %v1745, 48
      %v2572 = vpop.permute.xlu0 %2571
      %2573 = vrot.lane.b32.xlu0 %v1746, 48
      %v2574 = vpop.permute.xlu0 %2573
      %2575 = vrot.lane.b32.xlu0 %v1747, 48
      %v2576 = vpop.permute.xlu0 %2575
      %2577 = vrot.lane.b32.xlu0 %v1748, 48
      %v2578 = vpop.permute.xlu0 %2577
      %2579 = vrot.lane.b32.xlu0 %v1749, 48
      %v2580 = vpop.permute.xlu0 %2579
      %2581 = vrot.lane.b32.xlu0 %v1750, 48
      %v2582 = vpop.permute.xlu0 %2581
      %2655 = vrot.lane.b32.xlu0 %v1751, 56
      %v2656 = vpop.permute.xlu0 %2655
      %2657 = vrot.lane.b32.xlu0 %v1752, 56
      %v2658 = vpop.permute.xlu0 %2657
      %2659 = vrot.lane.b32.xlu0 %v1753, 56
      %v2660 = vpop.permute.xlu0 %2659
      %2661 = vrot.lane.b32.xlu0 %v1754, 56
      %v2662 = vpop.permute.xlu0 %2661
      %2663 = vrot.lane.b32.xlu0 %v1755, 56
      %v2664 = vpop.permute.xlu0 %2663
      %2665 = vrot.lane.b32.xlu0 %v1756, 56
      %v2666 = vpop.permute.xlu0 %2665
      %2667 = vrot.lane.b32.xlu0 %v1757, 56
      %v2668 = vpop.permute.xlu0 %2667
      %2669 = vrot.lane.b32.xlu0 %v1758, 56
      %v2670 = vpop.permute.xlu0 %2669
      %2671 = vrot.lane.b32.xlu0 %v1759, 56
      %v2672 = vpop.permute.xlu0 %2671
      %2673 = vrot.lane.b32.xlu0 %v1760, 56
      %v2674 = vpop.permute.xlu0 %2673
      %2675 = vrot.lane.b32.xlu0 %v1761, 56
      %v2676 = vpop.permute.xlu0 %2675
      %2677 = vrot.lane.b32.xlu0 %v1762, 56
      %v2678 = vpop.permute.xlu0 %2677
      %2679 = vrot.lane.b32.xlu0 %v1763, 56
      %v2680 = vpop.permute.xlu0 %2679
      %2681 = vrot.lane.b32.xlu0 %v1764, 56
      %v2682 = vpop.permute.xlu0 %2681
      %2683 = vrot.lane.b32.xlu0 %v1765, 56
      %v2684 = vpop.permute.xlu0 %2683
      %2685 = vrot.lane.b32.xlu0 %v1766, 56
      %v2686 = vpop.permute.xlu0 %2685
      %2687 = vrot.lane.b32.xlu0 %v1767, 56
      %v2688 = vpop.permute.xlu0 %2687
      %2689 = vrot.lane.b32.xlu0 %v1768, 56
      %v2690 = vpop.permute.xlu0 %2689
      %2691 = vrot.lane.b32.xlu0 %v1769, 56
      %v2692 = vpop.permute.xlu0 %2691
      %2693 = vrot.lane.b32.xlu0 %v1770, 56
      %v2694 = vpop.permute.xlu0 %2693
      %2695 = vrot.lane.b32.xlu0 %v1771, 56
      %v2696 = vpop.permute.xlu0 %2695
      %2697 = vrot.lane.b32.xlu0 %v1772, 56
      %v2698 = vpop.permute.xlu0 %2697
      %2699 = vrot.lane.b32.xlu0 %v1773, 56
      %v2700 = vpop.permute.xlu0 %2699
      %2701 = vrot.lane.b32.xlu0 %v1774, 56
      %v2702 = vpop.permute.xlu0 %2701
      %2703 = vrot.lane.b32.xlu0 %v1775, 56
      %v2704 = vpop.permute.xlu0 %2703
      %2705 = vrot.lane.b32.xlu0 %v1776, 56
      %v2706 = vpop.permute.xlu0 %2705
      %2707 = vrot.lane.b32.xlu0 %v1777, 56
      %v2708 = vpop.permute.xlu0 %2707
      %2709 = vrot.lane.b32.xlu0 %v1778, 56
      %v2710 = vpop.permute.xlu0 %2709
      %2711 = vrot.lane.b32.xlu0 %v1779, 56
      %v2712 = vpop.permute.xlu0 %2711
      %2713 = vrot.lane.b32.xlu0 %v1780, 56
      %v2714 = vpop.permute.xlu0 %2713
      %2715 = vrot.lane.b32.xlu0 %v1781, 56
      %v2716 = vpop.permute.xlu0 %2715
      %2717 = vrot.lane.b32.xlu0 %v1782, 56
      %v2718 = vpop.permute.xlu0 %2717
      %2719 = vrot.lane.b32.xlu0 %v1783, 56
      %v2720 = vpop.permute.xlu0 %2719
      %2721 = vrot.lane.b32.xlu0 %v1784, 56
      %v2722 = vpop.permute.xlu0 %2721
      %2723 = vrot.lane.b32.xlu0 %v1785, 56
      %v2724 = vpop.permute.xlu0 %2723
      %2725 = vrot.lane.b32.xlu0 %v1786, 56
      %v2726 = vpop.permute.xlu0 %2725
      %2799 = vrot.lane.b32.xlu0 %v1787, 64
      %v2800 = vpop.permute.xlu0 %2799
      %2801 = vrot.lane.b32.xlu0 %v1788, 64
      %v2802 = vpop.permute.xlu0 %2801
      %2803 = vrot.lane.b32.xlu0 %v1789, 64
      %v2804 = vpop.permute.xlu0 %2803
      %2805 = vrot.lane.b32.xlu0 %v1790, 64
      %v2806 = vpop.permute.xlu0 %2805
      %2807 = vrot.lane.b32.xlu0 %v1791, 64
      %v2808 = vpop.permute.xlu0 %2807
      %2809 = vrot.lane.b32.xlu0 %v1792, 64
      %v2810 = vpop.permute.xlu0 %2809
      %2811 = vrot.lane.b32.xlu0 %v1793, 64
      %v2812 = vpop.permute.xlu0 %2811
      %2813 = vrot.lane.b32.xlu0 %v1794, 64
      %v2814 = vpop.permute.xlu0 %2813
      %2815 = vrot.lane.b32.xlu0 %v1795, 64
      %v2816 = vpop.permute.xlu0 %2815
      %2817 = vrot.lane.b32.xlu0 %v1796, 64
      %v2818 = vpop.permute.xlu0 %2817
      %2819 = vrot.lane.b32.xlu0 %v1797, 64
      %v2820 = vpop.permute.xlu0 %2819
      %2821 = vrot.lane.b32.xlu0 %v1798, 64
      %v2822 = vpop.permute.xlu0 %2821
      %2823 = vrot.lane.b32.xlu0 %v1799, 64
      %v2824 = vpop.permute.xlu0 %2823
      %2825 = vrot.lane.b32.xlu0 %v1800, 64
      %v2826 = vpop.permute.xlu0 %2825
      %2827 = vrot.lane.b32.xlu0 %v1801, 64
      %v2828 = vpop.permute.xlu0 %2827
      %2829 = vrot.lane.b32.xlu0 %v1802, 64
      %v2830 = vpop.permute.xlu0 %2829
      %2831 = vrot.lane.b32.xlu0 %v1803, 64
      %v2832 = vpop.permute.xlu0 %2831
      %2833 = vrot.lane.b32.xlu0 %v1804, 64
      %v2834 = vpop.permute.xlu0 %2833
      %2835 = vrot.lane.b32.xlu0 %v1805, 64
      %v2836 = vpop.permute.xlu0 %2835
      %2837 = vrot.lane.b32.xlu0 %v1806, 64
      %v2838 = vpop.permute.xlu0 %2837
      %2839 = vrot.lane.b32.xlu0 %v1807, 64
      %v2840 = vpop.permute.xlu0 %2839
      %2841 = vrot.lane.b32.xlu0 %v1808, 64
      %v2842 = vpop.permute.xlu0 %2841
      %2843 = vrot.lane.b32.xlu0 %v1809, 64
      %v2844 = vpop.permute.xlu0 %2843
      %2845 = vrot.lane.b32.xlu0 %v1810, 64
      %v2846 = vpop.permute.xlu0 %2845
      %2847 = vrot.lane.b32.xlu0 %v1811, 64
      %v2848 = vpop.permute.xlu0 %2847
      %2849 = vrot.lane.b32.xlu0 %v1812, 64
      %v2850 = vpop.permute.xlu0 %2849
      %2851 = vrot.lane.b32.xlu0 %v1813, 64
      %v2852 = vpop.permute.xlu0 %2851
      %2853 = vrot.lane.b32.xlu0 %v1814, 64
      %v2854 = vpop.permute.xlu0 %2853
      %2855 = vrot.lane.b32.xlu0 %v1815, 64
      %v2856 = vpop.permute.xlu0 %2855
      %2857 = vrot.lane.b32.xlu0 %v1816, 64
      %v2858 = vpop.permute.xlu0 %2857
      %2859 = vrot.lane.b32.xlu0 %v1817, 64
      %v2860 = vpop.permute.xlu0 %2859
      %2861 = vrot.lane.b32.xlu0 %v1818, 64
      %v2862 = vpop.permute.xlu0 %2861
      %2863 = vrot.lane.b32.xlu0 %v1819, 64
      %v2864 = vpop.permute.xlu0 %2863
      %2865 = vrot.lane.b32.xlu0 %v1820, 64
      %v2866 = vpop.permute.xlu0 %2865
      %2867 = vrot.lane.b32.xlu0 %v1821, 64
      %v2868 = vpop.permute.xlu0 %2867
      %2869 = vrot.lane.b32.xlu0 %v1822, 64
      %v2870 = vpop.permute.xlu0 %2869
      %vm2907 = vcmask 64512
      %v2908 = vsel %vm2907, %v1567, %v1860
      %v2909 = vsel %vm2907, %v1568, %v1862
      %v2910 = vsel %vm2907, %v1569, %v1864
      %v2911 = vsel %vm2907, %v1570, %v1866
      %v2912 = vsel %vm2907, %v1571, %v1868
      %v2913 = vsel %vm2907, %v1572, %v1870
      %v2914 = vsel %vm2907, %v1573, %v1872
      %v2915 = vsel %vm2907, %v1574, %v1874
      %v2916 = vsel %vm2907, %v1575, %v1876
      %v2917 = vsel %vm2907, %v1576, %v1878
      %v2918 = vsel %vm2907, %v1577, %v1880
      %v2919 = vsel %vm2907, %v1578, %v1882
      %v2920 = vsel %vm2907, %v1579, %v1884
      %v2921 = vsel %vm2907, %v1580, %v1886
      %v2922 = vsel %vm2907, %v1581, %v1888
      %v2923 = vsel %vm2907, %v1582, %v1890
      %v2924 = vsel %vm2907, %v1583, %v1892
      %v2925 = vsel %vm2907, %v1584, %v1894
      %v2926 = vsel %vm2907, %v1585, %v1896
      %v2927 = vsel %vm2907, %v1586, %v1898
      %v2928 = vsel %vm2907, %v1587, %v1900
      %v2929 = vsel %vm2907, %v1588, %v1902
      %v2930 = vsel %vm2907, %v1589, %v1904
      %v2931 = vsel %vm2907, %v1590, %v1906
      %v2932 = vsel %vm2907, %v1591, %v1908
      %v2933 = vsel %vm2907, %v1592, %v1910
      %v2934 = vsel %vm2907, %v1593, %v1912
      %v2935 = vsel %vm2907, %v1594, %v1914
      %v2936 = vsel %vm2907, %v1595, %v1916
      %v2937 = vsel %vm2907, %v1596, %v1918
      %v2938 = vsel %vm2907, %v1597, %v1920
      %v2939 = vsel %vm2907, %v1598, %v1922
      %v2940 = vsel %vm2907, %v1599, %v1924
      %v2941 = vsel %vm2907, %v1600, %v1926
      %v2942 = vsel %vm2907, %v1601, %v1928
      %v2943 = vsel %vm2907, %v1602, %v1930
      %vm2944 = vcmask 130048
      %v2945 = vsel %vm2944, %v2908, %v2004
      %v2946 = vsel %vm2944, %v2909, %v2006
      %v2947 = vsel %vm2944, %v2910, %v2008
      %v2948 = vsel %vm2944, %v2911, %v2010
      %v2949 = vsel %vm2944, %v2912, %v2012
      %v2950 = vsel %vm2944, %v2913, %v2014
      %v2951 = vsel %vm2944, %v2914, %v2016
      %v2952 = vsel %vm2944, %v2915, %v2018
      %v2953 = vsel %vm2944, %v2916, %v2020
      %v2954 = vsel %vm2944, %v2917, %v2022
      %v2955 = vsel %vm2944, %v2918, %v2024
      %v2956 = vsel %vm2944, %v2919, %v2026
      %v2957 = vsel %vm2944, %v2920, %v2028
      %v2958 = vsel %vm2944, %v2921, %v2030
      %v2959 = vsel %vm2944, %v2922, %v2032
      %v2960 = vsel %vm2944, %v2923, %v2034
      %v2961 = vsel %vm2944, %v2924, %v2036
      %v2962 = vsel %vm2944, %v2925, %v2038
      %v2963 = vsel %vm2944, %v2926, %v2040
      %v2964 = vsel %vm2944, %v2927, %v2042
      %v2965 = vsel %vm2944, %v2928, %v2044
      %v2966 = vsel %vm2944, %v2929, %v2046
      %v2967 = vsel %vm2944, %v2930, %v2048
      %v2968 = vsel %vm2944, %v2931, %v2050
      %v2969 = vsel %vm2944, %v2932, %v2052
      %v2970 = vsel %vm2944, %v2933, %v2054
      %v2971 = vsel %vm2944, %v2934, %v2056
      %v2972 = vsel %vm2944, %v2935, %v2058
      %v2973 = vsel %vm2944, %v2936, %v2060
      %v2974 = vsel %vm2944, %v2937, %v2062
      %v2975 = vsel %vm2944, %v2938, %v2064
      %v2976 = vsel %vm2944, %v2939, %v2066
      %v2977 = vsel %vm2944, %v2940, %v2068
      %v2978 = vsel %vm2944, %v2941, %v2070
      %v2979 = vsel %vm2944, %v2942, %v2072
      %v2980 = vsel %vm2944, %v2943, %v2074
      %vm2981 = vcmask 195584
      %v2982 = vsel %vm2981, %v2945, %v2114
      %v2983 = vsel %vm2981, %v2946, %v2116
      %v2984 = vsel %vm2981, %v2947, %v2118
      %v2985 = vsel %vm2981, %v2948, %v2120
      %v2986 = vsel %vm2981, %v2949, %v2122
      %v2987 = vsel %vm2981, %v2950, %v2124
      %v2988 = vsel %vm2981, %v2951, %v2126
      %v2989 = vsel %vm2981, %v2952, %v2128
      %v2990 = vsel %vm2981, %v2953, %v2130
      %v2991 = vsel %vm2981, %v2954, %v2132
      %v2992 = vsel %vm2981, %v2955, %v2134
      %v2993 = vsel %vm2981, %v2956, %v2136
      %v2994 = vsel %vm2981, %v2957, %v2138
      %v2995 = vsel %vm2981, %v2958, %v2140
      %v2996 = vsel %vm2981, %v2959, %v2142
      %v2997 = vsel %vm2981, %v2960, %v2144
      %v2998 = vsel %vm2981, %v2961, %v2146
      %v2999 = vsel %vm2981, %v2962, %v2148
      %v3000 = vsel %vm2981, %v2963, %v2150
      %v3001 = vsel %vm2981, %v2964, %v2152
      %v3002 = vsel %vm2981, %v2965, %v2154
      %v3003 = vsel %vm2981, %v2966, %v2156
      %v3004 = vsel %vm2981, %v2967, %v2158
      %v3005 = vsel %vm2981, %v2968, %v2160
      %v3006 = vsel %vm2981, %v2969, %v2162
      %v3007 = vsel %vm2981, %v2970, %v2164
      %v3008 = vsel %vm2981, %v2971, %v2166
      %v3009 = vsel %vm2981, %v2972, %v2168
      %v3010 = vsel %vm2981, %v2973, %v2170
      %v3011 = vsel %vm2981, %v2974, %v2172
      %v3012 = vsel %vm2981, %v2975, %v2174
      %v3013 = vsel %vm2981, %v2976, %v2176
      %v3014 = vsel %vm2981, %v2977, %v2178
      %v3015 = vsel %vm2981, %v2978, %v2180
      %v3016 = vsel %vm2981, %v2979, %v2182
      %v3017 = vsel %vm2981, %v2980, %v2184
      %vm3018 = vcmask 261120
      %v3019 = vsel %vm3018, %v2982, %v2258
      %v3020 = vsel %vm3018, %v2983, %v2260
      %v3021 = vsel %vm3018, %v2984, %v2262
      %v3022 = vsel %vm3018, %v2985, %v2264
      %v3023 = vsel %vm3018, %v2986, %v2266
      %v3024 = vsel %vm3018, %v2987, %v2268
      %v3025 = vsel %vm3018, %v2988, %v2270
      %v3026 = vsel %vm3018, %v2989, %v2272
      %v3027 = vsel %vm3018, %v2990, %v2274
      %v3028 = vsel %vm3018, %v2991, %v2276
      %v3029 = vsel %vm3018, %v2992, %v2278
      %v3030 = vsel %vm3018, %v2993, %v2280
      %v3031 = vsel %vm3018, %v2994, %v2282
      %v3032 = vsel %vm3018, %v2995, %v2284
      %v3033 = vsel %vm3018, %v2996, %v2286
      %v3034 = vsel %vm3018, %v2997, %v2288
      %v3035 = vsel %vm3018, %v2998, %v2290
      %v3036 = vsel %vm3018, %v2999, %v2292
      %v3037 = vsel %vm3018, %v3000, %v2294
      %v3038 = vsel %vm3018, %v3001, %v2296
      %v3039 = vsel %vm3018, %v3002, %v2298
      %v3040 = vsel %vm3018, %v3003, %v2300
      %v3041 = vsel %vm3018, %v3004, %v2302
      %v3042 = vsel %vm3018, %v3005, %v2304
      %v3043 = vsel %vm3018, %v3006, %v2306
      %v3044 = vsel %vm3018, %v3007, %v2308
      %v3045 = vsel %vm3018, %v3008, %v2310
      %v3046 = vsel %vm3018, %v3009, %v2312
      %v3047 = vsel %vm3018, %v3010, %v2314
      %v3048 = vsel %vm3018, %v3011, %v2316
      %v3049 = vsel %vm3018, %v3012, %v2318
      %v3050 = vsel %vm3018, %v3013, %v2320
      %v3051 = vsel %vm3018, %v3014, %v2322
      %v3052 = vsel %vm3018, %v3015, %v2324
      %v3053 = vsel %vm3018, %v3016, %v2326
      %v3054 = vsel %vm3018, %v3017, %v2328
      %vm3055 = vcmask 326656
      %v3056 = vsel %vm3055, %v3019, %v2402
      %v3057 = vsel %vm3055, %v3020, %v2404
      %v3058 = vsel %vm3055, %v3021, %v2406
      %v3059 = vsel %vm3055, %v3022, %v2408
      %v3060 = vsel %vm3055, %v3023, %v2410
      %v3061 = vsel %vm3055, %v3024, %v2412
      %v3062 = vsel %vm3055, %v3025, %v2414
      %v3063 = vsel %vm3055, %v3026, %v2416
      %v3064 = vsel %vm3055, %v3027, %v2418
      %v3065 = vsel %vm3055, %v3028, %v2420
      %v3066 = vsel %vm3055, %v3029, %v2422
      %v3067 = vsel %vm3055, %v3030, %v2424
      %v3068 = vsel %vm3055, %v3031, %v2426
      %v3069 = vsel %vm3055, %v3032, %v2428
      %v3070 = vsel %vm3055, %v3033, %v2430
      %v3071 = vsel %vm3055, %v3034, %v2432
      %v3072 = vsel %vm3055, %v3035, %v2434
      %v3073 = vsel %vm3055, %v3036, %v2436
      %v3074 = vsel %vm3055, %v3037, %v2438
      %v3075 = vsel %vm3055, %v3038, %v2440
      %v3076 = vsel %vm3055, %v3039, %v2442
      %v3077 = vsel %vm3055, %v3040, %v2444
      %v3078 = vsel %vm3055, %v3041, %v2446
      %v3079 = vsel %vm3055, %v3042, %v2448
      %v3080 = vsel %vm3055, %v3043, %v2450
      %v3081 = vsel %vm3055, %v3044, %v2452
      %v3082 = vsel %vm3055, %v3045, %v2454
      %v3083 = vsel %vm3055, %v3046, %v2456
      %v3084 = vsel %vm3055, %v3047, %v2458
      %v3085 = vsel %vm3055, %v3048, %v2460
      %v3086 = vsel %vm3055, %v3049, %v2462
      %v3087 = vsel %vm3055, %v3050, %v2464
      %v3088 = vsel %vm3055, %v3051, %v2466
      %v3089 = vsel %vm3055, %v3052, %v2468
      %v3090 = vsel %vm3055, %v3053, %v2470
      %v3091 = vsel %vm3055, %v3054, %v2472
      %vm3092 = vcmask 392192
      %v3093 = vsel %vm3092, %v3056, %v2512
      %v3094 = vsel %vm3092, %v3057, %v2514
      %v3095 = vsel %vm3092, %v3058, %v2516
      %v3096 = vsel %vm3092, %v3059, %v2518
      %v3097 = vsel %vm3092, %v3060, %v2520
      %v3098 = vsel %vm3092, %v3061, %v2522
      %v3099 = vsel %vm3092, %v3062, %v2524
      %v3100 = vsel %vm3092, %v3063, %v2526
      %v3101 = vsel %vm3092, %v3064, %v2528
      %v3102 = vsel %vm3092, %v3065, %v2530
      %v3103 = vsel %vm3092, %v3066, %v2532
      %v3104 = vsel %vm3092, %v3067, %v2534
      %v3105 = vsel %vm3092, %v3068, %v2536
      %v3106 = vsel %vm3092, %v3069, %v2538
      %v3107 = vsel %vm3092, %v3070, %v2540
      %v3108 = vsel %vm3092, %v3071, %v2542
      %v3109 = vsel %vm3092, %v3072, %v2544
      %v3110 = vsel %vm3092, %v3073, %v2546
      %v3111 = vsel %vm3092, %v3074, %v2548
      %v3112 = vsel %vm3092, %v3075, %v2550
      %v3113 = vsel %vm3092, %v3076, %v2552
      %v3114 = vsel %vm3092, %v3077, %v2554
      %v3115 = vsel %vm3092, %v3078, %v2556
      %v3116 = vsel %vm3092, %v3079, %v2558
      %v3117 = vsel %vm3092, %v3080, %v2560
      %v3118 = vsel %vm3092, %v3081, %v2562
      %v3119 = vsel %vm3092, %v3082, %v2564
      %v3120 = vsel %vm3092, %v3083, %v2566
      %v3121 = vsel %vm3092, %v3084, %v2568
      %v3122 = vsel %vm3092, %v3085, %v2570
      %v3123 = vsel %vm3092, %v3086, %v2572
      %v3124 = vsel %vm3092, %v3087, %v2574
      %v3125 = vsel %vm3092, %v3088, %v2576
      %v3126 = vsel %vm3092, %v3089, %v2578
      %v3127 = vsel %vm3092, %v3090, %v2580
      %v3128 = vsel %vm3092, %v3091, %v2582
      %vm3129 = vcmask 457728
      %v3130 = vsel %vm3129, %v3093, %v2656
      %v3131 = vsel %vm3129, %v3094, %v2658
      %v3132 = vsel %vm3129, %v3095, %v2660
      %v3133 = vsel %vm3129, %v3096, %v2662
      %v3134 = vsel %vm3129, %v3097, %v2664
      %v3135 = vsel %vm3129, %v3098, %v2666
      %v3136 = vsel %vm3129, %v3099, %v2668
      %v3137 = vsel %vm3129, %v3100, %v2670
      %v3138 = vsel %vm3129, %v3101, %v2672
      %v3139 = vsel %vm3129, %v3102, %v2674
      %v3140 = vsel %vm3129, %v3103, %v2676
      %v3141 = vsel %vm3129, %v3104, %v2678
      %v3142 = vsel %vm3129, %v3105, %v2680
      %v3143 = vsel %vm3129, %v3106, %v2682
      %v3144 = vsel %vm3129, %v3107, %v2684
      %v3145 = vsel %vm3129, %v3108, %v2686
      %v3146 = vsel %vm3129, %v3109, %v2688
      %v3147 = vsel %vm3129, %v3110, %v2690
      %v3148 = vsel %vm3129, %v3111, %v2692
      %v3149 = vsel %vm3129, %v3112, %v2694
      %v3150 = vsel %vm3129, %v3113, %v2696
      %v3151 = vsel %vm3129, %v3114, %v2698
      %v3152 = vsel %vm3129, %v3115, %v2700
      %v3153 = vsel %vm3129, %v3116, %v2702
      %v3154 = vsel %vm3129, %v3117, %v2704
      %v3155 = vsel %vm3129, %v3118, %v2706
      %v3156 = vsel %vm3129, %v3119, %v2708
      %v3157 = vsel %vm3129, %v3120, %v2710
      %v3158 = vsel %vm3129, %v3121, %v2712
      %v3159 = vsel %vm3129, %v3122, %v2714
      %v3160 = vsel %vm3129, %v3123, %v2716
      %v3161 = vsel %vm3129, %v3124, %v2718
      %v3162 = vsel %vm3129, %v3125, %v2720
      %v3163 = vsel %vm3129, %v3126, %v2722
      %v3164 = vsel %vm3129, %v3127, %v2724
      %v3165 = vsel %vm3129, %v3128, %v2726
      %vm3166 = vcmask 523264
      %v3167 = vsel %vm3166, %v3130, %v2800
      %v3168 = vsel %vm3166, %v3131, %v2802
      %v3169 = vsel %vm3166, %v3132, %v2804
      %v3170 = vsel %vm3166, %v3133, %v2806
      %v3171 = vsel %vm3166, %v3134, %v2808
      %v3172 = vsel %vm3166, %v3135, %v2810
      %v3173 = vsel %vm3166, %v3136, %v2812
      %v3174 = vsel %vm3166, %v3137, %v2814
      %v3175 = vsel %vm3166, %v3138, %v2816
      %v3176 = vsel %vm3166, %v3139, %v2818
      %v3177 = vsel %vm3166, %v3140, %v2820
      %v3178 = vsel %vm3166, %v3141, %v2822
      %v3179 = vsel %vm3166, %v3142, %v2824
      %v3180 = vsel %vm3166, %v3143, %v2826
      %v3181 = vsel %vm3166, %v3144, %v2828
      %v3182 = vsel %vm3166, %v3145, %v2830
      %v3183 = vsel %vm3166, %v3146, %v2832
      %v3184 = vsel %vm3166, %v3147, %v2834
      %v3185 = vsel %vm3166, %v3148, %v2836
      %v3186 = vsel %vm3166, %v3149, %v2838
      %v3187 = vsel %vm3166, %v3150, %v2840
      %v3188 = vsel %vm3166, %v3151, %v2842
      %v3189 = vsel %vm3166, %v3152, %v2844
      %v3190 = vsel %vm3166, %v3153, %v2846
      %v3191 = vsel %vm3166, %v3154, %v2848
      %v3192 = vsel %vm3166, %v3155, %v2850
      %v3193 = vsel %vm3166, %v3156, %v2852
      %v3194 = vsel %vm3166, %v3157, %v2854
      %v3195 = vsel %vm3166, %v3158, %v2856
      %v3196 = vsel %vm3166, %v3159, %v2858
      %v3197 = vsel %vm3166, %v3160, %v2860
      %v3198 = vsel %vm3166, %v3161, %v2862
      %v3199 = vsel %vm3166, %v3162, %v2864
      %v3200 = vsel %vm3166, %v3163, %v2866
      %v3201 = vsel %vm3166, %v3164, %v2868
      %v3202 = vsel %vm3166, %v3165, %v2870
      %v3203 = vpack.c.bf16 %v3168, %v3167
      %v3204 = vpack.c.bf16 %v3170, %v3169
      %v3205 = vpack.c.bf16 %v3172, %v3171
      %v3206 = vpack.c.bf16 %v3174, %v3173
      %v3207 = vpack.c.bf16 %v3176, %v3175
      %v3208 = vpack.c.bf16 %v3178, %v3177
      %v3209 = vpack.c.bf16 %v3180, %v3179
      %v3210 = vpack.c.bf16 %v3182, %v3181
      %v3211 = vpack.c.bf16 %v3184, %v3183
      %v3212 = vpack.c.bf16 %v3186, %v3185
      %v3213 = vpack.c.bf16 %v3188, %v3187
      %v3214 = vpack.c.bf16 %v3190, %v3189
      %v3215 = vpack.c.bf16 %v3192, %v3191
      %v3216 = vpack.c.bf16 %v3194, %v3193
      %v3217 = vpack.c.bf16 %v3196, %v3195
      %v3218 = vpack.c.bf16 %v3198, %v3197
      %v3219 = vpack.c.bf16 %v3200, %v3199
      %v3220 = vpack.c.bf16 %v3202, %v3201
      %v3230 = vunpack.c.l.b16 %v1549
      %v3231 = vunpack.c.l.b16 %v1550
      %v3232 = vunpack.c.l.b16 %v1551
      %v3233 = vunpack.c.l.b16 %v1552
      %v3234 = vunpack.c.l.b16 %v1553
      %v3235 = vunpack.c.l.b16 %v1554
      %v3236 = vunpack.c.l.b16 %v1555
      %v3237 = vunpack.c.l.b16 %v1556
      %v3238 = vunpack.c.l.b16 %v1557
      %v3239 = vpack.c.b16 %v3231, %v3230
      %v3240 = vpack.c.b16 %v3233, %v3232
      %v3241 = vpack.c.b16 %v3235, %v3234
      %v3242 = vpack.c.b16 %v3237, %v3236
      %v3243 = vpack.c.b16 %v3238, %v3238
      %vm3248 = vcmask 588800
      %v3250 = vsel %vm3248, %v3203, 0
      %v3253 = vsel %vm3248, %v3204, 0
      %v3256 = vsel %vm3248, %v3205, 0
      %v3259 = vsel %vm3248, %v3206, 0
      %v3262 = vsel %vm3248, %v3207, 0
      %v3265 = vsel %vm3248, %v3208, 0
      %v3268 = vsel %vm3248, %v3209, 0
      %v3271 = vsel %vm3248, %v3210, 0
      %v3274 = vsel %vm3248, %v3211, 0
      %v3277 = vsel %vm3248, %v3212, 0
      %v3280 = vsel %vm3248, %v3213, 0
      %v3283 = vsel %vm3248, %v3214, 0
      %v3286 = vsel %vm3248, %v3215, 0
      %v3289 = vsel %vm3248, %v3216, 0
      %v3292 = vsel %vm3248, %v3217, 0
      %v3295 = vsel %vm3248, %v3218, 0
      %v3298 = vsel %vm3248, %v3219, 0
      %v3301 = vsel %vm3248, %v3220, 0
      %vm3303 = vcmask 1043456
      %v3305 = vsel %vm3303, %v3243, 0
      %3307 = vmatpush.bf16.msra.mxu0 0
      %3308 = vmatpush.bf16.msra.mxu0 0
      %3309 = vmatpush.bf16.msra.mxu0 0
      %3310 = vmatpush.bf16.msra.mxu0 %v3305
      %3311 = vmatpush.bf16.msra.mxu0 %v3242
      %3312 = vmatpush.bf16.msra.mxu0 %v3241
      %3313 = vmatpush.bf16.msra.mxu0 %v3240
      %3314 = vmatpush.bf16.msra.mxu0 %v3239
      %3315 = vmatmul.bf16.gmra.mxu0 %v3250
      %v3316 = vpop.f32.mrf.mxu0
      %v3317 = vadd.f32 0.0, %v3316
      %v3318 = vpop.f32.mrf.mxu0
      %v3319 = vadd.f32 0.0, %v3318
      %3320 = vmatmul.bf16.gmra.mxu0 %v3253
      %v3321 = vpop.f32.mrf.mxu0
      %v3322 = vadd.f32 0.0, %v3321
      %v3323 = vpop.f32.mrf.mxu0
      %v3324 = vadd.f32 0.0, %v3323
      %3325 = vmatmul.bf16.gmra.mxu0 %v3256
      %v3326 = vpop.f32.mrf.mxu0
      %v3327 = vadd.f32 0.0, %v3326
      %v3328 = vpop.f32.mrf.mxu0
      %v3329 = vadd.f32 0.0, %v3328
      %3330 = vmatmul.bf16.gmra.mxu0 %v3259
      %v3331 = vpop.f32.mrf.mxu0
      %v3332 = vadd.f32 0.0, %v3331
      %v3333 = vpop.f32.mrf.mxu0
      %v3334 = vadd.f32 0.0, %v3333
      %3335 = vmatmul.bf16.gmra.mxu0 %v3262
      %v3336 = vpop.f32.mrf.mxu0
      %v3337 = vadd.f32 0.0, %v3336
      %v3338 = vpop.f32.mrf.mxu0
      %v3339 = vadd.f32 0.0, %v3338
      %3340 = vmatmul.bf16.gmra.mxu0 %v3265
      %v3341 = vpop.f32.mrf.mxu0
      %v3342 = vadd.f32 0.0, %v3341
      %v3343 = vpop.f32.mrf.mxu0
      %v3344 = vadd.f32 0.0, %v3343
      %3345 = vmatmul.bf16.gmra.mxu0 %v3268
      %v3346 = vpop.f32.mrf.mxu0
      %v3347 = vadd.f32 0.0, %v3346
      %v3348 = vpop.f32.mrf.mxu0
      %v3349 = vadd.f32 0.0, %v3348
      %3350 = vmatmul.bf16.gmra.mxu0 %v3271
      %v3351 = vpop.f32.mrf.mxu0
      %v3352 = vadd.f32 0.0, %v3351
      %v3353 = vpop.f32.mrf.mxu0
      %v3354 = vadd.f32 0.0, %v3353
      %3355 = vmatmul.bf16.gmra.mxu0 %v3274
      %v3356 = vpop.f32.mrf.mxu0
      %v3357 = vadd.f32 0.0, %v3356
      %v3358 = vpop.f32.mrf.mxu0
      %v3359 = vadd.f32 0.0, %v3358
      %3360 = vmatmul.bf16.gmra.mxu0 %v3277
      %v3361 = vpop.f32.mrf.mxu0
      %v3362 = vadd.f32 0.0, %v3361
      %v3363 = vpop.f32.mrf.mxu0
      %v3364 = vadd.f32 0.0, %v3363
      %3365 = vmatmul.bf16.gmra.mxu0 %v3280
      %v3366 = vpop.f32.mrf.mxu0
      %v3367 = vadd.f32 0.0, %v3366
      %v3368 = vpop.f32.mrf.mxu0
      %v3369 = vadd.f32 0.0, %v3368
      %3370 = vmatmul.bf16.gmra.mxu0 %v3283
      %v3371 = vpop.f32.mrf.mxu0
      %v3372 = vadd.f32 0.0, %v3371
      %v3373 = vpop.f32.mrf.mxu0
      %v3374 = vadd.f32 0.0, %v3373
      %3375 = vmatmul.bf16.gmra.mxu0 %v3286
      %v3376 = vpop.f32.mrf.mxu0
      %v3377 = vadd.f32 0.0, %v3376
      %v3378 = vpop.f32.mrf.mxu0
      %v3379 = vadd.f32 0.0, %v3378
      %3380 = vmatmul.bf16.gmra.mxu0 %v3289
      %v3381 = vpop.f32.mrf.mxu0
      %v3382 = vadd.f32 0.0, %v3381
      %v3383 = vpop.f32.mrf.mxu0
      %v3384 = vadd.f32 0.0, %v3383
      %3385 = vmatmul.bf16.gmra.mxu0 %v3292
      %v3386 = vpop.f32.mrf.mxu0
      %v3387 = vadd.f32 0.0, %v3386
      %v3388 = vpop.f32.mrf.mxu0
      %v3389 = vadd.f32 0.0, %v3388
      %3390 = vmatmul.bf16.gmra.mxu0 %v3295
      %v3391 = vpop.f32.mrf.mxu0
      %v3392 = vadd.f32 0.0, %v3391
      %v3393 = vpop.f32.mrf.mxu0
      %v3394 = vadd.f32 0.0, %v3393
      %3395 = vmatmul.bf16.gmra.mxu0 %v3298
      %v3396 = vpop.f32.mrf.mxu0
      %v3397 = vadd.f32 0.0, %v3396
      %v3398 = vpop.f32.mrf.mxu0
      %v3399 = vadd.f32 0.0, %v3398
      %3400 = vmatmul.bf16.gmra.mxu0 %v3301
      %v3401 = vpop.f32.mrf.mxu0
      %v3402 = vadd.f32 0.0, %v3401
      %v3403 = vpop.f32.mrf.mxu0
      %v3404 = vadd.f32 0.0, %v3403
      %3405 = vdwg.mxu0
      %v3406 = vmul.f32 %v3317, %v1513
      %v3407 = vmul.f32 %v3319, %v1514
      %v3408 = vmul.f32 %v3322, %v1515
      %v3409 = vmul.f32 %v3324, %v1516
      %v3410 = vmul.f32 %v3327, %v1517
      %v3411 = vmul.f32 %v3329, %v1518
      %v3412 = vmul.f32 %v3332, %v1519
      %v3413 = vmul.f32 %v3334, %v1520
      %v3414 = vmul.f32 %v3337, %v1521
      %v3415 = vmul.f32 %v3339, %v1522
      %v3416 = vmul.f32 %v3342, %v1523
      %v3417 = vmul.f32 %v3344, %v1524
      %v3418 = vmul.f32 %v3347, %v1525
      %v3419 = vmul.f32 %v3349, %v1526
      %v3420 = vmul.f32 %v3352, %v1527
      %v3421 = vmul.f32 %v3354, %v1528
      %v3422 = vmul.f32 %v3357, %v1529
      %v3423 = vmul.f32 %v3359, %v1530
      %v3424 = vmul.f32 %v3362, %v1531
      %v3425 = vmul.f32 %v3364, %v1532
      %v3426 = vmul.f32 %v3367, %v1533
      %v3427 = vmul.f32 %v3369, %v1534
      %v3428 = vmul.f32 %v3372, %v1535
      %v3429 = vmul.f32 %v3374, %v1536
      %v3430 = vmul.f32 %v3377, %v1537
      %v3431 = vmul.f32 %v3379, %v1538
      %v3432 = vmul.f32 %v3382, %v1539
      %v3433 = vmul.f32 %v3384, %v1540
      %v3434 = vmul.f32 %v3387, %v1541
      %v3435 = vmul.f32 %v3389, %v1542
      %v3436 = vmul.f32 %v3392, %v1543
      %v3437 = vmul.f32 %v3394, %v1544
      %v3438 = vmul.f32 %v3397, %v1545
      %v3439 = vmul.f32 %v3399, %v1546
      %v3440 = vmul.f32 %v3402, %v1547
      %v3441 = vmul.f32 %v3404, %v1548
      %v3442 = vsel %vm2907, %v3406, 0.0
      %v3443 = vsel %vm2907, %v3407, 0.0
      %v3444 = vadd.f32 %v3442, %v3443
      %v3445 = vsel %vm2907, %v3408, 0.0
      %v3446 = vadd.f32 %v3444, %v3445
      %v3447 = vsel %vm2907, %v3409, 0.0
      %v3448 = vadd.f32 %v3446, %v3447
      %v3449 = vsel %vm2907, %v3410, 0.0
      %v3450 = vadd.f32 %v3448, %v3449
      %v3451 = vsel %vm2907, %v3411, 0.0
      %v3452 = vadd.f32 %v3450, %v3451
      %v3453 = vsel %vm2907, %v3412, 0.0
      %v3454 = vadd.f32 %v3452, %v3453
      %v3455 = vsel %vm2907, %v3413, 0.0
      %v3456 = vadd.f32 %v3454, %v3455
      %v3457 = vsel %vm2907, %v3414, 0.0
      %v3458 = vadd.f32 %v3456, %v3457
      %v3459 = vsel %vm2907, %v3415, 0.0
      %v3460 = vadd.f32 %v3458, %v3459
      %v3461 = vsel %vm2907, %v3416, 0.0
      %v3462 = vadd.f32 %v3460, %v3461
      %v3463 = vsel %vm2907, %v3417, 0.0
      %v3464 = vadd.f32 %v3462, %v3463
      %v3465 = vsel %vm2907, %v3418, 0.0
      %v3466 = vadd.f32 %v3464, %v3465
      %v3467 = vsel %vm2907, %v3419, 0.0
      %v3468 = vadd.f32 %v3466, %v3467
      %v3469 = vsel %vm2907, %v3420, 0.0
      %v3470 = vadd.f32 %v3468, %v3469
      %v3471 = vsel %vm2907, %v3421, 0.0
      %v3472 = vadd.f32 %v3470, %v3471
      %v3473 = vsel %vm2907, %v3422, 0.0
      %v3474 = vadd.f32 %v3472, %v3473
      %v3475 = vsel %vm2907, %v3423, 0.0
      %v3476 = vadd.f32 %v3474, %v3475
      %v3477 = vsel %vm2907, %v3424, 0.0
      %v3478 = vadd.f32 %v3476, %v3477
      %v3479 = vsel %vm2907, %v3425, 0.0
      %v3480 = vadd.f32 %v3478, %v3479
      %v3481 = vsel %vm2907, %v3426, 0.0
      %v3482 = vadd.f32 %v3480, %v3481
      %v3483 = vsel %vm2907, %v3427, 0.0
      %v3484 = vadd.f32 %v3482, %v3483
      %v3485 = vsel %vm2907, %v3428, 0.0
      %v3486 = vadd.f32 %v3484, %v3485
      %v3487 = vsel %vm2907, %v3429, 0.0
      %v3488 = vadd.f32 %v3486, %v3487
      %v3489 = vsel %vm2907, %v3430, 0.0
      %v3490 = vadd.f32 %v3488, %v3489
      %v3491 = vsel %vm2907, %v3431, 0.0
      %v3492 = vadd.f32 %v3490, %v3491
      %v3493 = vsel %vm2907, %v3432, 0.0
      %v3494 = vadd.f32 %v3492, %v3493
      %v3495 = vsel %vm2907, %v3433, 0.0
      %v3496 = vadd.f32 %v3494, %v3495
      %v3497 = vsel %vm2907, %v3434, 0.0
      %v3498 = vadd.f32 %v3496, %v3497
      %v3499 = vsel %vm2907, %v3435, 0.0
      %v3500 = vadd.f32 %v3498, %v3499
      %v3501 = vsel %vm2907, %v3436, 0.0
      %v3502 = vadd.f32 %v3500, %v3501
      %v3503 = vsel %vm2907, %v3437, 0.0
      %v3504 = vadd.f32 %v3502, %v3503
      %v3505 = vsel %vm2907, %v3438, 0.0
      %v3506 = vadd.f32 %v3504, %v3505
      %v3507 = vsel %vm2907, %v3439, 0.0
      %v3508 = vadd.f32 %v3506, %v3507
      %v3509 = vsel %vm2907, %v3440, 0.0
      %v3510 = vadd.f32 %v3508, %v3509
      %v3511 = vsel %vm2907, %v3441, 0.0
      %v3512 = vadd.f32 %v3510, %v3511
      %v3513 = vrot.slane %v3512, 4
      %v3514 = vadd.f32 %v3512, %v3513
      %v3515 = vrot.slane %v3514, 2
      %v3516 = vadd.f32 %v3514, %v3515
      %v3517 = vrot.slane %v3516, 1
      %v3518 = vadd.f32 %v3516, %v3517
      %v3519 = vmul.f32 %v3518, 0.00390625
      %v3520 = vsub.f32 %v3317, %v3519
      %v3521 = vsub.f32 %v3319, %v3519
      %v3522 = vsub.f32 %v3322, %v3519
      %v3523 = vsub.f32 %v3324, %v3519
      %v3524 = vsub.f32 %v3327, %v3519
      %v3525 = vsub.f32 %v3329, %v3519
      %v3526 = vsub.f32 %v3332, %v3519
      %v3527 = vsub.f32 %v3334, %v3519
      %v3528 = vsub.f32 %v3337, %v3519
      %v3529 = vsub.f32 %v3339, %v3519
      %v3530 = vsub.f32 %v3342, %v3519
      %v3531 = vsub.f32 %v3344, %v3519
      %v3532 = vsub.f32 %v3347, %v3519
      %v3533 = vsub.f32 %v3349, %v3519
      %v3534 = vsub.f32 %v3352, %v3519
      %v3535 = vsub.f32 %v3354, %v3519
      %v3536 = vsub.f32 %v3357, %v3519
      %v3537 = vsub.f32 %v3359, %v3519
      %v3538 = vsub.f32 %v3362, %v3519
      %v3539 = vsub.f32 %v3364, %v3519
      %v3540 = vsub.f32 %v3367, %v3519
      %v3541 = vsub.f32 %v3369, %v3519
      %v3542 = vsub.f32 %v3372, %v3519
      %v3543 = vsub.f32 %v3374, %v3519
      %v3544 = vsub.f32 %v3377, %v3519
      %v3545 = vsub.f32 %v3379, %v3519
      %v3546 = vsub.f32 %v3382, %v3519
      %v3547 = vsub.f32 %v3384, %v3519
      %v3548 = vsub.f32 %v3387, %v3519
      %v3549 = vsub.f32 %v3389, %v3519
      %v3550 = vsub.f32 %v3392, %v3519
      %v3551 = vsub.f32 %v3394, %v3519
      %v3552 = vsub.f32 %v3397, %v3519
      %v3553 = vsub.f32 %v3399, %v3519
      %v3554 = vsub.f32 %v3402, %v3519
      %v3555 = vsub.f32 %v3404, %v3519
      %v3556 = vmul.f32 %v3520, %v3520
      %v3557 = vmul.f32 %v3521, %v3521
      %v3558 = vmul.f32 %v3522, %v3522
      %v3559 = vmul.f32 %v3523, %v3523
      %v3560 = vmul.f32 %v3524, %v3524
      %v3561 = vmul.f32 %v3525, %v3525
      %v3562 = vmul.f32 %v3526, %v3526
      %v3563 = vmul.f32 %v3527, %v3527
      %v3564 = vmul.f32 %v3528, %v3528
      %v3565 = vmul.f32 %v3529, %v3529
      %v3566 = vmul.f32 %v3530, %v3530
      %v3567 = vmul.f32 %v3531, %v3531
      %v3568 = vmul.f32 %v3532, %v3532
      %v3569 = vmul.f32 %v3533, %v3533
      %v3570 = vmul.f32 %v3534, %v3534
      %v3571 = vmul.f32 %v3535, %v3535
      %v3572 = vmul.f32 %v3536, %v3536
      %v3573 = vmul.f32 %v3537, %v3537
      %v3574 = vmul.f32 %v3538, %v3538
      %v3575 = vmul.f32 %v3539, %v3539
      %v3576 = vmul.f32 %v3540, %v3540
      %v3577 = vmul.f32 %v3541, %v3541
      %v3578 = vmul.f32 %v3542, %v3542
      %v3579 = vmul.f32 %v3543, %v3543
      %v3580 = vmul.f32 %v3544, %v3544
      %v3581 = vmul.f32 %v3545, %v3545
      %v3582 = vmul.f32 %v3546, %v3546
      %v3583 = vmul.f32 %v3547, %v3547
      %v3584 = vmul.f32 %v3548, %v3548
      %v3585 = vmul.f32 %v3549, %v3549
      %v3586 = vmul.f32 %v3550, %v3550
      %v3587 = vmul.f32 %v3551, %v3551
      %v3588 = vmul.f32 %v3552, %v3552
      %v3589 = vmul.f32 %v3553, %v3553
      %v3590 = vmul.f32 %v3554, %v3554
      %v3591 = vmul.f32 %v3555, %v3555
      %v3592 = vmul.f32 %v3556, %v1513
      %v3593 = vmul.f32 %v3557, %v1514
      %v3594 = vmul.f32 %v3558, %v1515
      %v3595 = vmul.f32 %v3559, %v1516
      %v3596 = vmul.f32 %v3560, %v1517
      %v3597 = vmul.f32 %v3561, %v1518
      %v3598 = vmul.f32 %v3562, %v1519
      %v3599 = vmul.f32 %v3563, %v1520
      %v3600 = vmul.f32 %v3564, %v1521
      %v3601 = vmul.f32 %v3565, %v1522
      %v3602 = vmul.f32 %v3566, %v1523
      %v3603 = vmul.f32 %v3567, %v1524
      %v3604 = vmul.f32 %v3568, %v1525
      %v3605 = vmul.f32 %v3569, %v1526
      %v3606 = vmul.f32 %v3570, %v1527
      %v3607 = vmul.f32 %v3571, %v1528
      %v3608 = vmul.f32 %v3572, %v1529
      %v3609 = vmul.f32 %v3573, %v1530
      %v3610 = vmul.f32 %v3574, %v1531
      %v3611 = vmul.f32 %v3575, %v1532
      %v3612 = vmul.f32 %v3576, %v1533
      %v3613 = vmul.f32 %v3577, %v1534
      %v3614 = vmul.f32 %v3578, %v1535
      %v3615 = vmul.f32 %v3579, %v1536
      %v3616 = vmul.f32 %v3580, %v1537
      %v3617 = vmul.f32 %v3581, %v1538
      %v3618 = vmul.f32 %v3582, %v1539
      %v3619 = vmul.f32 %v3583, %v1540
      %v3620 = vmul.f32 %v3584, %v1541
      %v3621 = vmul.f32 %v3585, %v1542
      %v3622 = vmul.f32 %v3586, %v1543
      %v3623 = vmul.f32 %v3587, %v1544
      %v3624 = vmul.f32 %v3588, %v1545
      %v3625 = vmul.f32 %v3589, %v1546
      %v3626 = vmul.f32 %v3590, %v1547
      %v3627 = vmul.f32 %v3591, %v1548
      %v3628 = vsel %vm2907, %v3592, 0.0
      %v3629 = vsel %vm2907, %v3593, 0.0
      %v3630 = vadd.f32 %v3628, %v3629
      %v3631 = vsel %vm2907, %v3594, 0.0
      %v3632 = vadd.f32 %v3630, %v3631
      %v3633 = vsel %vm2907, %v3595, 0.0
      %v3634 = vadd.f32 %v3632, %v3633
      %v3635 = vsel %vm2907, %v3596, 0.0
      %v3636 = vadd.f32 %v3634, %v3635
      %v3637 = vsel %vm2907, %v3597, 0.0
      %v3638 = vadd.f32 %v3636, %v3637
      %v3639 = vsel %vm2907, %v3598, 0.0
      %v3640 = vadd.f32 %v3638, %v3639
      %v3641 = vsel %vm2907, %v3599, 0.0
      %v3642 = vadd.f32 %v3640, %v3641
      %v3643 = vsel %vm2907, %v3600, 0.0
      %v3644 = vadd.f32 %v3642, %v3643
      %v3645 = vsel %vm2907, %v3601, 0.0
      %v3646 = vadd.f32 %v3644, %v3645
      %v3647 = vsel %vm2907, %v3602, 0.0
      %v3648 = vadd.f32 %v3646, %v3647
      %v3649 = vsel %vm2907, %v3603, 0.0
      %v3650 = vadd.f32 %v3648, %v3649
      %v3651 = vsel %vm2907, %v3604, 0.0
      %v3652 = vadd.f32 %v3650, %v3651
      %v3653 = vsel %vm2907, %v3605, 0.0
      %v3654 = vadd.f32 %v3652, %v3653
      %v3655 = vsel %vm2907, %v3606, 0.0
      %v3656 = vadd.f32 %v3654, %v3655
      %v3657 = vsel %vm2907, %v3607, 0.0
      %v3658 = vadd.f32 %v3656, %v3657
      %v3659 = vsel %vm2907, %v3608, 0.0
      %v3660 = vadd.f32 %v3658, %v3659
      %v3661 = vsel %vm2907, %v3609, 0.0
      %v3662 = vadd.f32 %v3660, %v3661
      %v3663 = vsel %vm2907, %v3610, 0.0
      %v3664 = vadd.f32 %v3662, %v3663
      %v3665 = vsel %vm2907, %v3611, 0.0
      %v3666 = vadd.f32 %v3664, %v3665
      %v3667 = vsel %vm2907, %v3612, 0.0
      %v3668 = vadd.f32 %v3666, %v3667
      %v3669 = vsel %vm2907, %v3613, 0.0
      %v3670 = vadd.f32 %v3668, %v3669
      %v3671 = vsel %vm2907, %v3614, 0.0
      %v3672 = vadd.f32 %v3670, %v3671
      %v3673 = vsel %vm2907, %v3615, 0.0
      %v3674 = vadd.f32 %v3672, %v3673
      %v3675 = vsel %vm2907, %v3616, 0.0
      %v3676 = vadd.f32 %v3674, %v3675
      %v3677 = vsel %vm2907, %v3617, 0.0
      %v3678 = vadd.f32 %v3676, %v3677
      %v3679 = vsel %vm2907, %v3618, 0.0
      %v3680 = vadd.f32 %v3678, %v3679
      %v3681 = vsel %vm2907, %v3619, 0.0
      %v3682 = vadd.f32 %v3680, %v3681
      %v3683 = vsel %vm2907, %v3620, 0.0
      %v3684 = vadd.f32 %v3682, %v3683
      %v3685 = vsel %vm2907, %v3621, 0.0
      %v3686 = vadd.f32 %v3684, %v3685
      %v3687 = vsel %vm2907, %v3622, 0.0
      %v3688 = vadd.f32 %v3686, %v3687
      %v3689 = vsel %vm2907, %v3623, 0.0
      %v3690 = vadd.f32 %v3688, %v3689
      %v3691 = vsel %vm2907, %v3624, 0.0
      %v3692 = vadd.f32 %v3690, %v3691
      %v3693 = vsel %vm2907, %v3625, 0.0
      %v3694 = vadd.f32 %v3692, %v3693
      %v3695 = vsel %vm2907, %v3626, 0.0
      %v3696 = vadd.f32 %v3694, %v3695
      %v3697 = vsel %vm2907, %v3627, 0.0
      %v3698 = vadd.f32 %v3696, %v3697
      %v3699 = vrot.slane %v3698, 4
      %v3700 = vadd.f32 %v3698, %v3699
      %v3701 = vrot.slane %v3700, 2
      %v3702 = vadd.f32 %v3700, %v3701
      %v3703 = vrot.slane %v3702, 1
      %v3704 = vadd.f32 %v3702, %v3703
      %v3705 = vmul.f32 %v3704, 0.00390625
      %v3706 = vadd.f32 %v3705, 1e-05
      %v3707 = vrsqrt.pop %v3706
      %v3708 = vmul.f32 %v3707, %v3706
      %v3709 = vmul.f32 %v3708, %v3707
      %v3710 = vmul.f32 0.5, %v3709
      %v3711 = vsub.f32 1.5, %v3710
      %v3712 = vmul.f32 %v3707, %v3711
      %vm3713 = vweird.f32 %v3706
      %vm3714 = vweird.f32 %v3707
      %vm3715 = vmor %vm3713, %vm3714
      %v3716 = vsel %vm3715, %v3707, %v3712
      %v3717 = vmul.f32 %v3520, %v3716
      %v3718 = vmul.f32 %v3521, %v3716
      %v3719 = vmul.f32 %v3522, %v3716
      %v3720 = vmul.f32 %v3523, %v3716
      %v3721 = vmul.f32 %v3524, %v3716
      %v3722 = vmul.f32 %v3525, %v3716
      %v3723 = vmul.f32 %v3526, %v3716
      %v3724 = vmul.f32 %v3527, %v3716
      %v3725 = vmul.f32 %v3528, %v3716
      %v3726 = vmul.f32 %v3529, %v3716
      %v3727 = vmul.f32 %v3530, %v3716
      %v3728 = vmul.f32 %v3531, %v3716
      %v3729 = vmul.f32 %v3532, %v3716
      %v3730 = vmul.f32 %v3533, %v3716
      %v3731 = vmul.f32 %v3534, %v3716
      %v3732 = vmul.f32 %v3535, %v3716
      %v3733 = vmul.f32 %v3536, %v3716
      %v3734 = vmul.f32 %v3537, %v3716
      %v3735 = vmul.f32 %v3538, %v3716
      %v3736 = vmul.f32 %v3539, %v3716
      %v3737 = vmul.f32 %v3540, %v3716
      %v3738 = vmul.f32 %v3541, %v3716
      %v3739 = vmul.f32 %v3542, %v3716
      %v3740 = vmul.f32 %v3543, %v3716
      %v3741 = vmul.f32 %v3544, %v3716
      %v3742 = vmul.f32 %v3545, %v3716
      %v3743 = vmul.f32 %v3546, %v3716
      %v3744 = vmul.f32 %v3547, %v3716
      %v3745 = vmul.f32 %v3548, %v3716
      %v3746 = vmul.f32 %v3549, %v3716
      %v3747 = vmul.f32 %v3550, %v3716
      %v3748 = vmul.f32 %v3551, %v3716
      %v3749 = vmul.f32 %v3552, %v3716
      %v3750 = vmul.f32 %v3553, %v3716
      %v3751 = vmul.f32 %v3554, %v3716
      %v3752 = vmul.f32 %v3555, %v3716
      %v3753 = vmax.f32 %v3717, 0.0
      %v3754 = vmax.f32 %v3718, 0.0
      %v3755 = vmax.f32 %v3719, 0.0
      %v3756 = vmax.f32 %v3720, 0.0
      %v3757 = vmax.f32 %v3721, 0.0
      %v3758 = vmax.f32 %v3722, 0.0
      %v3759 = vmax.f32 %v3723, 0.0
      %v3760 = vmax.f32 %v3724, 0.0
      %v3761 = vmax.f32 %v3725, 0.0
      %v3762 = vmax.f32 %v3726, 0.0
      %v3763 = vmax.f32 %v3727, 0.0
      %v3764 = vmax.f32 %v3728, 0.0
      %v3765 = vmax.f32 %v3729, 0.0
      %v3766 = vmax.f32 %v3730, 0.0
      %v3767 = vmax.f32 %v3731, 0.0
      %v3768 = vmax.f32 %v3732, 0.0
      %v3769 = vmax.f32 %v3733, 0.0
      %v3770 = vmax.f32 %v3734, 0.0
      %v3771 = vmax.f32 %v3735, 0.0
      %v3772 = vmax.f32 %v3736, 0.0
      %v3773 = vmax.f32 %v3737, 0.0
      %v3774 = vmax.f32 %v3738, 0.0
      %v3775 = vmax.f32 %v3739, 0.0
      %v3776 = vmax.f32 %v3740, 0.0
      %v3777 = vmax.f32 %v3741, 0.0
      %v3778 = vmax.f32 %v3742, 0.0
      %v3779 = vmax.f32 %v3743, 0.0
      %v3780 = vmax.f32 %v3744, 0.0
      %v3781 = vmax.f32 %v3745, 0.0
      %v3782 = vmax.f32 %v3746, 0.0
      %v3783 = vmax.f32 %v3747, 0.0
      %v3784 = vmax.f32 %v3748, 0.0
      %v3785 = vmax.f32 %v3749, 0.0
      %v3786 = vmax.f32 %v3750, 0.0
      %v3787 = vmax.f32 %v3751, 0.0
      %v3788 = vmax.f32 %v3752, 0.0
      %v3789 = vmul.f32 %v3753, %v1513
      %v3790 = vmul.f32 %v3754, %v1514
      %v3791 = vmul.f32 %v3755, %v1515
      %v3792 = vmul.f32 %v3756, %v1516
      %v3793 = vmul.f32 %v3757, %v1517
      %v3794 = vmul.f32 %v3758, %v1518
      %v3795 = vmul.f32 %v3759, %v1519
      %v3796 = vmul.f32 %v3760, %v1520
      %v3797 = vmul.f32 %v3761, %v1521
      %v3798 = vmul.f32 %v3762, %v1522
      %v3799 = vmul.f32 %v3763, %v1523
      %v3800 = vmul.f32 %v3764, %v1524
      %v3801 = vmul.f32 %v3765, %v1525
      %v3802 = vmul.f32 %v3766, %v1526
      %v3803 = vmul.f32 %v3767, %v1527
      %v3804 = vmul.f32 %v3768, %v1528
      %v3805 = vmul.f32 %v3769, %v1529
      %v3806 = vmul.f32 %v3770, %v1530
      %v3807 = vmul.f32 %v3771, %v1531
      %v3808 = vmul.f32 %v3772, %v1532
      %v3809 = vmul.f32 %v3773, %v1533
      %v3810 = vmul.f32 %v3774, %v1534
      %v3811 = vmul.f32 %v3775, %v1535
      %v3812 = vmul.f32 %v3776, %v1536
      %v3813 = vmul.f32 %v3777, %v1537
      %v3814 = vmul.f32 %v3778, %v1538
      %v3815 = vmul.f32 %v3779, %v1539
      %v3816 = vmul.f32 %v3780, %v1540
      %v3817 = vmul.f32 %v3781, %v1541
      %v3818 = vmul.f32 %v3782, %v1542
      %v3819 = vmul.f32 %v3783, %v1543
      %v3820 = vmul.f32 %v3784, %v1544
      %v3821 = vmul.f32 %v3785, %v1545
      %v3822 = vmul.f32 %v3786, %v1546
      %v3823 = vmul.f32 %v3787, %v1547
      %v3824 = vmul.f32 %v3788, %v1548
      %vm3859 = vcmask 1042432
      %v3860 = vrot.slane %v3789, 5
      %v3861 = vrot.slane %v3790, 5
      %v3862 = vsel %vm3859, %v3860, %v3861
      %v3863 = vrot.slane %v3791, 5
      %v3864 = vsel %vm3859, %v3861, %v3863
      %v3865 = vrot.slane %v3792, 5
      %v3866 = vsel %vm3859, %v3863, %v3865
      %v3867 = vrot.slane %v3793, 5
      %v3868 = vsel %vm3859, %v3865, %v3867
      %v3869 = vrot.slane %v3794, 5
      %v3870 = vsel %vm3859, %v3867, %v3869
      %v3871 = vrot.slane %v3795, 5
      %v3872 = vsel %vm3859, %v3869, %v3871
      %v3873 = vrot.slane %v3796, 5
      %v3874 = vsel %vm3859, %v3871, %v3873
      %v3875 = vrot.slane %v3797, 5
      %v3876 = vsel %vm3859, %v3873, %v3875
      %v3877 = vrot.slane %v3798, 5
      %v3878 = vsel %vm3859, %v3875, %v3877
      %v3879 = vrot.slane %v3799, 5
      %v3880 = vsel %vm3859, %v3877, %v3879
      %v3881 = vrot.slane %v3800, 5
      %v3882 = vsel %vm3859, %v3879, %v3881
      %v3883 = vrot.slane %v3801, 5
      %v3884 = vsel %vm3859, %v3881, %v3883
      %v3885 = vrot.slane %v3802, 5
      %v3886 = vsel %vm3859, %v3883, %v3885
      %v3887 = vrot.slane %v3803, 5
      %v3888 = vsel %vm3859, %v3885, %v3887
      %v3889 = vrot.slane %v3804, 5
      %v3890 = vsel %vm3859, %v3887, %v3889
      %v3891 = vrot.slane %v3805, 5
      %v3892 = vsel %vm3859, %v3889, %v3891
      %v3893 = vrot.slane %v3806, 5
      %v3894 = vsel %vm3859, %v3891, %v3893
      %v3895 = vrot.slane %v3807, 5
      %v3896 = vsel %vm3859, %v3893, %v3895
      %v3897 = vrot.slane %v3808, 5
      %v3898 = vsel %vm3859, %v3895, %v3897
      %v3899 = vrot.slane %v3809, 5
      %v3900 = vsel %vm3859, %v3897, %v3899
      %v3901 = vrot.slane %v3810, 5
      %v3902 = vsel %vm3859, %v3899, %v3901
      %v3903 = vrot.slane %v3811, 5
      %v3904 = vsel %vm3859, %v3901, %v3903
      %v3905 = vrot.slane %v3812, 5
      %v3906 = vsel %vm3859, %v3903, %v3905
      %v3907 = vrot.slane %v3813, 5
      %v3908 = vsel %vm3859, %v3905, %v3907
      %v3909 = vrot.slane %v3814, 5
      %v3910 = vsel %vm3859, %v3907, %v3909
      %v3911 = vrot.slane %v3815, 5
      %v3912 = vsel %vm3859, %v3909, %v3911
      %v3913 = vrot.slane %v3816, 5
      %v3914 = vsel %vm3859, %v3911, %v3913
      %v3915 = vrot.slane %v3817, 5
      %v3916 = vsel %vm3859, %v3913, %v3915
      %v3917 = vrot.slane %v3818, 5
      %v3918 = vsel %vm3859, %v3915, %v3917
      %v3919 = vrot.slane %v3819, 5
      %v3920 = vsel %vm3859, %v3917, %v3919
      %v3921 = vrot.slane %v3820, 5
      %v3922 = vsel %vm3859, %v3919, %v3921
      %v3923 = vrot.slane %v3821, 5
      %v3924 = vsel %vm3859, %v3921, %v3923
      %v3925 = vrot.slane %v3822, 5
      %v3926 = vsel %vm3859, %v3923, %v3925
      %v3961 = vsel %vm3859, 0.0, %v3860
      %vm3962 = vcmask 1041408
      %v3963 = vrot.slane %v3789, 6
      %v3964 = vrot.slane %v3790, 6
      %v3965 = vsel %vm3962, %v3963, %v3964
      %v3966 = vrot.slane %v3791, 6
      %v3967 = vsel %vm3962, %v3964, %v3966
      %v3968 = vrot.slane %v3792, 6
      %v3969 = vsel %vm3962, %v3966, %v3968
      %v3970 = vrot.slane %v3793, 6
      %v3971 = vsel %vm3962, %v3968, %v3970
      %v3972 = vrot.slane %v3794, 6
      %v3973 = vsel %vm3962, %v3970, %v3972
      %v3974 = vrot.slane %v3795, 6
      %v3975 = vsel %vm3962, %v3972, %v3974
      %v3976 = vrot.slane %v3796, 6
      %v3977 = vsel %vm3962, %v3974, %v3976
      %v3978 = vrot.slane %v3797, 6
      %v3979 = vsel %vm3962, %v3976, %v3978
      %v3980 = vrot.slane %v3798, 6
      %v3981 = vsel %vm3962, %v3978, %v3980
      %v3982 = vrot.slane %v3799, 6
      %v3983 = vsel %vm3962, %v3980, %v3982
      %v3984 = vrot.slane %v3800, 6
      %v3985 = vsel %vm3962, %v3982, %v3984
      %v3986 = vrot.slane %v3801, 6
      %v3987 = vsel %vm3962, %v3984, %v3986
      %v3988 = vrot.slane %v3802, 6
      %v3989 = vsel %vm3962, %v3986, %v3988
      %v3990 = vrot.slane %v3803, 6
      %v3991 = vsel %vm3962, %v3988, %v3990
      %v3992 = vrot.slane %v3804, 6
      %v3993 = vsel %vm3962, %v3990, %v3992
      %v3994 = vrot.slane %v3805, 6
      %v3995 = vsel %vm3962, %v3992, %v3994
      %v3996 = vrot.slane %v3806, 6
      %v3997 = vsel %vm3962, %v3994, %v3996
      %v3998 = vrot.slane %v3807, 6
      %v3999 = vsel %vm3962, %v3996, %v3998
      %v4000 = vrot.slane %v3808, 6
      %v4001 = vsel %vm3962, %v3998, %v4000
      %v4002 = vrot.slane %v3809, 6
      %v4003 = vsel %vm3962, %v4000, %v4002
      %v4004 = vrot.slane %v3810, 6
      %v4005 = vsel %vm3962, %v4002, %v4004
      %v4006 = vrot.slane %v3811, 6
      %v4007 = vsel %vm3962, %v4004, %v4006
      %v4008 = vrot.slane %v3812, 6
      %v4009 = vsel %vm3962, %v4006, %v4008
      %v4010 = vrot.slane %v3813, 6
      %v4011 = vsel %vm3962, %v4008, %v4010
      %v4012 = vrot.slane %v3814, 6
      %v4013 = vsel %vm3962, %v4010, %v4012
      %v4014 = vrot.slane %v3815, 6
      %v4015 = vsel %vm3962, %v4012, %v4014
      %v4016 = vrot.slane %v3816, 6
      %v4017 = vsel %vm3962, %v4014, %v4016
      %v4018 = vrot.slane %v3817, 6
      %v4019 = vsel %vm3962, %v4016, %v4018
      %v4020 = vrot.slane %v3818, 6
      %v4021 = vsel %vm3962, %v4018, %v4020
      %v4022 = vrot.slane %v3819, 6
      %v4023 = vsel %vm3962, %v4020, %v4022
      %v4024 = vrot.slane %v3820, 6
      %v4025 = vsel %vm3962, %v4022, %v4024
      %v4026 = vrot.slane %v3821, 6
      %v4027 = vsel %vm3962, %v4024, %v4026
      %v4028 = vrot.slane %v3822, 6
      %v4029 = vsel %vm3962, %v4026, %v4028
      %v4031 = vsel %vm3962, 0.0, %v3963
      %vm4032 = vcmask 1040384
      %v4033 = vrot.slane %v3789, 7
      %v4034 = vrot.slane %v3790, 7
      %v4035 = vsel %vm4032, %v4033, %v4034
      %v4036 = vrot.slane %v3791, 7
      %v4037 = vsel %vm4032, %v4034, %v4036
      %v4038 = vrot.slane %v3792, 7
      %v4039 = vsel %vm4032, %v4036, %v4038
      %v4040 = vrot.slane %v3793, 7
      %v4041 = vsel %vm4032, %v4038, %v4040
      %v4042 = vrot.slane %v3794, 7
      %v4043 = vsel %vm4032, %v4040, %v4042
      %v4044 = vrot.slane %v3795, 7
      %v4045 = vsel %vm4032, %v4042, %v4044
      %v4046 = vrot.slane %v3796, 7
      %v4047 = vsel %vm4032, %v4044, %v4046
      %v4048 = vrot.slane %v3797, 7
      %v4049 = vsel %vm4032, %v4046, %v4048
      %v4050 = vrot.slane %v3798, 7
      %v4051 = vsel %vm4032, %v4048, %v4050
      %v4052 = vrot.slane %v3799, 7
      %v4053 = vsel %vm4032, %v4050, %v4052
      %v4054 = vrot.slane %v3800, 7
      %v4055 = vsel %vm4032, %v4052, %v4054
      %v4056 = vrot.slane %v3801, 7
      %v4057 = vsel %vm4032, %v4054, %v4056
      %v4058 = vrot.slane %v3802, 7
      %v4059 = vsel %vm4032, %v4056, %v4058
      %v4060 = vrot.slane %v3803, 7
      %v4061 = vsel %vm4032, %v4058, %v4060
      %v4062 = vrot.slane %v3804, 7
      %v4063 = vsel %vm4032, %v4060, %v4062
      %v4064 = vrot.slane %v3805, 7
      %v4065 = vsel %vm4032, %v4062, %v4064
      %v4066 = vrot.slane %v3806, 7
      %v4067 = vsel %vm4032, %v4064, %v4066
      %v4068 = vrot.slane %v3807, 7
      %v4069 = vsel %vm4032, %v4066, %v4068
      %v4070 = vrot.slane %v3808, 7
      %v4071 = vsel %vm4032, %v4068, %v4070
      %v4072 = vrot.slane %v3809, 7
      %v4073 = vsel %vm4032, %v4070, %v4072
      %v4074 = vrot.slane %v3810, 7
      %v4075 = vsel %vm4032, %v4072, %v4074
      %v4076 = vrot.slane %v3811, 7
      %v4077 = vsel %vm4032, %v4074, %v4076
      %v4078 = vrot.slane %v3812, 7
      %v4079 = vsel %vm4032, %v4076, %v4078
      %v4080 = vrot.slane %v3813, 7
      %v4081 = vsel %vm4032, %v4078, %v4080
      %v4082 = vrot.slane %v3814, 7
      %v4083 = vsel %vm4032, %v4080, %v4082
      %v4084 = vrot.slane %v3815, 7
      %v4085 = vsel %vm4032, %v4082, %v4084
      %v4086 = vrot.slane %v3816, 7
      %v4087 = vsel %vm4032, %v4084, %v4086
      %v4088 = vrot.slane %v3817, 7
      %v4089 = vsel %vm4032, %v4086, %v4088
      %v4090 = vrot.slane %v3818, 7
      %v4091 = vsel %vm4032, %v4088, %v4090
      %v4092 = vrot.slane %v3819, 7
      %v4093 = vsel %vm4032, %v4090, %v4092
      %v4094 = vrot.slane %v3820, 7
      %v4095 = vsel %vm4032, %v4092, %v4094
      %v4096 = vrot.slane %v3821, 7
      %v4097 = vsel %vm4032, %v4094, %v4096
      %v4098 = vrot.slane %v3822, 7
      %v4099 = vsel %vm4032, %v4096, %v4098
      %v4101 = vsel %vm4032, 0.0, %v4033
      %v4104 = vrot.slane %v3823, 7
      %v4105 = vsel %vm4032, %v4098, %v4104
      %v4106 = vrot.slane %v3824, 7
      %v4107 = vsel %vm4032, %v4104, %v4106
      %vm4108 = vcmask 1046528
      %v4109 = vrot.slane %v3789, 1
      %v4110 = vrot.slane %v3790, 1
      %v4111 = vsel %vm4108, %v4109, %v4110
      %v4112 = vrot.slane %v3791, 1
      %v4113 = vsel %vm4108, %v4110, %v4112
      %v4114 = vrot.slane %v3792, 1
      %v4115 = vsel %vm4108, %v4112, %v4114
      %v4116 = vrot.slane %v3793, 1
      %v4117 = vsel %vm4108, %v4114, %v4116
      %v4118 = vrot.slane %v3794, 1
      %v4119 = vsel %vm4108, %v4116, %v4118
      %v4120 = vrot.slane %v3795, 1
      %v4121 = vsel %vm4108, %v4118, %v4120
      %v4122 = vrot.slane %v3796, 1
      %v4123 = vsel %vm4108, %v4120, %v4122
      %v4124 = vrot.slane %v3797, 1
      %v4125 = vsel %vm4108, %v4122, %v4124
      %v4126 = vrot.slane %v3798, 1
      %v4127 = vsel %vm4108, %v4124, %v4126
      %v4128 = vrot.slane %v3799, 1
      %v4129 = vsel %vm4108, %v4126, %v4128
      %v4130 = vrot.slane %v3800, 1
      %v4131 = vsel %vm4108, %v4128, %v4130
      %v4132 = vrot.slane %v3801, 1
      %v4133 = vsel %vm4108, %v4130, %v4132
      %v4134 = vrot.slane %v3802, 1
      %v4135 = vsel %vm4108, %v4132, %v4134
      %v4136 = vrot.slane %v3803, 1
      %v4137 = vsel %vm4108, %v4134, %v4136
      %v4138 = vrot.slane %v3804, 1
      %v4139 = vsel %vm4108, %v4136, %v4138
      %v4140 = vrot.slane %v3805, 1
      %v4141 = vsel %vm4108, %v4138, %v4140
      %v4142 = vrot.slane %v3806, 1
      %v4143 = vsel %vm4108, %v4140, %v4142
      %v4144 = vrot.slane %v3807, 1
      %v4145 = vsel %vm4108, %v4142, %v4144
      %v4146 = vrot.slane %v3808, 1
      %v4147 = vsel %vm4108, %v4144, %v4146
      %v4148 = vrot.slane %v3809, 1
      %v4149 = vsel %vm4108, %v4146, %v4148
      %v4150 = vrot.slane %v3810, 1
      %v4151 = vsel %vm4108, %v4148, %v4150
      %v4152 = vrot.slane %v3811, 1
      %v4153 = vsel %vm4108, %v4150, %v4152
      %v4154 = vrot.slane %v3812, 1
      %v4155 = vsel %vm4108, %v4152, %v4154
      %v4156 = vrot.slane %v3813, 1
      %v4157 = vsel %vm4108, %v4154, %v4156
      %v4158 = vrot.slane %v3814, 1
      %v4159 = vsel %vm4108, %v4156, %v4158
      %v4160 = vrot.slane %v3815, 1
      %v4161 = vsel %vm4108, %v4158, %v4160
      %v4162 = vrot.slane %v3816, 1
      %v4163 = vsel %vm4108, %v4160, %v4162
      %v4164 = vrot.slane %v3817, 1
      %v4165 = vsel %vm4108, %v4162, %v4164
      %v4166 = vrot.slane %v3818, 1
      %v4167 = vsel %vm4108, %v4164, %v4166
      %v4168 = vrot.slane %v3819, 1
      %v4169 = vsel %vm4108, %v4166, %v4168
      %v4170 = vrot.slane %v3820, 1
      %v4171 = vsel %vm4108, %v4168, %v4170
      %v4172 = vrot.slane %v3821, 1
      %v4173 = vsel %vm4108, %v4170, %v4172
      %v4174 = vrot.slane %v3822, 1
      %v4175 = vsel %vm4108, %v4172, %v4174
      %v4176 = vrot.slane %v3823, 1
      %v4177 = vsel %vm4108, %v4174, %v4176
      %v4178 = vrot.slane %v3824, 1
      %v4179 = vsel %vm4108, %v4176, %v4178
      %v4181 = vsel %vm4108, %v4178, 0.0
      %vm4182 = vcmask 1045504
      %v4183 = vrot.slane %v3791, 2
      %v4184 = vrot.slane %v3792, 2
      %v4185 = vsel %vm4182, %v4183, %v4184
      %v4186 = vrot.slane %v3793, 2
      %v4187 = vsel %vm4182, %v4184, %v4186
      %v4188 = vrot.slane %v3794, 2
      %v4189 = vsel %vm4182, %v4186, %v4188
      %v4190 = vrot.slane %v3795, 2
      %v4191 = vsel %vm4182, %v4188, %v4190
      %v4192 = vrot.slane %v3796, 2
      %v4193 = vsel %vm4182, %v4190, %v4192
      %v4194 = vrot.slane %v3797, 2
      %v4195 = vsel %vm4182, %v4192, %v4194
      %v4196 = vrot.slane %v3798, 2
      %v4197 = vsel %vm4182, %v4194, %v4196
      %v4198 = vrot.slane %v3799, 2
      %v4199 = vsel %vm4182, %v4196, %v4198
      %v4200 = vrot.slane %v3800, 2
      %v4201 = vsel %vm4182, %v4198, %v4200
      %v4202 = vrot.slane %v3801, 2
      %v4203 = vsel %vm4182, %v4200, %v4202
      %v4204 = vrot.slane %v3802, 2
      %v4205 = vsel %vm4182, %v4202, %v4204
      %v4206 = vrot.slane %v3803, 2
      %v4207 = vsel %vm4182, %v4204, %v4206
      %v4208 = vrot.slane %v3804, 2
      %v4209 = vsel %vm4182, %v4206, %v4208
      %v4210 = vrot.slane %v3805, 2
      %v4211 = vsel %vm4182, %v4208, %v4210
      %v4212 = vrot.slane %v3806, 2
      %v4213 = vsel %vm4182, %v4210, %v4212
      %v4214 = vrot.slane %v3807, 2
      %v4215 = vsel %vm4182, %v4212, %v4214
      %v4216 = vrot.slane %v3808, 2
      %v4217 = vsel %vm4182, %v4214, %v4216
      %v4218 = vrot.slane %v3809, 2
      %v4219 = vsel %vm4182, %v4216, %v4218
      %v4220 = vrot.slane %v3810, 2
      %v4221 = vsel %vm4182, %v4218, %v4220
      %v4222 = vrot.slane %v3811, 2
      %v4223 = vsel %vm4182, %v4220, %v4222
      %v4224 = vrot.slane %v3812, 2
      %v4225 = vsel %vm4182, %v4222, %v4224
      %v4226 = vrot.slane %v3813, 2
      %v4227 = vsel %vm4182, %v4224, %v4226
      %v4228 = vrot.slane %v3814, 2
      %v4229 = vsel %vm4182, %v4226, %v4228
      %v4230 = vrot.slane %v3815, 2
      %v4231 = vsel %vm4182, %v4228, %v4230
      %v4232 = vrot.slane %v3816, 2
      %v4233 = vsel %vm4182, %v4230, %v4232
      %v4234 = vrot.slane %v3817, 2
      %v4235 = vsel %vm4182, %v4232, %v4234
      %v4236 = vrot.slane %v3818, 2
      %v4237 = vsel %vm4182, %v4234, %v4236
      %v4238 = vrot.slane %v3819, 2
      %v4239 = vsel %vm4182, %v4236, %v4238
      %v4240 = vrot.slane %v3820, 2
      %v4241 = vsel %vm4182, %v4238, %v4240
      %v4242 = vrot.slane %v3821, 2
      %v4243 = vsel %vm4182, %v4240, %v4242
      %v4244 = vrot.slane %v3822, 2
      %v4245 = vsel %vm4182, %v4242, %v4244
      %v4246 = vrot.slane %v3823, 2
      %v4247 = vsel %vm4182, %v4244, %v4246
      %v4248 = vrot.slane %v3824, 2
      %v4249 = vsel %vm4182, %v4246, %v4248
      %v4251 = vsel %vm4182, %v4248, 0.0
      %vm4252 = vcmask 1044480
      %v4253 = vrot.slane %v3791, 3
      %v4254 = vrot.slane %v3792, 3
      %v4255 = vsel %vm4252, %v4253, %v4254
      %v4256 = vrot.slane %v3793, 3
      %v4257 = vsel %vm4252, %v4254, %v4256
      %v4258 = vrot.slane %v3794, 3
      %v4259 = vsel %vm4252, %v4256, %v4258
      %v4260 = vrot.slane %v3795, 3
      %v4261 = vsel %vm4252, %v4258, %v4260
      %v4262 = vrot.slane %v3796, 3
      %v4263 = vsel %vm4252, %v4260, %v4262
      %v4264 = vrot.slane %v3797, 3
      %v4265 = vsel %vm4252, %v4262, %v4264
      %v4266 = vrot.slane %v3798, 3
      %v4267 = vsel %vm4252, %v4264, %v4266
      %v4268 = vrot.slane %v3799, 3
      %v4269 = vsel %vm4252, %v4266, %v4268
      %v4270 = vrot.slane %v3800, 3
      %v4271 = vsel %vm4252, %v4268, %v4270
      %v4272 = vrot.slane %v3801, 3
      %v4273 = vsel %vm4252, %v4270, %v4272
      %v4274 = vrot.slane %v3802, 3
      %v4275 = vsel %vm4252, %v4272, %v4274
      %v4276 = vrot.slane %v3803, 3
      %v4277 = vsel %vm4252, %v4274, %v4276
      %v4278 = vrot.slane %v3804, 3
      %v4279 = vsel %vm4252, %v4276, %v4278
      %v4280 = vrot.slane %v3805, 3
      %v4281 = vsel %vm4252, %v4278, %v4280
      %v4282 = vrot.slane %v3806, 3
      %v4283 = vsel %vm4252, %v4280, %v4282
      %v4284 = vrot.slane %v3807, 3
      %v4285 = vsel %vm4252, %v4282, %v4284
      %v4286 = vrot.slane %v3808, 3
      %v4287 = vsel %vm4252, %v4284, %v4286
      %v4288 = vrot.slane %v3809, 3
      %v4289 = vsel %vm4252, %v4286, %v4288
      %v4290 = vrot.slane %v3810, 3
      %v4291 = vsel %vm4252, %v4288, %v4290
      %v4292 = vrot.slane %v3811, 3
      %v4293 = vsel %vm4252, %v4290, %v4292
      %v4294 = vrot.slane %v3812, 3
      %v4295 = vsel %vm4252, %v4292, %v4294
      %v4296 = vrot.slane %v3813, 3
      %v4297 = vsel %vm4252, %v4294, %v4296
      %v4298 = vrot.slane %v3814, 3
      %v4299 = vsel %vm4252, %v4296, %v4298
      %v4300 = vrot.slane %v3815, 3
      %v4301 = vsel %vm4252, %v4298, %v4300
      %v4302 = vrot.slane %v3816, 3
      %v4303 = vsel %vm4252, %v4300, %v4302
      %v4304 = vrot.slane %v3817, 3
      %v4305 = vsel %vm4252, %v4302, %v4304
      %v4306 = vrot.slane %v3818, 3
      %v4307 = vsel %vm4252, %v4304, %v4306
      %v4308 = vrot.slane %v3819, 3
      %v4309 = vsel %vm4252, %v4306, %v4308
      %v4310 = vrot.slane %v3820, 3
      %v4311 = vsel %vm4252, %v4308, %v4310
      %v4312 = vrot.slane %v3821, 3
      %v4313 = vsel %vm4252, %v4310, %v4312
      %v4314 = vrot.slane %v3822, 3
      %v4315 = vsel %vm4252, %v4312, %v4314
      %v4316 = vrot.slane %v3823, 3
      %v4317 = vsel %vm4252, %v4314, %v4316
      %v4318 = vrot.slane %v3824, 3
      %v4319 = vsel %vm4252, %v4316, %v4318
      %v4321 = vsel %vm4252, %v4318, 0.0
      %4324 = vrot.lane.b32.xlu0 0.0, 8
      %v4325 = vpop.permute.xlu0 %4324
      %4326 = vrot.lane.b32.xlu0 %v4031, 8
      %v4327 = vpop.permute.xlu0 %4326
      %4328 = vrot.lane.b32.xlu0 %v3965, 8
      %v4329 = vpop.permute.xlu0 %4328
      %4330 = vrot.lane.b32.xlu0 %v3967, 8
      %v4331 = vpop.permute.xlu0 %4330
      %4332 = vrot.lane.b32.xlu0 %v3969, 8
      %v4333 = vpop.permute.xlu0 %4332
      %4334 = vrot.lane.b32.xlu0 %v3971, 8
      %v4335 = vpop.permute.xlu0 %4334
      %4336 = vrot.lane.b32.xlu0 %v3973, 8
      %v4337 = vpop.permute.xlu0 %4336
      %4338 = vrot.lane.b32.xlu0 %v3975, 8
      %v4339 = vpop.permute.xlu0 %4338
      %4340 = vrot.lane.b32.xlu0 %v3977, 8
      %v4341 = vpop.permute.xlu0 %4340
      %4342 = vrot.lane.b32.xlu0 %v3979, 8
      %v4343 = vpop.permute.xlu0 %4342
      %4344 = vrot.lane.b32.xlu0 %v3981, 8
      %v4345 = vpop.permute.xlu0 %4344
      %4346 = vrot.lane.b32.xlu0 %v3983, 8
      %v4347 = vpop.permute.xlu0 %4346
      %4348 = vrot.lane.b32.xlu0 %v3985, 8
      %v4349 = vpop.permute.xlu0 %4348
      %4350 = vrot.lane.b32.xlu0 %v3987, 8
      %v4351 = vpop.permute.xlu0 %4350
      %4352 = vrot.lane.b32.xlu0 %v3989, 8
      %v4353 = vpop.permute.xlu0 %4352
      %4354 = vrot.lane.b32.xlu0 %v3991, 8
      %v4355 = vpop.permute.xlu0 %4354
      %4356 = vrot.lane.b32.xlu0 %v3993, 8
      %v4357 = vpop.permute.xlu0 %4356
      %4358 = vrot.lane.b32.xlu0 %v3995, 8
      %v4359 = vpop.permute.xlu0 %4358
      %4360 = vrot.lane.b32.xlu0 %v3997, 8
      %v4361 = vpop.permute.xlu0 %4360
      %4362 = vrot.lane.b32.xlu0 %v3999, 8
      %v4363 = vpop.permute.xlu0 %4362
      %4364 = vrot.lane.b32.xlu0 %v4001, 8
      %v4365 = vpop.permute.xlu0 %4364
      %4366 = vrot.lane.b32.xlu0 %v4003, 8
      %v4367 = vpop.permute.xlu0 %4366
      %4368 = vrot.lane.b32.xlu0 %v4005, 8
      %v4369 = vpop.permute.xlu0 %4368
      %4370 = vrot.lane.b32.xlu0 %v4007, 8
      %v4371 = vpop.permute.xlu0 %4370
      %4372 = vrot.lane.b32.xlu0 %v4009, 8
      %v4373 = vpop.permute.xlu0 %4372
      %4374 = vrot.lane.b32.xlu0 %v4011, 8
      %v4375 = vpop.permute.xlu0 %4374
      %4376 = vrot.lane.b32.xlu0 %v4013, 8
      %v4377 = vpop.permute.xlu0 %4376
      %4378 = vrot.lane.b32.xlu0 %v4015, 8
      %v4379 = vpop.permute.xlu0 %4378
      %4380 = vrot.lane.b32.xlu0 %v4017, 8
      %v4381 = vpop.permute.xlu0 %4380
      %4382 = vrot.lane.b32.xlu0 %v4019, 8
      %v4383 = vpop.permute.xlu0 %4382
      %4384 = vrot.lane.b32.xlu0 %v4021, 8
      %v4385 = vpop.permute.xlu0 %4384
      %4386 = vrot.lane.b32.xlu0 %v4023, 8
      %v4387 = vpop.permute.xlu0 %4386
      %4388 = vrot.lane.b32.xlu0 %v4025, 8
      %v4389 = vpop.permute.xlu0 %4388
      %4390 = vrot.lane.b32.xlu0 %v4027, 8
      %v4391 = vpop.permute.xlu0 %4390
      %4392 = vrot.lane.b32.xlu0 %v4029, 8
      %v4393 = vpop.permute.xlu0 %4392
      %4430 = vrot.lane.b32.xlu0 0.0, 16
      %v4431 = vpop.permute.xlu0 %4430
      %4432 = vrot.lane.b32.xlu0 %v4101, 16
      %v4433 = vpop.permute.xlu0 %4432
      %4434 = vrot.lane.b32.xlu0 %v4035, 16
      %v4435 = vpop.permute.xlu0 %4434
      %4436 = vrot.lane.b32.xlu0 %v4037, 16
      %v4437 = vpop.permute.xlu0 %4436
      %4438 = vrot.lane.b32.xlu0 %v4039, 16
      %v4439 = vpop.permute.xlu0 %4438
      %4440 = vrot.lane.b32.xlu0 %v4041, 16
      %v4441 = vpop.permute.xlu0 %4440
      %4442 = vrot.lane.b32.xlu0 %v4043, 16
      %v4443 = vpop.permute.xlu0 %4442
      %4444 = vrot.lane.b32.xlu0 %v4045, 16
      %v4445 = vpop.permute.xlu0 %4444
      %4446 = vrot.lane.b32.xlu0 %v4047, 16
      %v4447 = vpop.permute.xlu0 %4446
      %4448 = vrot.lane.b32.xlu0 %v4049, 16
      %v4449 = vpop.permute.xlu0 %4448
      %4450 = vrot.lane.b32.xlu0 %v4051, 16
      %v4451 = vpop.permute.xlu0 %4450
      %4452 = vrot.lane.b32.xlu0 %v4053, 16
      %v4453 = vpop.permute.xlu0 %4452
      %4454 = vrot.lane.b32.xlu0 %v4055, 16
      %v4455 = vpop.permute.xlu0 %4454
      %4456 = vrot.lane.b32.xlu0 %v4057, 16
      %v4457 = vpop.permute.xlu0 %4456
      %4458 = vrot.lane.b32.xlu0 %v4059, 16
      %v4459 = vpop.permute.xlu0 %4458
      %4460 = vrot.lane.b32.xlu0 %v4061, 16
      %v4461 = vpop.permute.xlu0 %4460
      %4462 = vrot.lane.b32.xlu0 %v4063, 16
      %v4463 = vpop.permute.xlu0 %4462
      %4464 = vrot.lane.b32.xlu0 %v4065, 16
      %v4465 = vpop.permute.xlu0 %4464
      %4466 = vrot.lane.b32.xlu0 %v4067, 16
      %v4467 = vpop.permute.xlu0 %4466
      %4468 = vrot.lane.b32.xlu0 %v4069, 16
      %v4469 = vpop.permute.xlu0 %4468
      %4470 = vrot.lane.b32.xlu0 %v4071, 16
      %v4471 = vpop.permute.xlu0 %4470
      %4472 = vrot.lane.b32.xlu0 %v4073, 16
      %v4473 = vpop.permute.xlu0 %4472
      %4474 = vrot.lane.b32.xlu0 %v4075, 16
      %v4475 = vpop.permute.xlu0 %4474
      %4476 = vrot.lane.b32.xlu0 %v4077, 16
      %v4477 = vpop.permute.xlu0 %4476
      %4478 = vrot.lane.b32.xlu0 %v4079, 16
      %v4479 = vpop.permute.xlu0 %4478
      %4480 = vrot.lane.b32.xlu0 %v4081, 16
      %v4481 = vpop.permute.xlu0 %4480
      %4482 = vrot.lane.b32.xlu0 %v4083, 16
      %v4483 = vpop.permute.xlu0 %4482
      %4484 = vrot.lane.b32.xlu0 %v4085, 16
      %v4485 = vpop.permute.xlu0 %4484
      %4486 = vrot.lane.b32.xlu0 %v4087, 16
      %v4487 = vpop.permute.xlu0 %4486
      %4488 = vrot.lane.b32.xlu0 %v4089, 16
      %v4489 = vpop.permute.xlu0 %4488
      %4490 = vrot.lane.b32.xlu0 %v4091, 16
      %v4491 = vpop.permute.xlu0 %4490
      %4492 = vrot.lane.b32.xlu0 %v4093, 16
      %v4493 = vpop.permute.xlu0 %4492
      %4494 = vrot.lane.b32.xlu0 %v4095, 16
      %v4495 = vpop.permute.xlu0 %4494
      %4496 = vrot.lane.b32.xlu0 %v4097, 16
      %v4497 = vpop.permute.xlu0 %4496
      %4498 = vrot.lane.b32.xlu0 %v4099, 16
      %v4499 = vpop.permute.xlu0 %4498
      %4535 = vrot.lane.b32.xlu0 %v4101, 24
      %v4536 = vpop.permute.xlu0 %4535
      %4537 = vrot.lane.b32.xlu0 %v4035, 24
      %v4538 = vpop.permute.xlu0 %4537
      %4539 = vrot.lane.b32.xlu0 %v4037, 24
      %v4540 = vpop.permute.xlu0 %4539
      %4541 = vrot.lane.b32.xlu0 %v4039, 24
      %v4542 = vpop.permute.xlu0 %4541
      %4543 = vrot.lane.b32.xlu0 %v4041, 24
      %v4544 = vpop.permute.xlu0 %4543
      %4545 = vrot.lane.b32.xlu0 %v4043, 24
      %v4546 = vpop.permute.xlu0 %4545
      %4547 = vrot.lane.b32.xlu0 %v4045, 24
      %v4548 = vpop.permute.xlu0 %4547
      %4549 = vrot.lane.b32.xlu0 %v4047, 24
      %v4550 = vpop.permute.xlu0 %4549
      %4551 = vrot.lane.b32.xlu0 %v4049, 24
      %v4552 = vpop.permute.xlu0 %4551
      %4553 = vrot.lane.b32.xlu0 %v4051, 24
      %v4554 = vpop.permute.xlu0 %4553
      %4555 = vrot.lane.b32.xlu0 %v4053, 24
      %v4556 = vpop.permute.xlu0 %4555
      %4557 = vrot.lane.b32.xlu0 %v4055, 24
      %v4558 = vpop.permute.xlu0 %4557
      %4559 = vrot.lane.b32.xlu0 %v4057, 24
      %v4560 = vpop.permute.xlu0 %4559
      %4561 = vrot.lane.b32.xlu0 %v4059, 24
      %v4562 = vpop.permute.xlu0 %4561
      %4563 = vrot.lane.b32.xlu0 %v4061, 24
      %v4564 = vpop.permute.xlu0 %4563
      %4565 = vrot.lane.b32.xlu0 %v4063, 24
      %v4566 = vpop.permute.xlu0 %4565
      %4567 = vrot.lane.b32.xlu0 %v4065, 24
      %v4568 = vpop.permute.xlu0 %4567
      %4569 = vrot.lane.b32.xlu0 %v4067, 24
      %v4570 = vpop.permute.xlu0 %4569
      %4571 = vrot.lane.b32.xlu0 %v4069, 24
      %v4572 = vpop.permute.xlu0 %4571
      %4573 = vrot.lane.b32.xlu0 %v4071, 24
      %v4574 = vpop.permute.xlu0 %4573
      %4575 = vrot.lane.b32.xlu0 %v4073, 24
      %v4576 = vpop.permute.xlu0 %4575
      %4577 = vrot.lane.b32.xlu0 %v4075, 24
      %v4578 = vpop.permute.xlu0 %4577
      %4579 = vrot.lane.b32.xlu0 %v4077, 24
      %v4580 = vpop.permute.xlu0 %4579
      %4581 = vrot.lane.b32.xlu0 %v4079, 24
      %v4582 = vpop.permute.xlu0 %4581
      %4583 = vrot.lane.b32.xlu0 %v4081, 24
      %v4584 = vpop.permute.xlu0 %4583
      %4585 = vrot.lane.b32.xlu0 %v4083, 24
      %v4586 = vpop.permute.xlu0 %4585
      %4587 = vrot.lane.b32.xlu0 %v4085, 24
      %v4588 = vpop.permute.xlu0 %4587
      %4589 = vrot.lane.b32.xlu0 %v4087, 24
      %v4590 = vpop.permute.xlu0 %4589
      %4591 = vrot.lane.b32.xlu0 %v4089, 24
      %v4592 = vpop.permute.xlu0 %4591
      %4593 = vrot.lane.b32.xlu0 %v4091, 24
      %v4594 = vpop.permute.xlu0 %4593
      %4595 = vrot.lane.b32.xlu0 %v4093, 24
      %v4596 = vpop.permute.xlu0 %4595
      %4597 = vrot.lane.b32.xlu0 %v4095, 24
      %v4598 = vpop.permute.xlu0 %4597
      %4599 = vrot.lane.b32.xlu0 %v4097, 24
      %v4600 = vpop.permute.xlu0 %4599
      %4601 = vrot.lane.b32.xlu0 %v4099, 24
      %v4602 = vpop.permute.xlu0 %4601
      %4603 = vrot.lane.b32.xlu0 %v4105, 24
      %v4604 = vpop.permute.xlu0 %4603
      %4605 = vrot.lane.b32.xlu0 %v4107, 24
      %v4606 = vpop.permute.xlu0 %4605
      %4643 = vrot.lane.b32.xlu0 %v3789, 32
      %v4644 = vpop.permute.xlu0 %4643
      %4645 = vrot.lane.b32.xlu0 %v3790, 32
      %v4646 = vpop.permute.xlu0 %4645
      %4647 = vrot.lane.b32.xlu0 %v3791, 32
      %v4648 = vpop.permute.xlu0 %4647
      %4649 = vrot.lane.b32.xlu0 %v3792, 32
      %v4650 = vpop.permute.xlu0 %4649
      %4651 = vrot.lane.b32.xlu0 %v3793, 32
      %v4652 = vpop.permute.xlu0 %4651
      %4653 = vrot.lane.b32.xlu0 %v3794, 32
      %v4654 = vpop.permute.xlu0 %4653
      %4655 = vrot.lane.b32.xlu0 %v3795, 32
      %v4656 = vpop.permute.xlu0 %4655
      %4657 = vrot.lane.b32.xlu0 %v3796, 32
      %v4658 = vpop.permute.xlu0 %4657
      %4659 = vrot.lane.b32.xlu0 %v3797, 32
      %v4660 = vpop.permute.xlu0 %4659
      %4661 = vrot.lane.b32.xlu0 %v3798, 32
      %v4662 = vpop.permute.xlu0 %4661
      %4663 = vrot.lane.b32.xlu0 %v3799, 32
      %v4664 = vpop.permute.xlu0 %4663
      %4665 = vrot.lane.b32.xlu0 %v3800, 32
      %v4666 = vpop.permute.xlu0 %4665
      %4667 = vrot.lane.b32.xlu0 %v3801, 32
      %v4668 = vpop.permute.xlu0 %4667
      %4669 = vrot.lane.b32.xlu0 %v3802, 32
      %v4670 = vpop.permute.xlu0 %4669
      %4671 = vrot.lane.b32.xlu0 %v3803, 32
      %v4672 = vpop.permute.xlu0 %4671
      %4673 = vrot.lane.b32.xlu0 %v3804, 32
      %v4674 = vpop.permute.xlu0 %4673
      %4675 = vrot.lane.b32.xlu0 %v3805, 32
      %v4676 = vpop.permute.xlu0 %4675
      %4677 = vrot.lane.b32.xlu0 %v3806, 32
      %v4678 = vpop.permute.xlu0 %4677
      %4679 = vrot.lane.b32.xlu0 %v3807, 32
      %v4680 = vpop.permute.xlu0 %4679
      %4681 = vrot.lane.b32.xlu0 %v3808, 32
      %v4682 = vpop.permute.xlu0 %4681
      %4683 = vrot.lane.b32.xlu0 %v3809, 32
      %v4684 = vpop.permute.xlu0 %4683
      %4685 = vrot.lane.b32.xlu0 %v3810, 32
      %v4686 = vpop.permute.xlu0 %4685
      %4687 = vrot.lane.b32.xlu0 %v3811, 32
      %v4688 = vpop.permute.xlu0 %4687
      %4689 = vrot.lane.b32.xlu0 %v3812, 32
      %v4690 = vpop.permute.xlu0 %4689
      %4691 = vrot.lane.b32.xlu0 %v3813, 32
      %v4692 = vpop.permute.xlu0 %4691
      %4693 = vrot.lane.b32.xlu0 %v3814, 32
      %v4694 = vpop.permute.xlu0 %4693
      %4695 = vrot.lane.b32.xlu0 %v3815, 32
      %v4696 = vpop.permute.xlu0 %4695
      %4697 = vrot.lane.b32.xlu0 %v3816, 32
      %v4698 = vpop.permute.xlu0 %4697
      %4699 = vrot.lane.b32.xlu0 %v3817, 32
      %v4700 = vpop.permute.xlu0 %4699
      %4701 = vrot.lane.b32.xlu0 %v3818, 32
      %v4702 = vpop.permute.xlu0 %4701
      %4703 = vrot.lane.b32.xlu0 %v3819, 32
      %v4704 = vpop.permute.xlu0 %4703
      %4705 = vrot.lane.b32.xlu0 %v3820, 32
      %v4706 = vpop.permute.xlu0 %4705
      %4707 = vrot.lane.b32.xlu0 %v3821, 32
      %v4708 = vpop.permute.xlu0 %4707
      %4709 = vrot.lane.b32.xlu0 %v3822, 32
      %v4710 = vpop.permute.xlu0 %4709
      %4711 = vrot.lane.b32.xlu0 %v3823, 32
      %v4712 = vpop.permute.xlu0 %4711
      %4713 = vrot.lane.b32.xlu0 %v3824, 32
      %v4714 = vpop.permute.xlu0 %4713
      %4752 = vrot.lane.b32.xlu0 %v4111, 40
      %v4753 = vpop.permute.xlu0 %4752
      %4754 = vrot.lane.b32.xlu0 %v4113, 40
      %v4755 = vpop.permute.xlu0 %4754
      %4756 = vrot.lane.b32.xlu0 %v4115, 40
      %v4757 = vpop.permute.xlu0 %4756
      %4758 = vrot.lane.b32.xlu0 %v4117, 40
      %v4759 = vpop.permute.xlu0 %4758
      %4760 = vrot.lane.b32.xlu0 %v4119, 40
      %v4761 = vpop.permute.xlu0 %4760
      %4762 = vrot.lane.b32.xlu0 %v4121, 40
      %v4763 = vpop.permute.xlu0 %4762
      %4764 = vrot.lane.b32.xlu0 %v4123, 40
      %v4765 = vpop.permute.xlu0 %4764
      %4766 = vrot.lane.b32.xlu0 %v4125, 40
      %v4767 = vpop.permute.xlu0 %4766
      %4768 = vrot.lane.b32.xlu0 %v4127, 40
      %v4769 = vpop.permute.xlu0 %4768
      %4770 = vrot.lane.b32.xlu0 %v4129, 40
      %v4771 = vpop.permute.xlu0 %4770
      %4772 = vrot.lane.b32.xlu0 %v4131, 40
      %v4773 = vpop.permute.xlu0 %4772
      %4774 = vrot.lane.b32.xlu0 %v4133, 40
      %v4775 = vpop.permute.xlu0 %4774
      %4776 = vrot.lane.b32.xlu0 %v4135, 40
      %v4777 = vpop.permute.xlu0 %4776
      %4778 = vrot.lane.b32.xlu0 %v4137, 40
      %v4779 = vpop.permute.xlu0 %4778
      %4780 = vrot.lane.b32.xlu0 %v4139, 40
      %v4781 = vpop.permute.xlu0 %4780
      %4782 = vrot.lane.b32.xlu0 %v4141, 40
      %v4783 = vpop.permute.xlu0 %4782
      %4784 = vrot.lane.b32.xlu0 %v4143, 40
      %v4785 = vpop.permute.xlu0 %4784
      %4786 = vrot.lane.b32.xlu0 %v4145, 40
      %v4787 = vpop.permute.xlu0 %4786
      %4788 = vrot.lane.b32.xlu0 %v4147, 40
      %v4789 = vpop.permute.xlu0 %4788
      %4790 = vrot.lane.b32.xlu0 %v4149, 40
      %v4791 = vpop.permute.xlu0 %4790
      %4792 = vrot.lane.b32.xlu0 %v4151, 40
      %v4793 = vpop.permute.xlu0 %4792
      %4794 = vrot.lane.b32.xlu0 %v4153, 40
      %v4795 = vpop.permute.xlu0 %4794
      %4796 = vrot.lane.b32.xlu0 %v4155, 40
      %v4797 = vpop.permute.xlu0 %4796
      %4798 = vrot.lane.b32.xlu0 %v4157, 40
      %v4799 = vpop.permute.xlu0 %4798
      %4800 = vrot.lane.b32.xlu0 %v4159, 40
      %v4801 = vpop.permute.xlu0 %4800
      %4802 = vrot.lane.b32.xlu0 %v4161, 40
      %v4803 = vpop.permute.xlu0 %4802
      %4804 = vrot.lane.b32.xlu0 %v4163, 40
      %v4805 = vpop.permute.xlu0 %4804
      %4806 = vrot.lane.b32.xlu0 %v4165, 40
      %v4807 = vpop.permute.xlu0 %4806
      %4808 = vrot.lane.b32.xlu0 %v4167, 40
      %v4809 = vpop.permute.xlu0 %4808
      %4810 = vrot.lane.b32.xlu0 %v4169, 40
      %v4811 = vpop.permute.xlu0 %4810
      %4812 = vrot.lane.b32.xlu0 %v4171, 40
      %v4813 = vpop.permute.xlu0 %4812
      %4814 = vrot.lane.b32.xlu0 %v4173, 40
      %v4815 = vpop.permute.xlu0 %4814
      %4816 = vrot.lane.b32.xlu0 %v4175, 40
      %v4817 = vpop.permute.xlu0 %4816
      %4818 = vrot.lane.b32.xlu0 %v4177, 40
      %v4819 = vpop.permute.xlu0 %4818
      %4820 = vrot.lane.b32.xlu0 %v4179, 40
      %v4821 = vpop.permute.xlu0 %4820
      %4822 = vrot.lane.b32.xlu0 %v4181, 40
      %v4823 = vpop.permute.xlu0 %4822
      %4860 = vrot.lane.b32.xlu0 %v4115, 48
      %v4861 = vpop.permute.xlu0 %4860
      %4862 = vrot.lane.b32.xlu0 %v4117, 48
      %v4863 = vpop.permute.xlu0 %4862
      %4864 = vrot.lane.b32.xlu0 %v4119, 48
      %v4865 = vpop.permute.xlu0 %4864
      %4866 = vrot.lane.b32.xlu0 %v4121, 48
      %v4867 = vpop.permute.xlu0 %4866
      %4868 = vrot.lane.b32.xlu0 %v4123, 48
      %v4869 = vpop.permute.xlu0 %4868
      %4870 = vrot.lane.b32.xlu0 %v4125, 48
      %v4871 = vpop.permute.xlu0 %4870
      %4872 = vrot.lane.b32.xlu0 %v4127, 48
      %v4873 = vpop.permute.xlu0 %4872
      %4874 = vrot.lane.b32.xlu0 %v4129, 48
      %v4875 = vpop.permute.xlu0 %4874
      %4876 = vrot.lane.b32.xlu0 %v4131, 48
      %v4877 = vpop.permute.xlu0 %4876
      %4878 = vrot.lane.b32.xlu0 %v4133, 48
      %v4879 = vpop.permute.xlu0 %4878
      %4880 = vrot.lane.b32.xlu0 %v4135, 48
      %v4881 = vpop.permute.xlu0 %4880
      %4882 = vrot.lane.b32.xlu0 %v4137, 48
      %v4883 = vpop.permute.xlu0 %4882
      %4884 = vrot.lane.b32.xlu0 %v4139, 48
      %v4885 = vpop.permute.xlu0 %4884
      %4886 = vrot.lane.b32.xlu0 %v4141, 48
      %v4887 = vpop.permute.xlu0 %4886
      %4888 = vrot.lane.b32.xlu0 %v4143, 48
      %v4889 = vpop.permute.xlu0 %4888
      %4890 = vrot.lane.b32.xlu0 %v4145, 48
      %v4891 = vpop.permute.xlu0 %4890
      %4892 = vrot.lane.b32.xlu0 %v4147, 48
      %v4893 = vpop.permute.xlu0 %4892
      %4894 = vrot.lane.b32.xlu0 %v4149, 48
      %v4895 = vpop.permute.xlu0 %4894
      %4896 = vrot.lane.b32.xlu0 %v4151, 48
      %v4897 = vpop.permute.xlu0 %4896
      %4898 = vrot.lane.b32.xlu0 %v4153, 48
      %v4899 = vpop.permute.xlu0 %4898
      %4900 = vrot.lane.b32.xlu0 %v4155, 48
      %v4901 = vpop.permute.xlu0 %4900
      %4902 = vrot.lane.b32.xlu0 %v4157, 48
      %v4903 = vpop.permute.xlu0 %4902
      %4904 = vrot.lane.b32.xlu0 %v4159, 48
      %v4905 = vpop.permute.xlu0 %4904
      %4906 = vrot.lane.b32.xlu0 %v4161, 48
      %v4907 = vpop.permute.xlu0 %4906
      %4908 = vrot.lane.b32.xlu0 %v4163, 48
      %v4909 = vpop.permute.xlu0 %4908
      %4910 = vrot.lane.b32.xlu0 %v4165, 48
      %v4911 = vpop.permute.xlu0 %4910
      %4912 = vrot.lane.b32.xlu0 %v4167, 48
      %v4913 = vpop.permute.xlu0 %4912
      %4914 = vrot.lane.b32.xlu0 %v4169, 48
      %v4915 = vpop.permute.xlu0 %4914
      %4916 = vrot.lane.b32.xlu0 %v4171, 48
      %v4917 = vpop.permute.xlu0 %4916
      %4918 = vrot.lane.b32.xlu0 %v4173, 48
      %v4919 = vpop.permute.xlu0 %4918
      %4920 = vrot.lane.b32.xlu0 %v4175, 48
      %v4921 = vpop.permute.xlu0 %4920
      %4922 = vrot.lane.b32.xlu0 %v4177, 48
      %v4923 = vpop.permute.xlu0 %4922
      %4924 = vrot.lane.b32.xlu0 %v4179, 48
      %v4925 = vpop.permute.xlu0 %4924
      %4926 = vrot.lane.b32.xlu0 %v4181, 48
      %v4927 = vpop.permute.xlu0 %4926
      %4928 = vrot.lane.b32.xlu0 0.0, 48
      %v4929 = vpop.permute.xlu0 %4928
      %4966 = vrot.lane.b32.xlu0 %v4185, 56
      %v4967 = vpop.permute.xlu0 %4966
      %4968 = vrot.lane.b32.xlu0 %v4187, 56
      %v4969 = vpop.permute.xlu0 %4968
      %4970 = vrot.lane.b32.xlu0 %v4189, 56
      %v4971 = vpop.permute.xlu0 %4970
      %4972 = vrot.lane.b32.xlu0 %v4191, 56
      %v4973 = vpop.permute.xlu0 %4972
      %4974 = vrot.lane.b32.xlu0 %v4193, 56
      %v4975 = vpop.permute.xlu0 %4974
      %4976 = vrot.lane.b32.xlu0 %v4195, 56
      %v4977 = vpop.permute.xlu0 %4976
      %4978 = vrot.lane.b32.xlu0 %v4197, 56
      %v4979 = vpop.permute.xlu0 %4978
      %4980 = vrot.lane.b32.xlu0 %v4199, 56
      %v4981 = vpop.permute.xlu0 %4980
      %4982 = vrot.lane.b32.xlu0 %v4201, 56
      %v4983 = vpop.permute.xlu0 %4982
      %4984 = vrot.lane.b32.xlu0 %v4203, 56
      %v4985 = vpop.permute.xlu0 %4984
      %4986 = vrot.lane.b32.xlu0 %v4205, 56
      %v4987 = vpop.permute.xlu0 %4986
      %4988 = vrot.lane.b32.xlu0 %v4207, 56
      %v4989 = vpop.permute.xlu0 %4988
      %4990 = vrot.lane.b32.xlu0 %v4209, 56
      %v4991 = vpop.permute.xlu0 %4990
      %4992 = vrot.lane.b32.xlu0 %v4211, 56
      %v4993 = vpop.permute.xlu0 %4992
      %4994 = vrot.lane.b32.xlu0 %v4213, 56
      %v4995 = vpop.permute.xlu0 %4994
      %4996 = vrot.lane.b32.xlu0 %v4215, 56
      %v4997 = vpop.permute.xlu0 %4996
      %4998 = vrot.lane.b32.xlu0 %v4217, 56
      %v4999 = vpop.permute.xlu0 %4998
      %5000 = vrot.lane.b32.xlu0 %v4219, 56
      %v5001 = vpop.permute.xlu0 %5000
      %5002 = vrot.lane.b32.xlu0 %v4221, 56
      %v5003 = vpop.permute.xlu0 %5002
      %5004 = vrot.lane.b32.xlu0 %v4223, 56
      %v5005 = vpop.permute.xlu0 %5004
      %5006 = vrot.lane.b32.xlu0 %v4225, 56
      %v5007 = vpop.permute.xlu0 %5006
      %5008 = vrot.lane.b32.xlu0 %v4227, 56
      %v5009 = vpop.permute.xlu0 %5008
      %5010 = vrot.lane.b32.xlu0 %v4229, 56
      %v5011 = vpop.permute.xlu0 %5010
      %5012 = vrot.lane.b32.xlu0 %v4231, 56
      %v5013 = vpop.permute.xlu0 %5012
      %5014 = vrot.lane.b32.xlu0 %v4233, 56
      %v5015 = vpop.permute.xlu0 %5014
      %5016 = vrot.lane.b32.xlu0 %v4235, 56
      %v5017 = vpop.permute.xlu0 %5016
      %5018 = vrot.lane.b32.xlu0 %v4237, 56
      %v5019 = vpop.permute.xlu0 %5018
      %5020 = vrot.lane.b32.xlu0 %v4239, 56
      %v5021 = vpop.permute.xlu0 %5020
      %5022 = vrot.lane.b32.xlu0 %v4241, 56
      %v5023 = vpop.permute.xlu0 %5022
      %5024 = vrot.lane.b32.xlu0 %v4243, 56
      %v5025 = vpop.permute.xlu0 %5024
      %5026 = vrot.lane.b32.xlu0 %v4245, 56
      %v5027 = vpop.permute.xlu0 %5026
      %5028 = vrot.lane.b32.xlu0 %v4247, 56
      %v5029 = vpop.permute.xlu0 %5028
      %5030 = vrot.lane.b32.xlu0 %v4249, 56
      %v5031 = vpop.permute.xlu0 %5030
      %5032 = vrot.lane.b32.xlu0 %v4251, 56
      %v5033 = vpop.permute.xlu0 %5032
      %5034 = vrot.lane.b32.xlu0 0.0, 56
      %v5035 = vpop.permute.xlu0 %5034
      %5072 = vrot.lane.b32.xlu0 %v4255, 64
      %v5073 = vpop.permute.xlu0 %5072
      %5074 = vrot.lane.b32.xlu0 %v4257, 64
      %v5075 = vpop.permute.xlu0 %5074
      %5076 = vrot.lane.b32.xlu0 %v4259, 64
      %v5077 = vpop.permute.xlu0 %5076
      %5078 = vrot.lane.b32.xlu0 %v4261, 64
      %v5079 = vpop.permute.xlu0 %5078
      %5080 = vrot.lane.b32.xlu0 %v4263, 64
      %v5081 = vpop.permute.xlu0 %5080
      %5082 = vrot.lane.b32.xlu0 %v4265, 64
      %v5083 = vpop.permute.xlu0 %5082
      %5084 = vrot.lane.b32.xlu0 %v4267, 64
      %v5085 = vpop.permute.xlu0 %5084
      %5086 = vrot.lane.b32.xlu0 %v4269, 64
      %v5087 = vpop.permute.xlu0 %5086
      %5088 = vrot.lane.b32.xlu0 %v4271, 64
      %v5089 = vpop.permute.xlu0 %5088
      %5090 = vrot.lane.b32.xlu0 %v4273, 64
      %v5091 = vpop.permute.xlu0 %5090
      %5092 = vrot.lane.b32.xlu0 %v4275, 64
      %v5093 = vpop.permute.xlu0 %5092
      %5094 = vrot.lane.b32.xlu0 %v4277, 64
      %v5095 = vpop.permute.xlu0 %5094
      %5096 = vrot.lane.b32.xlu0 %v4279, 64
      %v5097 = vpop.permute.xlu0 %5096
      %5098 = vrot.lane.b32.xlu0 %v4281, 64
      %v5099 = vpop.permute.xlu0 %5098
      %5100 = vrot.lane.b32.xlu0 %v4283, 64
      %v5101 = vpop.permute.xlu0 %5100
      %5102 = vrot.lane.b32.xlu0 %v4285, 64
      %v5103 = vpop.permute.xlu0 %5102
      %5104 = vrot.lane.b32.xlu0 %v4287, 64
      %v5105 = vpop.permute.xlu0 %5104
      %5106 = vrot.lane.b32.xlu0 %v4289, 64
      %v5107 = vpop.permute.xlu0 %5106
      %5108 = vrot.lane.b32.xlu0 %v4291, 64
      %v5109 = vpop.permute.xlu0 %5108
      %5110 = vrot.lane.b32.xlu0 %v4293, 64
      %v5111 = vpop.permute.xlu0 %5110
      %5112 = vrot.lane.b32.xlu0 %v4295, 64
      %v5113 = vpop.permute.xlu0 %5112
      %5114 = vrot.lane.b32.xlu0 %v4297, 64
      %v5115 = vpop.permute.xlu0 %5114
      %5116 = vrot.lane.b32.xlu0 %v4299, 64
      %v5117 = vpop.permute.xlu0 %5116
      %5118 = vrot.lane.b32.xlu0 %v4301, 64
      %v5119 = vpop.permute.xlu0 %5118
      %5120 = vrot.lane.b32.xlu0 %v4303, 64
      %v5121 = vpop.permute.xlu0 %5120
      %5122 = vrot.lane.b32.xlu0 %v4305, 64
      %v5123 = vpop.permute.xlu0 %5122
      %5124 = vrot.lane.b32.xlu0 %v4307, 64
      %v5125 = vpop.permute.xlu0 %5124
      %5126 = vrot.lane.b32.xlu0 %v4309, 64
      %v5127 = vpop.permute.xlu0 %5126
      %5128 = vrot.lane.b32.xlu0 %v4311, 64
      %v5129 = vpop.permute.xlu0 %5128
      %5130 = vrot.lane.b32.xlu0 %v4313, 64
      %v5131 = vpop.permute.xlu0 %5130
      %5132 = vrot.lane.b32.xlu0 %v4315, 64
      %v5133 = vpop.permute.xlu0 %5132
      %5134 = vrot.lane.b32.xlu0 %v4317, 64
      %v5135 = vpop.permute.xlu0 %5134
      %5136 = vrot.lane.b32.xlu0 %v4319, 64
      %v5137 = vpop.permute.xlu0 %5136
      %5138 = vrot.lane.b32.xlu0 %v4321, 64
      %v5139 = vpop.permute.xlu0 %5138
      %5140 = vrot.lane.b32.xlu0 0.0, 64
      %v5141 = vpop.permute.xlu0 %5140
      %v5177 = vsel %vm2907, 0.0, %v4325
      %v5178 = vsel %vm2907, %v3961, %v4327
      %v5179 = vsel %vm2907, %v3862, %v4329
      %v5180 = vsel %vm2907, %v3864, %v4331
      %v5181 = vsel %vm2907, %v3866, %v4333
      %v5182 = vsel %vm2907, %v3868, %v4335
      %v5183 = vsel %vm2907, %v3870, %v4337
      %v5184 = vsel %vm2907, %v3872, %v4339
      %v5185 = vsel %vm2907, %v3874, %v4341
      %v5186 = vsel %vm2907, %v3876, %v4343
      %v5187 = vsel %vm2907, %v3878, %v4345
      %v5188 = vsel %vm2907, %v3880, %v4347
      %v5189 = vsel %vm2907, %v3882, %v4349
      %v5190 = vsel %vm2907, %v3884, %v4351
      %v5191 = vsel %vm2907, %v3886, %v4353
      %v5192 = vsel %vm2907, %v3888, %v4355
      %v5193 = vsel %vm2907, %v3890, %v4357
      %v5194 = vsel %vm2907, %v3892, %v4359
      %v5195 = vsel %vm2907, %v3894, %v4361
      %v5196 = vsel %vm2907, %v3896, %v4363
      %v5197 = vsel %vm2907, %v3898, %v4365
      %v5198 = vsel %vm2907, %v3900, %v4367
      %v5199 = vsel %vm2907, %v3902, %v4369
      %v5200 = vsel %vm2907, %v3904, %v4371
      %v5201 = vsel %vm2907, %v3906, %v4373
      %v5202 = vsel %vm2907, %v3908, %v4375
      %v5203 = vsel %vm2907, %v3910, %v4377
      %v5204 = vsel %vm2907, %v3912, %v4379
      %v5205 = vsel %vm2907, %v3914, %v4381
      %v5206 = vsel %vm2907, %v3916, %v4383
      %v5207 = vsel %vm2907, %v3918, %v4385
      %v5208 = vsel %vm2907, %v3920, %v4387
      %v5209 = vsel %vm2907, %v3922, %v4389
      %v5210 = vsel %vm2907, %v3924, %v4391
      %v5211 = vsel %vm2907, %v3926, %v4393
      %v5212 = vsel %vm2944, %v5177, %v4431
      %v5213 = vsel %vm2944, %v5178, %v4433
      %v5214 = vsel %vm2944, %v5179, %v4435
      %v5215 = vsel %vm2944, %v5180, %v4437
      %v5216 = vsel %vm2944, %v5181, %v4439
      %v5217 = vsel %vm2944, %v5182, %v4441
      %v5218 = vsel %vm2944, %v5183, %v4443
      %v5219 = vsel %vm2944, %v5184, %v4445
      %v5220 = vsel %vm2944, %v5185, %v4447
      %v5221 = vsel %vm2944, %v5186, %v4449
      %v5222 = vsel %vm2944, %v5187, %v4451
      %v5223 = vsel %vm2944, %v5188, %v4453
      %v5224 = vsel %vm2944, %v5189, %v4455
      %v5225 = vsel %vm2944, %v5190, %v4457
      %v5226 = vsel %vm2944, %v5191, %v4459
      %v5227 = vsel %vm2944, %v5192, %v4461
      %v5228 = vsel %vm2944, %v5193, %v4463
      %v5229 = vsel %vm2944, %v5194, %v4465
      %v5230 = vsel %vm2944, %v5195, %v4467
      %v5231 = vsel %vm2944, %v5196, %v4469
      %v5232 = vsel %vm2944, %v5197, %v4471
      %v5233 = vsel %vm2944, %v5198, %v4473
      %v5234 = vsel %vm2944, %v5199, %v4475
      %v5235 = vsel %vm2944, %v5200, %v4477
      %v5236 = vsel %vm2944, %v5201, %v4479
      %v5237 = vsel %vm2944, %v5202, %v4481
      %v5238 = vsel %vm2944, %v5203, %v4483
      %v5239 = vsel %vm2944, %v5204, %v4485
      %v5240 = vsel %vm2944, %v5205, %v4487
      %v5241 = vsel %vm2944, %v5206, %v4489
      %v5242 = vsel %vm2944, %v5207, %v4491
      %v5243 = vsel %vm2944, %v5208, %v4493
      %v5244 = vsel %vm2944, %v5209, %v4495
      %v5245 = vsel %vm2944, %v5210, %v4497
      %v5246 = vsel %vm2944, %v5211, %v4499
      %v5247 = vsel %vm2981, %v5212, %v4536
      %v5248 = vsel %vm2981, %v5212, %v4538
      %v5249 = vsel %vm2981, %v5213, %v4540
      %v5250 = vsel %vm2981, %v5214, %v4542
      %v5251 = vsel %vm2981, %v5215, %v4544
      %v5252 = vsel %vm2981, %v5216, %v4546
      %v5253 = vsel %vm2981, %v5217, %v4548
      %v5254 = vsel %vm2981, %v5218, %v4550
      %v5255 = vsel %vm2981, %v5219, %v4552
      %v5256 = vsel %vm2981, %v5220, %v4554
      %v5257 = vsel %vm2981, %v5221, %v4556
      %v5258 = vsel %vm2981, %v5222, %v4558
      %v5259 = vsel %vm2981, %v5223, %v4560
      %v5260 = vsel %vm2981, %v5224, %v4562
      %v5261 = vsel %vm2981, %v5225, %v4564
      %v5262 = vsel %vm2981, %v5226, %v4566
      %v5263 = vsel %vm2981, %v5227, %v4568
      %v5264 = vsel %vm2981, %v5228, %v4570
      %v5265 = vsel %vm2981, %v5229, %v4572
      %v5266 = vsel %vm2981, %v5230, %v4574
      %v5267 = vsel %vm2981, %v5231, %v4576
      %v5268 = vsel %vm2981, %v5232, %v4578
      %v5269 = vsel %vm2981, %v5233, %v4580
      %v5270 = vsel %vm2981, %v5234, %v4582
      %v5271 = vsel %vm2981, %v5235, %v4584
      %v5272 = vsel %vm2981, %v5236, %v4586
      %v5273 = vsel %vm2981, %v5237, %v4588
      %v5274 = vsel %vm2981, %v5238, %v4590
      %v5275 = vsel %vm2981, %v5239, %v4592
      %v5276 = vsel %vm2981, %v5240, %v4594
      %v5277 = vsel %vm2981, %v5241, %v4596
      %v5278 = vsel %vm2981, %v5242, %v4598
      %v5279 = vsel %vm2981, %v5243, %v4600
      %v5280 = vsel %vm2981, %v5244, %v4602
      %v5281 = vsel %vm2981, %v5245, %v4604
      %v5282 = vsel %vm2981, %v5246, %v4606
      %v5283 = vsel %vm3018, %v5247, %v4644
      %v5284 = vsel %vm3018, %v5248, %v4646
      %v5285 = vsel %vm3018, %v5249, %v4648
      %v5286 = vsel %vm3018, %v5250, %v4650
      %v5287 = vsel %vm3018, %v5251, %v4652
      %v5288 = vsel %vm3018, %v5252, %v4654
      %v5289 = vsel %vm3018, %v5253, %v4656
      %v5290 = vsel %vm3018, %v5254, %v4658
      %v5291 = vsel %vm3018, %v5255, %v4660
      %v5292 = vsel %vm3018, %v5256, %v4662
      %v5293 = vsel %vm3018, %v5257, %v4664
      %v5294 = vsel %vm3018, %v5258, %v4666
      %v5295 = vsel %vm3018, %v5259, %v4668
      %v5296 = vsel %vm3018, %v5260, %v4670
      %v5297 = vsel %vm3018, %v5261, %v4672
      %v5298 = vsel %vm3018, %v5262, %v4674
      %v5299 = vsel %vm3018, %v5263, %v4676
      %v5300 = vsel %vm3018, %v5264, %v4678
      %v5301 = vsel %vm3018, %v5265, %v4680
      %v5302 = vsel %vm3018, %v5266, %v4682
      %v5303 = vsel %vm3018, %v5267, %v4684
      %v5304 = vsel %vm3018, %v5268, %v4686
      %v5305 = vsel %vm3018, %v5269, %v4688
      %v5306 = vsel %vm3018, %v5270, %v4690
      %v5307 = vsel %vm3018, %v5271, %v4692
      %v5308 = vsel %vm3018, %v5272, %v4694
      %v5309 = vsel %vm3018, %v5273, %v4696
      %v5310 = vsel %vm3018, %v5274, %v4698
      %v5311 = vsel %vm3018, %v5275, %v4700
      %v5312 = vsel %vm3018, %v5276, %v4702
      %v5313 = vsel %vm3018, %v5277, %v4704
      %v5314 = vsel %vm3018, %v5278, %v4706
      %v5315 = vsel %vm3018, %v5279, %v4708
      %v5316 = vsel %vm3018, %v5280, %v4710
      %v5317 = vsel %vm3018, %v5281, %v4712
      %v5318 = vsel %vm3018, %v5282, %v4714
      %v5319 = vsel %vm3055, %v5283, %v4753
      %v5320 = vsel %vm3055, %v5284, %v4755
      %v5321 = vsel %vm3055, %v5285, %v4757
      %v5322 = vsel %vm3055, %v5286, %v4759
      %v5323 = vsel %vm3055, %v5287, %v4761
      %v5324 = vsel %vm3055, %v5288, %v4763
      %v5325 = vsel %vm3055, %v5289, %v4765
      %v5326 = vsel %vm3055, %v5290, %v4767
      %v5327 = vsel %vm3055, %v5291, %v4769
      %v5328 = vsel %vm3055, %v5292, %v4771
      %v5329 = vsel %vm3055, %v5293, %v4773
      %v5330 = vsel %vm3055, %v5294, %v4775
      %v5331 = vsel %vm3055, %v5295, %v4777
      %v5332 = vsel %vm3055, %v5296, %v4779
      %v5333 = vsel %vm3055, %v5297, %v4781
      %v5334 = vsel %vm3055, %v5298, %v4783
      %v5335 = vsel %vm3055, %v5299, %v4785
      %v5336 = vsel %vm3055, %v5300, %v4787
      %v5337 = vsel %vm3055, %v5301, %v4789
      %v5338 = vsel %vm3055, %v5302, %v4791
      %v5339 = vsel %vm3055, %v5303, %v4793
      %v5340 = vsel %vm3055, %v5304, %v4795
      %v5341 = vsel %vm3055, %v5305, %v4797
      %v5342 = vsel %vm3055, %v5306, %v4799
      %v5343 = vsel %vm3055, %v5307, %v4801
      %v5344 = vsel %vm3055, %v5308, %v4803
      %v5345 = vsel %vm3055, %v5309, %v4805
      %v5346 = vsel %vm3055, %v5310, %v4807
      %v5347 = vsel %vm3055, %v5311, %v4809
      %v5348 = vsel %vm3055, %v5312, %v4811
      %v5349 = vsel %vm3055, %v5313, %v4813
      %v5350 = vsel %vm3055, %v5314, %v4815
      %v5351 = vsel %vm3055, %v5315, %v4817
      %v5352 = vsel %vm3055, %v5316, %v4819
      %v5353 = vsel %vm3055, %v5317, %v4821
      %v5354 = vsel %vm3055, %v5318, %v4823
      %v5355 = vsel %vm3092, %v5319, %v4861
      %v5356 = vsel %vm3092, %v5320, %v4863
      %v5357 = vsel %vm3092, %v5321, %v4865
      %v5358 = vsel %vm3092, %v5322, %v4867
      %v5359 = vsel %vm3092, %v5323, %v4869
      %v5360 = vsel %vm3092, %v5324, %v4871
      %v5361 = vsel %vm3092, %v5325, %v4873
      %v5362 = vsel %vm3092, %v5326, %v4875
      %v5363 = vsel %vm3092, %v5327, %v4877
      %v5364 = vsel %vm3092, %v5328, %v4879
      %v5365 = vsel %vm3092, %v5329, %v4881
      %v5366 = vsel %vm3092, %v5330, %v4883
      %v5367 = vsel %vm3092, %v5331, %v4885
      %v5368 = vsel %vm3092, %v5332, %v4887
      %v5369 = vsel %vm3092, %v5333, %v4889
      %v5370 = vsel %vm3092, %v5334, %v4891
      %v5371 = vsel %vm3092, %v5335, %v4893
      %v5372 = vsel %vm3092, %v5336, %v4895
      %v5373 = vsel %vm3092, %v5337, %v4897
      %v5374 = vsel %vm3092, %v5338, %v4899
      %v5375 = vsel %vm3092, %v5339, %v4901
      %v5376 = vsel %vm3092, %v5340, %v4903
      %v5377 = vsel %vm3092, %v5341, %v4905
      %v5378 = vsel %vm3092, %v5342, %v4907
      %v5379 = vsel %vm3092, %v5343, %v4909
      %v5380 = vsel %vm3092, %v5344, %v4911
      %v5381 = vsel %vm3092, %v5345, %v4913
      %v5382 = vsel %vm3092, %v5346, %v4915
      %v5383 = vsel %vm3092, %v5347, %v4917
      %v5384 = vsel %vm3092, %v5348, %v4919
      %v5385 = vsel %vm3092, %v5349, %v4921
      %v5386 = vsel %vm3092, %v5350, %v4923
      %v5387 = vsel %vm3092, %v5351, %v4925
      %v5388 = vsel %vm3092, %v5352, %v4927
      %v5389 = vsel %vm3092, %v5353, %v4929
      %v5390 = vsel %vm3092, %v5354, %v4929
      %v5391 = vsel %vm3129, %v5355, %v4967
      %v5392 = vsel %vm3129, %v5356, %v4969
      %v5393 = vsel %vm3129, %v5357, %v4971
      %v5394 = vsel %vm3129, %v5358, %v4973
      %v5395 = vsel %vm3129, %v5359, %v4975
      %v5396 = vsel %vm3129, %v5360, %v4977
      %v5397 = vsel %vm3129, %v5361, %v4979
      %v5398 = vsel %vm3129, %v5362, %v4981
      %v5399 = vsel %vm3129, %v5363, %v4983
      %v5400 = vsel %vm3129, %v5364, %v4985
      %v5401 = vsel %vm3129, %v5365, %v4987
      %v5402 = vsel %vm3129, %v5366, %v4989
      %v5403 = vsel %vm3129, %v5367, %v4991
      %v5404 = vsel %vm3129, %v5368, %v4993
      %v5405 = vsel %vm3129, %v5369, %v4995
      %v5406 = vsel %vm3129, %v5370, %v4997
      %v5407 = vsel %vm3129, %v5371, %v4999
      %v5408 = vsel %vm3129, %v5372, %v5001
      %v5409 = vsel %vm3129, %v5373, %v5003
      %v5410 = vsel %vm3129, %v5374, %v5005
      %v5411 = vsel %vm3129, %v5375, %v5007
      %v5412 = vsel %vm3129, %v5376, %v5009
      %v5413 = vsel %vm3129, %v5377, %v5011
      %v5414 = vsel %vm3129, %v5378, %v5013
      %v5415 = vsel %vm3129, %v5379, %v5015
      %v5416 = vsel %vm3129, %v5380, %v5017
      %v5417 = vsel %vm3129, %v5381, %v5019
      %v5418 = vsel %vm3129, %v5382, %v5021
      %v5419 = vsel %vm3129, %v5383, %v5023
      %v5420 = vsel %vm3129, %v5384, %v5025
      %v5421 = vsel %vm3129, %v5385, %v5027
      %v5422 = vsel %vm3129, %v5386, %v5029
      %v5423 = vsel %vm3129, %v5387, %v5031
      %v5424 = vsel %vm3129, %v5388, %v5033
      %v5425 = vsel %vm3129, %v5389, %v5035
      %v5426 = vsel %vm3129, %v5390, %v5035
      %v5427 = vsel %vm3166, %v5391, %v5073
      %v5428 = vsel %vm3166, %v5392, %v5075
      %v5429 = vsel %vm3166, %v5393, %v5077
      %v5430 = vsel %vm3166, %v5394, %v5079
      %v5431 = vsel %vm3166, %v5395, %v5081
      %v5432 = vsel %vm3166, %v5396, %v5083
      %v5433 = vsel %vm3166, %v5397, %v5085
      %v5434 = vsel %vm3166, %v5398, %v5087
      %v5435 = vsel %vm3166, %v5399, %v5089
      %v5436 = vsel %vm3166, %v5400, %v5091
      %v5437 = vsel %vm3166, %v5401, %v5093
      %v5438 = vsel %vm3166, %v5402, %v5095
      %v5439 = vsel %vm3166, %v5403, %v5097
      %v5440 = vsel %vm3166, %v5404, %v5099
      %v5441 = vsel %vm3166, %v5405, %v5101
      %v5442 = vsel %vm3166, %v5406, %v5103
      %v5443 = vsel %vm3166, %v5407, %v5105
      %v5444 = vsel %vm3166, %v5408, %v5107
      %v5445 = vsel %vm3166, %v5409, %v5109
      %v5446 = vsel %vm3166, %v5410, %v5111
      %v5447 = vsel %vm3166, %v5411, %v5113
      %v5448 = vsel %vm3166, %v5412, %v5115
      %v5449 = vsel %vm3166, %v5413, %v5117
      %v5450 = vsel %vm3166, %v5414, %v5119
      %v5451 = vsel %vm3166, %v5415, %v5121
      %v5452 = vsel %vm3166, %v5416, %v5123
      %v5453 = vsel %vm3166, %v5417, %v5125
      %v5454 = vsel %vm3166, %v5418, %v5127
      %v5455 = vsel %vm3166, %v5419, %v5129
      %v5456 = vsel %vm3166, %v5420, %v5131
      %v5457 = vsel %vm3166, %v5421, %v5133
      %v5458 = vsel %vm3166, %v5422, %v5135
      %v5459 = vsel %vm3166, %v5423, %v5137
      %v5460 = vsel %vm3166, %v5424, %v5139
      %v5461 = vsel %vm3166, %v5425, %v5141
      %v5462 = vsel %vm3166, %v5426, %v5141
      %v5463 = vpack.c.bf16 %v5428, %v5427
      %v5464 = vpack.c.bf16 %v5430, %v5429
      %v5465 = vpack.c.bf16 %v5432, %v5431
      %v5466 = vpack.c.bf16 %v5434, %v5433
      %v5467 = vpack.c.bf16 %v5436, %v5435
      %v5468 = vpack.c.bf16 %v5438, %v5437
      %v5469 = vpack.c.bf16 %v5440, %v5439
      %v5470 = vpack.c.bf16 %v5442, %v5441
      %v5471 = vpack.c.bf16 %v5444, %v5443
      %v5472 = vpack.c.bf16 %v5446, %v5445
      %v5473 = vpack.c.bf16 %v5448, %v5447
      %v5474 = vpack.c.bf16 %v5450, %v5449
      %v5475 = vpack.c.bf16 %v5452, %v5451
      %v5476 = vpack.c.bf16 %v5454, %v5453
      %v5477 = vpack.c.bf16 %v5456, %v5455
      %v5478 = vpack.c.bf16 %v5458, %v5457
      %v5479 = vpack.c.bf16 %v5460, %v5459
      %v5480 = vpack.c.bf16 %v5462, %v5461
      %v5490 = vunpack.c.l.b16 %v1558
      %v5491 = vunpack.c.l.b16 %v1559
      %v5492 = vunpack.c.l.b16 %v1560
      %v5493 = vunpack.c.l.b16 %v1561
      %v5494 = vunpack.c.l.b16 %v1562
      %v5495 = vunpack.c.l.b16 %v1563
      %v5496 = vunpack.c.l.b16 %v1564
      %v5497 = vunpack.c.l.b16 %v1565
      %v5498 = vunpack.c.l.b16 %v1566
      %v5499 = vpack.c.b16 %v5491, %v5490
      %v5500 = vpack.c.b16 %v5493, %v5492
      %v5501 = vpack.c.b16 %v5495, %v5494
      %v5502 = vpack.c.b16 %v5497, %v5496
      %v5503 = vpack.c.b16 %v5498, %v5498
      %v5509 = vsel %vm3248, %v5463, 0
      %v5512 = vsel %vm3248, %v5464, 0
      %v5515 = vsel %vm3248, %v5465, 0
      %v5518 = vsel %vm3248, %v5466, 0
      %v5521 = vsel %vm3248, %v5467, 0
      %v5524 = vsel %vm3248, %v5468, 0
      %v5527 = vsel %vm3248, %v5469, 0
      %v5530 = vsel %vm3248, %v5470, 0
      %v5533 = vsel %vm3248, %v5471, 0
      %v5536 = vsel %vm3248, %v5472, 0
      %v5539 = vsel %vm3248, %v5473, 0
      %v5542 = vsel %vm3248, %v5474, 0
      %v5545 = vsel %vm3248, %v5475, 0
      %v5548 = vsel %vm3248, %v5476, 0
      %v5551 = vsel %vm3248, %v5477, 0
      %v5554 = vsel %vm3248, %v5478, 0
      %v5557 = vsel %vm3248, %v5479, 0
      %v5560 = vsel %vm3248, %v5480, 0
      %v5563 = vsel %vm3303, %v5503, 0
      %5565 = vmatpush.bf16.msra.mxu0 0
      %5566 = vmatpush.bf16.msra.mxu0 0
      %5567 = vmatpush.bf16.msra.mxu0 0
      %5568 = vmatpush.bf16.msra.mxu0 %v5563
      %5569 = vmatpush.bf16.msra.mxu0 %v5502
      %5570 = vmatpush.bf16.msra.mxu0 %v5501
      %5571 = vmatpush.bf16.msra.mxu0 %v5500
      %5572 = vmatpush.bf16.msra.mxu0 %v5499
      %5573 = vmatmul.bf16.gmra.mxu0 %v5509
      %v5574 = vpop.f32.mrf.mxu0
      %v5575 = vadd.f32 0.0, %v5574
      %v5576 = vpop.f32.mrf.mxu0
      %v5577 = vadd.f32 0.0, %v5576
      %5578 = vmatmul.bf16.gmra.mxu0 %v5512
      %v5579 = vpop.f32.mrf.mxu0
      %v5580 = vadd.f32 0.0, %v5579
      %v5581 = vpop.f32.mrf.mxu0
      %v5582 = vadd.f32 0.0, %v5581
      %5583 = vmatmul.bf16.gmra.mxu0 %v5515
      %v5584 = vpop.f32.mrf.mxu0
      %v5585 = vadd.f32 0.0, %v5584
      %v5586 = vpop.f32.mrf.mxu0
      %v5587 = vadd.f32 0.0, %v5586
      %5588 = vmatmul.bf16.gmra.mxu0 %v5518
      %v5589 = vpop.f32.mrf.mxu0
      %v5590 = vadd.f32 0.0, %v5589
      %v5591 = vpop.f32.mrf.mxu0
      %v5592 = vadd.f32 0.0, %v5591
      %5593 = vmatmul.bf16.gmra.mxu0 %v5521
      %v5594 = vpop.f32.mrf.mxu0
      %v5595 = vadd.f32 0.0, %v5594
      %v5596 = vpop.f32.mrf.mxu0
      %v5597 = vadd.f32 0.0, %v5596
      %5598 = vmatmul.bf16.gmra.mxu0 %v5524
      %v5599 = vpop.f32.mrf.mxu0
      %v5600 = vadd.f32 0.0, %v5599
      %v5601 = vpop.f32.mrf.mxu0
      %v5602 = vadd.f32 0.0, %v5601
      %5603 = vmatmul.bf16.gmra.mxu0 %v5527
      %v5604 = vpop.f32.mrf.mxu0
      %v5605 = vadd.f32 0.0, %v5604
      %v5606 = vpop.f32.mrf.mxu0
      %v5607 = vadd.f32 0.0, %v5606
      %5608 = vmatmul.bf16.gmra.mxu0 %v5530
      %v5609 = vpop.f32.mrf.mxu0
      %v5610 = vadd.f32 0.0, %v5609
      %v5611 = vpop.f32.mrf.mxu0
      %v5612 = vadd.f32 0.0, %v5611
      %5613 = vmatmul.bf16.gmra.mxu0 %v5533
      %v5614 = vpop.f32.mrf.mxu0
      %v5615 = vadd.f32 0.0, %v5614
      %v5616 = vpop.f32.mrf.mxu0
      %v5617 = vadd.f32 0.0, %v5616
      %5618 = vmatmul.bf16.gmra.mxu0 %v5536
      %v5619 = vpop.f32.mrf.mxu0
      %v5620 = vadd.f32 0.0, %v5619
      %v5621 = vpop.f32.mrf.mxu0
      %v5622 = vadd.f32 0.0, %v5621
      %5623 = vmatmul.bf16.gmra.mxu0 %v5539
      %v5624 = vpop.f32.mrf.mxu0
      %v5625 = vadd.f32 0.0, %v5624
      %v5626 = vpop.f32.mrf.mxu0
      %v5627 = vadd.f32 0.0, %v5626
      %5628 = vmatmul.bf16.gmra.mxu0 %v5542
      %v5629 = vpop.f32.mrf.mxu0
      %v5630 = vadd.f32 0.0, %v5629
      %v5631 = vpop.f32.mrf.mxu0
      %v5632 = vadd.f32 0.0, %v5631
      %5633 = vmatmul.bf16.gmra.mxu0 %v5545
      %v5634 = vpop.f32.mrf.mxu0
      %v5635 = vadd.f32 0.0, %v5634
      %v5636 = vpop.f32.mrf.mxu0
      %v5637 = vadd.f32 0.0, %v5636
      %5638 = vmatmul.bf16.gmra.mxu0 %v5548
      %v5639 = vpop.f32.mrf.mxu0
      %v5640 = vadd.f32 0.0, %v5639
      %v5641 = vpop.f32.mrf.mxu0
      %v5642 = vadd.f32 0.0, %v5641
      %5643 = vmatmul.bf16.gmra.mxu0 %v5551
      %v5644 = vpop.f32.mrf.mxu0
      %v5645 = vadd.f32 0.0, %v5644
      %v5646 = vpop.f32.mrf.mxu0
      %v5647 = vadd.f32 0.0, %v5646
      %5648 = vmatmul.bf16.gmra.mxu0 %v5554
      %v5649 = vpop.f32.mrf.mxu0
      %v5650 = vadd.f32 0.0, %v5649
      %v5651 = vpop.f32.mrf.mxu0
      %v5652 = vadd.f32 0.0, %v5651
      %5653 = vmatmul.bf16.gmra.mxu0 %v5557
      %v5654 = vpop.f32.mrf.mxu0
      %v5655 = vadd.f32 0.0, %v5654
      %v5656 = vpop.f32.mrf.mxu0
      %v5657 = vadd.f32 0.0, %v5656
      %5658 = vmatmul.bf16.gmra.mxu0 %v5560
      %v5659 = vpop.f32.mrf.mxu0
      %v5660 = vadd.f32 0.0, %v5659
      %v5661 = vpop.f32.mrf.mxu0
      %v5662 = vadd.f32 0.0, %v5661
      %5663 = vdwg.mxu0
      %v5664 = vmul.f32 %v5575, %v1513
      %v5665 = vmul.f32 %v5577, %v1514
      %v5666 = vmul.f32 %v5580, %v1515
      %v5667 = vmul.f32 %v5582, %v1516
      %v5668 = vmul.f32 %v5585, %v1517
      %v5669 = vmul.f32 %v5587, %v1518
      %v5670 = vmul.f32 %v5590, %v1519
      %v5671 = vmul.f32 %v5592, %v1520
      %v5672 = vmul.f32 %v5595, %v1521
      %v5673 = vmul.f32 %v5597, %v1522
      %v5674 = vmul.f32 %v5600, %v1523
      %v5675 = vmul.f32 %v5602, %v1524
      %v5676 = vmul.f32 %v5605, %v1525
      %v5677 = vmul.f32 %v5607, %v1526
      %v5678 = vmul.f32 %v5610, %v1527
      %v5679 = vmul.f32 %v5612, %v1528
      %v5680 = vmul.f32 %v5615, %v1529
      %v5681 = vmul.f32 %v5617, %v1530
      %v5682 = vmul.f32 %v5620, %v1531
      %v5683 = vmul.f32 %v5622, %v1532
      %v5684 = vmul.f32 %v5625, %v1533
      %v5685 = vmul.f32 %v5627, %v1534
      %v5686 = vmul.f32 %v5630, %v1535
      %v5687 = vmul.f32 %v5632, %v1536
      %v5688 = vmul.f32 %v5635, %v1537
      %v5689 = vmul.f32 %v5637, %v1538
      %v5690 = vmul.f32 %v5640, %v1539
      %v5691 = vmul.f32 %v5642, %v1540
      %v5692 = vmul.f32 %v5645, %v1541
      %v5693 = vmul.f32 %v5647, %v1542
      %v5694 = vmul.f32 %v5650, %v1543
      %v5695 = vmul.f32 %v5652, %v1544
      %v5696 = vmul.f32 %v5655, %v1545
      %v5697 = vmul.f32 %v5657, %v1546
      %v5698 = vmul.f32 %v5660, %v1547
      %v5699 = vmul.f32 %v5662, %v1548
      %v5700 = vsel %vm2907, %v5664, 0.0
      %v5701 = vsel %vm2907, %v5665, 0.0
      %v5702 = vadd.f32 %v5700, %v5701
      %v5703 = vsel %vm2907, %v5666, 0.0
      %v5704 = vadd.f32 %v5702, %v5703
      %v5705 = vsel %vm2907, %v5667, 0.0
      %v5706 = vadd.f32 %v5704, %v5705
      %v5707 = vsel %vm2907, %v5668, 0.0
      %v5708 = vadd.f32 %v5706, %v5707
      %v5709 = vsel %vm2907, %v5669, 0.0
      %v5710 = vadd.f32 %v5708, %v5709
      %v5711 = vsel %vm2907, %v5670, 0.0
      %v5712 = vadd.f32 %v5710, %v5711
      %v5713 = vsel %vm2907, %v5671, 0.0
      %v5714 = vadd.f32 %v5712, %v5713
      %v5715 = vsel %vm2907, %v5672, 0.0
      %v5716 = vadd.f32 %v5714, %v5715
      %v5717 = vsel %vm2907, %v5673, 0.0
      %v5718 = vadd.f32 %v5716, %v5717
      %v5719 = vsel %vm2907, %v5674, 0.0
      %v5720 = vadd.f32 %v5718, %v5719
      %v5721 = vsel %vm2907, %v5675, 0.0
      %v5722 = vadd.f32 %v5720, %v5721
      %v5723 = vsel %vm2907, %v5676, 0.0
      %v5724 = vadd.f32 %v5722, %v5723
      %v5725 = vsel %vm2907, %v5677, 0.0
      %v5726 = vadd.f32 %v5724, %v5725
      %v5727 = vsel %vm2907, %v5678, 0.0
      %v5728 = vadd.f32 %v5726, %v5727
      %v5729 = vsel %vm2907, %v5679, 0.0
      %v5730 = vadd.f32 %v5728, %v5729
      %v5731 = vsel %vm2907, %v5680, 0.0
      %v5732 = vadd.f32 %v5730, %v5731
      %v5733 = vsel %vm2907, %v5681, 0.0
      %v5734 = vadd.f32 %v5732, %v5733
      %v5735 = vsel %vm2907, %v5682, 0.0
      %v5736 = vadd.f32 %v5734, %v5735
      %v5737 = vsel %vm2907, %v5683, 0.0
      %v5738 = vadd.f32 %v5736, %v5737
      %v5739 = vsel %vm2907, %v5684, 0.0
      %v5740 = vadd.f32 %v5738, %v5739
      %v5741 = vsel %vm2907, %v5685, 0.0
      %v5742 = vadd.f32 %v5740, %v5741
      %v5743 = vsel %vm2907, %v5686, 0.0
      %v5744 = vadd.f32 %v5742, %v5743
      %v5745 = vsel %vm2907, %v5687, 0.0
      %v5746 = vadd.f32 %v5744, %v5745
      %v5747 = vsel %vm2907, %v5688, 0.0
      %v5748 = vadd.f32 %v5746, %v5747
      %v5749 = vsel %vm2907, %v5689, 0.0
      %v5750 = vadd.f32 %v5748, %v5749
      %v5751 = vsel %vm2907, %v5690, 0.0
      %v5752 = vadd.f32 %v5750, %v5751
      %v5753 = vsel %vm2907, %v5691, 0.0
      %v5754 = vadd.f32 %v5752, %v5753
      %v5755 = vsel %vm2907, %v5692, 0.0
      %v5756 = vadd.f32 %v5754, %v5755
      %v5757 = vsel %vm2907, %v5693, 0.0
      %v5758 = vadd.f32 %v5756, %v5757
      %v5759 = vsel %vm2907, %v5694, 0.0
      %v5760 = vadd.f32 %v5758, %v5759
      %v5761 = vsel %vm2907, %v5695, 0.0
      %v5762 = vadd.f32 %v5760, %v5761
      %v5763 = vsel %vm2907, %v5696, 0.0
      %v5764 = vadd.f32 %v5762, %v5763
      %v5765 = vsel %vm2907, %v5697, 0.0
      %v5766 = vadd.f32 %v5764, %v5765
      %v5767 = vsel %vm2907, %v5698, 0.0
      %v5768 = vadd.f32 %v5766, %v5767
      %v5769 = vsel %vm2907, %v5699, 0.0
      %v5770 = vadd.f32 %v5768, %v5769
      %v5771 = vrot.slane %v5770, 4
      %v5772 = vadd.f32 %v5770, %v5771
      %v5773 = vrot.slane %v5772, 2
      %v5774 = vadd.f32 %v5772, %v5773
      %v5775 = vrot.slane %v5774, 1
      %v5776 = vadd.f32 %v5774, %v5775
      %v5777 = vmul.f32 %v5776, 0.00390625
      %v5778 = vsub.f32 %v5575, %v5777
      %v5779 = vsub.f32 %v5577, %v5777
      %v5780 = vsub.f32 %v5580, %v5777
      %v5781 = vsub.f32 %v5582, %v5777
      %v5782 = vsub.f32 %v5585, %v5777
      %v5783 = vsub.f32 %v5587, %v5777
      %v5784 = vsub.f32 %v5590, %v5777
      %v5785 = vsub.f32 %v5592, %v5777
      %v5786 = vsub.f32 %v5595, %v5777
      %v5787 = vsub.f32 %v5597, %v5777
      %v5788 = vsub.f32 %v5600, %v5777
      %v5789 = vsub.f32 %v5602, %v5777
      %v5790 = vsub.f32 %v5605, %v5777
      %v5791 = vsub.f32 %v5607, %v5777
      %v5792 = vsub.f32 %v5610, %v5777
      %v5793 = vsub.f32 %v5612, %v5777
      %v5794 = vsub.f32 %v5615, %v5777
      %v5795 = vsub.f32 %v5617, %v5777
      %v5796 = vsub.f32 %v5620, %v5777
      %v5797 = vsub.f32 %v5622, %v5777
      %v5798 = vsub.f32 %v5625, %v5777
      %v5799 = vsub.f32 %v5627, %v5777
      %v5800 = vsub.f32 %v5630, %v5777
      %v5801 = vsub.f32 %v5632, %v5777
      %v5802 = vsub.f32 %v5635, %v5777
      %v5803 = vsub.f32 %v5637, %v5777
      %v5804 = vsub.f32 %v5640, %v5777
      %v5805 = vsub.f32 %v5642, %v5777
      %v5806 = vsub.f32 %v5645, %v5777
      %v5807 = vsub.f32 %v5647, %v5777
      %v5808 = vsub.f32 %v5650, %v5777
      %v5809 = vsub.f32 %v5652, %v5777
      %v5810 = vsub.f32 %v5655, %v5777
      %v5811 = vsub.f32 %v5657, %v5777
      %v5812 = vsub.f32 %v5660, %v5777
      %v5813 = vsub.f32 %v5662, %v5777
      %v5814 = vmul.f32 %v5778, %v5778
      %v5815 = vmul.f32 %v5779, %v5779
      %v5816 = vmul.f32 %v5780, %v5780
      %v5817 = vmul.f32 %v5781, %v5781
      %v5818 = vmul.f32 %v5782, %v5782
      %v5819 = vmul.f32 %v5783, %v5783
      %v5820 = vmul.f32 %v5784, %v5784
      %v5821 = vmul.f32 %v5785, %v5785
      %v5822 = vmul.f32 %v5786, %v5786
      %v5823 = vmul.f32 %v5787, %v5787
      %v5824 = vmul.f32 %v5788, %v5788
      %v5825 = vmul.f32 %v5789, %v5789
      %v5826 = vmul.f32 %v5790, %v5790
      %v5827 = vmul.f32 %v5791, %v5791
      %v5828 = vmul.f32 %v5792, %v5792
      %v5829 = vmul.f32 %v5793, %v5793
      %v5830 = vmul.f32 %v5794, %v5794
      %v5831 = vmul.f32 %v5795, %v5795
      %v5832 = vmul.f32 %v5796, %v5796
      %v5833 = vmul.f32 %v5797, %v5797
      %v5834 = vmul.f32 %v5798, %v5798
      %v5835 = vmul.f32 %v5799, %v5799
      %v5836 = vmul.f32 %v5800, %v5800
      %v5837 = vmul.f32 %v5801, %v5801
      %v5838 = vmul.f32 %v5802, %v5802
      %v5839 = vmul.f32 %v5803, %v5803
      %v5840 = vmul.f32 %v5804, %v5804
      %v5841 = vmul.f32 %v5805, %v5805
      %v5842 = vmul.f32 %v5806, %v5806
      %v5843 = vmul.f32 %v5807, %v5807
      %v5844 = vmul.f32 %v5808, %v5808
      %v5845 = vmul.f32 %v5809, %v5809
      %v5846 = vmul.f32 %v5810, %v5810
      %v5847 = vmul.f32 %v5811, %v5811
      %v5848 = vmul.f32 %v5812, %v5812
      %v5849 = vmul.f32 %v5813, %v5813
      %v5850 = vmul.f32 %v5814, %v1513
      %v5851 = vmul.f32 %v5815, %v1514
      %v5852 = vmul.f32 %v5816, %v1515
      %v5853 = vmul.f32 %v5817, %v1516
      %v5854 = vmul.f32 %v5818, %v1517
      %v5855 = vmul.f32 %v5819, %v1518
      %v5856 = vmul.f32 %v5820, %v1519
      %v5857 = vmul.f32 %v5821, %v1520
      %v5858 = vmul.f32 %v5822, %v1521
      %v5859 = vmul.f32 %v5823, %v1522
      %v5860 = vmul.f32 %v5824, %v1523
      %v5861 = vmul.f32 %v5825, %v1524
      %v5862 = vmul.f32 %v5826, %v1525
      %v5863 = vmul.f32 %v5827, %v1526
      %v5864 = vmul.f32 %v5828, %v1527
      %v5865 = vmul.f32 %v5829, %v1528
      %v5866 = vmul.f32 %v5830, %v1529
      %v5867 = vmul.f32 %v5831, %v1530
      %v5868 = vmul.f32 %v5832, %v1531
      %v5869 = vmul.f32 %v5833, %v1532
      %v5870 = vmul.f32 %v5834, %v1533
      %v5871 = vmul.f32 %v5835, %v1534
      %v5872 = vmul.f32 %v5836, %v1535
      %v5873 = vmul.f32 %v5837, %v1536
      %v5874 = vmul.f32 %v5838, %v1537
      %v5875 = vmul.f32 %v5839, %v1538
      %v5876 = vmul.f32 %v5840, %v1539
      %v5877 = vmul.f32 %v5841, %v1540
      %v5878 = vmul.f32 %v5842, %v1541
      %v5879 = vmul.f32 %v5843, %v1542
      %v5880 = vmul.f32 %v5844, %v1543
      %v5881 = vmul.f32 %v5845, %v1544
      %v5882 = vmul.f32 %v5846, %v1545
      %v5883 = vmul.f32 %v5847, %v1546
      %v5884 = vmul.f32 %v5848, %v1547
      %v5885 = vmul.f32 %v5849, %v1548
      %v5886 = vsel %vm2907, %v5850, 0.0
      %v5887 = vsel %vm2907, %v5851, 0.0
      %v5888 = vadd.f32 %v5886, %v5887
      %v5889 = vsel %vm2907, %v5852, 0.0
      %v5890 = vadd.f32 %v5888, %v5889
      %v5891 = vsel %vm2907, %v5853, 0.0
      %v5892 = vadd.f32 %v5890, %v5891
      %v5893 = vsel %vm2907, %v5854, 0.0
      %v5894 = vadd.f32 %v5892, %v5893
      %v5895 = vsel %vm2907, %v5855, 0.0
      %v5896 = vadd.f32 %v5894, %v5895
      %v5897 = vsel %vm2907, %v5856, 0.0
      %v5898 = vadd.f32 %v5896, %v5897
      %v5899 = vsel %vm2907, %v5857, 0.0
      %v5900 = vadd.f32 %v5898, %v5899
      %v5901 = vsel %vm2907, %v5858, 0.0
      %v5902 = vadd.f32 %v5900, %v5901
      %v5903 = vsel %vm2907, %v5859, 0.0
      %v5904 = vadd.f32 %v5902, %v5903
      %v5905 = vsel %vm2907, %v5860, 0.0
      %v5906 = vadd.f32 %v5904, %v5905
      %v5907 = vsel %vm2907, %v5861, 0.0
      %v5908 = vadd.f32 %v5906, %v5907
      %v5909 = vsel %vm2907, %v5862, 0.0
      %v5910 = vadd.f32 %v5908, %v5909
      %v5911 = vsel %vm2907, %v5863, 0.0
      %v5912 = vadd.f32 %v5910, %v5911
      %v5913 = vsel %vm2907, %v5864, 0.0
      %v5914 = vadd.f32 %v5912, %v5913
      %v5915 = vsel %vm2907, %v5865, 0.0
      %v5916 = vadd.f32 %v5914, %v5915
      %v5917 = vsel %vm2907, %v5866, 0.0
      %v5918 = vadd.f32 %v5916, %v5917
      %v5919 = vsel %vm2907, %v5867, 0.0
      %v5920 = vadd.f32 %v5918, %v5919
      %v5921 = vsel %vm2907, %v5868, 0.0
      %v5922 = vadd.f32 %v5920, %v5921
      %v5923 = vsel %vm2907, %v5869, 0.0
      %v5924 = vadd.f32 %v5922, %v5923
      %v5925 = vsel %vm2907, %v5870, 0.0
      %v5926 = vadd.f32 %v5924, %v5925
      %v5927 = vsel %vm2907, %v5871, 0.0
      %v5928 = vadd.f32 %v5926, %v5927
      %v5929 = vsel %vm2907, %v5872, 0.0
      %v5930 = vadd.f32 %v5928, %v5929
      %v5931 = vsel %vm2907, %v5873, 0.0
      %v5932 = vadd.f32 %v5930, %v5931
      %v5933 = vsel %vm2907, %v5874, 0.0
      %v5934 = vadd.f32 %v5932, %v5933
      %v5935 = vsel %vm2907, %v5875, 0.0
      %v5936 = vadd.f32 %v5934, %v5935
      %v5937 = vsel %vm2907, %v5876, 0.0
      %v5938 = vadd.f32 %v5936, %v5937
      %v5939 = vsel %vm2907, %v5877, 0.0
      %v5940 = vadd.f32 %v5938, %v5939
      %v5941 = vsel %vm2907, %v5878, 0.0
      %v5942 = vadd.f32 %v5940, %v5941
      %v5943 = vsel %vm2907, %v5879, 0.0
      %v5944 = vadd.f32 %v5942, %v5943
      %v5945 = vsel %vm2907, %v5880, 0.0
      %v5946 = vadd.f32 %v5944, %v5945
      %v5947 = vsel %vm2907, %v5881, 0.0
      %v5948 = vadd.f32 %v5946, %v5947
      %v5949 = vsel %vm2907, %v5882, 0.0
      %v5950 = vadd.f32 %v5948, %v5949
      %v5951 = vsel %vm2907, %v5883, 0.0
      %v5952 = vadd.f32 %v5950, %v5951
      %v5953 = vsel %vm2907, %v5884, 0.0
      %v5954 = vadd.f32 %v5952, %v5953
      %v5955 = vsel %vm2907, %v5885, 0.0
      %v5956 = vadd.f32 %v5954, %v5955
      %v5957 = vrot.slane %v5956, 4
      %v5958 = vadd.f32 %v5956, %v5957
      %v5959 = vrot.slane %v5958, 2
      %v5960 = vadd.f32 %v5958, %v5959
      %v5961 = vrot.slane %v5960, 1
      %v5962 = vadd.f32 %v5960, %v5961
      %v5963 = vmul.f32 %v5962, 0.00390625
      %v5964 = vadd.f32 %v5963, 1e-05
      %v5965 = vrsqrt.pop %v5964
      %v5966 = vmul.f32 %v5965, %v5964
      %v5967 = vmul.f32 %v5966, %v5965
      %v5968 = vmul.f32 0.5, %v5967
      %v5969 = vsub.f32 1.5, %v5968
      %v5970 = vmul.f32 %v5965, %v5969
      %vm5971 = vweird.f32 %v5964
      %vm5972 = vweird.f32 %v5965
      %vm5973 = vmor %vm5971, %vm5972
      %v5974 = vsel %vm5973, %v5965, %v5970
      %v5975 = vmul.f32 %v5778, %v5974
      %v5976 = vmul.f32 %v5779, %v5974
      %v5977 = vmul.f32 %v5780, %v5974
      %v5978 = vmul.f32 %v5781, %v5974
      %v5979 = vmul.f32 %v5782, %v5974
      %v5980 = vmul.f32 %v5783, %v5974
      %v5981 = vmul.f32 %v5784, %v5974
      %v5982 = vmul.f32 %v5785, %v5974
      %v5983 = vmul.f32 %v5786, %v5974
      %v5984 = vmul.f32 %v5787, %v5974
      %v5985 = vmul.f32 %v5788, %v5974
      %v5986 = vmul.f32 %v5789, %v5974
      %v5987 = vmul.f32 %v5790, %v5974
      %v5988 = vmul.f32 %v5791, %v5974
      %v5989 = vmul.f32 %v5792, %v5974
      %v5990 = vmul.f32 %v5793, %v5974
      %v5991 = vmul.f32 %v5794, %v5974
      %v5992 = vmul.f32 %v5795, %v5974
      %v5993 = vmul.f32 %v5796, %v5974
      %v5994 = vmul.f32 %v5797, %v5974
      %v5995 = vmul.f32 %v5798, %v5974
      %v5996 = vmul.f32 %v5799, %v5974
      %v5997 = vmul.f32 %v5800, %v5974
      %v5998 = vmul.f32 %v5801, %v5974
      %v5999 = vmul.f32 %v5802, %v5974
      %v6000 = vmul.f32 %v5803, %v5974
      %v6001 = vmul.f32 %v5804, %v5974
      %v6002 = vmul.f32 %v5805, %v5974
      %v6003 = vmul.f32 %v5806, %v5974
      %v6004 = vmul.f32 %v5807, %v5974
      %v6005 = vmul.f32 %v5808, %v5974
      %v6006 = vmul.f32 %v5809, %v5974
      %v6007 = vmul.f32 %v5810, %v5974
      %v6008 = vmul.f32 %v5811, %v5974
      %v6009 = vmul.f32 %v5812, %v5974
      %v6010 = vmul.f32 %v5813, %v5974
      %v6011 = vadd.f32 %v5975, %v1677
      %v6012 = vadd.f32 %v5976, %v1678
      %v6013 = vadd.f32 %v5977, %v1679
      %v6014 = vadd.f32 %v5978, %v1680
      %v6015 = vadd.f32 %v5979, %v1681
      %v6016 = vadd.f32 %v5980, %v1682
      %v6017 = vadd.f32 %v5981, %v1683
      %v6018 = vadd.f32 %v5982, %v1684
      %v6019 = vadd.f32 %v5983, %v1685
      %v6020 = vadd.f32 %v5984, %v1686
      %v6021 = vadd.f32 %v5985, %v1687
      %v6022 = vadd.f32 %v5986, %v1688
      %v6023 = vadd.f32 %v5987, %v1689
      %v6024 = vadd.f32 %v5988, %v1690
      %v6025 = vadd.f32 %v5989, %v1691
      %v6026 = vadd.f32 %v5990, %v1692
      %v6027 = vadd.f32 %v5991, %v1693
      %v6028 = vadd.f32 %v5992, %v1694
      %v6029 = vadd.f32 %v5993, %v1695
      %v6030 = vadd.f32 %v5994, %v1696
      %v6031 = vadd.f32 %v5995, %v1697
      %v6032 = vadd.f32 %v5996, %v1698
      %v6033 = vadd.f32 %v5997, %v1699
      %v6034 = vadd.f32 %v5998, %v1700
      %v6035 = vadd.f32 %v5999, %v1701
      %v6036 = vadd.f32 %v6000, %v1702
      %v6037 = vadd.f32 %v6001, %v1703
      %v6038 = vadd.f32 %v6002, %v1704
      %v6039 = vadd.f32 %v6003, %v1705
      %v6040 = vadd.f32 %v6004, %v1706
      %v6041 = vadd.f32 %v6005, %v1707
      %v6042 = vadd.f32 %v6006, %v1708
      %v6043 = vadd.f32 %v6007, %v1709
      %v6044 = vadd.f32 %v6008, %v1710
      %v6045 = vadd.f32 %v6009, %v1711
      %v6046 = vadd.f32 %v6010, %v1712
      %v6047 = vmax.f32 %v6011, 0.0
      %v6048 = vmax.f32 %v6012, 0.0
      %v6049 = vmax.f32 %v6013, 0.0
      %v6050 = vmax.f32 %v6014, 0.0
      %v6051 = vmax.f32 %v6015, 0.0
      %v6052 = vmax.f32 %v6016, 0.0
      %v6053 = vmax.f32 %v6017, 0.0
      %v6054 = vmax.f32 %v6018, 0.0
      %v6055 = vmax.f32 %v6019, 0.0
      %v6056 = vmax.f32 %v6020, 0.0
      %v6057 = vmax.f32 %v6021, 0.0
      %v6058 = vmax.f32 %v6022, 0.0
      %v6059 = vmax.f32 %v6023, 0.0
      %v6060 = vmax.f32 %v6024, 0.0
      %v6061 = vmax.f32 %v6025, 0.0
      %v6062 = vmax.f32 %v6026, 0.0
      %v6063 = vmax.f32 %v6027, 0.0
      %v6064 = vmax.f32 %v6028, 0.0
      %v6065 = vmax.f32 %v6029, 0.0
      %v6066 = vmax.f32 %v6030, 0.0
      %v6067 = vmax.f32 %v6031, 0.0
      %v6068 = vmax.f32 %v6032, 0.0
      %v6069 = vmax.f32 %v6033, 0.0
      %v6070 = vmax.f32 %v6034, 0.0
      %v6071 = vmax.f32 %v6035, 0.0
      %v6072 = vmax.f32 %v6036, 0.0
      %v6073 = vmax.f32 %v6037, 0.0
      %v6074 = vmax.f32 %v6038, 0.0
      %v6075 = vmax.f32 %v6039, 0.0
      %v6076 = vmax.f32 %v6040, 0.0
      %v6077 = vmax.f32 %v6041, 0.0
      %v6078 = vmax.f32 %v6042, 0.0
      %v6079 = vmax.f32 %v6043, 0.0
      %v6080 = vmax.f32 %v6044, 0.0
      %v6081 = vmax.f32 %v6045, 0.0
      %v6082 = vmax.f32 %v6046, 0.0
      %6083 = vst.msk [vmem:[%s177] sm:$0xff] %vm2907, %v6047
      %6084 = vst.msk [vmem:[%s177 + $0x8] sm:$0xff] %vm2907, %v6048
      %6085 = vst.msk [vmem:[%s177 + $0x10] sm:$0xff] %vm2907, %v6049
      %6086 = vst.msk [vmem:[%s177 + $0x18] sm:$0xff] %vm2907, %v6050
      %6087 = vst.msk [vmem:[%s177 + $0x20] sm:$0xff] %vm2907, %v6051
      %6088 = vst.msk [vmem:[%s177 + $0x28] sm:$0xff] %vm2907, %v6052
      %6089 = vst.msk [vmem:[%s177 + $0x30] sm:$0xff] %vm2907, %v6053
      %6090 = vst.msk [vmem:[%s177 + $0x38] sm:$0xff] %vm2907, %v6054
      %6091 = vst.msk [vmem:[%s177 + $0x40] sm:$0xff] %vm2907, %v6055
      %6092 = vst.msk [vmem:[%s177 + $0x48] sm:$0xff] %vm2907, %v6056
      %6093 = vst.msk [vmem:[%s177 + $0x50] sm:$0xff] %vm2907, %v6057
      %6094 = vst.msk [vmem:[%s177 + $0x58] sm:$0xff] %vm2907, %v6058
      %6095 = vst.msk [vmem:[%s177 + $0x60] sm:$0xff] %vm2907, %v6059
      %6096 = vst.msk [vmem:[%s177 + $0x68] sm:$0xff] %vm2907, %v6060
      %6097 = vst.msk [vmem:[%s177 + $0x70] sm:$0xff] %vm2907, %v6061
      %6098 = vst.msk [vmem:[%s177 + $0x78] sm:$0xff] %vm2907, %v6062
      %6099 = vst.msk [vmem:[%s177 + $0x80] sm:$0xff] %vm2907, %v6063
      %6100 = vst.msk [vmem:[%s177 + $0x88] sm:$0xff] %vm2907, %v6064
      %6101 = vst.msk [vmem:[%s177 + $0x90] sm:$0xff] %vm2907, %v6065
      %6102 = vst.msk [vmem:[%s177 + $0x98] sm:$0xff] %vm2907, %v6066
      %6103 = vst.msk [vmem:[%s177 + $0xa0] sm:$0xff] %vm2907, %v6067
      %6104 = vst.msk [vmem:[%s177 + $0xa8] sm:$0xff] %vm2907, %v6068
      %6105 = vst.msk [vmem:[%s177 + $0xb0] sm:$0xff] %vm2907, %v6069
      %6106 = vst.msk [vmem:[%s177 + $0xb8] sm:$0xff] %vm2907, %v6070
      %6107 = vst.msk [vmem:[%s177 + $0xc0] sm:$0xff] %vm2907, %v6071
      %6108 = vst.msk [vmem:[%s177 + $0xc8] sm:$0xff] %vm2907, %v6072
      %6109 = vst.msk [vmem:[%s177 + $0xd0] sm:$0xff] %vm2907, %v6073
      %6110 = vst.msk [vmem:[%s177 + $0xd8] sm:$0xff] %vm2907, %v6074
      %6111 = vst.msk [vmem:[%s177 + $0xe0] sm:$0xff] %vm2907, %v6075
      %6112 = vst.msk [vmem:[%s177 + $0xe8] sm:$0xff] %vm2907, %v6076
      %6113 = vst.msk [vmem:[%s177 + $0xf0] sm:$0xff] %vm2907, %v6077
      %6114 = vst.msk [vmem:[%s177 + $0xf8] sm:$0xff] %vm2907, %v6078
      %6115 = vst.msk [vmem:[%s177 + $0x100] sm:$0xff] %vm2907, %v6079
      %6116 = vst.msk [vmem:[%s177 + $0x108] sm:$0xff] %vm2907, %v6080
      %6117 = vst.msk [vmem:[%s177 + $0x110] sm:$0xff] %vm2907, %v6081
      %6118 = vst.msk [vmem:[%s177 + $0x118] sm:$0xff] %vm2907, %v6082
      %s6119 = scalar_lea.vmem %s170, 328
      %v6120 = vld [vmem:[%s6119] sm:$0xff]
      %v6121 = vld [vmem:[%s6119 + $0x8] sm:$0xff]
      %v6122 = vld [vmem:[%s6119 + $0x10] sm:$0xff]
      %v6123 = vld [vmem:[%s6119 + $0x18] sm:$0xff]
      %v6124 = vld [vmem:[%s6119 + $0x20] sm:$0xff]
      %v6125 = vld [vmem:[%s6119 + $0x28] sm:$0xff]
      %v6126 = vld [vmem:[%s6119 + $0x30] sm:$0xff]
      %v6127 = vld [vmem:[%s6119 + $0x38] sm:$0xff]
      %v6128 = vld [vmem:[%s6119 + $0x40] sm:$0xff]
      %v6129 = vld [vmem:[%s6119 + $0x48] sm:$0xff]
      %v6130 = vld [vmem:[%s6119 + $0x50] sm:$0xff]
      %v6131 = vld [vmem:[%s6119 + $0x58] sm:$0xff]
      %v6132 = vld [vmem:[%s6119 + $0x60] sm:$0xff]
      %v6133 = vld [vmem:[%s6119 + $0x68] sm:$0xff]
      %v6134 = vld [vmem:[%s6119 + $0x70] sm:$0xff]
      %v6135 = vld [vmem:[%s6119 + $0x78] sm:$0xff]
      %v6136 = vld [vmem:[%s6119 + $0x80] sm:$0xff]
      %v6137 = vld [vmem:[%s6119 + $0x88] sm:$0xff]
      %v6138 = vld [vmem:[%s6119 + $0x90] sm:$0xff]
      %v6139 = vld [vmem:[%s6119 + $0x98] sm:$0xff]
      %v6140 = vld [vmem:[%s6119 + $0xa0] sm:$0xff]
      %v6141 = vld [vmem:[%s6119 + $0xa8] sm:$0xff]
      %v6142 = vld [vmem:[%s6119 + $0xb0] sm:$0xff]
      %v6143 = vld [vmem:[%s6119 + $0xb8] sm:$0xff]
      %v6144 = vld [vmem:[%s6119 + $0xc0] sm:$0xff]
      %v6145 = vld [vmem:[%s6119 + $0xc8] sm:$0xff]
      %v6146 = vld [vmem:[%s6119 + $0xd0] sm:$0xff]
      %v6147 = vld [vmem:[%s6119 + $0xd8] sm:$0xff]
      %v6148 = vld [vmem:[%s6119 + $0xe0] sm:$0xff]
      %v6149 = vld [vmem:[%s6119 + $0xe8] sm:$0xff]
      %v6150 = vld [vmem:[%s6119 + $0xf0] sm:$0xff]
      %v6151 = vld [vmem:[%s6119 + $0xf8] sm:$0xff]
      %v6152 = vld [vmem:[%s6119 + $0x100] sm:$0xff]
      %v6153 = vld [vmem:[%s6119 + $0x108] sm:$0xff]
      %v6154 = vld [vmem:[%s6119 + $0x110] sm:$0xff]
      %v6155 = vld [vmem:[%s6119 + $0x118] sm:$0xff]
      %v6156 = vld [vmem:[%s6119 + $0x1] sm:$0xff]
      %v6157 = vld [vmem:[%s6119 + $0x9] sm:$0xff]
      %v6158 = vld [vmem:[%s6119 + $0x11] sm:$0xff]
      %v6159 = vld [vmem:[%s6119 + $0x19] sm:$0xff]
      %v6160 = vld [vmem:[%s6119 + $0x21] sm:$0xff]
      %v6161 = vld [vmem:[%s6119 + $0x29] sm:$0xff]
      %v6162 = vld [vmem:[%s6119 + $0x31] sm:$0xff]
      %v6163 = vld [vmem:[%s6119 + $0x39] sm:$0xff]
      %v6164 = vld [vmem:[%s6119 + $0x41] sm:$0xff]
      %v6165 = vld [vmem:[%s6119 + $0x49] sm:$0xff]
      %v6166 = vld [vmem:[%s6119 + $0x51] sm:$0xff]
      %v6167 = vld [vmem:[%s6119 + $0x59] sm:$0xff]
      %v6168 = vld [vmem:[%s6119 + $0x61] sm:$0xff]
      %v6169 = vld [vmem:[%s6119 + $0x69] sm:$0xff]
      %v6170 = vld [vmem:[%s6119 + $0x71] sm:$0xff]
      %v6171 = vld [vmem:[%s6119 + $0x79] sm:$0xff]
      %v6172 = vld [vmem:[%s6119 + $0x81] sm:$0xff]
      %v6173 = vld [vmem:[%s6119 + $0x89] sm:$0xff]
      %v6174 = vld [vmem:[%s6119 + $0x91] sm:$0xff]
      %v6175 = vld [vmem:[%s6119 + $0x99] sm:$0xff]
      %v6176 = vld [vmem:[%s6119 + $0xa1] sm:$0xff]
      %v6177 = vld [vmem:[%s6119 + $0xa9] sm:$0xff]
      %v6178 = vld [vmem:[%s6119 + $0xb1] sm:$0xff]
      %v6179 = vld [vmem:[%s6119 + $0xb9] sm:$0xff]
      %v6180 = vld [vmem:[%s6119 + $0xc1] sm:$0xff]
      %v6181 = vld [vmem:[%s6119 + $0xc9] sm:$0xff]
      %v6182 = vld [vmem:[%s6119 + $0xd1] sm:$0xff]
      %v6183 = vld [vmem:[%s6119 + $0xd9] sm:$0xff]
      %v6184 = vld [vmem:[%s6119 + $0xe1] sm:$0xff]
      %v6185 = vld [vmem:[%s6119 + $0xe9] sm:$0xff]
      %v6186 = vld [vmem:[%s6119 + $0xf1] sm:$0xff]
      %v6187 = vld [vmem:[%s6119 + $0xf9] sm:$0xff]
      %v6188 = vld [vmem:[%s6119 + $0x101] sm:$0xff]
      %v6189 = vld [vmem:[%s6119 + $0x109] sm:$0xff]
      %v6190 = vld [vmem:[%s6119 + $0x111] sm:$0xff]
      %v6191 = vld [vmem:[%s6119 + $0x119] sm:$0xff]
      %v6192 = vld [vmem:[%s6119 + $0x2] sm:$0xff]
      %v6193 = vld [vmem:[%s6119 + $0xa] sm:$0xff]
      %v6194 = vld [vmem:[%s6119 + $0x12] sm:$0xff]
      %v6195 = vld [vmem:[%s6119 + $0x1a] sm:$0xff]
      %v6196 = vld [vmem:[%s6119 + $0x22] sm:$0xff]
      %v6197 = vld [vmem:[%s6119 + $0x2a] sm:$0xff]
      %v6198 = vld [vmem:[%s6119 + $0x32] sm:$0xff]
      %v6199 = vld [vmem:[%s6119 + $0x3a] sm:$0xff]
      %v6200 = vld [vmem:[%s6119 + $0x42] sm:$0xff]
      %v6201 = vld [vmem:[%s6119 + $0x4a] sm:$0xff]
      %v6202 = vld [vmem:[%s6119 + $0x52] sm:$0xff]
      %v6203 = vld [vmem:[%s6119 + $0x5a] sm:$0xff]
      %v6204 = vld [vmem:[%s6119 + $0x62] sm:$0xff]
      %v6205 = vld [vmem:[%s6119 + $0x6a] sm:$0xff]
      %v6206 = vld [vmem:[%s6119 + $0x72] sm:$0xff]
      %v6207 = vld [vmem:[%s6119 + $0x7a] sm:$0xff]
      %v6208 = vld [vmem:[%s6119 + $0x82] sm:$0xff]
      %v6209 = vld [vmem:[%s6119 + $0x8a] sm:$0xff]
      %v6210 = vld [vmem:[%s6119 + $0x92] sm:$0xff]
      %v6211 = vld [vmem:[%s6119 + $0x9a] sm:$0xff]
      %v6212 = vld [vmem:[%s6119 + $0xa2] sm:$0xff]
      %v6213 = vld [vmem:[%s6119 + $0xaa] sm:$0xff]
      %v6214 = vld [vmem:[%s6119 + $0xb2] sm:$0xff]
      %v6215 = vld [vmem:[%s6119 + $0xba] sm:$0xff]
      %v6216 = vld [vmem:[%s6119 + $0xc2] sm:$0xff]
      %v6217 = vld [vmem:[%s6119 + $0xca] sm:$0xff]
      %v6218 = vld [vmem:[%s6119 + $0xd2] sm:$0xff]
      %v6219 = vld [vmem:[%s6119 + $0xda] sm:$0xff]
      %v6220 = vld [vmem:[%s6119 + $0xe2] sm:$0xff]
      %v6221 = vld [vmem:[%s6119 + $0xea] sm:$0xff]
      %v6222 = vld [vmem:[%s6119 + $0xf2] sm:$0xff]
      %v6223 = vld [vmem:[%s6119 + $0xfa] sm:$0xff]
      %v6224 = vld [vmem:[%s6119 + $0x102] sm:$0xff]
      %v6225 = vld [vmem:[%s6119 + $0x10a] sm:$0xff]
      %v6226 = vld [vmem:[%s6119 + $0x112] sm:$0xff]
      %v6227 = vld [vmem:[%s6119 + $0x11a] sm:$0xff]
      %v6228 = vld [vmem:[%s6119 + $0x122] sm:$0xff]
      %v6229 = vld [vmem:[%s6119 + $0x12a] sm:$0xff]
      %v6230 = vld [vmem:[%s6119 + $0x13] sm:$0xff]
      %v6231 = vld [vmem:[%s6119 + $0x1b] sm:$0xff]
      %v6232 = vld [vmem:[%s6119 + $0x23] sm:$0xff]
      %v6233 = vld [vmem:[%s6119 + $0x2b] sm:$0xff]
      %v6234 = vld [vmem:[%s6119 + $0x33] sm:$0xff]
      %v6235 = vld [vmem:[%s6119 + $0x3b] sm:$0xff]
      %v6236 = vld [vmem:[%s6119 + $0x43] sm:$0xff]
      %v6237 = vld [vmem:[%s6119 + $0x4b] sm:$0xff]
      %v6238 = vld [vmem:[%s6119 + $0x53] sm:$0xff]
      %v6239 = vld [vmem:[%s6119 + $0x5b] sm:$0xff]
      %v6240 = vld [vmem:[%s6119 + $0x63] sm:$0xff]
      %v6241 = vld [vmem:[%s6119 + $0x6b] sm:$0xff]
      %v6242 = vld [vmem:[%s6119 + $0x73] sm:$0xff]
      %v6243 = vld [vmem:[%s6119 + $0x7b] sm:$0xff]
      %v6244 = vld [vmem:[%s6119 + $0x83] sm:$0xff]
      %v6245 = vld [vmem:[%s6119 + $0x8b] sm:$0xff]
      %v6246 = vld [vmem:[%s6119 + $0x93] sm:$0xff]
      %v6247 = vld [vmem:[%s6119 + $0x9b] sm:$0xff]
      %v6248 = vld [vmem:[%s6119 + $0xa3] sm:$0xff]
      %v6249 = vld [vmem:[%s6119 + $0xab] sm:$0xff]
      %v6250 = vld [vmem:[%s6119 + $0xb3] sm:$0xff]
      %v6251 = vld [vmem:[%s6119 + $0xbb] sm:$0xff]
      %v6252 = vld [vmem:[%s6119 + $0xc3] sm:$0xff]
      %v6253 = vld [vmem:[%s6119 + $0xcb] sm:$0xff]
      %v6254 = vld [vmem:[%s6119 + $0xd3] sm:$0xff]
      %v6255 = vld [vmem:[%s6119 + $0xdb] sm:$0xff]
      %v6256 = vld [vmem:[%s6119 + $0xe3] sm:$0xff]
      %v6257 = vld [vmem:[%s6119 + $0xeb] sm:$0xff]
      %v6258 = vld [vmem:[%s6119 + $0xf3] sm:$0xff]
      %v6259 = vld [vmem:[%s6119 + $0xfb] sm:$0xff]
      %v6260 = vld [vmem:[%s6119 + $0x103] sm:$0xff]
      %v6261 = vld [vmem:[%s6119 + $0x10b] sm:$0xff]
      %v6262 = vld [vmem:[%s6119 + $0x113] sm:$0xff]
      %v6263 = vld [vmem:[%s6119 + $0x11b] sm:$0xff]
      %v6264 = vld [vmem:[%s6119 + $0x123] sm:$0xff]
      %v6265 = vld [vmem:[%s6119 + $0x12b] sm:$0xff]
      %v6266 = vld [vmem:[%s6119 + $0x14] sm:$0xff]
      %v6267 = vld [vmem:[%s6119 + $0x1c] sm:$0xff]
      %v6268 = vld [vmem:[%s6119 + $0x24] sm:$0xff]
      %v6269 = vld [vmem:[%s6119 + $0x2c] sm:$0xff]
      %v6270 = vld [vmem:[%s6119 + $0x34] sm:$0xff]
      %v6271 = vld [vmem:[%s6119 + $0x3c] sm:$0xff]
      %v6272 = vld [vmem:[%s6119 + $0x44] sm:$0xff]
      %v6273 = vld [vmem:[%s6119 + $0x4c] sm:$0xff]
      %v6274 = vld [vmem:[%s6119 + $0x54] sm:$0xff]
      %v6275 = vld [vmem:[%s6119 + $0x5c] sm:$0xff]
      %v6276 = vld [vmem:[%s6119 + $0x64] sm:$0xff]
      %v6277 = vld [vmem:[%s6119 + $0x6c] sm:$0xff]
      %v6278 = vld [vmem:[%s6119 + $0x74] sm:$0xff]
      %v6279 = vld [vmem:[%s6119 + $0x7c] sm:$0xff]
      %v6280 = vld [vmem:[%s6119 + $0x84] sm:$0xff]
      %v6281 = vld [vmem:[%s6119 + $0x8c] sm:$0xff]
      %v6282 = vld [vmem:[%s6119 + $0x94] sm:$0xff]
      %v6283 = vld [vmem:[%s6119 + $0x9c] sm:$0xff]
      %v6284 = vld [vmem:[%s6119 + $0xa4] sm:$0xff]
      %v6285 = vld [vmem:[%s6119 + $0xac] sm:$0xff]
      %v6286 = vld [vmem:[%s6119 + $0xb4] sm:$0xff]
      %v6287 = vld [vmem:[%s6119 + $0xbc] sm:$0xff]
      %v6288 = vld [vmem:[%s6119 + $0xc4] sm:$0xff]
      %v6289 = vld [vmem:[%s6119 + $0xcc] sm:$0xff]
      %v6290 = vld [vmem:[%s6119 + $0xd4] sm:$0xff]
      %v6291 = vld [vmem:[%s6119 + $0xdc] sm:$0xff]
      %v6292 = vld [vmem:[%s6119 + $0xe4] sm:$0xff]
      %v6293 = vld [vmem:[%s6119 + $0xec] sm:$0xff]
      %v6294 = vld [vmem:[%s6119 + $0xf4] sm:$0xff]
      %v6295 = vld [vmem:[%s6119 + $0xfc] sm:$0xff]
      %v6296 = vld [vmem:[%s6119 + $0x104] sm:$0xff]
      %v6297 = vld [vmem:[%s6119 + $0x10c] sm:$0xff]
      %v6298 = vld [vmem:[%s6119 + $0x114] sm:$0xff]
      %v6299 = vld [vmem:[%s6119 + $0x11c] sm:$0xff]
      %v6300 = vld [vmem:[%s6119 + $0x124] sm:$0xff]
      %v6301 = vld [vmem:[%s6119 + $0x12c] sm:$0xff]
      %v6302 = vld [vmem:[%s6119 + $0x134] sm:$0xff]
      %v6303 = vld [vmem:[%s6119 + $0x13c] sm:$0xff]
      %v6304 = vld [vmem:[%s6119 + $0x25] sm:$0xff]
      %v6305 = vld [vmem:[%s6119 + $0x2d] sm:$0xff]
      %v6306 = vld [vmem:[%s6119 + $0x35] sm:$0xff]
      %v6307 = vld [vmem:[%s6119 + $0x3d] sm:$0xff]
      %v6308 = vld [vmem:[%s6119 + $0x45] sm:$0xff]
      %v6309 = vld [vmem:[%s6119 + $0x4d] sm:$0xff]
      %v6310 = vld [vmem:[%s6119 + $0x55] sm:$0xff]
      %v6311 = vld [vmem:[%s6119 + $0x5d] sm:$0xff]
      %v6312 = vld [vmem:[%s6119 + $0x65] sm:$0xff]
      %v6313 = vld [vmem:[%s6119 + $0x6d] sm:$0xff]
      %v6314 = vld [vmem:[%s6119 + $0x75] sm:$0xff]
      %v6315 = vld [vmem:[%s6119 + $0x7d] sm:$0xff]
      %v6316 = vld [vmem:[%s6119 + $0x85] sm:$0xff]
      %v6317 = vld [vmem:[%s6119 + $0x8d] sm:$0xff]
      %v6318 = vld [vmem:[%s6119 + $0x95] sm:$0xff]
      %v6319 = vld [vmem:[%s6119 + $0x9d] sm:$0xff]
      %v6320 = vld [vmem:[%s6119 + $0xa5] sm:$0xff]
      %v6321 = vld [vmem:[%s6119 + $0xad] sm:$0xff]
      %v6322 = vld [vmem:[%s6119 + $0xb5] sm:$0xff]
      %v6323 = vld [vmem:[%s6119 + $0xbd] sm:$0xff]
      %v6324 = vld [vmem:[%s6119 + $0xc5] sm:$0xff]
      %v6325 = vld [vmem:[%s6119 + $0xcd] sm:$0xff]
      %v6326 = vld [vmem:[%s6119 + $0xd5] sm:$0xff]
      %v6327 = vld [vmem:[%s6119 + $0xdd] sm:$0xff]
      %v6328 = vld [vmem:[%s6119 + $0xe5] sm:$0xff]
      %v6329 = vld [vmem:[%s6119 + $0xed] sm:$0xff]
      %v6330 = vld [vmem:[%s6119 + $0xf5] sm:$0xff]
      %v6331 = vld [vmem:[%s6119 + $0xfd] sm:$0xff]
      %v6332 = vld [vmem:[%s6119 + $0x105] sm:$0xff]
      %v6333 = vld [vmem:[%s6119 + $0x10d] sm:$0xff]
      %v6334 = vld [vmem:[%s6119 + $0x115] sm:$0xff]
      %v6335 = vld [vmem:[%s6119 + $0x11d] sm:$0xff]
      %v6336 = vld [vmem:[%s6119 + $0x125] sm:$0xff]
      %v6337 = vld [vmem:[%s6119 + $0x12d] sm:$0xff]
      %v6338 = vld [vmem:[%s6119 + $0x135] sm:$0xff]
      %v6339 = vld [vmem:[%s6119 + $0x13d] sm:$0xff]
      %v6340 = vld [vmem:[%s6119 + $0x26] sm:$0xff]
      %v6341 = vld [vmem:[%s6119 + $0x2e] sm:$0xff]
      %v6342 = vld [vmem:[%s6119 + $0x36] sm:$0xff]
      %v6343 = vld [vmem:[%s6119 + $0x3e] sm:$0xff]
      %v6344 = vld [vmem:[%s6119 + $0x46] sm:$0xff]
      %v6345 = vld [vmem:[%s6119 + $0x4e] sm:$0xff]
      %v6346 = vld [vmem:[%s6119 + $0x56] sm:$0xff]
      %v6347 = vld [vmem:[%s6119 + $0x5e] sm:$0xff]
      %v6348 = vld [vmem:[%s6119 + $0x66] sm:$0xff]
      %v6349 = vld [vmem:[%s6119 + $0x6e] sm:$0xff]
      %v6350 = vld [vmem:[%s6119 + $0x76] sm:$0xff]
      %v6351 = vld [vmem:[%s6119 + $0x7e] sm:$0xff]
      %v6352 = vld [vmem:[%s6119 + $0x86] sm:$0xff]
      %v6353 = vld [vmem:[%s6119 + $0x8e] sm:$0xff]
      %v6354 = vld [vmem:[%s6119 + $0x96] sm:$0xff]
      %v6355 = vld [vmem:[%s6119 + $0x9e] sm:$0xff]
      %v6356 = vld [vmem:[%s6119 + $0xa6] sm:$0xff]
      %v6357 = vld [vmem:[%s6119 + $0xae] sm:$0xff]
      %v6358 = vld [vmem:[%s6119 + $0xb6] sm:$0xff]
      %v6359 = vld [vmem:[%s6119 + $0xbe] sm:$0xff]
      %v6360 = vld [vmem:[%s6119 + $0xc6] sm:$0xff]
      %v6361 = vld [vmem:[%s6119 + $0xce] sm:$0xff]
      %v6362 = vld [vmem:[%s6119 + $0xd6] sm:$0xff]
      %v6363 = vld [vmem:[%s6119 + $0xde] sm:$0xff]
      %v6364 = vld [vmem:[%s6119 + $0xe6] sm:$0xff]
      %v6365 = vld [vmem:[%s6119 + $0xee] sm:$0xff]
      %v6366 = vld [vmem:[%s6119 + $0xf6] sm:$0xff]
      %v6367 = vld [vmem:[%s6119 + $0xfe] sm:$0xff]
      %v6368 = vld [vmem:[%s6119 + $0x106] sm:$0xff]
      %v6369 = vld [vmem:[%s6119 + $0x10e] sm:$0xff]
      %v6370 = vld [vmem:[%s6119 + $0x116] sm:$0xff]
      %v6371 = vld [vmem:[%s6119 + $0x11e] sm:$0xff]
      %v6372 = vld [vmem:[%s6119 + $0x126] sm:$0xff]
      %v6373 = vld [vmem:[%s6119 + $0x12e] sm:$0xff]
      %v6374 = vld [vmem:[%s6119 + $0x136] sm:$0xff]
      %v6375 = vld [vmem:[%s6119 + $0x13e] sm:$0xff]
      %6412 = vrot.lane.b32.xlu0 %v6156, 8
      %v6413 = vpop.permute.xlu0 %6412
      %6414 = vrot.lane.b32.xlu0 %v6157, 8
      %v6415 = vpop.permute.xlu0 %6414
      %6416 = vrot.lane.b32.xlu0 %v6158, 8
      %v6417 = vpop.permute.xlu0 %6416
      %6418 = vrot.lane.b32.xlu0 %v6159, 8
      %v6419 = vpop.permute.xlu0 %6418
      %6420 = vrot.lane.b32.xlu0 %v6160, 8
      %v6421 = vpop.permute.xlu0 %6420
      %6422 = vrot.lane.b32.xlu0 %v6161, 8
      %v6423 = vpop.permute.xlu0 %6422
      %6424 = vrot.lane.b32.xlu0 %v6162, 8
      %v6425 = vpop.permute.xlu0 %6424
      %6426 = vrot.lane.b32.xlu0 %v6163, 8
      %v6427 = vpop.permute.xlu0 %6426
      %6428 = vrot.lane.b32.xlu0 %v6164, 8
      %v6429 = vpop.permute.xlu0 %6428
      %6430 = vrot.lane.b32.xlu0 %v6165, 8
      %v6431 = vpop.permute.xlu0 %6430
      %6432 = vrot.lane.b32.xlu0 %v6166, 8
      %v6433 = vpop.permute.xlu0 %6432
      %6434 = vrot.lane.b32.xlu0 %v6167, 8
      %v6435 = vpop.permute.xlu0 %6434
      %6436 = vrot.lane.b32.xlu0 %v6168, 8
      %v6437 = vpop.permute.xlu0 %6436
      %6438 = vrot.lane.b32.xlu0 %v6169, 8
      %v6439 = vpop.permute.xlu0 %6438
      %6440 = vrot.lane.b32.xlu0 %v6170, 8
      %v6441 = vpop.permute.xlu0 %6440
      %6442 = vrot.lane.b32.xlu0 %v6171, 8
      %v6443 = vpop.permute.xlu0 %6442
      %6444 = vrot.lane.b32.xlu0 %v6172, 8
      %v6445 = vpop.permute.xlu0 %6444
      %6446 = vrot.lane.b32.xlu0 %v6173, 8
      %v6447 = vpop.permute.xlu0 %6446
      %6448 = vrot.lane.b32.xlu0 %v6174, 8
      %v6449 = vpop.permute.xlu0 %6448
      %6450 = vrot.lane.b32.xlu0 %v6175, 8
      %v6451 = vpop.permute.xlu0 %6450
      %6452 = vrot.lane.b32.xlu0 %v6176, 8
      %v6453 = vpop.permute.xlu0 %6452
      %6454 = vrot.lane.b32.xlu0 %v6177, 8
      %v6455 = vpop.permute.xlu0 %6454
      %6456 = vrot.lane.b32.xlu0 %v6178, 8
      %v6457 = vpop.permute.xlu0 %6456
      %6458 = vrot.lane.b32.xlu0 %v6179, 8
      %v6459 = vpop.permute.xlu0 %6458
      %6460 = vrot.lane.b32.xlu0 %v6180, 8
      %v6461 = vpop.permute.xlu0 %6460
      %6462 = vrot.lane.b32.xlu0 %v6181, 8
      %v6463 = vpop.permute.xlu0 %6462
      %6464 = vrot.lane.b32.xlu0 %v6182, 8
      %v6465 = vpop.permute.xlu0 %6464
      %6466 = vrot.lane.b32.xlu0 %v6183, 8
      %v6467 = vpop.permute.xlu0 %6466
      %6468 = vrot.lane.b32.xlu0 %v6184, 8
      %v6469 = vpop.permute.xlu0 %6468
      %6470 = vrot.lane.b32.xlu0 %v6185, 8
      %v6471 = vpop.permute.xlu0 %6470
      %6472 = vrot.lane.b32.xlu0 %v6186, 8
      %v6473 = vpop.permute.xlu0 %6472
      %6474 = vrot.lane.b32.xlu0 %v6187, 8
      %v6475 = vpop.permute.xlu0 %6474
      %6476 = vrot.lane.b32.xlu0 %v6188, 8
      %v6477 = vpop.permute.xlu0 %6476
      %6478 = vrot.lane.b32.xlu0 %v6189, 8
      %v6479 = vpop.permute.xlu0 %6478
      %6480 = vrot.lane.b32.xlu0 %v6190, 8
      %v6481 = vpop.permute.xlu0 %6480
      %6482 = vrot.lane.b32.xlu0 %v6191, 8
      %v6483 = vpop.permute.xlu0 %6482
      %6556 = vrot.lane.b32.xlu0 %v6192, 16
      %v6557 = vpop.permute.xlu0 %6556
      %6558 = vrot.lane.b32.xlu0 %v6193, 16
      %v6559 = vpop.permute.xlu0 %6558
      %6560 = vrot.lane.b32.xlu0 %v6194, 16
      %v6561 = vpop.permute.xlu0 %6560
      %6562 = vrot.lane.b32.xlu0 %v6195, 16
      %v6563 = vpop.permute.xlu0 %6562
      %6564 = vrot.lane.b32.xlu0 %v6196, 16
      %v6565 = vpop.permute.xlu0 %6564
      %6566 = vrot.lane.b32.xlu0 %v6197, 16
      %v6567 = vpop.permute.xlu0 %6566
      %6568 = vrot.lane.b32.xlu0 %v6198, 16
      %v6569 = vpop.permute.xlu0 %6568
      %6570 = vrot.lane.b32.xlu0 %v6199, 16
      %v6571 = vpop.permute.xlu0 %6570
      %6572 = vrot.lane.b32.xlu0 %v6200, 16
      %v6573 = vpop.permute.xlu0 %6572
      %6574 = vrot.lane.b32.xlu0 %v6201, 16
      %v6575 = vpop.permute.xlu0 %6574
      %6576 = vrot.lane.b32.xlu0 %v6202, 16
      %v6577 = vpop.permute.xlu0 %6576
      %6578 = vrot.lane.b32.xlu0 %v6203, 16
      %v6579 = vpop.permute.xlu0 %6578
      %6580 = vrot.lane.b32.xlu0 %v6204, 16
      %v6581 = vpop.permute.xlu0 %6580
      %6582 = vrot.lane.b32.xlu0 %v6205, 16
      %v6583 = vpop.permute.xlu0 %6582
      %6584 = vrot.lane.b32.xlu0 %v6206, 16
      %v6585 = vpop.permute.xlu0 %6584
      %6586 = vrot.lane.b32.xlu0 %v6207, 16
      %v6587 = vpop.permute.xlu0 %6586
      %6588 = vrot.lane.b32.xlu0 %v6208, 16
      %v6589 = vpop.permute.xlu0 %6588
      %6590 = vrot.lane.b32.xlu0 %v6209, 16
      %v6591 = vpop.permute.xlu0 %6590
      %6592 = vrot.lane.b32.xlu0 %v6210, 16
      %v6593 = vpop.permute.xlu0 %6592
      %6594 = vrot.lane.b32.xlu0 %v6211, 16
      %v6595 = vpop.permute.xlu0 %6594
      %6596 = vrot.lane.b32.xlu0 %v6212, 16
      %v6597 = vpop.permute.xlu0 %6596
      %6598 = vrot.lane.b32.xlu0 %v6213, 16
      %v6599 = vpop.permute.xlu0 %6598
      %6600 = vrot.lane.b32.xlu0 %v6214, 16
      %v6601 = vpop.permute.xlu0 %6600
      %6602 = vrot.lane.b32.xlu0 %v6215, 16
      %v6603 = vpop.permute.xlu0 %6602
      %6604 = vrot.lane.b32.xlu0 %v6216, 16
      %v6605 = vpop.permute.xlu0 %6604
      %6606 = vrot.lane.b32.xlu0 %v6217, 16
      %v6607 = vpop.permute.xlu0 %6606
      %6608 = vrot.lane.b32.xlu0 %v6218, 16
      %v6609 = vpop.permute.xlu0 %6608
      %6610 = vrot.lane.b32.xlu0 %v6219, 16
      %v6611 = vpop.permute.xlu0 %6610
      %6612 = vrot.lane.b32.xlu0 %v6220, 16
      %v6613 = vpop.permute.xlu0 %6612
      %6614 = vrot.lane.b32.xlu0 %v6221, 16
      %v6615 = vpop.permute.xlu0 %6614
      %6616 = vrot.lane.b32.xlu0 %v6222, 16
      %v6617 = vpop.permute.xlu0 %6616
      %6618 = vrot.lane.b32.xlu0 %v6223, 16
      %v6619 = vpop.permute.xlu0 %6618
      %6620 = vrot.lane.b32.xlu0 %v6224, 16
      %v6621 = vpop.permute.xlu0 %6620
      %6622 = vrot.lane.b32.xlu0 %v6225, 16
      %v6623 = vpop.permute.xlu0 %6622
      %6624 = vrot.lane.b32.xlu0 %v6226, 16
      %v6625 = vpop.permute.xlu0 %6624
      %6626 = vrot.lane.b32.xlu0 %v6227, 16
      %v6627 = vpop.permute.xlu0 %6626
      %6666 = vrot.lane.b32.xlu0 %v6194, 24
      %v6667 = vpop.permute.xlu0 %6666
      %6668 = vrot.lane.b32.xlu0 %v6195, 24
      %v6669 = vpop.permute.xlu0 %6668
      %6670 = vrot.lane.b32.xlu0 %v6196, 24
      %v6671 = vpop.permute.xlu0 %6670
      %6672 = vrot.lane.b32.xlu0 %v6197, 24
      %v6673 = vpop.permute.xlu0 %6672
      %6674 = vrot.lane.b32.xlu0 %v6198, 24
      %v6675 = vpop.permute.xlu0 %6674
      %6676 = vrot.lane.b32.xlu0 %v6199, 24
      %v6677 = vpop.permute.xlu0 %6676
      %6678 = vrot.lane.b32.xlu0 %v6200, 24
      %v6679 = vpop.permute.xlu0 %6678
      %6680 = vrot.lane.b32.xlu0 %v6201, 24
      %v6681 = vpop.permute.xlu0 %6680
      %6682 = vrot.lane.b32.xlu0 %v6202, 24
      %v6683 = vpop.permute.xlu0 %6682
      %6684 = vrot.lane.b32.xlu0 %v6203, 24
      %v6685 = vpop.permute.xlu0 %6684
      %6686 = vrot.lane.b32.xlu0 %v6204, 24
      %v6687 = vpop.permute.xlu0 %6686
      %6688 = vrot.lane.b32.xlu0 %v6205, 24
      %v6689 = vpop.permute.xlu0 %6688
      %6690 = vrot.lane.b32.xlu0 %v6206, 24
      %v6691 = vpop.permute.xlu0 %6690
      %6692 = vrot.lane.b32.xlu0 %v6207, 24
      %v6693 = vpop.permute.xlu0 %6692
      %6694 = vrot.lane.b32.xlu0 %v6208, 24
      %v6695 = vpop.permute.xlu0 %6694
      %6696 = vrot.lane.b32.xlu0 %v6209, 24
      %v6697 = vpop.permute.xlu0 %6696
      %6698 = vrot.lane.b32.xlu0 %v6210, 24
      %v6699 = vpop.permute.xlu0 %6698
      %6700 = vrot.lane.b32.xlu0 %v6211, 24
      %v6701 = vpop.permute.xlu0 %6700
      %6702 = vrot.lane.b32.xlu0 %v6212, 24
      %v6703 = vpop.permute.xlu0 %6702
      %6704 = vrot.lane.b32.xlu0 %v6213, 24
      %v6705 = vpop.permute.xlu0 %6704
      %6706 = vrot.lane.b32.xlu0 %v6214, 24
      %v6707 = vpop.permute.xlu0 %6706
      %6708 = vrot.lane.b32.xlu0 %v6215, 24
      %v6709 = vpop.permute.xlu0 %6708
      %6710 = vrot.lane.b32.xlu0 %v6216, 24
      %v6711 = vpop.permute.xlu0 %6710
      %6712 = vrot.lane.b32.xlu0 %v6217, 24
      %v6713 = vpop.permute.xlu0 %6712
      %6714 = vrot.lane.b32.xlu0 %v6218, 24
      %v6715 = vpop.permute.xlu0 %6714
      %6716 = vrot.lane.b32.xlu0 %v6219, 24
      %v6717 = vpop.permute.xlu0 %6716
      %6718 = vrot.lane.b32.xlu0 %v6220, 24
      %v6719 = vpop.permute.xlu0 %6718
      %6720 = vrot.lane.b32.xlu0 %v6221, 24
      %v6721 = vpop.permute.xlu0 %6720
      %6722 = vrot.lane.b32.xlu0 %v6222, 24
      %v6723 = vpop.permute.xlu0 %6722
      %6724 = vrot.lane.b32.xlu0 %v6223, 24
      %v6725 = vpop.permute.xlu0 %6724
      %6726 = vrot.lane.b32.xlu0 %v6224, 24
      %v6727 = vpop.permute.xlu0 %6726
      %6728 = vrot.lane.b32.xlu0 %v6225, 24
      %v6729 = vpop.permute.xlu0 %6728
      %6730 = vrot.lane.b32.xlu0 %v6226, 24
      %v6731 = vpop.permute.xlu0 %6730
      %6732 = vrot.lane.b32.xlu0 %v6227, 24
      %v6733 = vpop.permute.xlu0 %6732
      %6734 = vrot.lane.b32.xlu0 %v6228, 24
      %v6735 = vpop.permute.xlu0 %6734
      %6736 = vrot.lane.b32.xlu0 %v6229, 24
      %v6737 = vpop.permute.xlu0 %6736
      %6810 = vrot.lane.b32.xlu0 %v6230, 32
      %v6811 = vpop.permute.xlu0 %6810
      %6812 = vrot.lane.b32.xlu0 %v6231, 32
      %v6813 = vpop.permute.xlu0 %6812
      %6814 = vrot.lane.b32.xlu0 %v6232, 32
      %v6815 = vpop.permute.xlu0 %6814
      %6816 = vrot.lane.b32.xlu0 %v6233, 32
      %v6817 = vpop.permute.xlu0 %6816
      %6818 = vrot.lane.b32.xlu0 %v6234, 32
      %v6819 = vpop.permute.xlu0 %6818
      %6820 = vrot.lane.b32.xlu0 %v6235, 32
      %v6821 = vpop.permute.xlu0 %6820
      %6822 = vrot.lane.b32.xlu0 %v6236, 32
      %v6823 = vpop.permute.xlu0 %6822
      %6824 = vrot.lane.b32.xlu0 %v6237, 32
      %v6825 = vpop.permute.xlu0 %6824
      %6826 = vrot.lane.b32.xlu0 %v6238, 32
      %v6827 = vpop.permute.xlu0 %6826
      %6828 = vrot.lane.b32.xlu0 %v6239, 32
      %v6829 = vpop.permute.xlu0 %6828
      %6830 = vrot.lane.b32.xlu0 %v6240, 32
      %v6831 = vpop.permute.xlu0 %6830
      %6832 = vrot.lane.b32.xlu0 %v6241, 32
      %v6833 = vpop.permute.xlu0 %6832
      %6834 = vrot.lane.b32.xlu0 %v6242, 32
      %v6835 = vpop.permute.xlu0 %6834
      %6836 = vrot.lane.b32.xlu0 %v6243, 32
      %v6837 = vpop.permute.xlu0 %6836
      %6838 = vrot.lane.b32.xlu0 %v6244, 32
      %v6839 = vpop.permute.xlu0 %6838
      %6840 = vrot.lane.b32.xlu0 %v6245, 32
      %v6841 = vpop.permute.xlu0 %6840
      %6842 = vrot.lane.b32.xlu0 %v6246, 32
      %v6843 = vpop.permute.xlu0 %6842
      %6844 = vrot.lane.b32.xlu0 %v6247, 32
      %v6845 = vpop.permute.xlu0 %6844
      %6846 = vrot.lane.b32.xlu0 %v6248, 32
      %v6847 = vpop.permute.xlu0 %6846
      %6848 = vrot.lane.b32.xlu0 %v6249, 32
      %v6849 = vpop.permute.xlu0 %6848
      %6850 = vrot.lane.b32.xlu0 %v6250, 32
      %v6851 = vpop.permute.xlu0 %6850
      %6852 = vrot.lane.b32.xlu0 %v6251, 32
      %v6853 = vpop.permute.xlu0 %6852
      %6854 = vrot.lane.b32.xlu0 %v6252, 32
      %v6855 = vpop.permute.xlu0 %6854
      %6856 = vrot.lane.b32.xlu0 %v6253, 32
      %v6857 = vpop.permute.xlu0 %6856
      %6858 = vrot.lane.b32.xlu0 %v6254, 32
      %v6859 = vpop.permute.xlu0 %6858
      %6860 = vrot.lane.b32.xlu0 %v6255, 32
      %v6861 = vpop.permute.xlu0 %6860
      %6862 = vrot.lane.b32.xlu0 %v6256, 32
      %v6863 = vpop.permute.xlu0 %6862
      %6864 = vrot.lane.b32.xlu0 %v6257, 32
      %v6865 = vpop.permute.xlu0 %6864
      %6866 = vrot.lane.b32.xlu0 %v6258, 32
      %v6867 = vpop.permute.xlu0 %6866
      %6868 = vrot.lane.b32.xlu0 %v6259, 32
      %v6869 = vpop.permute.xlu0 %6868
      %6870 = vrot.lane.b32.xlu0 %v6260, 32
      %v6871 = vpop.permute.xlu0 %6870
      %6872 = vrot.lane.b32.xlu0 %v6261, 32
      %v6873 = vpop.permute.xlu0 %6872
      %6874 = vrot.lane.b32.xlu0 %v6262, 32
      %v6875 = vpop.permute.xlu0 %6874
      %6876 = vrot.lane.b32.xlu0 %v6263, 32
      %v6877 = vpop.permute.xlu0 %6876
      %6878 = vrot.lane.b32.xlu0 %v6264, 32
      %v6879 = vpop.permute.xlu0 %6878
      %6880 = vrot.lane.b32.xlu0 %v6265, 32
      %v6881 = vpop.permute.xlu0 %6880
      %6954 = vrot.lane.b32.xlu0 %v6266, 40
      %v6955 = vpop.permute.xlu0 %6954
      %6956 = vrot.lane.b32.xlu0 %v6267, 40
      %v6957 = vpop.permute.xlu0 %6956
      %6958 = vrot.lane.b32.xlu0 %v6268, 40
      %v6959 = vpop.permute.xlu0 %6958
      %6960 = vrot.lane.b32.xlu0 %v6269, 40
      %v6961 = vpop.permute.xlu0 %6960
      %6962 = vrot.lane.b32.xlu0 %v6270, 40
      %v6963 = vpop.permute.xlu0 %6962
      %6964 = vrot.lane.b32.xlu0 %v6271, 40
      %v6965 = vpop.permute.xlu0 %6964
      %6966 = vrot.lane.b32.xlu0 %v6272, 40
      %v6967 = vpop.permute.xlu0 %6966
      %6968 = vrot.lane.b32.xlu0 %v6273, 40
      %v6969 = vpop.permute.xlu0 %6968
      %6970 = vrot.lane.b32.xlu0 %v6274, 40
      %v6971 = vpop.permute.xlu0 %6970
      %6972 = vrot.lane.b32.xlu0 %v6275, 40
      %v6973 = vpop.permute.xlu0 %6972
      %6974 = vrot.lane.b32.xlu0 %v6276, 40
      %v6975 = vpop.permute.xlu0 %6974
      %6976 = vrot.lane.b32.xlu0 %v6277, 40
      %v6977 = vpop.permute.xlu0 %6976
      %6978 = vrot.lane.b32.xlu0 %v6278, 40
      %v6979 = vpop.permute.xlu0 %6978
      %6980 = vrot.lane.b32.xlu0 %v6279, 40
      %v6981 = vpop.permute.xlu0 %6980
      %6982 = vrot.lane.b32.xlu0 %v6280, 40
      %v6983 = vpop.permute.xlu0 %6982
      %6984 = vrot.lane.b32.xlu0 %v6281, 40
      %v6985 = vpop.permute.xlu0 %6984
      %6986 = vrot.lane.b32.xlu0 %v6282, 40
      %v6987 = vpop.permute.xlu0 %6986
      %6988 = vrot.lane.b32.xlu0 %v6283, 40
      %v6989 = vpop.permute.xlu0 %6988
      %6990 = vrot.lane.b32.xlu0 %v6284, 40
      %v6991 = vpop.permute.xlu0 %6990
      %6992 = vrot.lane.b32.xlu0 %v6285, 40
      %v6993 = vpop.permute.xlu0 %6992
      %6994 = vrot.lane.b32.xlu0 %v6286, 40
      %v6995 = vpop.permute.xlu0 %6994
      %6996 = vrot.lane.b32.xlu0 %v6287, 40
      %v6997 = vpop.permute.xlu0 %6996
      %6998 = vrot.lane.b32.xlu0 %v6288, 40
      %v6999 = vpop.permute.xlu0 %6998
      %7000 = vrot.lane.b32.xlu0 %v6289, 40
      %v7001 = vpop.permute.xlu0 %7000
      %7002 = vrot.lane.b32.xlu0 %v6290, 40
      %v7003 = vpop.permute.xlu0 %7002
      %7004 = vrot.lane.b32.xlu0 %v6291, 40
      %v7005 = vpop.permute.xlu0 %7004
      %7006 = vrot.lane.b32.xlu0 %v6292, 40
      %v7007 = vpop.permute.xlu0 %7006
      %7008 = vrot.lane.b32.xlu0 %v6293, 40
      %v7009 = vpop.permute.xlu0 %7008
      %7010 = vrot.lane.b32.xlu0 %v6294, 40
      %v7011 = vpop.permute.xlu0 %7010
      %7012 = vrot.lane.b32.xlu0 %v6295, 40
      %v7013 = vpop.permute.xlu0 %7012
      %7014 = vrot.lane.b32.xlu0 %v6296, 40
      %v7015 = vpop.permute.xlu0 %7014
      %7016 = vrot.lane.b32.xlu0 %v6297, 40
      %v7017 = vpop.permute.xlu0 %7016
      %7018 = vrot.lane.b32.xlu0 %v6298, 40
      %v7019 = vpop.permute.xlu0 %7018
      %7020 = vrot.lane.b32.xlu0 %v6299, 40
      %v7021 = vpop.permute.xlu0 %7020
      %7022 = vrot.lane.b32.xlu0 %v6300, 40
      %v7023 = vpop.permute.xlu0 %7022
      %7024 = vrot.lane.b32.xlu0 %v6301, 40
      %v7025 = vpop.permute.xlu0 %7024
      %7064 = vrot.lane.b32.xlu0 %v6268, 48
      %v7065 = vpop.permute.xlu0 %7064
      %7066 = vrot.lane.b32.xlu0 %v6269, 48
      %v7067 = vpop.permute.xlu0 %7066
      %7068 = vrot.lane.b32.xlu0 %v6270, 48
      %v7069 = vpop.permute.xlu0 %7068
      %7070 = vrot.lane.b32.xlu0 %v6271, 48
      %v7071 = vpop.permute.xlu0 %7070
      %7072 = vrot.lane.b32.xlu0 %v6272, 48
      %v7073 = vpop.permute.xlu0 %7072
      %7074 = vrot.lane.b32.xlu0 %v6273, 48
      %v7075 = vpop.permute.xlu0 %7074
      %7076 = vrot.lane.b32.xlu0 %v6274, 48
      %v7077 = vpop.permute.xlu0 %7076
      %7078 = vrot.lane.b32.xlu0 %v6275, 48
      %v7079 = vpop.permute.xlu0 %7078
      %7080 = vrot.lane.b32.xlu0 %v6276, 48
      %v7081 = vpop.permute.xlu0 %7080
      %7082 = vrot.lane.b32.xlu0 %v6277, 48
      %v7083 = vpop.permute.xlu0 %7082
      %7084 = vrot.lane.b32.xlu0 %v6278, 48
      %v7085 = vpop.permute.xlu0 %7084
      %7086 = vrot.lane.b32.xlu0 %v6279, 48
      %v7087 = vpop.permute.xlu0 %7086
      %7088 = vrot.lane.b32.xlu0 %v6280, 48
      %v7089 = vpop.permute.xlu0 %7088
      %7090 = vrot.lane.b32.xlu0 %v6281, 48
      %v7091 = vpop.permute.xlu0 %7090
      %7092 = vrot.lane.b32.xlu0 %v6282, 48
      %v7093 = vpop.permute.xlu0 %7092
      %7094 = vrot.lane.b32.xlu0 %v6283, 48
      %v7095 = vpop.permute.xlu0 %7094
      %7096 = vrot.lane.b32.xlu0 %v6284, 48
      %v7097 = vpop.permute.xlu0 %7096
      %7098 = vrot.lane.b32.xlu0 %v6285, 48
      %v7099 = vpop.permute.xlu0 %7098
      %7100 = vrot.lane.b32.xlu0 %v6286, 48
      %v7101 = vpop.permute.xlu0 %7100
      %7102 = vrot.lane.b32.xlu0 %v6287, 48
      %v7103 = vpop.permute.xlu0 %7102
      %7104 = vrot.lane.b32.xlu0 %v6288, 48
      %v7105 = vpop.permute.xlu0 %7104
      %7106 = vrot.lane.b32.xlu0 %v6289, 48
      %v7107 = vpop.permute.xlu0 %7106
      %7108 = vrot.lane.b32.xlu0 %v6290, 48
      %v7109 = vpop.permute.xlu0 %7108
      %7110 = vrot.lane.b32.xlu0 %v6291, 48
      %v7111 = vpop.permute.xlu0 %7110
      %7112 = vrot.lane.b32.xlu0 %v6292, 48
      %v7113 = vpop.permute.xlu0 %7112
      %7114 = vrot.lane.b32.xlu0 %v6293, 48
      %v7115 = vpop.permute.xlu0 %7114
      %7116 = vrot.lane.b32.xlu0 %v6294, 48
      %v7117 = vpop.permute.xlu0 %7116
      %7118 = vrot.lane.b32.xlu0 %v6295, 48
      %v7119 = vpop.permute.xlu0 %7118
      %7120 = vrot.lane.b32.xlu0 %v6296, 48
      %v7121 = vpop.permute.xlu0 %7120
      %7122 = vrot.lane.b32.xlu0 %v6297, 48
      %v7123 = vpop.permute.xlu0 %7122
      %7124 = vrot.lane.b32.xlu0 %v6298, 48
      %v7125 = vpop.permute.xlu0 %7124
      %7126 = vrot.lane.b32.xlu0 %v6299, 48
      %v7127 = vpop.permute.xlu0 %7126
      %7128 = vrot.lane.b32.xlu0 %v6300, 48
      %v7129 = vpop.permute.xlu0 %7128
      %7130 = vrot.lane.b32.xlu0 %v6301, 48
      %v7131 = vpop.permute.xlu0 %7130
      %7132 = vrot.lane.b32.xlu0 %v6302, 48
      %v7133 = vpop.permute.xlu0 %7132
      %7134 = vrot.lane.b32.xlu0 %v6303, 48
      %v7135 = vpop.permute.xlu0 %7134
      %7208 = vrot.lane.b32.xlu0 %v6304, 56
      %v7209 = vpop.permute.xlu0 %7208
      %7210 = vrot.lane.b32.xlu0 %v6305, 56
      %v7211 = vpop.permute.xlu0 %7210
      %7212 = vrot.lane.b32.xlu0 %v6306, 56
      %v7213 = vpop.permute.xlu0 %7212
      %7214 = vrot.lane.b32.xlu0 %v6307, 56
      %v7215 = vpop.permute.xlu0 %7214
      %7216 = vrot.lane.b32.xlu0 %v6308, 56
      %v7217 = vpop.permute.xlu0 %7216
      %7218 = vrot.lane.b32.xlu0 %v6309, 56
      %v7219 = vpop.permute.xlu0 %7218
      %7220 = vrot.lane.b32.xlu0 %v6310, 56
      %v7221 = vpop.permute.xlu0 %7220
      %7222 = vrot.lane.b32.xlu0 %v6311, 56
      %v7223 = vpop.permute.xlu0 %7222
      %7224 = vrot.lane.b32.xlu0 %v6312, 56
      %v7225 = vpop.permute.xlu0 %7224
      %7226 = vrot.lane.b32.xlu0 %v6313, 56
      %v7227 = vpop.permute.xlu0 %7226
      %7228 = vrot.lane.b32.xlu0 %v6314, 56
      %v7229 = vpop.permute.xlu0 %7228
      %7230 = vrot.lane.b32.xlu0 %v6315, 56
      %v7231 = vpop.permute.xlu0 %7230
      %7232 = vrot.lane.b32.xlu0 %v6316, 56
      %v7233 = vpop.permute.xlu0 %7232
      %7234 = vrot.lane.b32.xlu0 %v6317, 56
      %v7235 = vpop.permute.xlu0 %7234
      %7236 = vrot.lane.b32.xlu0 %v6318, 56
      %v7237 = vpop.permute.xlu0 %7236
      %7238 = vrot.lane.b32.xlu0 %v6319, 56
      %v7239 = vpop.permute.xlu0 %7238
      %7240 = vrot.lane.b32.xlu0 %v6320, 56
      %v7241 = vpop.permute.xlu0 %7240
      %7242 = vrot.lane.b32.xlu0 %v6321, 56
      %v7243 = vpop.permute.xlu0 %7242
      %7244 = vrot.lane.b32.xlu0 %v6322, 56
      %v7245 = vpop.permute.xlu0 %7244
      %7246 = vrot.lane.b32.xlu0 %v6323, 56
      %v7247 = vpop.permute.xlu0 %7246
      %7248 = vrot.lane.b32.xlu0 %v6324, 56
      %v7249 = vpop.permute.xlu0 %7248
      %7250 = vrot.lane.b32.xlu0 %v6325, 56
      %v7251 = vpop.permute.xlu0 %7250
      %7252 = vrot.lane.b32.xlu0 %v6326, 56
      %v7253 = vpop.permute.xlu0 %7252
      %7254 = vrot.lane.b32.xlu0 %v6327, 56
      %v7255 = vpop.permute.xlu0 %7254
      %7256 = vrot.lane.b32.xlu0 %v6328, 56
      %v7257 = vpop.permute.xlu0 %7256
      %7258 = vrot.lane.b32.xlu0 %v6329, 56
      %v7259 = vpop.permute.xlu0 %7258
      %7260 = vrot.lane.b32.xlu0 %v6330, 56
      %v7261 = vpop.permute.xlu0 %7260
      %7262 = vrot.lane.b32.xlu0 %v6331, 56
      %v7263 = vpop.permute.xlu0 %7262
      %7264 = vrot.lane.b32.xlu0 %v6332, 56
      %v7265 = vpop.permute.xlu0 %7264
      %7266 = vrot.lane.b32.xlu0 %v6333, 56
      %v7267 = vpop.permute.xlu0 %7266
      %7268 = vrot.lane.b32.xlu0 %v6334, 56
      %v7269 = vpop.permute.xlu0 %7268
      %7270 = vrot.lane.b32.xlu0 %v6335, 56
      %v7271 = vpop.permute.xlu0 %7270
      %7272 = vrot.lane.b32.xlu0 %v6336, 56
      %v7273 = vpop.permute.xlu0 %7272
      %7274 = vrot.lane.b32.xlu0 %v6337, 56
      %v7275 = vpop.permute.xlu0 %7274
      %7276 = vrot.lane.b32.xlu0 %v6338, 56
      %v7277 = vpop.permute.xlu0 %7276
      %7278 = vrot.lane.b32.xlu0 %v6339, 56
      %v7279 = vpop.permute.xlu0 %7278
      %7352 = vrot.lane.b32.xlu0 %v6340, 64
      %v7353 = vpop.permute.xlu0 %7352
      %7354 = vrot.lane.b32.xlu0 %v6341, 64
      %v7355 = vpop.permute.xlu0 %7354
      %7356 = vrot.lane.b32.xlu0 %v6342, 64
      %v7357 = vpop.permute.xlu0 %7356
      %7358 = vrot.lane.b32.xlu0 %v6343, 64
      %v7359 = vpop.permute.xlu0 %7358
      %7360 = vrot.lane.b32.xlu0 %v6344, 64
      %v7361 = vpop.permute.xlu0 %7360
      %7362 = vrot.lane.b32.xlu0 %v6345, 64
      %v7363 = vpop.permute.xlu0 %7362
      %7364 = vrot.lane.b32.xlu0 %v6346, 64
      %v7365 = vpop.permute.xlu0 %7364
      %7366 = vrot.lane.b32.xlu0 %v6347, 64
      %v7367 = vpop.permute.xlu0 %7366
      %7368 = vrot.lane.b32.xlu0 %v6348, 64
      %v7369 = vpop.permute.xlu0 %7368
      %7370 = vrot.lane.b32.xlu0 %v6349, 64
      %v7371 = vpop.permute.xlu0 %7370
      %7372 = vrot.lane.b32.xlu0 %v6350, 64
      %v7373 = vpop.permute.xlu0 %7372
      %7374 = vrot.lane.b32.xlu0 %v6351, 64
      %v7375 = vpop.permute.xlu0 %7374
      %7376 = vrot.lane.b32.xlu0 %v6352, 64
      %v7377 = vpop.permute.xlu0 %7376
      %7378 = vrot.lane.b32.xlu0 %v6353, 64
      %v7379 = vpop.permute.xlu0 %7378
      %7380 = vrot.lane.b32.xlu0 %v6354, 64
      %v7381 = vpop.permute.xlu0 %7380
      %7382 = vrot.lane.b32.xlu0 %v6355, 64
      %v7383 = vpop.permute.xlu0 %7382
      %7384 = vrot.lane.b32.xlu0 %v6356, 64
      %v7385 = vpop.permute.xlu0 %7384
      %7386 = vrot.lane.b32.xlu0 %v6357, 64
      %v7387 = vpop.permute.xlu0 %7386
      %7388 = vrot.lane.b32.xlu0 %v6358, 64
      %v7389 = vpop.permute.xlu0 %7388
      %7390 = vrot.lane.b32.xlu0 %v6359, 64
      %v7391 = vpop.permute.xlu0 %7390
      %7392 = vrot.lane.b32.xlu0 %v6360, 64
      %v7393 = vpop.permute.xlu0 %7392
      %7394 = vrot.lane.b32.xlu0 %v6361, 64
      %v7395 = vpop.permute.xlu0 %7394
      %7396 = vrot.lane.b32.xlu0 %v6362, 64
      %v7397 = vpop.permute.xlu0 %7396
      %7398 = vrot.lane.b32.xlu0 %v6363, 64
      %v7399 = vpop.permute.xlu0 %7398
      %7400 = vrot.lane.b32.xlu0 %v6364, 64
      %v7401 = vpop.permute.xlu0 %7400
      %7402 = vrot.lane.b32.xlu0 %v6365, 64
      %v7403 = vpop.permute.xlu0 %7402
      %7404 = vrot.lane.b32.xlu0 %v6366, 64
      %v7405 = vpop.permute.xlu0 %7404
      %7406 = vrot.lane.b32.xlu0 %v6367, 64
      %v7407 = vpop.permute.xlu0 %7406
      %7408 = vrot.lane.b32.xlu0 %v6368, 64
      %v7409 = vpop.permute.xlu0 %7408
      %7410 = vrot.lane.b32.xlu0 %v6369, 64
      %v7411 = vpop.permute.xlu0 %7410
      %7412 = vrot.lane.b32.xlu0 %v6370, 64
      %v7413 = vpop.permute.xlu0 %7412
      %7414 = vrot.lane.b32.xlu0 %v6371, 64
      %v7415 = vpop.permute.xlu0 %7414
      %7416 = vrot.lane.b32.xlu0 %v6372, 64
      %v7417 = vpop.permute.xlu0 %7416
      %7418 = vrot.lane.b32.xlu0 %v6373, 64
      %v7419 = vpop.permute.xlu0 %7418
      %7420 = vrot.lane.b32.xlu0 %v6374, 64
      %v7421 = vpop.permute.xlu0 %7420
      %7422 = vrot.lane.b32.xlu0 %v6375, 64
      %v7423 = vpop.permute.xlu0 %7422
      %v7460 = vsel %vm2907, %v6120, %v6413
      %v7461 = vsel %vm2907, %v6121, %v6415
      %v7462 = vsel %vm2907, %v6122, %v6417
      %v7463 = vsel %vm2907, %v6123, %v6419
      %v7464 = vsel %vm2907, %v6124, %v6421
      %v7465 = vsel %vm2907, %v6125, %v6423
      %v7466 = vsel %vm2907, %v6126, %v6425
      %v7467 = vsel %vm2907, %v6127, %v6427
      %v7468 = vsel %vm2907, %v6128, %v6429
      %v7469 = vsel %vm2907, %v6129, %v6431
      %v7470 = vsel %vm2907, %v6130, %v6433
      %v7471 = vsel %vm2907, %v6131, %v6435
      %v7472 = vsel %vm2907, %v6132, %v6437
      %v7473 = vsel %vm2907, %v6133, %v6439
      %v7474 = vsel %vm2907, %v6134, %v6441
      %v7475 = vsel %vm2907, %v6135, %v6443
      %v7476 = vsel %vm2907, %v6136, %v6445
      %v7477 = vsel %vm2907, %v6137, %v6447
      %v7478 = vsel %vm2907, %v6138, %v6449
      %v7479 = vsel %vm2907, %v6139, %v6451
      %v7480 = vsel %vm2907, %v6140, %v6453
      %v7481 = vsel %vm2907, %v6141, %v6455
      %v7482 = vsel %vm2907, %v6142, %v6457
      %v7483 = vsel %vm2907, %v6143, %v6459
      %v7484 = vsel %vm2907, %v6144, %v6461
      %v7485 = vsel %vm2907, %v6145, %v6463
      %v7486 = vsel %vm2907, %v6146, %v6465
      %v7487 = vsel %vm2907, %v6147, %v6467
      %v7488 = vsel %vm2907, %v6148, %v6469
      %v7489 = vsel %vm2907, %v6149, %v6471
      %v7490 = vsel %vm2907, %v6150, %v6473
      %v7491 = vsel %vm2907, %v6151, %v6475
      %v7492 = vsel %vm2907, %v6152, %v6477
      %v7493 = vsel %vm2907, %v6153, %v6479
      %v7494 = vsel %vm2907, %v6154, %v6481
      %v7495 = vsel %vm2907, %v6155, %v6483
      %v7496 = vsel %vm2944, %v7460, %v6557
      %v7497 = vsel %vm2944, %v7461, %v6559
      %v7498 = vsel %vm2944, %v7462, %v6561
      %v7499 = vsel %vm2944, %v7463, %v6563
      %v7500 = vsel %vm2944, %v7464, %v6565
      %v7501 = vsel %vm2944, %v7465, %v6567
      %v7502 = vsel %vm2944, %v7466, %v6569
      %v7503 = vsel %vm2944, %v7467, %v6571
      %v7504 = vsel %vm2944, %v7468, %v6573
      %v7505 = vsel %vm2944, %v7469, %v6575
      %v7506 = vsel %vm2944, %v7470, %v6577
      %v7507 = vsel %vm2944, %v7471, %v6579
      %v7508 = vsel %vm2944, %v7472, %v6581
      %v7509 = vsel %vm2944, %v7473, %v6583
      %v7510 = vsel %vm2944, %v7474, %v6585
      %v7511 = vsel %vm2944, %v7475, %v6587
      %v7512 = vsel %vm2944, %v7476, %v6589
      %v7513 = vsel %vm2944, %v7477, %v6591
      %v7514 = vsel %vm2944, %v7478, %v6593
      %v7515 = vsel %vm2944, %v7479, %v6595
      %v7516 = vsel %vm2944, %v7480, %v6597
      %v7517 = vsel %vm2944, %v7481, %v6599
      %v7518 = vsel %vm2944, %v7482, %v6601
      %v7519 = vsel %vm2944, %v7483, %v6603
      %v7520 = vsel %vm2944, %v7484, %v6605
      %v7521 = vsel %vm2944, %v7485, %v6607
      %v7522 = vsel %vm2944, %v7486, %v6609
      %v7523 = vsel %vm2944, %v7487, %v6611
      %v7524 = vsel %vm2944, %v7488, %v6613
      %v7525 = vsel %vm2944, %v7489, %v6615
      %v7526 = vsel %vm2944, %v7490, %v6617
      %v7527 = vsel %vm2944, %v7491, %v6619
      %v7528 = vsel %vm2944, %v7492, %v6621
      %v7529 = vsel %vm2944, %v7493, %v6623
      %v7530 = vsel %vm2944, %v7494, %v6625
      %v7531 = vsel %vm2944, %v7495, %v6627
      %v7532 = vsel %vm2981, %v7496, %v6667
      %v7533 = vsel %vm2981, %v7497, %v6669
      %v7534 = vsel %vm2981, %v7498, %v6671
      %v7535 = vsel %vm2981, %v7499, %v6673
      %v7536 = vsel %vm2981, %v7500, %v6675
      %v7537 = vsel %vm2981, %v7501, %v6677
      %v7538 = vsel %vm2981, %v7502, %v6679
      %v7539 = vsel %vm2981, %v7503, %v6681
      %v7540 = vsel %vm2981, %v7504, %v6683
      %v7541 = vsel %vm2981, %v7505, %v6685
      %v7542 = vsel %vm2981, %v7506, %v6687
      %v7543 = vsel %vm2981, %v7507, %v6689
      %v7544 = vsel %vm2981, %v7508, %v6691
      %v7545 = vsel %vm2981, %v7509, %v6693
      %v7546 = vsel %vm2981, %v7510, %v6695
      %v7547 = vsel %vm2981, %v7511, %v6697
      %v7548 = vsel %vm2981, %v7512, %v6699
      %v7549 = vsel %vm2981, %v7513, %v6701
      %v7550 = vsel %vm2981, %v7514, %v6703
      %v7551 = vsel %vm2981, %v7515, %v6705
      %v7552 = vsel %vm2981, %v7516, %v6707
      %v7553 = vsel %vm2981, %v7517, %v6709
      %v7554 = vsel %vm2981, %v7518, %v6711
      %v7555 = vsel %vm2981, %v7519, %v6713
      %v7556 = vsel %vm2981, %v7520, %v6715
      %v7557 = vsel %vm2981, %v7521, %v6717
      %v7558 = vsel %vm2981, %v7522, %v6719
      %v7559 = vsel %vm2981, %v7523, %v6721
      %v7560 = vsel %vm2981, %v7524, %v6723
      %v7561 = vsel %vm2981, %v7525, %v6725
      %v7562 = vsel %vm2981, %v7526, %v6727
      %v7563 = vsel %vm2981, %v7527, %v6729
      %v7564 = vsel %vm2981, %v7528, %v6731
      %v7565 = vsel %vm2981, %v7529, %v6733
      %v7566 = vsel %vm2981, %v7530, %v6735
      %v7567 = vsel %vm2981, %v7531, %v6737
      %v7568 = vsel %vm3018, %v7532, %v6811
      %v7569 = vsel %vm3018, %v7533, %v6813
      %v7570 = vsel %vm3018, %v7534, %v6815
      %v7571 = vsel %vm3018, %v7535, %v6817
      %v7572 = vsel %vm3018, %v7536, %v6819
      %v7573 = vsel %vm3018, %v7537, %v6821
      %v7574 = vsel %vm3018, %v7538, %v6823
      %v7575 = vsel %vm3018, %v7539, %v6825
      %v7576 = vsel %vm3018, %v7540, %v6827
      %v7577 = vsel %vm3018, %v7541, %v6829
      %v7578 = vsel %vm3018, %v7542, %v6831
      %v7579 = vsel %vm3018, %v7543, %v6833
      %v7580 = vsel %vm3018, %v7544, %v6835
      %v7581 = vsel %vm3018, %v7545, %v6837
      %v7582 = vsel %vm3018, %v7546, %v6839
      %v7583 = vsel %vm3018, %v7547, %v6841
      %v7584 = vsel %vm3018, %v7548, %v6843
      %v7585 = vsel %vm3018, %v7549, %v6845
      %v7586 = vsel %vm3018, %v7550, %v6847
      %v7587 = vsel %vm3018, %v7551, %v6849
      %v7588 = vsel %vm3018, %v7552, %v6851
      %v7589 = vsel %vm3018, %v7553, %v6853
      %v7590 = vsel %vm3018, %v7554, %v6855
      %v7591 = vsel %vm3018, %v7555, %v6857
      %v7592 = vsel %vm3018, %v7556, %v6859
      %v7593 = vsel %vm3018, %v7557, %v6861
      %v7594 = vsel %vm3018, %v7558, %v6863
      %v7595 = vsel %vm3018, %v7559, %v6865
      %v7596 = vsel %vm3018, %v7560, %v6867
      %v7597 = vsel %vm3018, %v7561, %v6869
      %v7598 = vsel %vm3018, %v7562, %v6871
      %v7599 = vsel %vm3018, %v7563, %v6873
      %v7600 = vsel %vm3018, %v7564, %v6875
      %v7601 = vsel %vm3018, %v7565, %v6877
      %v7602 = vsel %vm3018, %v7566, %v6879
      %v7603 = vsel %vm3018, %v7567, %v6881
      %v7604 = vsel %vm3055, %v7568, %v6955
      %v7605 = vsel %vm3055, %v7569, %v6957
      %v7606 = vsel %vm3055, %v7570, %v6959
      %v7607 = vsel %vm3055, %v7571, %v6961
      %v7608 = vsel %vm3055, %v7572, %v6963
      %v7609 = vsel %vm3055, %v7573, %v6965
      %v7610 = vsel %vm3055, %v7574, %v6967
      %v7611 = vsel %vm3055, %v7575, %v6969
      %v7612 = vsel %vm3055, %v7576, %v6971
      %v7613 = vsel %vm3055, %v7577, %v6973
      %v7614 = vsel %vm3055, %v7578, %v6975
      %v7615 = vsel %vm3055, %v7579, %v6977
      %v7616 = vsel %vm3055, %v7580, %v6979
      %v7617 = vsel %vm3055, %v7581, %v6981
      %v7618 = vsel %vm3055, %v7582, %v6983
      %v7619 = vsel %vm3055, %v7583, %v6985
      %v7620 = vsel %vm3055, %v7584, %v6987
      %v7621 = vsel %vm3055, %v7585, %v6989
      %v7622 = vsel %vm3055, %v7586, %v6991
      %v7623 = vsel %vm3055, %v7587, %v6993
      %v7624 = vsel %vm3055, %v7588, %v6995
      %v7625 = vsel %vm3055, %v7589, %v6997
      %v7626 = vsel %vm3055, %v7590, %v6999
      %v7627 = vsel %vm3055, %v7591, %v7001
      %v7628 = vsel %vm3055, %v7592, %v7003
      %v7629 = vsel %vm3055, %v7593, %v7005
      %v7630 = vsel %vm3055, %v7594, %v7007
      %v7631 = vsel %vm3055, %v7595, %v7009
      %v7632 = vsel %vm3055, %v7596, %v7011
      %v7633 = vsel %vm3055, %v7597, %v7013
      %v7634 = vsel %vm3055, %v7598, %v7015
      %v7635 = vsel %vm3055, %v7599, %v7017
      %v7636 = vsel %vm3055, %v7600, %v7019
      %v7637 = vsel %vm3055, %v7601, %v7021
      %v7638 = vsel %vm3055, %v7602, %v7023
      %v7639 = vsel %vm3055, %v7603, %v7025
      %v7640 = vsel %vm3092, %v7604, %v7065
      %v7641 = vsel %vm3092, %v7605, %v7067
      %v7642 = vsel %vm3092, %v7606, %v7069
      %v7643 = vsel %vm3092, %v7607, %v7071
      %v7644 = vsel %vm3092, %v7608, %v7073
      %v7645 = vsel %vm3092, %v7609, %v7075
      %v7646 = vsel %vm3092, %v7610, %v7077
      %v7647 = vsel %vm3092, %v7611, %v7079
      %v7648 = vsel %vm3092, %v7612, %v7081
      %v7649 = vsel %vm3092, %v7613, %v7083
      %v7650 = vsel %vm3092, %v7614, %v7085
      %v7651 = vsel %vm3092, %v7615, %v7087
      %v7652 = vsel %vm3092, %v7616, %v7089
      %v7653 = vsel %vm3092, %v7617, %v7091
      %v7654 = vsel %vm3092, %v7618, %v7093
      %v7655 = vsel %vm3092, %v7619, %v7095
      %v7656 = vsel %vm3092, %v7620, %v7097
      %v7657 = vsel %vm3092, %v7621, %v7099
      %v7658 = vsel %vm3092, %v7622, %v7101
      %v7659 = vsel %vm3092, %v7623, %v7103
      %v7660 = vsel %vm3092, %v7624, %v7105
      %v7661 = vsel %vm3092, %v7625, %v7107
      %v7662 = vsel %vm3092, %v7626, %v7109
      %v7663 = vsel %vm3092, %v7627, %v7111
      %v7664 = vsel %vm3092, %v7628, %v7113
      %v7665 = vsel %vm3092, %v7629, %v7115
      %v7666 = vsel %vm3092, %v7630, %v7117
      %v7667 = vsel %vm3092, %v7631, %v7119
      %v7668 = vsel %vm3092, %v7632, %v7121
      %v7669 = vsel %vm3092, %v7633, %v7123
      %v7670 = vsel %vm3092, %v7634, %v7125
      %v7671 = vsel %vm3092, %v7635, %v7127
      %v7672 = vsel %vm3092, %v7636, %v7129
      %v7673 = vsel %vm3092, %v7637, %v7131
      %v7674 = vsel %vm3092, %v7638, %v7133
      %v7675 = vsel %vm3092, %v7639, %v7135
      %v7676 = vsel %vm3129, %v7640, %v7209
      %v7677 = vsel %vm3129, %v7641, %v7211
      %v7678 = vsel %vm3129, %v7642, %v7213
      %v7679 = vsel %vm3129, %v7643, %v7215
      %v7680 = vsel %vm3129, %v7644, %v7217
      %v7681 = vsel %vm3129, %v7645, %v7219
      %v7682 = vsel %vm3129, %v7646, %v7221
      %v7683 = vsel %vm3129, %v7647, %v7223
      %v7684 = vsel %vm3129, %v7648, %v7225
      %v7685 = vsel %vm3129, %v7649, %v7227
      %v7686 = vsel %vm3129, %v7650, %v7229
      %v7687 = vsel %vm3129, %v7651, %v7231
      %v7688 = vsel %vm3129, %v7652, %v7233
      %v7689 = vsel %vm3129, %v7653, %v7235
      %v7690 = vsel %vm3129, %v7654, %v7237
      %v7691 = vsel %vm3129, %v7655, %v7239
      %v7692 = vsel %vm3129, %v7656, %v7241
      %v7693 = vsel %vm3129, %v7657, %v7243
      %v7694 = vsel %vm3129, %v7658, %v7245
      %v7695 = vsel %vm3129, %v7659, %v7247
      %v7696 = vsel %vm3129, %v7660, %v7249
      %v7697 = vsel %vm3129, %v7661, %v7251
      %v7698 = vsel %vm3129, %v7662, %v7253
      %v7699 = vsel %vm3129, %v7663, %v7255
      %v7700 = vsel %vm3129, %v7664, %v7257
      %v7701 = vsel %vm3129, %v7665, %v7259
      %v7702 = vsel %vm3129, %v7666, %v7261
      %v7703 = vsel %vm3129, %v7667, %v7263
      %v7704 = vsel %vm3129, %v7668, %v7265
      %v7705 = vsel %vm3129, %v7669, %v7267
      %v7706 = vsel %vm3129, %v7670, %v7269
      %v7707 = vsel %vm3129, %v7671, %v7271
      %v7708 = vsel %vm3129, %v7672, %v7273
      %v7709 = vsel %vm3129, %v7673, %v7275
      %v7710 = vsel %vm3129, %v7674, %v7277
      %v7711 = vsel %vm3129, %v7675, %v7279
      %v7712 = vsel %vm3166, %v7676, %v7353
      %v7713 = vsel %vm3166, %v7677, %v7355
      %v7714 = vsel %vm3166, %v7678, %v7357
      %v7715 = vsel %vm3166, %v7679, %v7359
      %v7716 = vsel %vm3166, %v7680, %v7361
      %v7717 = vsel %vm3166, %v7681, %v7363
      %v7718 = vsel %vm3166, %v7682, %v7365
      %v7719 = vsel %vm3166, %v7683, %v7367
      %v7720 = vsel %vm3166, %v7684, %v7369
      %v7721 = vsel %vm3166, %v7685, %v7371
      %v7722 = vsel %vm3166, %v7686, %v7373
      %v7723 = vsel %vm3166, %v7687, %v7375
      %v7724 = vsel %vm3166, %v7688, %v7377
      %v7725 = vsel %vm3166, %v7689, %v7379
      %v7726 = vsel %vm3166, %v7690, %v7381
      %v7727 = vsel %vm3166, %v7691, %v7383
      %v7728 = vsel %vm3166, %v7692, %v7385
      %v7729 = vsel %vm3166, %v7693, %v7387
      %v7730 = vsel %vm3166, %v7694, %v7389
      %v7731 = vsel %vm3166, %v7695, %v7391
      %v7732 = vsel %vm3166, %v7696, %v7393
      %v7733 = vsel %vm3166, %v7697, %v7395
      %v7734 = vsel %vm3166, %v7698, %v7397
      %v7735 = vsel %vm3166, %v7699, %v7399
      %v7736 = vsel %vm3166, %v7700, %v7401
      %v7737 = vsel %vm3166, %v7701, %v7403
      %v7738 = vsel %vm3166, %v7702, %v7405
      %v7739 = vsel %vm3166, %v7703, %v7407
      %v7740 = vsel %vm3166, %v7704, %v7409
      %v7741 = vsel %vm3166, %v7705, %v7411
      %v7742 = vsel %vm3166, %v7706, %v7413
      %v7743 = vsel %vm3166, %v7707, %v7415
      %v7744 = vsel %vm3166, %v7708, %v7417
      %v7745 = vsel %vm3166, %v7709, %v7419
      %v7746 = vsel %vm3166, %v7710, %v7421
      %v7747 = vsel %vm3166, %v7711, %v7423
      %v7748 = vpack.c.bf16 %v7713, %v7712
      %v7749 = vpack.c.bf16 %v7715, %v7714
      %v7750 = vpack.c.bf16 %v7717, %v7716
      %v7751 = vpack.c.bf16 %v7719, %v7718
      %v7752 = vpack.c.bf16 %v7721, %v7720
      %v7753 = vpack.c.bf16 %v7723, %v7722
      %v7754 = vpack.c.bf16 %v7725, %v7724
      %v7755 = vpack.c.bf16 %v7727, %v7726
      %v7756 = vpack.c.bf16 %v7729, %v7728
      %v7757 = vpack.c.bf16 %v7731, %v7730
      %v7758 = vpack.c.bf16 %v7733, %v7732
      %v7759 = vpack.c.bf16 %v7735, %v7734
      %v7760 = vpack.c.bf16 %v7737, %v7736
      %v7761 = vpack.c.bf16 %v7739, %v7738
      %v7762 = vpack.c.bf16 %v7741, %v7740
      %v7763 = vpack.c.bf16 %v7743, %v7742
      %v7764 = vpack.c.bf16 %v7745, %v7744
      %v7765 = vpack.c.bf16 %v7747, %v7746
      %v7767 = vsel %vm3248, %v7748, 0
      %v7770 = vsel %vm3248, %v7749, 0
      %v7773 = vsel %vm3248, %v7750, 0
      %v7776 = vsel %vm3248, %v7751, 0
      %v7779 = vsel %vm3248, %v7752, 0
      %v7782 = vsel %vm3248, %v7753, 0
      %v7785 = vsel %vm3248, %v7754, 0
      %v7788 = vsel %vm3248, %v7755, 0
      %v7791 = vsel %vm3248, %v7756, 0
      %v7794 = vsel %vm3248, %v7757, 0
      %v7797 = vsel %vm3248, %v7758, 0
      %v7800 = vsel %vm3248, %v7759, 0
      %v7803 = vsel %vm3248, %v7760, 0
      %v7806 = vsel %vm3248, %v7761, 0
      %v7809 = vsel %vm3248, %v7762, 0
      %v7812 = vsel %vm3248, %v7763, 0
      %v7815 = vsel %vm3248, %v7764, 0
      %v7818 = vsel %vm3248, %v7765, 0
      %7820 = vmatpush.bf16.msra.mxu0 0
      %7821 = vmatpush.bf16.msra.mxu0 0
      %7822 = vmatpush.bf16.msra.mxu0 0
      %7823 = vmatpush.bf16.msra.mxu0 %v3305
      %7824 = vmatpush.bf16.msra.mxu0 %v3242
      %7825 = vmatpush.bf16.msra.mxu0 %v3241
      %7826 = vmatpush.bf16.msra.mxu0 %v3240
      %7827 = vmatpush.bf16.msra.mxu0 %v3239
      %7828 = vmatmul.bf16.gmra.mxu0 %v7767
      %v7829 = vpop.f32.mrf.mxu0
      %v7830 = vadd.f32 0.0, %v7829
      %v7831 = vpop.f32.mrf.mxu0
      %v7832 = vadd.f32 0.0, %v7831
      %7833 = vmatmul.bf16.gmra.mxu0 %v7770
      %v7834 = vpop.f32.mrf.mxu0
      %v7835 = vadd.f32 0.0, %v7834
      %v7836 = vpop.f32.mrf.mxu0
      %v7837 = vadd.f32 0.0, %v7836
      %7838 = vmatmul.bf16.gmra.mxu0 %v7773
      %v7839 = vpop.f32.mrf.mxu0
      %v7840 = vadd.f32 0.0, %v7839
      %v7841 = vpop.f32.mrf.mxu0
      %v7842 = vadd.f32 0.0, %v7841
      %7843 = vmatmul.bf16.gmra.mxu0 %v7776
      %v7844 = vpop.f32.mrf.mxu0
      %v7845 = vadd.f32 0.0, %v7844
      %v7846 = vpop.f32.mrf.mxu0
      %v7847 = vadd.f32 0.0, %v7846
      %7848 = vmatmul.bf16.gmra.mxu0 %v7779
      %v7849 = vpop.f32.mrf.mxu0
      %v7850 = vadd.f32 0.0, %v7849
      %v7851 = vpop.f32.mrf.mxu0
      %v7852 = vadd.f32 0.0, %v7851
      %7853 = vmatmul.bf16.gmra.mxu0 %v7782
      %v7854 = vpop.f32.mrf.mxu0
      %v7855 = vadd.f32 0.0, %v7854
      %v7856 = vpop.f32.mrf.mxu0
      %v7857 = vadd.f32 0.0, %v7856
      %7858 = vmatmul.bf16.gmra.mxu0 %v7785
      %v7859 = vpop.f32.mrf.mxu0
      %v7860 = vadd.f32 0.0, %v7859
      %v7861 = vpop.f32.mrf.mxu0
      %v7862 = vadd.f32 0.0, %v7861
      %7863 = vmatmul.bf16.gmra.mxu0 %v7788
      %v7864 = vpop.f32.mrf.mxu0
      %v7865 = vadd.f32 0.0, %v7864
      %v7866 = vpop.f32.mrf.mxu0
      %v7867 = vadd.f32 0.0, %v7866
      %7868 = vmatmul.bf16.gmra.mxu0 %v7791
      %v7869 = vpop.f32.mrf.mxu0
      %v7870 = vadd.f32 0.0, %v7869
      %v7871 = vpop.f32.mrf.mxu0
      %v7872 = vadd.f32 0.0, %v7871
      %7873 = vmatmul.bf16.gmra.mxu0 %v7794
      %v7874 = vpop.f32.mrf.mxu0
      %v7875 = vadd.f32 0.0, %v7874
      %v7876 = vpop.f32.mrf.mxu0
      %v7877 = vadd.f32 0.0, %v7876
      %7878 = vmatmul.bf16.gmra.mxu0 %v7797
      %v7879 = vpop.f32.mrf.mxu0
      %v7880 = vadd.f32 0.0, %v7879
      %v7881 = vpop.f32.mrf.mxu0
      %v7882 = vadd.f32 0.0, %v7881
      %7883 = vmatmul.bf16.gmra.mxu0 %v7800
      %v7884 = vpop.f32.mrf.mxu0
      %v7885 = vadd.f32 0.0, %v7884
      %v7886 = vpop.f32.mrf.mxu0
      %v7887 = vadd.f32 0.0, %v7886
      %7888 = vmatmul.bf16.gmra.mxu0 %v7803
      %v7889 = vpop.f32.mrf.mxu0
      %v7890 = vadd.f32 0.0, %v7889
      %v7891 = vpop.f32.mrf.mxu0
      %v7892 = vadd.f32 0.0, %v7891
      %7893 = vmatmul.bf16.gmra.mxu0 %v7806
      %v7894 = vpop.f32.mrf.mxu0
      %v7895 = vadd.f32 0.0, %v7894
      %v7896 = vpop.f32.mrf.mxu0
      %v7897 = vadd.f32 0.0, %v7896
      %7898 = vmatmul.bf16.gmra.mxu0 %v7809
      %v7899 = vpop.f32.mrf.mxu0
      %v7900 = vadd.f32 0.0, %v7899
      %v7901 = vpop.f32.mrf.mxu0
      %v7902 = vadd.f32 0.0, %v7901
      %7903 = vmatmul.bf16.gmra.mxu0 %v7812
      %v7904 = vpop.f32.mrf.mxu0
      %v7905 = vadd.f32 0.0, %v7904
      %v7906 = vpop.f32.mrf.mxu0
      %v7907 = vadd.f32 0.0, %v7906
      %7908 = vmatmul.bf16.gmra.mxu0 %v7815
      %v7909 = vpop.f32.mrf.mxu0
      %v7910 = vadd.f32 0.0, %v7909
      %v7911 = vpop.f32.mrf.mxu0
      %v7912 = vadd.f32 0.0, %v7911
      %7913 = vmatmul.bf16.gmra.mxu0 %v7818
      %v7914 = vpop.f32.mrf.mxu0
      %v7915 = vadd.f32 0.0, %v7914
      %v7916 = vpop.f32.mrf.mxu0
      %v7917 = vadd.f32 0.0, %v7916
      %7918 = vdwg.mxu0
      %v7919 = vmul.f32 %v7830, %v1513
      %v7920 = vmul.f32 %v7832, %v1514
      %v7921 = vmul.f32 %v7835, %v1515
      %v7922 = vmul.f32 %v7837, %v1516
      %v7923 = vmul.f32 %v7840, %v1517
      %v7924 = vmul.f32 %v7842, %v1518
      %v7925 = vmul.f32 %v7845, %v1519
      %v7926 = vmul.f32 %v7847, %v1520
      %v7927 = vmul.f32 %v7850, %v1521
      %v7928 = vmul.f32 %v7852, %v1522
      %v7929 = vmul.f32 %v7855, %v1523
      %v7930 = vmul.f32 %v7857, %v1524
      %v7931 = vmul.f32 %v7860, %v1525
      %v7932 = vmul.f32 %v7862, %v1526
      %v7933 = vmul.f32 %v7865, %v1527
      %v7934 = vmul.f32 %v7867, %v1528
      %v7935 = vmul.f32 %v7870, %v1529
      %v7936 = vmul.f32 %v7872, %v1530
      %v7937 = vmul.f32 %v7875, %v1531
      %v7938 = vmul.f32 %v7877, %v1532
      %v7939 = vmul.f32 %v7880, %v1533
      %v7940 = vmul.f32 %v7882, %v1534
      %v7941 = vmul.f32 %v7885, %v1535
      %v7942 = vmul.f32 %v7887, %v1536
      %v7943 = vmul.f32 %v7890, %v1537
      %v7944 = vmul.f32 %v7892, %v1538
      %v7945 = vmul.f32 %v7895, %v1539
      %v7946 = vmul.f32 %v7897, %v1540
      %v7947 = vmul.f32 %v7900, %v1541
      %v7948 = vmul.f32 %v7902, %v1542
      %v7949 = vmul.f32 %v7905, %v1543
      %v7950 = vmul.f32 %v7907, %v1544
      %v7951 = vmul.f32 %v7910, %v1545
      %v7952 = vmul.f32 %v7912, %v1546
      %v7953 = vmul.f32 %v7915, %v1547
      %v7954 = vmul.f32 %v7917, %v1548
      %v7955 = vsel %vm2907, %v7919, 0.0
      %v7956 = vsel %vm2907, %v7920, 0.0
      %v7957 = vadd.f32 %v7955, %v7956
      %v7958 = vsel %vm2907, %v7921, 0.0
      %v7959 = vadd.f32 %v7957, %v7958
      %v7960 = vsel %vm2907, %v7922, 0.0
      %v7961 = vadd.f32 %v7959, %v7960
      %v7962 = vsel %vm2907, %v7923, 0.0
      %v7963 = vadd.f32 %v7961, %v7962
      %v7964 = vsel %vm2907, %v7924, 0.0
      %v7965 = vadd.f32 %v7963, %v7964
      %v7966 = vsel %vm2907, %v7925, 0.0
      %v7967 = vadd.f32 %v7965, %v7966
      %v7968 = vsel %vm2907, %v7926, 0.0
      %v7969 = vadd.f32 %v7967, %v7968
      %v7970 = vsel %vm2907, %v7927, 0.0
      %v7971 = vadd.f32 %v7969, %v7970
      %v7972 = vsel %vm2907, %v7928, 0.0
      %v7973 = vadd.f32 %v7971, %v7972
      %v7974 = vsel %vm2907, %v7929, 0.0
      %v7975 = vadd.f32 %v7973, %v7974
      %v7976 = vsel %vm2907, %v7930, 0.0
      %v7977 = vadd.f32 %v7975, %v7976
      %v7978 = vsel %vm2907, %v7931, 0.0
      %v7979 = vadd.f32 %v7977, %v7978
      %v7980 = vsel %vm2907, %v7932, 0.0
      %v7981 = vadd.f32 %v7979, %v7980
      %v7982 = vsel %vm2907, %v7933, 0.0
      %v7983 = vadd.f32 %v7981, %v7982
      %v7984 = vsel %vm2907, %v7934, 0.0
      %v7985 = vadd.f32 %v7983, %v7984
      %v7986 = vsel %vm2907, %v7935, 0.0
      %v7987 = vadd.f32 %v7985, %v7986
      %v7988 = vsel %vm2907, %v7936, 0.0
      %v7989 = vadd.f32 %v7987, %v7988
      %v7990 = vsel %vm2907, %v7937, 0.0
      %v7991 = vadd.f32 %v7989, %v7990
      %v7992 = vsel %vm2907, %v7938, 0.0
      %v7993 = vadd.f32 %v7991, %v7992
      %v7994 = vsel %vm2907, %v7939, 0.0
      %v7995 = vadd.f32 %v7993, %v7994
      %v7996 = vsel %vm2907, %v7940, 0.0
      %v7997 = vadd.f32 %v7995, %v7996
      %v7998 = vsel %vm2907, %v7941, 0.0
      %v7999 = vadd.f32 %v7997, %v7998
      %v8000 = vsel %vm2907, %v7942, 0.0
      %v8001 = vadd.f32 %v7999, %v8000
      %v8002 = vsel %vm2907, %v7943, 0.0
      %v8003 = vadd.f32 %v8001, %v8002
      %v8004 = vsel %vm2907, %v7944, 0.0
      %v8005 = vadd.f32 %v8003, %v8004
      %v8006 = vsel %vm2907, %v7945, 0.0
      %v8007 = vadd.f32 %v8005, %v8006
      %v8008 = vsel %vm2907, %v7946, 0.0
      %v8009 = vadd.f32 %v8007, %v8008
      %v8010 = vsel %vm2907, %v7947, 0.0
      %v8011 = vadd.f32 %v8009, %v8010
      %v8012 = vsel %vm2907, %v7948, 0.0
      %v8013 = vadd.f32 %v8011, %v8012
      %v8014 = vsel %vm2907, %v7949, 0.0
      %v8015 = vadd.f32 %v8013, %v8014
      %v8016 = vsel %vm2907, %v7950, 0.0
      %v8017 = vadd.f32 %v8015, %v8016
      %v8018 = vsel %vm2907, %v7951, 0.0
      %v8019 = vadd.f32 %v8017, %v8018
      %v8020 = vsel %vm2907, %v7952, 0.0
      %v8021 = vadd.f32 %v8019, %v8020
      %v8022 = vsel %vm2907, %v7953, 0.0
      %v8023 = vadd.f32 %v8021, %v8022
      %v8024 = vsel %vm2907, %v7954, 0.0
      %v8025 = vadd.f32 %v8023, %v8024
      %v8026 = vrot.slane %v8025, 4
      %v8027 = vadd.f32 %v8025, %v8026
      %v8028 = vrot.slane %v8027, 2
      %v8029 = vadd.f32 %v8027, %v8028
      %v8030 = vrot.slane %v8029, 1
      %v8031 = vadd.f32 %v8029, %v8030
      %v8032 = vmul.f32 %v8031, 0.00390625
      %v8033 = vsub.f32 %v7830, %v8032
      %v8034 = vsub.f32 %v7832, %v8032
      %v8035 = vsub.f32 %v7835, %v8032
      %v8036 = vsub.f32 %v7837, %v8032
      %v8037 = vsub.f32 %v7840, %v8032
      %v8038 = vsub.f32 %v7842, %v8032
      %v8039 = vsub.f32 %v7845, %v8032
      %v8040 = vsub.f32 %v7847, %v8032
      %v8041 = vsub.f32 %v7850, %v8032
      %v8042 = vsub.f32 %v7852, %v8032
      %v8043 = vsub.f32 %v7855, %v8032
      %v8044 = vsub.f32 %v7857, %v8032
      %v8045 = vsub.f32 %v7860, %v8032
      %v8046 = vsub.f32 %v7862, %v8032
      %v8047 = vsub.f32 %v7865, %v8032
      %v8048 = vsub.f32 %v7867, %v8032
      %v8049 = vsub.f32 %v7870, %v8032
      %v8050 = vsub.f32 %v7872, %v8032
      %v8051 = vsub.f32 %v7875, %v8032
      %v8052 = vsub.f32 %v7877, %v8032
      %v8053 = vsub.f32 %v7880, %v8032
      %v8054 = vsub.f32 %v7882, %v8032
      %v8055 = vsub.f32 %v7885, %v8032
      %v8056 = vsub.f32 %v7887, %v8032
      %v8057 = vsub.f32 %v7890, %v8032
      %v8058 = vsub.f32 %v7892, %v8032
      %v8059 = vsub.f32 %v7895, %v8032
      %v8060 = vsub.f32 %v7897, %v8032
      %v8061 = vsub.f32 %v7900, %v8032
      %v8062 = vsub.f32 %v7902, %v8032
      %v8063 = vsub.f32 %v7905, %v8032
      %v8064 = vsub.f32 %v7907, %v8032
      %v8065 = vsub.f32 %v7910, %v8032
      %v8066 = vsub.f32 %v7912, %v8032
      %v8067 = vsub.f32 %v7915, %v8032
      %v8068 = vsub.f32 %v7917, %v8032
      %v8069 = vmul.f32 %v8033, %v8033
      %v8070 = vmul.f32 %v8034, %v8034
      %v8071 = vmul.f32 %v8035, %v8035
      %v8072 = vmul.f32 %v8036, %v8036
      %v8073 = vmul.f32 %v8037, %v8037
      %v8074 = vmul.f32 %v8038, %v8038
      %v8075 = vmul.f32 %v8039, %v8039
      %v8076 = vmul.f32 %v8040, %v8040
      %v8077 = vmul.f32 %v8041, %v8041
      %v8078 = vmul.f32 %v8042, %v8042
      %v8079 = vmul.f32 %v8043, %v8043
      %v8080 = vmul.f32 %v8044, %v8044
      %v8081 = vmul.f32 %v8045, %v8045
      %v8082 = vmul.f32 %v8046, %v8046
      %v8083 = vmul.f32 %v8047, %v8047
      %v8084 = vmul.f32 %v8048, %v8048
      %v8085 = vmul.f32 %v8049, %v8049
      %v8086 = vmul.f32 %v8050, %v8050
      %v8087 = vmul.f32 %v8051, %v8051
      %v8088 = vmul.f32 %v8052, %v8052
      %v8089 = vmul.f32 %v8053, %v8053
      %v8090 = vmul.f32 %v8054, %v8054
      %v8091 = vmul.f32 %v8055, %v8055
      %v8092 = vmul.f32 %v8056, %v8056
      %v8093 = vmul.f32 %v8057, %v8057
      %v8094 = vmul.f32 %v8058, %v8058
      %v8095 = vmul.f32 %v8059, %v8059
      %v8096 = vmul.f32 %v8060, %v8060
      %v8097 = vmul.f32 %v8061, %v8061
      %v8098 = vmul.f32 %v8062, %v8062
      %v8099 = vmul.f32 %v8063, %v8063
      %v8100 = vmul.f32 %v8064, %v8064
      %v8101 = vmul.f32 %v8065, %v8065
      %v8102 = vmul.f32 %v8066, %v8066
      %v8103 = vmul.f32 %v8067, %v8067
      %v8104 = vmul.f32 %v8068, %v8068
      %v8105 = vmul.f32 %v8069, %v1513
      %v8106 = vmul.f32 %v8070, %v1514
      %v8107 = vmul.f32 %v8071, %v1515
      %v8108 = vmul.f32 %v8072, %v1516
      %v8109 = vmul.f32 %v8073, %v1517
      %v8110 = vmul.f32 %v8074, %v1518
      %v8111 = vmul.f32 %v8075, %v1519
      %v8112 = vmul.f32 %v8076, %v1520
      %v8113 = vmul.f32 %v8077, %v1521
      %v8114 = vmul.f32 %v8078, %v1522
      %v8115 = vmul.f32 %v8079, %v1523
      %v8116 = vmul.f32 %v8080, %v1524
      %v8117 = vmul.f32 %v8081, %v1525
      %v8118 = vmul.f32 %v8082, %v1526
      %v8119 = vmul.f32 %v8083, %v1527
      %v8120 = vmul.f32 %v8084, %v1528
      %v8121 = vmul.f32 %v8085, %v1529
      %v8122 = vmul.f32 %v8086, %v1530
      %v8123 = vmul.f32 %v8087, %v1531
      %v8124 = vmul.f32 %v8088, %v1532
      %v8125 = vmul.f32 %v8089, %v1533
      %v8126 = vmul.f32 %v8090, %v1534
      %v8127 = vmul.f32 %v8091, %v1535
      %v8128 = vmul.f32 %v8092, %v1536
      %v8129 = vmul.f32 %v8093, %v1537
      %v8130 = vmul.f32 %v8094, %v1538
      %v8131 = vmul.f32 %v8095, %v1539
      %v8132 = vmul.f32 %v8096, %v1540
      %v8133 = vmul.f32 %v8097, %v1541
      %v8134 = vmul.f32 %v8098, %v1542
      %v8135 = vmul.f32 %v8099, %v1543
      %v8136 = vmul.f32 %v8100, %v1544
      %v8137 = vmul.f32 %v8101, %v1545
      %v8138 = vmul.f32 %v8102, %v1546
      %v8139 = vmul.f32 %v8103, %v1547
      %v8140 = vmul.f32 %v8104, %v1548
      %v8141 = vsel %vm2907, %v8105, 0.0
      %v8142 = vsel %vm2907, %v8106, 0.0
      %v8143 = vadd.f32 %v8141, %v8142
      %v8144 = vsel %vm2907, %v8107, 0.0
      %v8145 = vadd.f32 %v8143, %v8144
      %v8146 = vsel %vm2907, %v8108, 0.0
      %v8147 = vadd.f32 %v8145, %v8146
      %v8148 = vsel %vm2907, %v8109, 0.0
      %v8149 = vadd.f32 %v8147, %v8148
      %v8150 = vsel %vm2907, %v8110, 0.0
      %v8151 = vadd.f32 %v8149, %v8150
      %v8152 = vsel %vm2907, %v8111, 0.0
      %v8153 = vadd.f32 %v8151, %v8152
      %v8154 = vsel %vm2907, %v8112, 0.0
      %v8155 = vadd.f32 %v8153, %v8154
      %v8156 = vsel %vm2907, %v8113, 0.0
      %v8157 = vadd.f32 %v8155, %v8156
      %v8158 = vsel %vm2907, %v8114, 0.0
      %v8159 = vadd.f32 %v8157, %v8158
      %v8160 = vsel %vm2907, %v8115, 0.0
      %v8161 = vadd.f32 %v8159, %v8160
      %v8162 = vsel %vm2907, %v8116, 0.0
      %v8163 = vadd.f32 %v8161, %v8162
      %v8164 = vsel %vm2907, %v8117, 0.0
      %v8165 = vadd.f32 %v8163, %v8164
      %v8166 = vsel %vm2907, %v8118, 0.0
      %v8167 = vadd.f32 %v8165, %v8166
      %v8168 = vsel %vm2907, %v8119, 0.0
      %v8169 = vadd.f32 %v8167, %v8168
      %v8170 = vsel %vm2907, %v8120, 0.0
      %v8171 = vadd.f32 %v8169, %v8170
      %v8172 = vsel %vm2907, %v8121, 0.0
      %v8173 = vadd.f32 %v8171, %v8172
      %v8174 = vsel %vm2907, %v8122, 0.0
      %v8175 = vadd.f32 %v8173, %v8174
      %v8176 = vsel %vm2907, %v8123, 0.0
      %v8177 = vadd.f32 %v8175, %v8176
      %v8178 = vsel %vm2907, %v8124, 0.0
      %v8179 = vadd.f32 %v8177, %v8178
      %v8180 = vsel %vm2907, %v8125, 0.0
      %v8181 = vadd.f32 %v8179, %v8180
      %v8182 = vsel %vm2907, %v8126, 0.0
      %v8183 = vadd.f32 %v8181, %v8182
      %v8184 = vsel %vm2907, %v8127, 0.0
      %v8185 = vadd.f32 %v8183, %v8184
      %v8186 = vsel %vm2907, %v8128, 0.0
      %v8187 = vadd.f32 %v8185, %v8186
      %v8188 = vsel %vm2907, %v8129, 0.0
      %v8189 = vadd.f32 %v8187, %v8188
      %v8190 = vsel %vm2907, %v8130, 0.0
      %v8191 = vadd.f32 %v8189, %v8190
      %v8192 = vsel %vm2907, %v8131, 0.0
      %v8193 = vadd.f32 %v8191, %v8192
      %v8194 = vsel %vm2907, %v8132, 0.0
      %v8195 = vadd.f32 %v8193, %v8194
      %v8196 = vsel %vm2907, %v8133, 0.0
      %v8197 = vadd.f32 %v8195, %v8196
      %v8198 = vsel %vm2907, %v8134, 0.0
      %v8199 = vadd.f32 %v8197, %v8198
      %v8200 = vsel %vm2907, %v8135, 0.0
      %v8201 = vadd.f32 %v8199, %v8200
      %v8202 = vsel %vm2907, %v8136, 0.0
      %v8203 = vadd.f32 %v8201, %v8202
      %v8204 = vsel %vm2907, %v8137, 0.0
      %v8205 = vadd.f32 %v8203, %v8204
      %v8206 = vsel %vm2907, %v8138, 0.0
      %v8207 = vadd.f32 %v8205, %v8206
      %v8208 = vsel %vm2907, %v8139, 0.0
      %v8209 = vadd.f32 %v8207, %v8208
      %v8210 = vsel %vm2907, %v8140, 0.0
      %v8211 = vadd.f32 %v8209, %v8210
      %v8212 = vrot.slane %v8211, 4
      %v8213 = vadd.f32 %v8211, %v8212
      %v8214 = vrot.slane %v8213, 2
      %v8215 = vadd.f32 %v8213, %v8214
      %v8216 = vrot.slane %v8215, 1
      %v8217 = vadd.f32 %v8215, %v8216
      %v8218 = vmul.f32 %v8217, 0.00390625
      %v8219 = vadd.f32 %v8218, 1e-05
      %v8220 = vrsqrt.pop %v8219
      %v8221 = vmul.f32 %v8220, %v8219
      %v8222 = vmul.f32 %v8221, %v8220
      %v8223 = vmul.f32 0.5, %v8222
      %v8224 = vsub.f32 1.5, %v8223
      %v8225 = vmul.f32 %v8220, %v8224
      %vm8226 = vweird.f32 %v8219
      %vm8227 = vweird.f32 %v8220
      %vm8228 = vmor %vm8226, %vm8227
      %v8229 = vsel %vm8228, %v8220, %v8225
      %v8230 = vmul.f32 %v8033, %v8229
      %v8231 = vmul.f32 %v8034, %v8229
      %v8232 = vmul.f32 %v8035, %v8229
      %v8233 = vmul.f32 %v8036, %v8229
      %v8234 = vmul.f32 %v8037, %v8229
      %v8235 = vmul.f32 %v8038, %v8229
      %v8236 = vmul.f32 %v8039, %v8229
      %v8237 = vmul.f32 %v8040, %v8229
      %v8238 = vmul.f32 %v8041, %v8229
      %v8239 = vmul.f32 %v8042, %v8229
      %v8240 = vmul.f32 %v8043, %v8229
      %v8241 = vmul.f32 %v8044, %v8229
      %v8242 = vmul.f32 %v8045, %v8229
      %v8243 = vmul.f32 %v8046, %v8229
      %v8244 = vmul.f32 %v8047, %v8229
      %v8245 = vmul.f32 %v8048, %v8229
      %v8246 = vmul.f32 %v8049, %v8229
      %v8247 = vmul.f32 %v8050, %v8229
      %v8248 = vmul.f32 %v8051, %v8229
      %v8249 = vmul.f32 %v8052, %v8229
      %v8250 = vmul.f32 %v8053, %v8229
      %v8251 = vmul.f32 %v8054, %v8229
      %v8252 = vmul.f32 %v8055, %v8229
      %v8253 = vmul.f32 %v8056, %v8229
      %v8254 = vmul.f32 %v8057, %v8229
      %v8255 = vmul.f32 %v8058, %v8229
      %v8256 = vmul.f32 %v8059, %v8229
      %v8257 = vmul.f32 %v8060, %v8229
      %v8258 = vmul.f32 %v8061, %v8229
      %v8259 = vmul.f32 %v8062, %v8229
      %v8260 = vmul.f32 %v8063, %v8229
      %v8261 = vmul.f32 %v8064, %v8229
      %v8262 = vmul.f32 %v8065, %v8229
      %v8263 = vmul.f32 %v8066, %v8229
      %v8264 = vmul.f32 %v8067, %v8229
      %v8265 = vmul.f32 %v8068, %v8229
      %v8266 = vmax.f32 %v8230, 0.0
      %v8267 = vmax.f32 %v8231, 0.0
      %v8268 = vmax.f32 %v8232, 0.0
      %v8269 = vmax.f32 %v8233, 0.0
      %v8270 = vmax.f32 %v8234, 0.0
      %v8271 = vmax.f32 %v8235, 0.0
      %v8272 = vmax.f32 %v8236, 0.0
      %v8273 = vmax.f32 %v8237, 0.0
      %v8274 = vmax.f32 %v8238, 0.0
      %v8275 = vmax.f32 %v8239, 0.0
      %v8276 = vmax.f32 %v8240, 0.0
      %v8277 = vmax.f32 %v8241, 0.0
      %v8278 = vmax.f32 %v8242, 0.0
      %v8279 = vmax.f32 %v8243, 0.0
      %v8280 = vmax.f32 %v8244, 0.0
      %v8281 = vmax.f32 %v8245, 0.0
      %v8282 = vmax.f32 %v8246, 0.0
      %v8283 = vmax.f32 %v8247, 0.0
      %v8284 = vmax.f32 %v8248, 0.0
      %v8285 = vmax.f32 %v8249, 0.0
      %v8286 = vmax.f32 %v8250, 0.0
      %v8287 = vmax.f32 %v8251, 0.0
      %v8288 = vmax.f32 %v8252, 0.0
      %v8289 = vmax.f32 %v8253, 0.0
      %v8290 = vmax.f32 %v8254, 0.0
      %v8291 = vmax.f32 %v8255, 0.0
      %v8292 = vmax.f32 %v8256, 0.0
      %v8293 = vmax.f32 %v8257, 0.0
      %v8294 = vmax.f32 %v8258, 0.0
      %v8295 = vmax.f32 %v8259, 0.0
      %v8296 = vmax.f32 %v8260, 0.0
      %v8297 = vmax.f32 %v8261, 0.0
      %v8298 = vmax.f32 %v8262, 0.0
      %v8299 = vmax.f32 %v8263, 0.0
      %v8300 = vmax.f32 %v8264, 0.0
      %v8301 = vmax.f32 %v8265, 0.0
      %v8302 = vmul.f32 %v8266, %v1513
      %v8303 = vmul.f32 %v8267, %v1514
      %v8304 = vmul.f32 %v8268, %v1515
      %v8305 = vmul.f32 %v8269, %v1516
      %v8306 = vmul.f32 %v8270, %v1517
      %v8307 = vmul.f32 %v8271, %v1518
      %v8308 = vmul.f32 %v8272, %v1519
      %v8309 = vmul.f32 %v8273, %v1520
      %v8310 = vmul.f32 %v8274, %v1521
      %v8311 = vmul.f32 %v8275, %v1522
      %v8312 = vmul.f32 %v8276, %v1523
      %v8313 = vmul.f32 %v8277, %v1524
      %v8314 = vmul.f32 %v8278, %v1525
      %v8315 = vmul.f32 %v8279, %v1526
      %v8316 = vmul.f32 %v8280, %v1527
      %v8317 = vmul.f32 %v8281, %v1528
      %v8318 = vmul.f32 %v8282, %v1529
      %v8319 = vmul.f32 %v8283, %v1530
      %v8320 = vmul.f32 %v8284, %v1531
      %v8321 = vmul.f32 %v8285, %v1532
      %v8322 = vmul.f32 %v8286, %v1533
      %v8323 = vmul.f32 %v8287, %v1534
      %v8324 = vmul.f32 %v8288, %v1535
      %v8325 = vmul.f32 %v8289, %v1536
      %v8326 = vmul.f32 %v8290, %v1537
      %v8327 = vmul.f32 %v8291, %v1538
      %v8328 = vmul.f32 %v8292, %v1539
      %v8329 = vmul.f32 %v8293, %v1540
      %v8330 = vmul.f32 %v8294, %v1541
      %v8331 = vmul.f32 %v8295, %v1542
      %v8332 = vmul.f32 %v8296, %v1543
      %v8333 = vmul.f32 %v8297, %v1544
      %v8334 = vmul.f32 %v8298, %v1545
      %v8335 = vmul.f32 %v8299, %v1546
      %v8336 = vmul.f32 %v8300, %v1547
      %v8337 = vmul.f32 %v8301, %v1548
      %v8372 = vrot.slane %v8302, 5
      %v8373 = vrot.slane %v8303, 5
      %v8374 = vsel %vm3859, %v8372, %v8373
      %v8375 = vrot.slane %v8304, 5
      %v8376 = vsel %vm3859, %v8373, %v8375
      %v8377 = vrot.slane %v8305, 5
      %v8378 = vsel %vm3859, %v8375, %v8377
      %v8379 = vrot.slane %v8306, 5
      %v8380 = vsel %vm3859, %v8377, %v8379
      %v8381 = vrot.slane %v8307, 5
      %v8382 = vsel %vm3859, %v8379, %v8381
      %v8383 = vrot.slane %v8308, 5
      %v8384 = vsel %vm3859, %v8381, %v8383
      %v8385 = vrot.slane %v8309, 5
      %v8386 = vsel %vm3859, %v8383, %v8385
      %v8387 = vrot.slane %v8310, 5
      %v8388 = vsel %vm3859, %v8385, %v8387
      %v8389 = vrot.slane %v8311, 5
      %v8390 = vsel %vm3859, %v8387, %v8389
      %v8391 = vrot.slane %v8312, 5
      %v8392 = vsel %vm3859, %v8389, %v8391
      %v8393 = vrot.slane %v8313, 5
      %v8394 = vsel %vm3859, %v8391, %v8393
      %v8395 = vrot.slane %v8314, 5
      %v8396 = vsel %vm3859, %v8393, %v8395
      %v8397 = vrot.slane %v8315, 5
      %v8398 = vsel %vm3859, %v8395, %v8397
      %v8399 = vrot.slane %v8316, 5
      %v8400 = vsel %vm3859, %v8397, %v8399
      %v8401 = vrot.slane %v8317, 5
      %v8402 = vsel %vm3859, %v8399, %v8401
      %v8403 = vrot.slane %v8318, 5
      %v8404 = vsel %vm3859, %v8401, %v8403
      %v8405 = vrot.slane %v8319, 5
      %v8406 = vsel %vm3859, %v8403, %v8405
      %v8407 = vrot.slane %v8320, 5
      %v8408 = vsel %vm3859, %v8405, %v8407
      %v8409 = vrot.slane %v8321, 5
      %v8410 = vsel %vm3859, %v8407, %v8409
      %v8411 = vrot.slane %v8322, 5
      %v8412 = vsel %vm3859, %v8409, %v8411
      %v8413 = vrot.slane %v8323, 5
      %v8414 = vsel %vm3859, %v8411, %v8413
      %v8415 = vrot.slane %v8324, 5
      %v8416 = vsel %vm3859, %v8413, %v8415
      %v8417 = vrot.slane %v8325, 5
      %v8418 = vsel %vm3859, %v8415, %v8417
      %v8419 = vrot.slane %v8326, 5
      %v8420 = vsel %vm3859, %v8417, %v8419
      %v8421 = vrot.slane %v8327, 5
      %v8422 = vsel %vm3859, %v8419, %v8421
      %v8423 = vrot.slane %v8328, 5
      %v8424 = vsel %vm3859, %v8421, %v8423
      %v8425 = vrot.slane %v8329, 5
      %v8426 = vsel %vm3859, %v8423, %v8425
      %v8427 = vrot.slane %v8330, 5
      %v8428 = vsel %vm3859, %v8425, %v8427
      %v8429 = vrot.slane %v8331, 5
      %v8430 = vsel %vm3859, %v8427, %v8429
      %v8431 = vrot.slane %v8332, 5
      %v8432 = vsel %vm3859, %v8429, %v8431
      %v8433 = vrot.slane %v8333, 5
      %v8434 = vsel %vm3859, %v8431, %v8433
      %v8435 = vrot.slane %v8334, 5
      %v8436 = vsel %vm3859, %v8433, %v8435
      %v8437 = vrot.slane %v8335, 5
      %v8438 = vsel %vm3859, %v8435, %v8437
      %v8473 = vsel %vm3859, 0.0, %v8372
      %v8474 = vrot.slane %v8302, 6
      %v8475 = vrot.slane %v8303, 6
      %v8476 = vsel %vm3962, %v8474, %v8475
      %v8477 = vrot.slane %v8304, 6
      %v8478 = vsel %vm3962, %v8475, %v8477
      %v8479 = vrot.slane %v8305, 6
      %v8480 = vsel %vm3962, %v8477, %v8479
      %v8481 = vrot.slane %v8306, 6
      %v8482 = vsel %vm3962, %v8479, %v8481
      %v8483 = vrot.slane %v8307, 6
      %v8484 = vsel %vm3962, %v8481, %v8483
      %v8485 = vrot.slane %v8308, 6
      %v8486 = vsel %vm3962, %v8483, %v8485
      %v8487 = vrot.slane %v8309, 6
      %v8488 = vsel %vm3962, %v8485, %v8487
      %v8489 = vrot.slane %v8310, 6
      %v8490 = vsel %vm3962, %v8487, %v8489
      %v8491 = vrot.slane %v8311, 6
      %v8492 = vsel %vm3962, %v8489, %v8491
      %v8493 = vrot.slane %v8312, 6
      %v8494 = vsel %vm3962, %v8491, %v8493
      %v8495 = vrot.slane %v8313, 6
      %v8496 = vsel %vm3962, %v8493, %v8495
      %v8497 = vrot.slane %v8314, 6
      %v8498 = vsel %vm3962, %v8495, %v8497
      %v8499 = vrot.slane %v8315, 6
      %v8500 = vsel %vm3962, %v8497, %v8499
      %v8501 = vrot.slane %v8316, 6
      %v8502 = vsel %vm3962, %v8499, %v8501
      %v8503 = vrot.slane %v8317, 6
      %v8504 = vsel %vm3962, %v8501, %v8503
      %v8505 = vrot.slane %v8318, 6
      %v8506 = vsel %vm3962, %v8503, %v8505
      %v8507 = vrot.slane %v8319, 6
      %v8508 = vsel %vm3962, %v8505, %v8507
      %v8509 = vrot.slane %v8320, 6
      %v8510 = vsel %vm3962, %v8507, %v8509
      %v8511 = vrot.slane %v8321, 6
      %v8512 = vsel %vm3962, %v8509, %v8511
      %v8513 = vrot.slane %v8322, 6
      %v8514 = vsel %vm3962, %v8511, %v8513
      %v8515 = vrot.slane %v8323, 6
      %v8516 = vsel %vm3962, %v8513, %v8515
      %v8517 = vrot.slane %v8324, 6
      %v8518 = vsel %vm3962, %v8515, %v8517
      %v8519 = vrot.slane %v8325, 6
      %v8520 = vsel %vm3962, %v8517, %v8519
      %v8521 = vrot.slane %v8326, 6
      %v8522 = vsel %vm3962, %v8519, %v8521
      %v8523 = vrot.slane %v8327, 6
      %v8524 = vsel %vm3962, %v8521, %v8523
      %v8525 = vrot.slane %v8328, 6
      %v8526 = vsel %vm3962, %v8523, %v8525
      %v8527 = vrot.slane %v8329, 6
      %v8528 = vsel %vm3962, %v8525, %v8527
      %v8529 = vrot.slane %v8330, 6
      %v8530 = vsel %vm3962, %v8527, %v8529
      %v8531 = vrot.slane %v8331, 6
      %v8532 = vsel %vm3962, %v8529, %v8531
      %v8533 = vrot.slane %v8332, 6
      %v8534 = vsel %vm3962, %v8531, %v8533
      %v8535 = vrot.slane %v8333, 6
      %v8536 = vsel %vm3962, %v8533, %v8535
      %v8537 = vrot.slane %v8334, 6
      %v8538 = vsel %vm3962, %v8535, %v8537
      %v8539 = vrot.slane %v8335, 6
      %v8540 = vsel %vm3962, %v8537, %v8539
      %v8542 = vsel %vm3962, 0.0, %v8474
      %v8543 = vrot.slane %v8302, 7
      %v8544 = vrot.slane %v8303, 7
      %v8545 = vsel %vm4032, %v8543, %v8544
      %v8546 = vrot.slane %v8304, 7
      %v8547 = vsel %vm4032, %v8544, %v8546
      %v8548 = vrot.slane %v8305, 7
      %v8549 = vsel %vm4032, %v8546, %v8548
      %v8550 = vrot.slane %v8306, 7
      %v8551 = vsel %vm4032, %v8548, %v8550
      %v8552 = vrot.slane %v8307, 7
      %v8553 = vsel %vm4032, %v8550, %v8552
      %v8554 = vrot.slane %v8308, 7
      %v8555 = vsel %vm4032, %v8552, %v8554
      %v8556 = vrot.slane %v8309, 7
      %v8557 = vsel %vm4032, %v8554, %v8556
      %v8558 = vrot.slane %v8310, 7
      %v8559 = vsel %vm4032, %v8556, %v8558
      %v8560 = vrot.slane %v8311, 7
      %v8561 = vsel %vm4032, %v8558, %v8560
      %v8562 = vrot.slane %v8312, 7
      %v8563 = vsel %vm4032, %v8560, %v8562
      %v8564 = vrot.slane %v8313, 7
      %v8565 = vsel %vm4032, %v8562, %v8564
      %v8566 = vrot.slane %v8314, 7
      %v8567 = vsel %vm4032, %v8564, %v8566
      %v8568 = vrot.slane %v8315, 7
      %v8569 = vsel %vm4032, %v8566, %v8568
      %v8570 = vrot.slane %v8316, 7
      %v8571 = vsel %vm4032, %v8568, %v8570
      %v8572 = vrot.slane %v8317, 7
      %v8573 = vsel %vm4032, %v8570, %v8572
      %v8574 = vrot.slane %v8318, 7
      %v8575 = vsel %vm4032, %v8572, %v8574
      %v8576 = vrot.slane %v8319, 7
      %v8577 = vsel %vm4032, %v8574, %v8576
      %v8578 = vrot.slane %v8320, 7
      %v8579 = vsel %vm4032, %v8576, %v8578
      %v8580 = vrot.slane %v8321, 7
      %v8581 = vsel %vm4032, %v8578, %v8580
      %v8582 = vrot.slane %v8322, 7
      %v8583 = vsel %vm4032, %v8580, %v8582
      %v8584 = vrot.slane %v8323, 7
      %v8585 = vsel %vm4032, %v8582, %v8584
      %v8586 = vrot.slane %v8324, 7
      %v8587 = vsel %vm4032, %v8584, %v8586
      %v8588 = vrot.slane %v8325, 7
      %v8589 = vsel %vm4032, %v8586, %v8588
      %v8590 = vrot.slane %v8326, 7
      %v8591 = vsel %vm4032, %v8588, %v8590
      %v8592 = vrot.slane %v8327, 7
      %v8593 = vsel %vm4032, %v8590, %v8592
      %v8594 = vrot.slane %v8328, 7
      %v8595 = vsel %vm4032, %v8592, %v8594
      %v8596 = vrot.slane %v8329, 7
      %v8597 = vsel %vm4032, %v8594, %v8596
      %v8598 = vrot.slane %v8330, 7
      %v8599 = vsel %vm4032, %v8596, %v8598
      %v8600 = vrot.slane %v8331, 7
      %v8601 = vsel %vm4032, %v8598, %v8600
      %v8602 = vrot.slane %v8332, 7
      %v8603 = vsel %vm4032, %v8600, %v8602
      %v8604 = vrot.slane %v8333, 7
      %v8605 = vsel %vm4032, %v8602, %v8604
      %v8606 = vrot.slane %v8334, 7
      %v8607 = vsel %vm4032, %v8604, %v8606
      %v8608 = vrot.slane %v8335, 7
      %v8609 = vsel %vm4032, %v8606, %v8608
      %v8611 = vsel %vm4032, 0.0, %v8543
      %v8614 = vrot.slane %v8336, 7
      %v8615 = vsel %vm4032, %v8608, %v8614
      %v8616 = vrot.slane %v8337, 7
      %v8617 = vsel %vm4032, %v8614, %v8616
      %v8618 = vrot.slane %v8302, 1
      %v8619 = vrot.slane %v8303, 1
      %v8620 = vsel %vm4108, %v8618, %v8619
      %v8621 = vrot.slane %v8304, 1
      %v8622 = vsel %vm4108, %v8619, %v8621
      %v8623 = vrot.slane %v8305, 1
      %v8624 = vsel %vm4108, %v8621, %v8623
      %v8625 = vrot.slane %v8306, 1
      %v8626 = vsel %vm4108, %v8623, %v8625
      %v8627 = vrot.slane %v8307, 1
      %v8628 = vsel %vm4108, %v8625, %v8627
      %v8629 = vrot.slane %v8308, 1
      %v8630 = vsel %vm4108, %v8627, %v8629
      %v8631 = vrot.slane %v8309, 1
      %v8632 = vsel %vm4108, %v8629, %v8631
      %v8633 = vrot.slane %v8310, 1
      %v8634 = vsel %vm4108, %v8631, %v8633
      %v8635 = vrot.slane %v8311, 1
      %v8636 = vsel %vm4108, %v8633, %v8635
      %v8637 = vrot.slane %v8312, 1
      %v8638 = vsel %vm4108, %v8635, %v8637
      %v8639 = vrot.slane %v8313, 1
      %v8640 = vsel %vm4108, %v8637, %v8639
      %v8641 = vrot.slane %v8314, 1
      %v8642 = vsel %vm4108, %v8639, %v8641
      %v8643 = vrot.slane %v8315, 1
      %v8644 = vsel %vm4108, %v8641, %v8643
      %v8645 = vrot.slane %v8316, 1
      %v8646 = vsel %vm4108, %v8643, %v8645
      %v8647 = vrot.slane %v8317, 1
      %v8648 = vsel %vm4108, %v8645, %v8647
      %v8649 = vrot.slane %v8318, 1
      %v8650 = vsel %vm4108, %v8647, %v8649
      %v8651 = vrot.slane %v8319, 1
      %v8652 = vsel %vm4108, %v8649, %v8651
      %v8653 = vrot.slane %v8320, 1
      %v8654 = vsel %vm4108, %v8651, %v8653
      %v8655 = vrot.slane %v8321, 1
      %v8656 = vsel %vm4108, %v8653, %v8655
      %v8657 = vrot.slane %v8322, 1
      %v8658 = vsel %vm4108, %v8655, %v8657
      %v8659 = vrot.slane %v8323, 1
      %v8660 = vsel %vm4108, %v8657, %v8659
      %v8661 = vrot.slane %v8324, 1
      %v8662 = vsel %vm4108, %v8659, %v8661
      %v8663 = vrot.slane %v8325, 1
      %v8664 = vsel %vm4108, %v8661, %v8663
      %v8665 = vrot.slane %v8326, 1
      %v8666 = vsel %vm4108, %v8663, %v8665
      %v8667 = vrot.slane %v8327, 1
      %v8668 = vsel %vm4108, %v8665, %v8667
      %v8669 = vrot.slane %v8328, 1
      %v8670 = vsel %vm4108, %v8667, %v8669
      %v8671 = vrot.slane %v8329, 1
      %v8672 = vsel %vm4108, %v8669, %v8671
      %v8673 = vrot.slane %v8330, 1
      %v8674 = vsel %vm4108, %v8671, %v8673
      %v8675 = vrot.slane %v8331, 1
      %v8676 = vsel %vm4108, %v8673, %v8675
      %v8677 = vrot.slane %v8332, 1
      %v8678 = vsel %vm4108, %v8675, %v8677
      %v8679 = vrot.slane %v8333, 1
      %v8680 = vsel %vm4108, %v8677, %v8679
      %v8681 = vrot.slane %v8334, 1
      %v8682 = vsel %vm4108, %v8679, %v8681
      %v8683 = vrot.slane %v8335, 1
      %v8684 = vsel %vm4108, %v8681, %v8683
      %v8685 = vrot.slane %v8336, 1
      %v8686 = vsel %vm4108, %v8683, %v8685
      %v8687 = vrot.slane %v8337, 1
      %v8688 = vsel %vm4108, %v8685, %v8687
      %v8690 = vsel %vm4108, %v8687, 0.0
      %v8691 = vrot.slane %v8304, 2
      %v8692 = vrot.slane %v8305, 2
      %v8693 = vsel %vm4182, %v8691, %v8692
      %v8694 = vrot.slane %v8306, 2
      %v8695 = vsel %vm4182, %v8692, %v8694
      %v8696 = vrot.slane %v8307, 2
      %v8697 = vsel %vm4182, %v8694, %v8696
      %v8698 = vrot.slane %v8308, 2
      %v8699 = vsel %vm4182, %v8696, %v8698
      %v8700 = vrot.slane %v8309, 2
      %v8701 = vsel %vm4182, %v8698, %v8700
      %v8702 = vrot.slane %v8310, 2
      %v8703 = vsel %vm4182, %v8700, %v8702
      %v8704 = vrot.slane %v8311, 2
      %v8705 = vsel %vm4182, %v8702, %v8704
      %v8706 = vrot.slane %v8312, 2
      %v8707 = vsel %vm4182, %v8704, %v8706
      %v8708 = vrot.slane %v8313, 2
      %v8709 = vsel %vm4182, %v8706, %v8708
      %v8710 = vrot.slane %v8314, 2
      %v8711 = vsel %vm4182, %v8708, %v8710
      %v8712 = vrot.slane %v8315, 2
      %v8713 = vsel %vm4182, %v8710, %v8712
      %v8714 = vrot.slane %v8316, 2
      %v8715 = vsel %vm4182, %v8712, %v8714
      %v8716 = vrot.slane %v8317, 2
      %v8717 = vsel %vm4182, %v8714, %v8716
      %v8718 = vrot.slane %v8318, 2
      %v8719 = vsel %vm4182, %v8716, %v8718
      %v8720 = vrot.slane %v8319, 2
      %v8721 = vsel %vm4182, %v8718, %v8720
      %v8722 = vrot.slane %v8320, 2
      %v8723 = vsel %vm4182, %v8720, %v8722
      %v8724 = vrot.slane %v8321, 2
      %v8725 = vsel %vm4182, %v8722, %v8724
      %v8726 = vrot.slane %v8322, 2
      %v8727 = vsel %vm4182, %v8724, %v8726
      %v8728 = vrot.slane %v8323, 2
      %v8729 = vsel %vm4182, %v8726, %v8728
      %v8730 = vrot.slane %v8324, 2
      %v8731 = vsel %vm4182, %v8728, %v8730
      %v8732 = vrot.slane %v8325, 2
      %v8733 = vsel %vm4182, %v8730, %v8732
      %v8734 = vrot.slane %v8326, 2
      %v8735 = vsel %vm4182, %v8732, %v8734
      %v8736 = vrot.slane %v8327, 2
      %v8737 = vsel %vm4182, %v8734, %v8736
      %v8738 = vrot.slane %v8328, 2
      %v8739 = vsel %vm4182, %v8736, %v8738
      %v8740 = vrot.slane %v8329, 2
      %v8741 = vsel %vm4182, %v8738, %v8740
      %v8742 = vrot.slane %v8330, 2
      %v8743 = vsel %vm4182, %v8740, %v8742
      %v8744 = vrot.slane %v8331, 2
      %v8745 = vsel %vm4182, %v8742, %v8744
      %v8746 = vrot.slane %v8332, 2
      %v8747 = vsel %vm4182, %v8744, %v8746
      %v8748 = vrot.slane %v8333, 2
      %v8749 = vsel %vm4182, %v8746, %v8748
      %v8750 = vrot.slane %v8334, 2
      %v8751 = vsel %vm4182, %v8748, %v8750
      %v8752 = vrot.slane %v8335, 2
      %v8753 = vsel %vm4182, %v8750, %v8752
      %v8754 = vrot.slane %v8336, 2
      %v8755 = vsel %vm4182, %v8752, %v8754
      %v8756 = vrot.slane %v8337, 2
      %v8757 = vsel %vm4182, %v8754, %v8756
      %v8759 = vsel %vm4182, %v8756, 0.0
      %v8760 = vrot.slane %v8304, 3
      %v8761 = vrot.slane %v8305, 3
      %v8762 = vsel %vm4252, %v8760, %v8761
      %v8763 = vrot.slane %v8306, 3
      %v8764 = vsel %vm4252, %v8761, %v8763
      %v8765 = vrot.slane %v8307, 3
      %v8766 = vsel %vm4252, %v8763, %v8765
      %v8767 = vrot.slane %v8308, 3
      %v8768 = vsel %vm4252, %v8765, %v8767
      %v8769 = vrot.slane %v8309, 3
      %v8770 = vsel %vm4252, %v8767, %v8769
      %v8771 = vrot.slane %v8310, 3
      %v8772 = vsel %vm4252, %v8769, %v8771
      %v8773 = vrot.slane %v8311, 3
      %v8774 = vsel %vm4252, %v8771, %v8773
      %v8775 = vrot.slane %v8312, 3
      %v8776 = vsel %vm4252, %v8773, %v8775
      %v8777 = vrot.slane %v8313, 3
      %v8778 = vsel %vm4252, %v8775, %v8777
      %v8779 = vrot.slane %v8314, 3
      %v8780 = vsel %vm4252, %v8777, %v8779
      %v8781 = vrot.slane %v8315, 3
      %v8782 = vsel %vm4252, %v8779, %v8781
      %v8783 = vrot.slane %v8316, 3
      %v8784 = vsel %vm4252, %v8781, %v8783
      %v8785 = vrot.slane %v8317, 3
      %v8786 = vsel %vm4252, %v8783, %v8785
      %v8787 = vrot.slane %v8318, 3
      %v8788 = vsel %vm4252, %v8785, %v8787
      %v8789 = vrot.slane %v8319, 3
      %v8790 = vsel %vm4252, %v8787, %v8789
      %v8791 = vrot.slane %v8320, 3
      %v8792 = vsel %vm4252, %v8789, %v8791
      %v8793 = vrot.slane %v8321, 3
      %v8794 = vsel %vm4252, %v8791, %v8793
      %v8795 = vrot.slane %v8322, 3
      %v8796 = vsel %vm4252, %v8793, %v8795
      %v8797 = vrot.slane %v8323, 3
      %v8798 = vsel %vm4252, %v8795, %v8797
      %v8799 = vrot.slane %v8324, 3
      %v8800 = vsel %vm4252, %v8797, %v8799
      %v8801 = vrot.slane %v8325, 3
      %v8802 = vsel %vm4252, %v8799, %v8801
      %v8803 = vrot.slane %v8326, 3
      %v8804 = vsel %vm4252, %v8801, %v8803
      %v8805 = vrot.slane %v8327, 3
      %v8806 = vsel %vm4252, %v8803, %v8805
      %v8807 = vrot.slane %v8328, 3
      %v8808 = vsel %vm4252, %v8805, %v8807
      %v8809 = vrot.slane %v8329, 3
      %v8810 = vsel %vm4252, %v8807, %v8809
      %v8811 = vrot.slane %v8330, 3
      %v8812 = vsel %vm4252, %v8809, %v8811
      %v8813 = vrot.slane %v8331, 3
      %v8814 = vsel %vm4252, %v8811, %v8813
      %v8815 = vrot.slane %v8332, 3
      %v8816 = vsel %vm4252, %v8813, %v8815
      %v8817 = vrot.slane %v8333, 3
      %v8818 = vsel %vm4252, %v8815, %v8817
      %v8819 = vrot.slane %v8334, 3
      %v8820 = vsel %vm4252, %v8817, %v8819
      %v8821 = vrot.slane %v8335, 3
      %v8822 = vsel %vm4252, %v8819, %v8821
      %v8823 = vrot.slane %v8336, 3
      %v8824 = vsel %vm4252, %v8821, %v8823
      %v8825 = vrot.slane %v8337, 3
      %v8826 = vsel %vm4252, %v8823, %v8825
      %v8828 = vsel %vm4252, %v8825, 0.0
      %8830 = vrot.lane.b32.xlu0 %v8542, 8
      %v8831 = vpop.permute.xlu0 %8830
      %8832 = vrot.lane.b32.xlu0 %v8476, 8
      %v8833 = vpop.permute.xlu0 %8832
      %8834 = vrot.lane.b32.xlu0 %v8478, 8
      %v8835 = vpop.permute.xlu0 %8834
      %8836 = vrot.lane.b32.xlu0 %v8480, 8
      %v8837 = vpop.permute.xlu0 %8836
      %8838 = vrot.lane.b32.xlu0 %v8482, 8
      %v8839 = vpop.permute.xlu0 %8838
      %8840 = vrot.lane.b32.xlu0 %v8484, 8
      %v8841 = vpop.permute.xlu0 %8840
      %8842 = vrot.lane.b32.xlu0 %v8486, 8
      %v8843 = vpop.permute.xlu0 %8842
      %8844 = vrot.lane.b32.xlu0 %v8488, 8
      %v8845 = vpop.permute.xlu0 %8844
      %8846 = vrot.lane.b32.xlu0 %v8490, 8
      %v8847 = vpop.permute.xlu0 %8846
      %8848 = vrot.lane.b32.xlu0 %v8492, 8
      %v8849 = vpop.permute.xlu0 %8848
      %8850 = vrot.lane.b32.xlu0 %v8494, 8
      %v8851 = vpop.permute.xlu0 %8850
      %8852 = vrot.lane.b32.xlu0 %v8496, 8
      %v8853 = vpop.permute.xlu0 %8852
      %8854 = vrot.lane.b32.xlu0 %v8498, 8
      %v8855 = vpop.permute.xlu0 %8854
      %8856 = vrot.lane.b32.xlu0 %v8500, 8
      %v8857 = vpop.permute.xlu0 %8856
      %8858 = vrot.lane.b32.xlu0 %v8502, 8
      %v8859 = vpop.permute.xlu0 %8858
      %8860 = vrot.lane.b32.xlu0 %v8504, 8
      %v8861 = vpop.permute.xlu0 %8860
      %8862 = vrot.lane.b32.xlu0 %v8506, 8
      %v8863 = vpop.permute.xlu0 %8862
      %8864 = vrot.lane.b32.xlu0 %v8508, 8
      %v8865 = vpop.permute.xlu0 %8864
      %8866 = vrot.lane.b32.xlu0 %v8510, 8
      %v8867 = vpop.permute.xlu0 %8866
      %8868 = vrot.lane.b32.xlu0 %v8512, 8
      %v8869 = vpop.permute.xlu0 %8868
      %8870 = vrot.lane.b32.xlu0 %v8514, 8
      %v8871 = vpop.permute.xlu0 %8870
      %8872 = vrot.lane.b32.xlu0 %v8516, 8
      %v8873 = vpop.permute.xlu0 %8872
      %8874 = vrot.lane.b32.xlu0 %v8518, 8
      %v8875 = vpop.permute.xlu0 %8874
      %8876 = vrot.lane.b32.xlu0 %v8520, 8
      %v8877 = vpop.permute.xlu0 %8876
      %8878 = vrot.lane.b32.xlu0 %v8522, 8
      %v8879 = vpop.permute.xlu0 %8878
      %8880 = vrot.lane.b32.xlu0 %v8524, 8
      %v8881 = vpop.permute.xlu0 %8880
      %8882 = vrot.lane.b32.xlu0 %v8526, 8
      %v8883 = vpop.permute.xlu0 %8882
      %8884 = vrot.lane.b32.xlu0 %v8528, 8
      %v8885 = vpop.permute.xlu0 %8884
      %8886 = vrot.lane.b32.xlu0 %v8530, 8
      %v8887 = vpop.permute.xlu0 %8886
      %8888 = vrot.lane.b32.xlu0 %v8532, 8
      %v8889 = vpop.permute.xlu0 %8888
      %8890 = vrot.lane.b32.xlu0 %v8534, 8
      %v8891 = vpop.permute.xlu0 %8890
      %8892 = vrot.lane.b32.xlu0 %v8536, 8
      %v8893 = vpop.permute.xlu0 %8892
      %8894 = vrot.lane.b32.xlu0 %v8538, 8
      %v8895 = vpop.permute.xlu0 %8894
      %8896 = vrot.lane.b32.xlu0 %v8540, 8
      %v8897 = vpop.permute.xlu0 %8896
      %8933 = vrot.lane.b32.xlu0 %v8611, 16
      %v8934 = vpop.permute.xlu0 %8933
      %8935 = vrot.lane.b32.xlu0 %v8545, 16
      %v8936 = vpop.permute.xlu0 %8935
      %8937 = vrot.lane.b32.xlu0 %v8547, 16
      %v8938 = vpop.permute.xlu0 %8937
      %8939 = vrot.lane.b32.xlu0 %v8549, 16
      %v8940 = vpop.permute.xlu0 %8939
      %8941 = vrot.lane.b32.xlu0 %v8551, 16
      %v8942 = vpop.permute.xlu0 %8941
      %8943 = vrot.lane.b32.xlu0 %v8553, 16
      %v8944 = vpop.permute.xlu0 %8943
      %8945 = vrot.lane.b32.xlu0 %v8555, 16
      %v8946 = vpop.permute.xlu0 %8945
      %8947 = vrot.lane.b32.xlu0 %v8557, 16
      %v8948 = vpop.permute.xlu0 %8947
      %8949 = vrot.lane.b32.xlu0 %v8559, 16
      %v8950 = vpop.permute.xlu0 %8949
      %8951 = vrot.lane.b32.xlu0 %v8561, 16
      %v8952 = vpop.permute.xlu0 %8951
      %8953 = vrot.lane.b32.xlu0 %v8563, 16
      %v8954 = vpop.permute.xlu0 %8953
      %8955 = vrot.lane.b32.xlu0 %v8565, 16
      %v8956 = vpop.permute.xlu0 %8955
      %8957 = vrot.lane.b32.xlu0 %v8567, 16
      %v8958 = vpop.permute.xlu0 %8957
      %8959 = vrot.lane.b32.xlu0 %v8569, 16
      %v8960 = vpop.permute.xlu0 %8959
      %8961 = vrot.lane.b32.xlu0 %v8571, 16
      %v8962 = vpop.permute.xlu0 %8961
      %8963 = vrot.lane.b32.xlu0 %v8573, 16
      %v8964 = vpop.permute.xlu0 %8963
      %8965 = vrot.lane.b32.xlu0 %v8575, 16
      %v8966 = vpop.permute.xlu0 %8965
      %8967 = vrot.lane.b32.xlu0 %v8577, 16
      %v8968 = vpop.permute.xlu0 %8967
      %8969 = vrot.lane.b32.xlu0 %v8579, 16
      %v8970 = vpop.permute.xlu0 %8969
      %8971 = vrot.lane.b32.xlu0 %v8581, 16
      %v8972 = vpop.permute.xlu0 %8971
      %8973 = vrot.lane.b32.xlu0 %v8583, 16
      %v8974 = vpop.permute.xlu0 %8973
      %8975 = vrot.lane.b32.xlu0 %v8585, 16
      %v8976 = vpop.permute.xlu0 %8975
      %8977 = vrot.lane.b32.xlu0 %v8587, 16
      %v8978 = vpop.permute.xlu0 %8977
      %8979 = vrot.lane.b32.xlu0 %v8589, 16
      %v8980 = vpop.permute.xlu0 %8979
      %8981 = vrot.lane.b32.xlu0 %v8591, 16
      %v8982 = vpop.permute.xlu0 %8981
      %8983 = vrot.lane.b32.xlu0 %v8593, 16
      %v8984 = vpop.permute.xlu0 %8983
      %8985 = vrot.lane.b32.xlu0 %v8595, 16
      %v8986 = vpop.permute.xlu0 %8985
      %8987 = vrot.lane.b32.xlu0 %v8597, 16
      %v8988 = vpop.permute.xlu0 %8987
      %8989 = vrot.lane.b32.xlu0 %v8599, 16
      %v8990 = vpop.permute.xlu0 %8989
      %8991 = vrot.lane.b32.xlu0 %v8601, 16
      %v8992 = vpop.permute.xlu0 %8991
      %8993 = vrot.lane.b32.xlu0 %v8603, 16
      %v8994 = vpop.permute.xlu0 %8993
      %8995 = vrot.lane.b32.xlu0 %v8605, 16
      %v8996 = vpop.permute.xlu0 %8995
      %8997 = vrot.lane.b32.xlu0 %v8607, 16
      %v8998 = vpop.permute.xlu0 %8997
      %8999 = vrot.lane.b32.xlu0 %v8609, 16
      %v9000 = vpop.permute.xlu0 %8999
      %9035 = vrot.lane.b32.xlu0 %v8611, 24
      %v9036 = vpop.permute.xlu0 %9035
      %9037 = vrot.lane.b32.xlu0 %v8545, 24
      %v9038 = vpop.permute.xlu0 %9037
      %9039 = vrot.lane.b32.xlu0 %v8547, 24
      %v9040 = vpop.permute.xlu0 %9039
      %9041 = vrot.lane.b32.xlu0 %v8549, 24
      %v9042 = vpop.permute.xlu0 %9041
      %9043 = vrot.lane.b32.xlu0 %v8551, 24
      %v9044 = vpop.permute.xlu0 %9043
      %9045 = vrot.lane.b32.xlu0 %v8553, 24
      %v9046 = vpop.permute.xlu0 %9045
      %9047 = vrot.lane.b32.xlu0 %v8555, 24
      %v9048 = vpop.permute.xlu0 %9047
      %9049 = vrot.lane.b32.xlu0 %v8557, 24
      %v9050 = vpop.permute.xlu0 %9049
      %9051 = vrot.lane.b32.xlu0 %v8559, 24
      %v9052 = vpop.permute.xlu0 %9051
      %9053 = vrot.lane.b32.xlu0 %v8561, 24
      %v9054 = vpop.permute.xlu0 %9053
      %9055 = vrot.lane.b32.xlu0 %v8563, 24
      %v9056 = vpop.permute.xlu0 %9055
      %9057 = vrot.lane.b32.xlu0 %v8565, 24
      %v9058 = vpop.permute.xlu0 %9057
      %9059 = vrot.lane.b32.xlu0 %v8567, 24
      %v9060 = vpop.permute.xlu0 %9059
      %9061 = vrot.lane.b32.xlu0 %v8569, 24
      %v9062 = vpop.permute.xlu0 %9061
      %9063 = vrot.lane.b32.xlu0 %v8571, 24
      %v9064 = vpop.permute.xlu0 %9063
      %9065 = vrot.lane.b32.xlu0 %v8573, 24
      %v9066 = vpop.permute.xlu0 %9065
      %9067 = vrot.lane.b32.xlu0 %v8575, 24
      %v9068 = vpop.permute.xlu0 %9067
      %9069 = vrot.lane.b32.xlu0 %v8577, 24
      %v9070 = vpop.permute.xlu0 %9069
      %9071 = vrot.lane.b32.xlu0 %v8579, 24
      %v9072 = vpop.permute.xlu0 %9071
      %9073 = vrot.lane.b32.xlu0 %v8581, 24
      %v9074 = vpop.permute.xlu0 %9073
      %9075 = vrot.lane.b32.xlu0 %v8583, 24
      %v9076 = vpop.permute.xlu0 %9075
      %9077 = vrot.lane.b32.xlu0 %v8585, 24
      %v9078 = vpop.permute.xlu0 %9077
      %9079 = vrot.lane.b32.xlu0 %v8587, 24
      %v9080 = vpop.permute.xlu0 %9079
      %9081 = vrot.lane.b32.xlu0 %v8589, 24
      %v9082 = vpop.permute.xlu0 %9081
      %9083 = vrot.lane.b32.xlu0 %v8591, 24
      %v9084 = vpop.permute.xlu0 %9083
      %9085 = vrot.lane.b32.xlu0 %v8593, 24
      %v9086 = vpop.permute.xlu0 %9085
      %9087 = vrot.lane.b32.xlu0 %v8595, 24
      %v9088 = vpop.permute.xlu0 %9087
      %9089 = vrot.lane.b32.xlu0 %v8597, 24
      %v9090 = vpop.permute.xlu0 %9089
      %9091 = vrot.lane.b32.xlu0 %v8599, 24
      %v9092 = vpop.permute.xlu0 %9091
      %9093 = vrot.lane.b32.xlu0 %v8601, 24
      %v9094 = vpop.permute.xlu0 %9093
      %9095 = vrot.lane.b32.xlu0 %v8603, 24
      %v9096 = vpop.permute.xlu0 %9095
      %9097 = vrot.lane.b32.xlu0 %v8605, 24
      %v9098 = vpop.permute.xlu0 %9097
      %9099 = vrot.lane.b32.xlu0 %v8607, 24
      %v9100 = vpop.permute.xlu0 %9099
      %9101 = vrot.lane.b32.xlu0 %v8609, 24
      %v9102 = vpop.permute.xlu0 %9101
      %9103 = vrot.lane.b32.xlu0 %v8615, 24
      %v9104 = vpop.permute.xlu0 %9103
      %9105 = vrot.lane.b32.xlu0 %v8617, 24
      %v9106 = vpop.permute.xlu0 %9105
      %9143 = vrot.lane.b32.xlu0 %v8302, 32
      %v9144 = vpop.permute.xlu0 %9143
      %9145 = vrot.lane.b32.xlu0 %v8303, 32
      %v9146 = vpop.permute.xlu0 %9145
      %9147 = vrot.lane.b32.xlu0 %v8304, 32
      %v9148 = vpop.permute.xlu0 %9147
      %9149 = vrot.lane.b32.xlu0 %v8305, 32
      %v9150 = vpop.permute.xlu0 %9149
      %9151 = vrot.lane.b32.xlu0 %v8306, 32
      %v9152 = vpop.permute.xlu0 %9151
      %9153 = vrot.lane.b32.xlu0 %v8307, 32
      %v9154 = vpop.permute.xlu0 %9153
      %9155 = vrot.lane.b32.xlu0 %v8308, 32
      %v9156 = vpop.permute.xlu0 %9155
      %9157 = vrot.lane.b32.xlu0 %v8309, 32
      %v9158 = vpop.permute.xlu0 %9157
      %9159 = vrot.lane.b32.xlu0 %v8310, 32
      %v9160 = vpop.permute.xlu0 %9159
      %9161 = vrot.lane.b32.xlu0 %v8311, 32
      %v9162 = vpop.permute.xlu0 %9161
      %9163 = vrot.lane.b32.xlu0 %v8312, 32
      %v9164 = vpop.permute.xlu0 %9163
      %9165 = vrot.lane.b32.xlu0 %v8313, 32
      %v9166 = vpop.permute.xlu0 %9165
      %9167 = vrot.lane.b32.xlu0 %v8314, 32
      %v9168 = vpop.permute.xlu0 %9167
      %9169 = vrot.lane.b32.xlu0 %v8315, 32
      %v9170 = vpop.permute.xlu0 %9169
      %9171 = vrot.lane.b32.xlu0 %v8316, 32
      %v9172 = vpop.permute.xlu0 %9171
      %9173 = vrot.lane.b32.xlu0 %v8317, 32
      %v9174 = vpop.permute.xlu0 %9173
      %9175 = vrot.lane.b32.xlu0 %v8318, 32
      %v9176 = vpop.permute.xlu0 %9175
      %9177 = vrot.lane.b32.xlu0 %v8319, 32
      %v9178 = vpop.permute.xlu0 %9177
      %9179 = vrot.lane.b32.xlu0 %v8320, 32
      %v9180 = vpop.permute.xlu0 %9179
      %9181 = vrot.lane.b32.xlu0 %v8321, 32
      %v9182 = vpop.permute.xlu0 %9181
      %9183 = vrot.lane.b32.xlu0 %v8322, 32
      %v9184 = vpop.permute.xlu0 %9183
      %9185 = vrot.lane.b32.xlu0 %v8323, 32
      %v9186 = vpop.permute.xlu0 %9185
      %9187 = vrot.lane.b32.xlu0 %v8324, 32
      %v9188 = vpop.permute.xlu0 %9187
      %9189 = vrot.lane.b32.xlu0 %v8325, 32
      %v9190 = vpop.permute.xlu0 %9189
      %9191 = vrot.lane.b32.xlu0 %v8326, 32
      %v9192 = vpop.permute.xlu0 %9191
      %9193 = vrot.lane.b32.xlu0 %v8327, 32
      %v9194 = vpop.permute.xlu0 %9193
      %9195 = vrot.lane.b32.xlu0 %v8328, 32
      %v9196 = vpop.permute.xlu0 %9195
      %9197 = vrot.lane.b32.xlu0 %v8329, 32
      %v9198 = vpop.permute.xlu0 %9197
      %9199 = vrot.lane.b32.xlu0 %v8330, 32
      %v9200 = vpop.permute.xlu0 %9199
      %9201 = vrot.lane.b32.xlu0 %v8331, 32
      %v9202 = vpop.permute.xlu0 %9201
      %9203 = vrot.lane.b32.xlu0 %v8332, 32
      %v9204 = vpop.permute.xlu0 %9203
      %9205 = vrot.lane.b32.xlu0 %v8333, 32
      %v9206 = vpop.permute.xlu0 %9205
      %9207 = vrot.lane.b32.xlu0 %v8334, 32
      %v9208 = vpop.permute.xlu0 %9207
      %9209 = vrot.lane.b32.xlu0 %v8335, 32
      %v9210 = vpop.permute.xlu0 %9209
      %9211 = vrot.lane.b32.xlu0 %v8336, 32
      %v9212 = vpop.permute.xlu0 %9211
      %9213 = vrot.lane.b32.xlu0 %v8337, 32
      %v9214 = vpop.permute.xlu0 %9213
      %9252 = vrot.lane.b32.xlu0 %v8620, 40
      %v9253 = vpop.permute.xlu0 %9252
      %9254 = vrot.lane.b32.xlu0 %v8622, 40
      %v9255 = vpop.permute.xlu0 %9254
      %9256 = vrot.lane.b32.xlu0 %v8624, 40
      %v9257 = vpop.permute.xlu0 %9256
      %9258 = vrot.lane.b32.xlu0 %v8626, 40
      %v9259 = vpop.permute.xlu0 %9258
      %9260 = vrot.lane.b32.xlu0 %v8628, 40
      %v9261 = vpop.permute.xlu0 %9260
      %9262 = vrot.lane.b32.xlu0 %v8630, 40
      %v9263 = vpop.permute.xlu0 %9262
      %9264 = vrot.lane.b32.xlu0 %v8632, 40
      %v9265 = vpop.permute.xlu0 %9264
      %9266 = vrot.lane.b32.xlu0 %v8634, 40
      %v9267 = vpop.permute.xlu0 %9266
      %9268 = vrot.lane.b32.xlu0 %v8636, 40
      %v9269 = vpop.permute.xlu0 %9268
      %9270 = vrot.lane.b32.xlu0 %v8638, 40
      %v9271 = vpop.permute.xlu0 %9270
      %9272 = vrot.lane.b32.xlu0 %v8640, 40
      %v9273 = vpop.permute.xlu0 %9272
      %9274 = vrot.lane.b32.xlu0 %v8642, 40
      %v9275 = vpop.permute.xlu0 %9274
      %9276 = vrot.lane.b32.xlu0 %v8644, 40
      %v9277 = vpop.permute.xlu0 %9276
      %9278 = vrot.lane.b32.xlu0 %v8646, 40
      %v9279 = vpop.permute.xlu0 %9278
      %9280 = vrot.lane.b32.xlu0 %v8648, 40
      %v9281 = vpop.permute.xlu0 %9280
      %9282 = vrot.lane.b32.xlu0 %v8650, 40
      %v9283 = vpop.permute.xlu0 %9282
      %9284 = vrot.lane.b32.xlu0 %v8652, 40
      %v9285 = vpop.permute.xlu0 %9284
      %9286 = vrot.lane.b32.xlu0 %v8654, 40
      %v9287 = vpop.permute.xlu0 %9286
      %9288 = vrot.lane.b32.xlu0 %v8656, 40
      %v9289 = vpop.permute.xlu0 %9288
      %9290 = vrot.lane.b32.xlu0 %v8658, 40
      %v9291 = vpop.permute.xlu0 %9290
      %9292 = vrot.lane.b32.xlu0 %v8660, 40
      %v9293 = vpop.permute.xlu0 %9292
      %9294 = vrot.lane.b32.xlu0 %v8662, 40
      %v9295 = vpop.permute.xlu0 %9294
      %9296 = vrot.lane.b32.xlu0 %v8664, 40
      %v9297 = vpop.permute.xlu0 %9296
      %9298 = vrot.lane.b32.xlu0 %v8666, 40
      %v9299 = vpop.permute.xlu0 %9298
      %9300 = vrot.lane.b32.xlu0 %v8668, 40
      %v9301 = vpop.permute.xlu0 %9300
      %9302 = vrot.lane.b32.xlu0 %v8670, 40
      %v9303 = vpop.permute.xlu0 %9302
      %9304 = vrot.lane.b32.xlu0 %v8672, 40
      %v9305 = vpop.permute.xlu0 %9304
      %9306 = vrot.lane.b32.xlu0 %v8674, 40
      %v9307 = vpop.permute.xlu0 %9306
      %9308 = vrot.lane.b32.xlu0 %v8676, 40
      %v9309 = vpop.permute.xlu0 %9308
      %9310 = vrot.lane.b32.xlu0 %v8678, 40
      %v9311 = vpop.permute.xlu0 %9310
      %9312 = vrot.lane.b32.xlu0 %v8680, 40
      %v9313 = vpop.permute.xlu0 %9312
      %9314 = vrot.lane.b32.xlu0 %v8682, 40
      %v9315 = vpop.permute.xlu0 %9314
      %9316 = vrot.lane.b32.xlu0 %v8684, 40
      %v9317 = vpop.permute.xlu0 %9316
      %9318 = vrot.lane.b32.xlu0 %v8686, 40
      %v9319 = vpop.permute.xlu0 %9318
      %9320 = vrot.lane.b32.xlu0 %v8688, 40
      %v9321 = vpop.permute.xlu0 %9320
      %9322 = vrot.lane.b32.xlu0 %v8690, 40
      %v9323 = vpop.permute.xlu0 %9322
      %9360 = vrot.lane.b32.xlu0 %v8624, 48
      %v9361 = vpop.permute.xlu0 %9360
      %9362 = vrot.lane.b32.xlu0 %v8626, 48
      %v9363 = vpop.permute.xlu0 %9362
      %9364 = vrot.lane.b32.xlu0 %v8628, 48
      %v9365 = vpop.permute.xlu0 %9364
      %9366 = vrot.lane.b32.xlu0 %v8630, 48
      %v9367 = vpop.permute.xlu0 %9366
      %9368 = vrot.lane.b32.xlu0 %v8632, 48
      %v9369 = vpop.permute.xlu0 %9368
      %9370 = vrot.lane.b32.xlu0 %v8634, 48
      %v9371 = vpop.permute.xlu0 %9370
      %9372 = vrot.lane.b32.xlu0 %v8636, 48
      %v9373 = vpop.permute.xlu0 %9372
      %9374 = vrot.lane.b32.xlu0 %v8638, 48
      %v9375 = vpop.permute.xlu0 %9374
      %9376 = vrot.lane.b32.xlu0 %v8640, 48
      %v9377 = vpop.permute.xlu0 %9376
      %9378 = vrot.lane.b32.xlu0 %v8642, 48
      %v9379 = vpop.permute.xlu0 %9378
      %9380 = vrot.lane.b32.xlu0 %v8644, 48
      %v9381 = vpop.permute.xlu0 %9380
      %9382 = vrot.lane.b32.xlu0 %v8646, 48
      %v9383 = vpop.permute.xlu0 %9382
      %9384 = vrot.lane.b32.xlu0 %v8648, 48
      %v9385 = vpop.permute.xlu0 %9384
      %9386 = vrot.lane.b32.xlu0 %v8650, 48
      %v9387 = vpop.permute.xlu0 %9386
      %9388 = vrot.lane.b32.xlu0 %v8652, 48
      %v9389 = vpop.permute.xlu0 %9388
      %9390 = vrot.lane.b32.xlu0 %v8654, 48
      %v9391 = vpop.permute.xlu0 %9390
      %9392 = vrot.lane.b32.xlu0 %v8656, 48
      %v9393 = vpop.permute.xlu0 %9392
      %9394 = vrot.lane.b32.xlu0 %v8658, 48
      %v9395 = vpop.permute.xlu0 %9394
      %9396 = vrot.lane.b32.xlu0 %v8660, 48
      %v9397 = vpop.permute.xlu0 %9396
      %9398 = vrot.lane.b32.xlu0 %v8662, 48
      %v9399 = vpop.permute.xlu0 %9398
      %9400 = vrot.lane.b32.xlu0 %v8664, 48
      %v9401 = vpop.permute.xlu0 %9400
      %9402 = vrot.lane.b32.xlu0 %v8666, 48
      %v9403 = vpop.permute.xlu0 %9402
      %9404 = vrot.lane.b32.xlu0 %v8668, 48
      %v9405 = vpop.permute.xlu0 %9404
      %9406 = vrot.lane.b32.xlu0 %v8670, 48
      %v9407 = vpop.permute.xlu0 %9406
      %9408 = vrot.lane.b32.xlu0 %v8672, 48
      %v9409 = vpop.permute.xlu0 %9408
      %9410 = vrot.lane.b32.xlu0 %v8674, 48
      %v9411 = vpop.permute.xlu0 %9410
      %9412 = vrot.lane.b32.xlu0 %v8676, 48
      %v9413 = vpop.permute.xlu0 %9412
      %9414 = vrot.lane.b32.xlu0 %v8678, 48
      %v9415 = vpop.permute.xlu0 %9414
      %9416 = vrot.lane.b32.xlu0 %v8680, 48
      %v9417 = vpop.permute.xlu0 %9416
      %9418 = vrot.lane.b32.xlu0 %v8682, 48
      %v9419 = vpop.permute.xlu0 %9418
      %9420 = vrot.lane.b32.xlu0 %v8684, 48
      %v9421 = vpop.permute.xlu0 %9420
      %9422 = vrot.lane.b32.xlu0 %v8686, 48
      %v9423 = vpop.permute.xlu0 %9422
      %9424 = vrot.lane.b32.xlu0 %v8688, 48
      %v9425 = vpop.permute.xlu0 %9424
      %9426 = vrot.lane.b32.xlu0 %v8690, 48
      %v9427 = vpop.permute.xlu0 %9426
      %9463 = vrot.lane.b32.xlu0 %v8693, 56
      %v9464 = vpop.permute.xlu0 %9463
      %9465 = vrot.lane.b32.xlu0 %v8695, 56
      %v9466 = vpop.permute.xlu0 %9465
      %9467 = vrot.lane.b32.xlu0 %v8697, 56
      %v9468 = vpop.permute.xlu0 %9467
      %9469 = vrot.lane.b32.xlu0 %v8699, 56
      %v9470 = vpop.permute.xlu0 %9469
      %9471 = vrot.lane.b32.xlu0 %v8701, 56
      %v9472 = vpop.permute.xlu0 %9471
      %9473 = vrot.lane.b32.xlu0 %v8703, 56
      %v9474 = vpop.permute.xlu0 %9473
      %9475 = vrot.lane.b32.xlu0 %v8705, 56
      %v9476 = vpop.permute.xlu0 %9475
      %9477 = vrot.lane.b32.xlu0 %v8707, 56
      %v9478 = vpop.permute.xlu0 %9477
      %9479 = vrot.lane.b32.xlu0 %v8709, 56
      %v9480 = vpop.permute.xlu0 %9479
      %9481 = vrot.lane.b32.xlu0 %v8711, 56
      %v9482 = vpop.permute.xlu0 %9481
      %9483 = vrot.lane.b32.xlu0 %v8713, 56
      %v9484 = vpop.permute.xlu0 %9483
      %9485 = vrot.lane.b32.xlu0 %v8715, 56
      %v9486 = vpop.permute.xlu0 %9485
      %9487 = vrot.lane.b32.xlu0 %v8717, 56
      %v9488 = vpop.permute.xlu0 %9487
      %9489 = vrot.lane.b32.xlu0 %v8719, 56
      %v9490 = vpop.permute.xlu0 %9489
      %9491 = vrot.lane.b32.xlu0 %v8721, 56
      %v9492 = vpop.permute.xlu0 %9491
      %9493 = vrot.lane.b32.xlu0 %v8723, 56
      %v9494 = vpop.permute.xlu0 %9493
      %9495 = vrot.lane.b32.xlu0 %v8725, 56
      %v9496 = vpop.permute.xlu0 %9495
      %9497 = vrot.lane.b32.xlu0 %v8727, 56
      %v9498 = vpop.permute.xlu0 %9497
      %9499 = vrot.lane.b32.xlu0 %v8729, 56
      %v9500 = vpop.permute.xlu0 %9499
      %9501 = vrot.lane.b32.xlu0 %v8731, 56
      %v9502 = vpop.permute.xlu0 %9501
      %9503 = vrot.lane.b32.xlu0 %v8733, 56
      %v9504 = vpop.permute.xlu0 %9503
      %9505 = vrot.lane.b32.xlu0 %v8735, 56
      %v9506 = vpop.permute.xlu0 %9505
      %9507 = vrot.lane.b32.xlu0 %v8737, 56
      %v9508 = vpop.permute.xlu0 %9507
      %9509 = vrot.lane.b32.xlu0 %v8739, 56
      %v9510 = vpop.permute.xlu0 %9509
      %9511 = vrot.lane.b32.xlu0 %v8741, 56
      %v9512 = vpop.permute.xlu0 %9511
      %9513 = vrot.lane.b32.xlu0 %v8743, 56
      %v9514 = vpop.permute.xlu0 %9513
      %9515 = vrot.lane.b32.xlu0 %v8745, 56
      %v9516 = vpop.permute.xlu0 %9515
      %9517 = vrot.lane.b32.xlu0 %v8747, 56
      %v9518 = vpop.permute.xlu0 %9517
      %9519 = vrot.lane.b32.xlu0 %v8749, 56
      %v9520 = vpop.permute.xlu0 %9519
      %9521 = vrot.lane.b32.xlu0 %v8751, 56
      %v9522 = vpop.permute.xlu0 %9521
      %9523 = vrot.lane.b32.xlu0 %v8753, 56
      %v9524 = vpop.permute.xlu0 %9523
      %9525 = vrot.lane.b32.xlu0 %v8755, 56
      %v9526 = vpop.permute.xlu0 %9525
      %9527 = vrot.lane.b32.xlu0 %v8757, 56
      %v9528 = vpop.permute.xlu0 %9527
      %9529 = vrot.lane.b32.xlu0 %v8759, 56
      %v9530 = vpop.permute.xlu0 %9529
      %9566 = vrot.lane.b32.xlu0 %v8762, 64
      %v9567 = vpop.permute.xlu0 %9566
      %9568 = vrot.lane.b32.xlu0 %v8764, 64
      %v9569 = vpop.permute.xlu0 %9568
      %9570 = vrot.lane.b32.xlu0 %v8766, 64
      %v9571 = vpop.permute.xlu0 %9570
      %9572 = vrot.lane.b32.xlu0 %v8768, 64
      %v9573 = vpop.permute.xlu0 %9572
      %9574 = vrot.lane.b32.xlu0 %v8770, 64
      %v9575 = vpop.permute.xlu0 %9574
      %9576 = vrot.lane.b32.xlu0 %v8772, 64
      %v9577 = vpop.permute.xlu0 %9576
      %9578 = vrot.lane.b32.xlu0 %v8774, 64
      %v9579 = vpop.permute.xlu0 %9578
      %9580 = vrot.lane.b32.xlu0 %v8776, 64
      %v9581 = vpop.permute.xlu0 %9580
      %9582 = vrot.lane.b32.xlu0 %v8778, 64
      %v9583 = vpop.permute.xlu0 %9582
      %9584 = vrot.lane.b32.xlu0 %v8780, 64
      %v9585 = vpop.permute.xlu0 %9584
      %9586 = vrot.lane.b32.xlu0 %v8782, 64
      %v9587 = vpop.permute.xlu0 %9586
      %9588 = vrot.lane.b32.xlu0 %v8784, 64
      %v9589 = vpop.permute.xlu0 %9588
      %9590 = vrot.lane.b32.xlu0 %v8786, 64
      %v9591 = vpop.permute.xlu0 %9590
      %9592 = vrot.lane.b32.xlu0 %v8788, 64
      %v9593 = vpop.permute.xlu0 %9592
      %9594 = vrot.lane.b32.xlu0 %v8790, 64
      %v9595 = vpop.permute.xlu0 %9594
      %9596 = vrot.lane.b32.xlu0 %v8792, 64
      %v9597 = vpop.permute.xlu0 %9596
      %9598 = vrot.lane.b32.xlu0 %v8794, 64
      %v9599 = vpop.permute.xlu0 %9598
      %9600 = vrot.lane.b32.xlu0 %v8796, 64
      %v9601 = vpop.permute.xlu0 %9600
      %9602 = vrot.lane.b32.xlu0 %v8798, 64
      %v9603 = vpop.permute.xlu0 %9602
      %9604 = vrot.lane.b32.xlu0 %v8800, 64
      %v9605 = vpop.permute.xlu0 %9604
      %9606 = vrot.lane.b32.xlu0 %v8802, 64
      %v9607 = vpop.permute.xlu0 %9606
      %9608 = vrot.lane.b32.xlu0 %v8804, 64
      %v9609 = vpop.permute.xlu0 %9608
      %9610 = vrot.lane.b32.xlu0 %v8806, 64
      %v9611 = vpop.permute.xlu0 %9610
      %9612 = vrot.lane.b32.xlu0 %v8808, 64
      %v9613 = vpop.permute.xlu0 %9612
      %9614 = vrot.lane.b32.xlu0 %v8810, 64
      %v9615 = vpop.permute.xlu0 %9614
      %9616 = vrot.lane.b32.xlu0 %v8812, 64
      %v9617 = vpop.permute.xlu0 %9616
      %9618 = vrot.lane.b32.xlu0 %v8814, 64
      %v9619 = vpop.permute.xlu0 %9618
      %9620 = vrot.lane.b32.xlu0 %v8816, 64
      %v9621 = vpop.permute.xlu0 %9620
      %9622 = vrot.lane.b32.xlu0 %v8818, 64
      %v9623 = vpop.permute.xlu0 %9622
      %9624 = vrot.lane.b32.xlu0 %v8820, 64
      %v9625 = vpop.permute.xlu0 %9624
      %9626 = vrot.lane.b32.xlu0 %v8822, 64
      %v9627 = vpop.permute.xlu0 %9626
      %9628 = vrot.lane.b32.xlu0 %v8824, 64
      %v9629 = vpop.permute.xlu0 %9628
      %9630 = vrot.lane.b32.xlu0 %v8826, 64
      %v9631 = vpop.permute.xlu0 %9630
      %9632 = vrot.lane.b32.xlu0 %v8828, 64
      %v9633 = vpop.permute.xlu0 %9632
      %v9668 = vsel %vm2907, %v8473, %v8831
      %v9669 = vsel %vm2907, %v8374, %v8833
      %v9670 = vsel %vm2907, %v8376, %v8835
      %v9671 = vsel %vm2907, %v8378, %v8837
      %v9672 = vsel %vm2907, %v8380, %v8839
      %v9673 = vsel %vm2907, %v8382, %v8841
      %v9674 = vsel %vm2907, %v8384, %v8843
      %v9675 = vsel %vm2907, %v8386, %v8845
      %v9676 = vsel %vm2907, %v8388, %v8847
      %v9677 = vsel %vm2907, %v8390, %v8849
      %v9678 = vsel %vm2907, %v8392, %v8851
      %v9679 = vsel %vm2907, %v8394, %v8853
      %v9680 = vsel %vm2907, %v8396, %v8855
      %v9681 = vsel %vm2907, %v8398, %v8857
      %v9682 = vsel %vm2907, %v8400, %v8859
      %v9683 = vsel %vm2907, %v8402, %v8861
      %v9684 = vsel %vm2907, %v8404, %v8863
      %v9685 = vsel %vm2907, %v8406, %v8865
      %v9686 = vsel %vm2907, %v8408, %v8867
      %v9687 = vsel %vm2907, %v8410, %v8869
      %v9688 = vsel %vm2907, %v8412, %v8871
      %v9689 = vsel %vm2907, %v8414, %v8873
      %v9690 = vsel %vm2907, %v8416, %v8875
      %v9691 = vsel %vm2907, %v8418, %v8877
      %v9692 = vsel %vm2907, %v8420, %v8879
      %v9693 = vsel %vm2907, %v8422, %v8881
      %v9694 = vsel %vm2907, %v8424, %v8883
      %v9695 = vsel %vm2907, %v8426, %v8885
      %v9696 = vsel %vm2907, %v8428, %v8887
      %v9697 = vsel %vm2907, %v8430, %v8889
      %v9698 = vsel %vm2907, %v8432, %v8891
      %v9699 = vsel %vm2907, %v8434, %v8893
      %v9700 = vsel %vm2907, %v8436, %v8895
      %v9701 = vsel %vm2907, %v8438, %v8897
      %v9702 = vsel %vm2944, %v9668, %v8934
      %v9703 = vsel %vm2944, %v9669, %v8936
      %v9704 = vsel %vm2944, %v9670, %v8938
      %v9705 = vsel %vm2944, %v9671, %v8940
      %v9706 = vsel %vm2944, %v9672, %v8942
      %v9707 = vsel %vm2944, %v9673, %v8944
      %v9708 = vsel %vm2944, %v9674, %v8946
      %v9709 = vsel %vm2944, %v9675, %v8948
      %v9710 = vsel %vm2944, %v9676, %v8950
      %v9711 = vsel %vm2944, %v9677, %v8952
      %v9712 = vsel %vm2944, %v9678, %v8954
      %v9713 = vsel %vm2944, %v9679, %v8956
      %v9714 = vsel %vm2944, %v9680, %v8958
      %v9715 = vsel %vm2944, %v9681, %v8960
      %v9716 = vsel %vm2944, %v9682, %v8962
      %v9717 = vsel %vm2944, %v9683, %v8964
      %v9718 = vsel %vm2944, %v9684, %v8966
      %v9719 = vsel %vm2944, %v9685, %v8968
      %v9720 = vsel %vm2944, %v9686, %v8970
      %v9721 = vsel %vm2944, %v9687, %v8972
      %v9722 = vsel %vm2944, %v9688, %v8974
      %v9723 = vsel %vm2944, %v9689, %v8976
      %v9724 = vsel %vm2944, %v9690, %v8978
      %v9725 = vsel %vm2944, %v9691, %v8980
      %v9726 = vsel %vm2944, %v9692, %v8982
      %v9727 = vsel %vm2944, %v9693, %v8984
      %v9728 = vsel %vm2944, %v9694, %v8986
      %v9729 = vsel %vm2944, %v9695, %v8988
      %v9730 = vsel %vm2944, %v9696, %v8990
      %v9731 = vsel %vm2944, %v9697, %v8992
      %v9732 = vsel %vm2944, %v9698, %v8994
      %v9733 = vsel %vm2944, %v9699, %v8996
      %v9734 = vsel %vm2944, %v9700, %v8998
      %v9735 = vsel %vm2944, %v9701, %v9000
      %v9736 = vsel %vm2981, %v5212, %v9036
      %v9737 = vsel %vm2981, %v5212, %v9038
      %v9738 = vsel %vm2981, %v9702, %v9040
      %v9739 = vsel %vm2981, %v9703, %v9042
      %v9740 = vsel %vm2981, %v9704, %v9044
      %v9741 = vsel %vm2981, %v9705, %v9046
      %v9742 = vsel %vm2981, %v9706, %v9048
      %v9743 = vsel %vm2981, %v9707, %v9050
      %v9744 = vsel %vm2981, %v9708, %v9052
      %v9745 = vsel %vm2981, %v9709, %v9054
      %v9746 = vsel %vm2981, %v9710, %v9056
      %v9747 = vsel %vm2981, %v9711, %v9058
      %v9748 = vsel %vm2981, %v9712, %v9060
      %v9749 = vsel %vm2981, %v9713, %v9062
      %v9750 = vsel %vm2981, %v9714, %v9064
      %v9751 = vsel %vm2981, %v9715, %v9066
      %v9752 = vsel %vm2981, %v9716, %v9068
      %v9753 = vsel %vm2981, %v9717, %v9070
      %v9754 = vsel %vm2981, %v9718, %v9072
      %v9755 = vsel %vm2981, %v9719, %v9074
      %v9756 = vsel %vm2981, %v9720, %v9076
      %v9757 = vsel %vm2981, %v9721, %v9078
      %v9758 = vsel %vm2981, %v9722, %v9080
      %v9759 = vsel %vm2981, %v9723, %v9082
      %v9760 = vsel %vm2981, %v9724, %v9084
      %v9761 = vsel %vm2981, %v9725, %v9086
      %v9762 = vsel %vm2981, %v9726, %v9088
      %v9763 = vsel %vm2981, %v9727, %v9090
      %v9764 = vsel %vm2981, %v9728, %v9092
      %v9765 = vsel %vm2981, %v9729, %v9094
      %v9766 = vsel %vm2981, %v9730, %v9096
      %v9767 = vsel %vm2981, %v9731, %v9098
      %v9768 = vsel %vm2981, %v9732, %v9100
      %v9769 = vsel %vm2981, %v9733, %v9102
      %v9770 = vsel %vm2981, %v9734, %v9104
      %v9771 = vsel %vm2981, %v9735, %v9106
      %v9772 = vsel %vm3018, %v9736, %v9144
      %v9773 = vsel %vm3018, %v9737, %v9146
      %v9774 = vsel %vm3018, %v9738, %v9148
      %v9775 = vsel %vm3018, %v9739, %v9150
      %v9776 = vsel %vm3018, %v9740, %v9152
      %v9777 = vsel %vm3018, %v9741, %v9154
      %v9778 = vsel %vm3018, %v9742, %v9156
      %v9779 = vsel %vm3018, %v9743, %v9158
      %v9780 = vsel %vm3018, %v9744, %v9160
      %v9781 = vsel %vm3018, %v9745, %v9162
      %v9782 = vsel %vm3018, %v9746, %v9164
      %v9783 = vsel %vm3018, %v9747, %v9166
      %v9784 = vsel %vm3018, %v9748, %v9168
      %v9785 = vsel %vm3018, %v9749, %v9170
      %v9786 = vsel %vm3018, %v9750, %v9172
      %v9787 = vsel %vm3018, %v9751, %v9174
      %v9788 = vsel %vm3018, %v9752, %v9176
      %v9789 = vsel %vm3018, %v9753, %v9178
      %v9790 = vsel %vm3018, %v9754, %v9180
      %v9791 = vsel %vm3018, %v9755, %v9182
      %v9792 = vsel %vm3018, %v9756, %v9184
      %v9793 = vsel %vm3018, %v9757, %v9186
      %v9794 = vsel %vm3018, %v9758, %v9188
      %v9795 = vsel %vm3018, %v9759, %v9190
      %v9796 = vsel %vm3018, %v9760, %v9192
      %v9797 = vsel %vm3018, %v9761, %v9194
      %v9798 = vsel %vm3018, %v9762, %v9196
      %v9799 = vsel %vm3018, %v9763, %v9198
      %v9800 = vsel %vm3018, %v9764, %v9200
      %v9801 = vsel %vm3018, %v9765, %v9202
      %v9802 = vsel %vm3018, %v9766, %v9204
      %v9803 = vsel %vm3018, %v9767, %v9206
      %v9804 = vsel %vm3018, %v9768, %v9208
      %v9805 = vsel %vm3018, %v9769, %v9210
      %v9806 = vsel %vm3018, %v9770, %v9212
      %v9807 = vsel %vm3018, %v9771, %v9214
      %v9808 = vsel %vm3055, %v9772, %v9253
      %v9809 = vsel %vm3055, %v9773, %v9255
      %v9810 = vsel %vm3055, %v9774, %v9257
      %v9811 = vsel %vm3055, %v9775, %v9259
      %v9812 = vsel %vm3055, %v9776, %v9261
      %v9813 = vsel %vm3055, %v9777, %v9263
      %v9814 = vsel %vm3055, %v9778, %v9265
      %v9815 = vsel %vm3055, %v9779, %v9267
      %v9816 = vsel %vm3055, %v9780, %v9269
      %v9817 = vsel %vm3055, %v9781, %v9271
      %v9818 = vsel %vm3055, %v9782, %v9273
      %v9819 = vsel %vm3055, %v9783, %v9275
      %v9820 = vsel %vm3055, %v9784, %v9277
      %v9821 = vsel %vm3055, %v9785, %v9279
      %v9822 = vsel %vm3055, %v9786, %v9281
      %v9823 = vsel %vm3055, %v9787, %v9283
      %v9824 = vsel %vm3055, %v9788, %v9285
      %v9825 = vsel %vm3055, %v9789, %v9287
      %v9826 = vsel %vm3055, %v9790, %v9289
      %v9827 = vsel %vm3055, %v9791, %v9291
      %v9828 = vsel %vm3055, %v9792, %v9293
      %v9829 = vsel %vm3055, %v9793, %v9295
      %v9830 = vsel %vm3055, %v9794, %v9297
      %v9831 = vsel %vm3055, %v9795, %v9299
      %v9832 = vsel %vm3055, %v9796, %v9301
      %v9833 = vsel %vm3055, %v9797, %v9303
      %v9834 = vsel %vm3055, %v9798, %v9305
      %v9835 = vsel %vm3055, %v9799, %v9307
      %v9836 = vsel %vm3055, %v9800, %v9309
      %v9837 = vsel %vm3055, %v9801, %v9311
      %v9838 = vsel %vm3055, %v9802, %v9313
      %v9839 = vsel %vm3055, %v9803, %v9315
      %v9840 = vsel %vm3055, %v9804, %v9317
      %v9841 = vsel %vm3055, %v9805, %v9319
      %v9842 = vsel %vm3055, %v9806, %v9321
      %v9843 = vsel %vm3055, %v9807, %v9323
      %v9844 = vsel %vm3092, %v9808, %v9361
      %v9845 = vsel %vm3092, %v9809, %v9363
      %v9846 = vsel %vm3092, %v9810, %v9365
      %v9847 = vsel %vm3092, %v9811, %v9367
      %v9848 = vsel %vm3092, %v9812, %v9369
      %v9849 = vsel %vm3092, %v9813, %v9371
      %v9850 = vsel %vm3092, %v9814, %v9373
      %v9851 = vsel %vm3092, %v9815, %v9375
      %v9852 = vsel %vm3092, %v9816, %v9377
      %v9853 = vsel %vm3092, %v9817, %v9379
      %v9854 = vsel %vm3092, %v9818, %v9381
      %v9855 = vsel %vm3092, %v9819, %v9383
      %v9856 = vsel %vm3092, %v9820, %v9385
      %v9857 = vsel %vm3092, %v9821, %v9387
      %v9858 = vsel %vm3092, %v9822, %v9389
      %v9859 = vsel %vm3092, %v9823, %v9391
      %v9860 = vsel %vm3092, %v9824, %v9393
      %v9861 = vsel %vm3092, %v9825, %v9395
      %v9862 = vsel %vm3092, %v9826, %v9397
      %v9863 = vsel %vm3092, %v9827, %v9399
      %v9864 = vsel %vm3092, %v9828, %v9401
      %v9865 = vsel %vm3092, %v9829, %v9403
      %v9866 = vsel %vm3092, %v9830, %v9405
      %v9867 = vsel %vm3092, %v9831, %v9407
      %v9868 = vsel %vm3092, %v9832, %v9409
      %v9869 = vsel %vm3092, %v9833, %v9411
      %v9870 = vsel %vm3092, %v9834, %v9413
      %v9871 = vsel %vm3092, %v9835, %v9415
      %v9872 = vsel %vm3092, %v9836, %v9417
      %v9873 = vsel %vm3092, %v9837, %v9419
      %v9874 = vsel %vm3092, %v9838, %v9421
      %v9875 = vsel %vm3092, %v9839, %v9423
      %v9876 = vsel %vm3092, %v9840, %v9425
      %v9877 = vsel %vm3092, %v9841, %v9427
      %v9878 = vsel %vm3092, %v9842, %v4929
      %v9879 = vsel %vm3092, %v9843, %v4929
      %v9880 = vsel %vm3129, %v9844, %v9464
      %v9881 = vsel %vm3129, %v9845, %v9466
      %v9882 = vsel %vm3129, %v9846, %v9468
      %v9883 = vsel %vm3129, %v9847, %v9470
      %v9884 = vsel %vm3129, %v9848, %v9472
      %v9885 = vsel %vm3129, %v9849, %v9474
      %v9886 = vsel %vm3129, %v9850, %v9476
      %v9887 = vsel %vm3129, %v9851, %v9478
      %v9888 = vsel %vm3129, %v9852, %v9480
      %v9889 = vsel %vm3129, %v9853, %v9482
      %v9890 = vsel %vm3129, %v9854, %v9484
      %v9891 = vsel %vm3129, %v9855, %v9486
      %v9892 = vsel %vm3129, %v9856, %v9488
      %v9893 = vsel %vm3129, %v9857, %v9490
      %v9894 = vsel %vm3129, %v9858, %v9492
      %v9895 = vsel %vm3129, %v9859, %v9494
      %v9896 = vsel %vm3129, %v9860, %v9496
      %v9897 = vsel %vm3129, %v9861, %v9498
      %v9898 = vsel %vm3129, %v9862, %v9500
      %v9899 = vsel %vm3129, %v9863, %v9502
      %v9900 = vsel %vm3129, %v9864, %v9504
      %v9901 = vsel %vm3129, %v9865, %v9506
      %v9902 = vsel %vm3129, %v9866, %v9508
      %v9903 = vsel %vm3129, %v9867, %v9510
      %v9904 = vsel %vm3129, %v9868, %v9512
      %v9905 = vsel %vm3129, %v9869, %v9514
      %v9906 = vsel %vm3129, %v9870, %v9516
      %v9907 = vsel %vm3129, %v9871, %v9518
      %v9908 = vsel %vm3129, %v9872, %v9520
      %v9909 = vsel %vm3129, %v9873, %v9522
      %v9910 = vsel %vm3129, %v9874, %v9524
      %v9911 = vsel %vm3129, %v9875, %v9526
      %v9912 = vsel %vm3129, %v9876, %v9528
      %v9913 = vsel %vm3129, %v9877, %v9530
      %v9914 = vsel %vm3129, %v9878, %v5035
      %v9915 = vsel %vm3129, %v9879, %v5035
      %v9916 = vsel %vm3166, %v9880, %v9567
      %v9917 = vsel %vm3166, %v9881, %v9569
      %v9918 = vsel %vm3166, %v9882, %v9571
      %v9919 = vsel %vm3166, %v9883, %v9573
      %v9920 = vsel %vm3166, %v9884, %v9575
      %v9921 = vsel %vm3166, %v9885, %v9577
      %v9922 = vsel %vm3166, %v9886, %v9579
      %v9923 = vsel %vm3166, %v9887, %v9581
      %v9924 = vsel %vm3166, %v9888, %v9583
      %v9925 = vsel %vm3166, %v9889, %v9585
      %v9926 = vsel %vm3166, %v9890, %v9587
      %v9927 = vsel %vm3166, %v9891, %v9589
      %v9928 = vsel %vm3166, %v9892, %v9591
      %v9929 = vsel %vm3166, %v9893, %v9593
      %v9930 = vsel %vm3166, %v9894, %v9595
      %v9931 = vsel %vm3166, %v9895, %v9597
      %v9932 = vsel %vm3166, %v9896, %v9599
      %v9933 = vsel %vm3166, %v9897, %v9601
      %v9934 = vsel %vm3166, %v9898, %v9603
      %v9935 = vsel %vm3166, %v9899, %v9605
      %v9936 = vsel %vm3166, %v9900, %v9607
      %v9937 = vsel %vm3166, %v9901, %v9609
      %v9938 = vsel %vm3166, %v9902, %v9611
      %v9939 = vsel %vm3166, %v9903, %v9613
      %v9940 = vsel %vm3166, %v9904, %v9615
      %v9941 = vsel %vm3166, %v9905, %v9617
      %v9942 = vsel %vm3166, %v9906, %v9619
      %v9943 = vsel %vm3166, %v9907, %v9621
      %v9944 = vsel %vm3166, %v9908, %v9623
      %v9945 = vsel %vm3166, %v9909, %v9625
      %v9946 = vsel %vm3166, %v9910, %v9627
      %v9947 = vsel %vm3166, %v9911, %v9629
      %v9948 = vsel %vm3166, %v9912, %v9631
      %v9949 = vsel %vm3166, %v9913, %v9633
      %v9950 = vsel %vm3166, %v9914, %v5141
      %v9951 = vsel %vm3166, %v9915, %v5141
      %v9952 = vpack.c.bf16 %v9917, %v9916
      %v9953 = vpack.c.bf16 %v9919, %v9918
      %v9954 = vpack.c.bf16 %v9921, %v9920
      %v9955 = vpack.c.bf16 %v9923, %v9922
      %v9956 = vpack.c.bf16 %v9925, %v9924
      %v9957 = vpack.c.bf16 %v9927, %v9926
      %v9958 = vpack.c.bf16 %v9929, %v9928
      %v9959 = vpack.c.bf16 %v9931, %v9930
      %v9960 = vpack.c.bf16 %v9933, %v9932
      %v9961 = vpack.c.bf16 %v9935, %v9934
      %v9962 = vpack.c.bf16 %v9937, %v9936
      %v9963 = vpack.c.bf16 %v9939, %v9938
      %v9964 = vpack.c.bf16 %v9941, %v9940
      %v9965 = vpack.c.bf16 %v9943, %v9942
      %v9966 = vpack.c.bf16 %v9945, %v9944
      %v9967 = vpack.c.bf16 %v9947, %v9946
      %v9968 = vpack.c.bf16 %v9949, %v9948
      %v9969 = vpack.c.bf16 %v9951, %v9950
      %v9971 = vsel %vm3248, %v9952, 0
      %v9974 = vsel %vm3248, %v9953, 0
      %v9977 = vsel %vm3248, %v9954, 0
      %v9980 = vsel %vm3248, %v9955, 0
      %v9983 = vsel %vm3248, %v9956, 0
      %v9986 = vsel %vm3248, %v9957, 0
      %v9989 = vsel %vm3248, %v9958, 0
      %v9992 = vsel %vm3248, %v9959, 0
      %v9995 = vsel %vm3248, %v9960, 0
      %v9998 = vsel %vm3248, %v9961, 0
      %v10001 = vsel %vm3248, %v9962, 0
      %v10004 = vsel %vm3248, %v9963, 0
      %v10007 = vsel %vm3248, %v9964, 0
      %v10010 = vsel %vm3248, %v9965, 0
      %v10013 = vsel %vm3248, %v9966, 0
      %v10016 = vsel %vm3248, %v9967, 0
      %v10019 = vsel %vm3248, %v9968, 0
      %v10022 = vsel %vm3248, %v9969, 0
      %10024 = vmatpush.bf16.msra.mxu0 0
      %10025 = vmatpush.bf16.msra.mxu0 0
      %10026 = vmatpush.bf16.msra.mxu0 0
      %10027 = vmatpush.bf16.msra.mxu0 %v5563
      %10028 = vmatpush.bf16.msra.mxu0 %v5502
      %10029 = vmatpush.bf16.msra.mxu0 %v5501
      %10030 = vmatpush.bf16.msra.mxu0 %v5500
      %10031 = vmatpush.bf16.msra.mxu0 %v5499
      %10032 = vmatmul.bf16.gmra.mxu0 %v9971
      %v10033 = vpop.f32.mrf.mxu0
      %v10034 = vadd.f32 0.0, %v10033
      %v10035 = vpop.f32.mrf.mxu0
      %v10036 = vadd.f32 0.0, %v10035
      %10037 = vmatmul.bf16.gmra.mxu0 %v9974
      %v10038 = vpop.f32.mrf.mxu0
      %v10039 = vadd.f32 0.0, %v10038
      %v10040 = vpop.f32.mrf.mxu0
      %v10041 = vadd.f32 0.0, %v10040
      %10042 = vmatmul.bf16.gmra.mxu0 %v9977
      %v10043 = vpop.f32.mrf.mxu0
      %v10044 = vadd.f32 0.0, %v10043
      %v10045 = vpop.f32.mrf.mxu0
      %v10046 = vadd.f32 0.0, %v10045
      %10047 = vmatmul.bf16.gmra.mxu0 %v9980
      %v10048 = vpop.f32.mrf.mxu0
      %v10049 = vadd.f32 0.0, %v10048
      %v10050 = vpop.f32.mrf.mxu0
      %v10051 = vadd.f32 0.0, %v10050
      %10052 = vmatmul.bf16.gmra.mxu0 %v9983
      %v10053 = vpop.f32.mrf.mxu0
      %v10054 = vadd.f32 0.0, %v10053
      %v10055 = vpop.f32.mrf.mxu0
      %v10056 = vadd.f32 0.0, %v10055
      %10057 = vmatmul.bf16.gmra.mxu0 %v9986
      %v10058 = vpop.f32.mrf.mxu0
      %v10059 = vadd.f32 0.0, %v10058
      %v10060 = vpop.f32.mrf.mxu0
      %v10061 = vadd.f32 0.0, %v10060
      %10062 = vmatmul.bf16.gmra.mxu0 %v9989
      %v10063 = vpop.f32.mrf.mxu0
      %v10064 = vadd.f32 0.0, %v10063
      %v10065 = vpop.f32.mrf.mxu0
      %v10066 = vadd.f32 0.0, %v10065
      %10067 = vmatmul.bf16.gmra.mxu0 %v9992
      %v10068 = vpop.f32.mrf.mxu0
      %v10069 = vadd.f32 0.0, %v10068
      %v10070 = vpop.f32.mrf.mxu0
      %v10071 = vadd.f32 0.0, %v10070
      %10072 = vmatmul.bf16.gmra.mxu0 %v9995
      %v10073 = vpop.f32.mrf.mxu0
      %v10074 = vadd.f32 0.0, %v10073
      %v10075 = vpop.f32.mrf.mxu0
      %v10076 = vadd.f32 0.0, %v10075
      %10077 = vmatmul.bf16.gmra.mxu0 %v9998
      %v10078 = vpop.f32.mrf.mxu0
      %v10079 = vadd.f32 0.0, %v10078
      %v10080 = vpop.f32.mrf.mxu0
      %v10081 = vadd.f32 0.0, %v10080
      %10082 = vmatmul.bf16.gmra.mxu0 %v10001
      %v10083 = vpop.f32.mrf.mxu0
      %v10084 = vadd.f32 0.0, %v10083
      %v10085 = vpop.f32.mrf.mxu0
      %v10086 = vadd.f32 0.0, %v10085
      %10087 = vmatmul.bf16.gmra.mxu0 %v10004
      %v10088 = vpop.f32.mrf.mxu0
      %v10089 = vadd.f32 0.0, %v10088
      %v10090 = vpop.f32.mrf.mxu0
      %v10091 = vadd.f32 0.0, %v10090
      %10092 = vmatmul.bf16.gmra.mxu0 %v10007
      %v10093 = vpop.f32.mrf.mxu0
      %v10094 = vadd.f32 0.0, %v10093
      %v10095 = vpop.f32.mrf.mxu0
      %v10096 = vadd.f32 0.0, %v10095
      %10097 = vmatmul.bf16.gmra.mxu0 %v10010
      %v10098 = vpop.f32.mrf.mxu0
      %v10099 = vadd.f32 0.0, %v10098
      %v10100 = vpop.f32.mrf.mxu0
      %v10101 = vadd.f32 0.0, %v10100
      %10102 = vmatmul.bf16.gmra.mxu0 %v10013
      %v10103 = vpop.f32.mrf.mxu0
      %v10104 = vadd.f32 0.0, %v10103
      %v10105 = vpop.f32.mrf.mxu0
      %v10106 = vadd.f32 0.0, %v10105
      %10107 = vmatmul.bf16.gmra.mxu0 %v10016
      %v10108 = vpop.f32.mrf.mxu0
      %v10109 = vadd.f32 0.0, %v10108
      %v10110 = vpop.f32.mrf.mxu0
      %v10111 = vadd.f32 0.0, %v10110
      %10112 = vmatmul.bf16.gmra.mxu0 %v10019
      %v10113 = vpop.f32.mrf.mxu0
      %v10114 = vadd.f32 0.0, %v10113
      %v10115 = vpop.f32.mrf.mxu0
      %v10116 = vadd.f32 0.0, %v10115
      %10117 = vmatmul.bf16.gmra.mxu0 %v10022
      %v10118 = vpop.f32.mrf.mxu0
      %v10119 = vadd.f32 0.0, %v10118
      %v10120 = vpop.f32.mrf.mxu0
      %v10121 = vadd.f32 0.0, %v10120
      %10122 = vdwg.mxu0
      %v10123 = vmul.f32 %v10034, %v1513
      %v10124 = vmul.f32 %v10036, %v1514
      %v10125 = vmul.f32 %v10039, %v1515
      %v10126 = vmul.f32 %v10041, %v1516
      %v10127 = vmul.f32 %v10044, %v1517
      %v10128 = vmul.f32 %v10046, %v1518
      %v10129 = vmul.f32 %v10049, %v1519
      %v10130 = vmul.f32 %v10051, %v1520
      %v10131 = vmul.f32 %v10054, %v1521
      %v10132 = vmul.f32 %v10056, %v1522
      %v10133 = vmul.f32 %v10059, %v1523
      %v10134 = vmul.f32 %v10061, %v1524
      %v10135 = vmul.f32 %v10064, %v1525
      %v10136 = vmul.f32 %v10066, %v1526
      %v10137 = vmul.f32 %v10069, %v1527
      %v10138 = vmul.f32 %v10071, %v1528
      %v10139 = vmul.f32 %v10074, %v1529
      %v10140 = vmul.f32 %v10076, %v1530
      %v10141 = vmul.f32 %v10079, %v1531
      %v10142 = vmul.f32 %v10081, %v1532
      %v10143 = vmul.f32 %v10084, %v1533
      %v10144 = vmul.f32 %v10086, %v1534
      %v10145 = vmul.f32 %v10089, %v1535
      %v10146 = vmul.f32 %v10091, %v1536
      %v10147 = vmul.f32 %v10094, %v1537
      %v10148 = vmul.f32 %v10096, %v1538
      %v10149 = vmul.f32 %v10099, %v1539
      %v10150 = vmul.f32 %v10101, %v1540
      %v10151 = vmul.f32 %v10104, %v1541
      %v10152 = vmul.f32 %v10106, %v1542
      %v10153 = vmul.f32 %v10109, %v1543
      %v10154 = vmul.f32 %v10111, %v1544
      %v10155 = vmul.f32 %v10114, %v1545
      %v10156 = vmul.f32 %v10116, %v1546
      %v10157 = vmul.f32 %v10119, %v1547
      %v10158 = vmul.f32 %v10121, %v1548
      %v10159 = vsel %vm2907, %v10123, 0.0
      %v10160 = vsel %vm2907, %v10124, 0.0
      %v10161 = vadd.f32 %v10159, %v10160
      %v10162 = vsel %vm2907, %v10125, 0.0
      %v10163 = vadd.f32 %v10161, %v10162
      %v10164 = vsel %vm2907, %v10126, 0.0
      %v10165 = vadd.f32 %v10163, %v10164
      %v10166 = vsel %vm2907, %v10127, 0.0
      %v10167 = vadd.f32 %v10165, %v10166
      %v10168 = vsel %vm2907, %v10128, 0.0
      %v10169 = vadd.f32 %v10167, %v10168
      %v10170 = vsel %vm2907, %v10129, 0.0
      %v10171 = vadd.f32 %v10169, %v10170
      %v10172 = vsel %vm2907, %v10130, 0.0
      %v10173 = vadd.f32 %v10171, %v10172
      %v10174 = vsel %vm2907, %v10131, 0.0
      %v10175 = vadd.f32 %v10173, %v10174
      %v10176 = vsel %vm2907, %v10132, 0.0
      %v10177 = vadd.f32 %v10175, %v10176
      %v10178 = vsel %vm2907, %v10133, 0.0
      %v10179 = vadd.f32 %v10177, %v10178
      %v10180 = vsel %vm2907, %v10134, 0.0
      %v10181 = vadd.f32 %v10179, %v10180
      %v10182 = vsel %vm2907, %v10135, 0.0
      %v10183 = vadd.f32 %v10181, %v10182
      %v10184 = vsel %vm2907, %v10136, 0.0
      %v10185 = vadd.f32 %v10183, %v10184
      %v10186 = vsel %vm2907, %v10137, 0.0
      %v10187 = vadd.f32 %v10185, %v10186
      %v10188 = vsel %vm2907, %v10138, 0.0
      %v10189 = vadd.f32 %v10187, %v10188
      %v10190 = vsel %vm2907, %v10139, 0.0
      %v10191 = vadd.f32 %v10189, %v10190
      %v10192 = vsel %vm2907, %v10140, 0.0
      %v10193 = vadd.f32 %v10191, %v10192
      %v10194 = vsel %vm2907, %v10141, 0.0
      %v10195 = vadd.f32 %v10193, %v10194
      %v10196 = vsel %vm2907, %v10142, 0.0
      %v10197 = vadd.f32 %v10195, %v10196
      %v10198 = vsel %vm2907, %v10143, 0.0
      %v10199 = vadd.f32 %v10197, %v10198
      %v10200 = vsel %vm2907, %v10144, 0.0
      %v10201 = vadd.f32 %v10199, %v10200
      %v10202 = vsel %vm2907, %v10145, 0.0
      %v10203 = vadd.f32 %v10201, %v10202
      %v10204 = vsel %vm2907, %v10146, 0.0
      %v10205 = vadd.f32 %v10203, %v10204
      %v10206 = vsel %vm2907, %v10147, 0.0
      %v10207 = vadd.f32 %v10205, %v10206
      %v10208 = vsel %vm2907, %v10148, 0.0
      %v10209 = vadd.f32 %v10207, %v10208
      %v10210 = vsel %vm2907, %v10149, 0.0
      %v10211 = vadd.f32 %v10209, %v10210
      %v10212 = vsel %vm2907, %v10150, 0.0
      %v10213 = vadd.f32 %v10211, %v10212
      %v10214 = vsel %vm2907, %v10151, 0.0
      %v10215 = vadd.f32 %v10213, %v10214
      %v10216 = vsel %vm2907, %v10152, 0.0
      %v10217 = vadd.f32 %v10215, %v10216
      %v10218 = vsel %vm2907, %v10153, 0.0
      %v10219 = vadd.f32 %v10217, %v10218
      %v10220 = vsel %vm2907, %v10154, 0.0
      %v10221 = vadd.f32 %v10219, %v10220
      %v10222 = vsel %vm2907, %v10155, 0.0
      %v10223 = vadd.f32 %v10221, %v10222
      %v10224 = vsel %vm2907, %v10156, 0.0
      %v10225 = vadd.f32 %v10223, %v10224
      %v10226 = vsel %vm2907, %v10157, 0.0
      %v10227 = vadd.f32 %v10225, %v10226
      %v10228 = vsel %vm2907, %v10158, 0.0
      %v10229 = vadd.f32 %v10227, %v10228
      %v10230 = vrot.slane %v10229, 4
      %v10231 = vadd.f32 %v10229, %v10230
      %v10232 = vrot.slane %v10231, 2
      %v10233 = vadd.f32 %v10231, %v10232
      %v10234 = vrot.slane %v10233, 1
      %v10235 = vadd.f32 %v10233, %v10234
      %v10236 = vmul.f32 %v10235, 0.00390625
      %v10237 = vsub.f32 %v10034, %v10236
      %v10238 = vsub.f32 %v10036, %v10236
      %v10239 = vsub.f32 %v10039, %v10236
      %v10240 = vsub.f32 %v10041, %v10236
      %v10241 = vsub.f32 %v10044, %v10236
      %v10242 = vsub.f32 %v10046, %v10236
      %v10243 = vsub.f32 %v10049, %v10236
      %v10244 = vsub.f32 %v10051, %v10236
      %v10245 = vsub.f32 %v10054, %v10236
      %v10246 = vsub.f32 %v10056, %v10236
      %v10247 = vsub.f32 %v10059, %v10236
      %v10248 = vsub.f32 %v10061, %v10236
      %v10249 = vsub.f32 %v10064, %v10236
      %v10250 = vsub.f32 %v10066, %v10236
      %v10251 = vsub.f32 %v10069, %v10236
      %v10252 = vsub.f32 %v10071, %v10236
      %v10253 = vsub.f32 %v10074, %v10236
      %v10254 = vsub.f32 %v10076, %v10236
      %v10255 = vsub.f32 %v10079, %v10236
      %v10256 = vsub.f32 %v10081, %v10236
      %v10257 = vsub.f32 %v10084, %v10236
      %v10258 = vsub.f32 %v10086, %v10236
      %v10259 = vsub.f32 %v10089, %v10236
      %v10260 = vsub.f32 %v10091, %v10236
      %v10261 = vsub.f32 %v10094, %v10236
      %v10262 = vsub.f32 %v10096, %v10236
      %v10263 = vsub.f32 %v10099, %v10236
      %v10264 = vsub.f32 %v10101, %v10236
      %v10265 = vsub.f32 %v10104, %v10236
      %v10266 = vsub.f32 %v10106, %v10236
      %v10267 = vsub.f32 %v10109, %v10236
      %v10268 = vsub.f32 %v10111, %v10236
      %v10269 = vsub.f32 %v10114, %v10236
      %v10270 = vsub.f32 %v10116, %v10236
      %v10271 = vsub.f32 %v10119, %v10236
      %v10272 = vsub.f32 %v10121, %v10236
      %v10273 = vmul.f32 %v10237, %v10237
      %v10274 = vmul.f32 %v10238, %v10238
      %v10275 = vmul.f32 %v10239, %v10239
      %v10276 = vmul.f32 %v10240, %v10240
      %v10277 = vmul.f32 %v10241, %v10241
      %v10278 = vmul.f32 %v10242, %v10242
      %v10279 = vmul.f32 %v10243, %v10243
      %v10280 = vmul.f32 %v10244, %v10244
      %v10281 = vmul.f32 %v10245, %v10245
      %v10282 = vmul.f32 %v10246, %v10246
      %v10283 = vmul.f32 %v10247, %v10247
      %v10284 = vmul.f32 %v10248, %v10248
      %v10285 = vmul.f32 %v10249, %v10249
      %v10286 = vmul.f32 %v10250, %v10250
      %v10287 = vmul.f32 %v10251, %v10251
      %v10288 = vmul.f32 %v10252, %v10252
      %v10289 = vmul.f32 %v10253, %v10253
      %v10290 = vmul.f32 %v10254, %v10254
      %v10291 = vmul.f32 %v10255, %v10255
      %v10292 = vmul.f32 %v10256, %v10256
      %v10293 = vmul.f32 %v10257, %v10257
      %v10294 = vmul.f32 %v10258, %v10258
      %v10295 = vmul.f32 %v10259, %v10259
      %v10296 = vmul.f32 %v10260, %v10260
      %v10297 = vmul.f32 %v10261, %v10261
      %v10298 = vmul.f32 %v10262, %v10262
      %v10299 = vmul.f32 %v10263, %v10263
      %v10300 = vmul.f32 %v10264, %v10264
      %v10301 = vmul.f32 %v10265, %v10265
      %v10302 = vmul.f32 %v10266, %v10266
      %v10303 = vmul.f32 %v10267, %v10267
      %v10304 = vmul.f32 %v10268, %v10268
      %v10305 = vmul.f32 %v10269, %v10269
      %v10306 = vmul.f32 %v10270, %v10270
      %v10307 = vmul.f32 %v10271, %v10271
      %v10308 = vmul.f32 %v10272, %v10272
      %v10309 = vmul.f32 %v10273, %v1513
      %v10310 = vmul.f32 %v10274, %v1514
      %v10311 = vmul.f32 %v10275, %v1515
      %v10312 = vmul.f32 %v10276, %v1516
      %v10313 = vmul.f32 %v10277, %v1517
      %v10314 = vmul.f32 %v10278, %v1518
      %v10315 = vmul.f32 %v10279, %v1519
      %v10316 = vmul.f32 %v10280, %v1520
      %v10317 = vmul.f32 %v10281, %v1521
      %v10318 = vmul.f32 %v10282, %v1522
      %v10319 = vmul.f32 %v10283, %v1523
      %v10320 = vmul.f32 %v10284, %v1524
      %v10321 = vmul.f32 %v10285, %v1525
      %v10322 = vmul.f32 %v10286, %v1526
      %v10323 = vmul.f32 %v10287, %v1527
      %v10324 = vmul.f32 %v10288, %v1528
      %v10325 = vmul.f32 %v10289, %v1529
      %v10326 = vmul.f32 %v10290, %v1530
      %v10327 = vmul.f32 %v10291, %v1531
      %v10328 = vmul.f32 %v10292, %v1532
      %v10329 = vmul.f32 %v10293, %v1533
      %v10330 = vmul.f32 %v10294, %v1534
      %v10331 = vmul.f32 %v10295, %v1535
      %v10332 = vmul.f32 %v10296, %v1536
      %v10333 = vmul.f32 %v10297, %v1537
      %v10334 = vmul.f32 %v10298, %v1538
      %v10335 = vmul.f32 %v10299, %v1539
      %v10336 = vmul.f32 %v10300, %v1540
      %v10337 = vmul.f32 %v10301, %v1541
      %v10338 = vmul.f32 %v10302, %v1542
      %v10339 = vmul.f32 %v10303, %v1543
      %v10340 = vmul.f32 %v10304, %v1544
      %v10341 = vmul.f32 %v10305, %v1545
      %v10342 = vmul.f32 %v10306, %v1546
      %v10343 = vmul.f32 %v10307, %v1547
      %v10344 = vmul.f32 %v10308, %v1548
      %v10345 = vsel %vm2907, %v10309, 0.0
      %v10346 = vsel %vm2907, %v10310, 0.0
      %v10347 = vadd.f32 %v10345, %v10346
      %v10348 = vsel %vm2907, %v10311, 0.0
      %v10349 = vadd.f32 %v10347, %v10348
      %v10350 = vsel %vm2907, %v10312, 0.0
      %v10351 = vadd.f32 %v10349, %v10350
      %v10352 = vsel %vm2907, %v10313, 0.0
      %v10353 = vadd.f32 %v10351, %v10352
      %v10354 = vsel %vm2907, %v10314, 0.0
      %v10355 = vadd.f32 %v10353, %v10354
      %v10356 = vsel %vm2907, %v10315, 0.0
      %v10357 = vadd.f32 %v10355, %v10356
      %v10358 = vsel %vm2907, %v10316, 0.0
      %v10359 = vadd.f32 %v10357, %v10358
      %v10360 = vsel %vm2907, %v10317, 0.0
      %v10361 = vadd.f32 %v10359, %v10360
      %v10362 = vsel %vm2907, %v10318, 0.0
      %v10363 = vadd.f32 %v10361, %v10362
      %v10364 = vsel %vm2907, %v10319, 0.0
      %v10365 = vadd.f32 %v10363, %v10364
      %v10366 = vsel %vm2907, %v10320, 0.0
      %v10367 = vadd.f32 %v10365, %v10366
      %v10368 = vsel %vm2907, %v10321, 0.0
      %v10369 = vadd.f32 %v10367, %v10368
      %v10370 = vsel %vm2907, %v10322, 0.0
      %v10371 = vadd.f32 %v10369, %v10370
      %v10372 = vsel %vm2907, %v10323, 0.0
      %v10373 = vadd.f32 %v10371, %v10372
      %v10374 = vsel %vm2907, %v10324, 0.0
      %v10375 = vadd.f32 %v10373, %v10374
      %v10376 = vsel %vm2907, %v10325, 0.0
      %v10377 = vadd.f32 %v10375, %v10376
      %v10378 = vsel %vm2907, %v10326, 0.0
      %v10379 = vadd.f32 %v10377, %v10378
      %v10380 = vsel %vm2907, %v10327, 0.0
      %v10381 = vadd.f32 %v10379, %v10380
      %v10382 = vsel %vm2907, %v10328, 0.0
      %v10383 = vadd.f32 %v10381, %v10382
      %v10384 = vsel %vm2907, %v10329, 0.0
      %v10385 = vadd.f32 %v10383, %v10384
      %v10386 = vsel %vm2907, %v10330, 0.0
      %v10387 = vadd.f32 %v10385, %v10386
      %v10388 = vsel %vm2907, %v10331, 0.0
      %v10389 = vadd.f32 %v10387, %v10388
      %v10390 = vsel %vm2907, %v10332, 0.0
      %v10391 = vadd.f32 %v10389, %v10390
      %v10392 = vsel %vm2907, %v10333, 0.0
      %v10393 = vadd.f32 %v10391, %v10392
      %v10394 = vsel %vm2907, %v10334, 0.0
      %v10395 = vadd.f32 %v10393, %v10394
      %v10396 = vsel %vm2907, %v10335, 0.0
      %v10397 = vadd.f32 %v10395, %v10396
      %v10398 = vsel %vm2907, %v10336, 0.0
      %v10399 = vadd.f32 %v10397, %v10398
      %v10400 = vsel %vm2907, %v10337, 0.0
      %v10401 = vadd.f32 %v10399, %v10400
      %v10402 = vsel %vm2907, %v10338, 0.0
      %v10403 = vadd.f32 %v10401, %v10402
      %v10404 = vsel %vm2907, %v10339, 0.0
      %v10405 = vadd.f32 %v10403, %v10404
      %v10406 = vsel %vm2907, %v10340, 0.0
      %v10407 = vadd.f32 %v10405, %v10406
      %v10408 = vsel %vm2907, %v10341, 0.0
      %v10409 = vadd.f32 %v10407, %v10408
      %v10410 = vsel %vm2907, %v10342, 0.0
      %v10411 = vadd.f32 %v10409, %v10410
      %v10412 = vsel %vm2907, %v10343, 0.0
      %v10413 = vadd.f32 %v10411, %v10412
      %v10414 = vsel %vm2907, %v10344, 0.0
      %v10415 = vadd.f32 %v10413, %v10414
      %v10416 = vrot.slane %v10415, 4
      %v10417 = vadd.f32 %v10415, %v10416
      %v10418 = vrot.slane %v10417, 2
      %v10419 = vadd.f32 %v10417, %v10418
      %v10420 = vrot.slane %v10419, 1
      %v10421 = vadd.f32 %v10419, %v10420
      %v10422 = vmul.f32 %v10421, 0.00390625
      %v10423 = vadd.f32 %v10422, 1e-05
      %v10424 = vrsqrt.pop %v10423
      %v10425 = vmul.f32 %v10424, %v10423
      %v10426 = vmul.f32 %v10425, %v10424
      %v10427 = vmul.f32 0.5, %v10426
      %v10428 = vsub.f32 1.5, %v10427
      %v10429 = vmul.f32 %v10424, %v10428
      %vm10430 = vweird.f32 %v10423
      %vm10431 = vweird.f32 %v10424
      %vm10432 = vmor %vm10430, %vm10431
      %v10433 = vsel %vm10432, %v10424, %v10429
      %v10434 = vmul.f32 %v10237, %v10433
      %v10435 = vmul.f32 %v10238, %v10433
      %v10436 = vmul.f32 %v10239, %v10433
      %v10437 = vmul.f32 %v10240, %v10433
      %v10438 = vmul.f32 %v10241, %v10433
      %v10439 = vmul.f32 %v10242, %v10433
      %v10440 = vmul.f32 %v10243, %v10433
      %v10441 = vmul.f32 %v10244, %v10433
      %v10442 = vmul.f32 %v10245, %v10433
      %v10443 = vmul.f32 %v10246, %v10433
      %v10444 = vmul.f32 %v10247, %v10433
      %v10445 = vmul.f32 %v10248, %v10433
      %v10446 = vmul.f32 %v10249, %v10433
      %v10447 = vmul.f32 %v10250, %v10433
      %v10448 = vmul.f32 %v10251, %v10433
      %v10449 = vmul.f32 %v10252, %v10433
      %v10450 = vmul.f32 %v10253, %v10433
      %v10451 = vmul.f32 %v10254, %v10433
      %v10452 = vmul.f32 %v10255, %v10433
      %v10453 = vmul.f32 %v10256, %v10433
      %v10454 = vmul.f32 %v10257, %v10433
      %v10455 = vmul.f32 %v10258, %v10433
      %v10456 = vmul.f32 %v10259, %v10433
      %v10457 = vmul.f32 %v10260, %v10433
      %v10458 = vmul.f32 %v10261, %v10433
      %v10459 = vmul.f32 %v10262, %v10433
      %v10460 = vmul.f32 %v10263, %v10433
      %v10461 = vmul.f32 %v10264, %v10433
      %v10462 = vmul.f32 %v10265, %v10433
      %v10463 = vmul.f32 %v10266, %v10433
      %v10464 = vmul.f32 %v10267, %v10433
      %v10465 = vmul.f32 %v10268, %v10433
      %v10466 = vmul.f32 %v10269, %v10433
      %v10467 = vmul.f32 %v10270, %v10433
      %v10468 = vmul.f32 %v10271, %v10433
      %v10469 = vmul.f32 %v10272, %v10433
      %v10470 = vadd.f32 %v10434, %v6230
      %v10471 = vadd.f32 %v10435, %v6231
      %v10472 = vadd.f32 %v10436, %v6232
      %v10473 = vadd.f32 %v10437, %v6233
      %v10474 = vadd.f32 %v10438, %v6234
      %v10475 = vadd.f32 %v10439, %v6235
      %v10476 = vadd.f32 %v10440, %v6236
      %v10477 = vadd.f32 %v10441, %v6237
      %v10478 = vadd.f32 %v10442, %v6238
      %v10479 = vadd.f32 %v10443, %v6239
      %v10480 = vadd.f32 %v10444, %v6240
      %v10481 = vadd.f32 %v10445, %v6241
      %v10482 = vadd.f32 %v10446, %v6242
      %v10483 = vadd.f32 %v10447, %v6243
      %v10484 = vadd.f32 %v10448, %v6244
      %v10485 = vadd.f32 %v10449, %v6245
      %v10486 = vadd.f32 %v10450, %v6246
      %v10487 = vadd.f32 %v10451, %v6247
      %v10488 = vadd.f32 %v10452, %v6248
      %v10489 = vadd.f32 %v10453, %v6249
      %v10490 = vadd.f32 %v10454, %v6250
      %v10491 = vadd.f32 %v10455, %v6251
      %v10492 = vadd.f32 %v10456, %v6252
      %v10493 = vadd.f32 %v10457, %v6253
      %v10494 = vadd.f32 %v10458, %v6254
      %v10495 = vadd.f32 %v10459, %v6255
      %v10496 = vadd.f32 %v10460, %v6256
      %v10497 = vadd.f32 %v10461, %v6257
      %v10498 = vadd.f32 %v10462, %v6258
      %v10499 = vadd.f32 %v10463, %v6259
      %v10500 = vadd.f32 %v10464, %v6260
      %v10501 = vadd.f32 %v10465, %v6261
      %v10502 = vadd.f32 %v10466, %v6262
      %v10503 = vadd.f32 %v10467, %v6263
      %v10504 = vadd.f32 %v10468, %v6264
      %v10505 = vadd.f32 %v10469, %v6265
      %v10506 = vmax.f32 %v10470, 0.0
      %v10507 = vmax.f32 %v10471, 0.0
      %v10508 = vmax.f32 %v10472, 0.0
      %v10509 = vmax.f32 %v10473, 0.0
      %v10510 = vmax.f32 %v10474, 0.0
      %v10511 = vmax.f32 %v10475, 0.0
      %v10512 = vmax.f32 %v10476, 0.0
      %v10513 = vmax.f32 %v10477, 0.0
      %v10514 = vmax.f32 %v10478, 0.0
      %v10515 = vmax.f32 %v10479, 0.0
      %v10516 = vmax.f32 %v10480, 0.0
      %v10517 = vmax.f32 %v10481, 0.0
      %v10518 = vmax.f32 %v10482, 0.0
      %v10519 = vmax.f32 %v10483, 0.0
      %v10520 = vmax.f32 %v10484, 0.0
      %v10521 = vmax.f32 %v10485, 0.0
      %v10522 = vmax.f32 %v10486, 0.0
      %v10523 = vmax.f32 %v10487, 0.0
      %v10524 = vmax.f32 %v10488, 0.0
      %v10525 = vmax.f32 %v10489, 0.0
      %v10526 = vmax.f32 %v10490, 0.0
      %v10527 = vmax.f32 %v10491, 0.0
      %v10528 = vmax.f32 %v10492, 0.0
      %v10529 = vmax.f32 %v10493, 0.0
      %v10530 = vmax.f32 %v10494, 0.0
      %v10531 = vmax.f32 %v10495, 0.0
      %v10532 = vmax.f32 %v10496, 0.0
      %v10533 = vmax.f32 %v10497, 0.0
      %v10534 = vmax.f32 %v10498, 0.0
      %v10535 = vmax.f32 %v10499, 0.0
      %v10536 = vmax.f32 %v10500, 0.0
      %v10537 = vmax.f32 %v10501, 0.0
      %v10538 = vmax.f32 %v10502, 0.0
      %v10539 = vmax.f32 %v10503, 0.0
      %v10540 = vmax.f32 %v10504, 0.0
      %v10541 = vmax.f32 %v10505, 0.0
      %s10542 = scalar_lea.vmem %s177, 288
      %10543 = vst.msk [vmem:[%s10542] sm:$0xff] %vm2907, %v10506
      %10544 = vst.msk [vmem:[%s10542 + $0x8] sm:$0xff] %vm2907, %v10507
      %10545 = vst.msk [vmem:[%s10542 + $0x10] sm:$0xff] %vm2907, %v10508
      %10546 = vst.msk [vmem:[%s10542 + $0x18] sm:$0xff] %vm2907, %v10509
      %10547 = vst.msk [vmem:[%s10542 + $0x20] sm:$0xff] %vm2907, %v10510
      %10548 = vst.msk [vmem:[%s10542 + $0x28] sm:$0xff] %vm2907, %v10511
      %10549 = vst.msk [vmem:[%s10542 + $0x30] sm:$0xff] %vm2907, %v10512
      %10550 = vst.msk [vmem:[%s10542 + $0x38] sm:$0xff] %vm2907, %v10513
      %10551 = vst.msk [vmem:[%s10542 + $0x40] sm:$0xff] %vm2907, %v10514
      %10552 = vst.msk [vmem:[%s10542 + $0x48] sm:$0xff] %vm2907, %v10515
      %10553 = vst.msk [vmem:[%s10542 + $0x50] sm:$0xff] %vm2907, %v10516
      %10554 = vst.msk [vmem:[%s10542 + $0x58] sm:$0xff] %vm2907, %v10517
      %10555 = vst.msk [vmem:[%s10542 + $0x60] sm:$0xff] %vm2907, %v10518
      %10556 = vst.msk [vmem:[%s10542 + $0x68] sm:$0xff] %vm2907, %v10519
      %10557 = vst.msk [vmem:[%s10542 + $0x70] sm:$0xff] %vm2907, %v10520
      %10558 = vst.msk [vmem:[%s10542 + $0x78] sm:$0xff] %vm2907, %v10521
      %10559 = vst.msk [vmem:[%s10542 + $0x80] sm:$0xff] %vm2907, %v10522
      %10560 = vst.msk [vmem:[%s10542 + $0x88] sm:$0xff] %vm2907, %v10523
      %10561 = vst.msk [vmem:[%s10542 + $0x90] sm:$0xff] %vm2907, %v10524
      %10562 = vst.msk [vmem:[%s10542 + $0x98] sm:$0xff] %vm2907, %v10525
      %10563 = vst.msk [vmem:[%s10542 + $0xa0] sm:$0xff] %vm2907, %v10526
      %10564 = vst.msk [vmem:[%s10542 + $0xa8] sm:$0xff] %vm2907, %v10527
      %10565 = vst.msk [vmem:[%s10542 + $0xb0] sm:$0xff] %vm2907, %v10528
      %10566 = vst.msk [vmem:[%s10542 + $0xb8] sm:$0xff] %vm2907, %v10529
      %10567 = vst.msk [vmem:[%s10542 + $0xc0] sm:$0xff] %vm2907, %v10530
      %10568 = vst.msk [vmem:[%s10542 + $0xc8] sm:$0xff] %vm2907, %v10531
      %10569 = vst.msk [vmem:[%s10542 + $0xd0] sm:$0xff] %vm2907, %v10532
      %10570 = vst.msk [vmem:[%s10542 + $0xd8] sm:$0xff] %vm2907, %v10533
      %10571 = vst.msk [vmem:[%s10542 + $0xe0] sm:$0xff] %vm2907, %v10534
      %10572 = vst.msk [vmem:[%s10542 + $0xe8] sm:$0xff] %vm2907, %v10535
      %10573 = vst.msk [vmem:[%s10542 + $0xf0] sm:$0xff] %vm2907, %v10536
      %10574 = vst.msk [vmem:[%s10542 + $0xf8] sm:$0xff] %vm2907, %v10537
      %10575 = vst.msk [vmem:[%s10542 + $0x100] sm:$0xff] %vm2907, %v10538
      %10576 = vst.msk [vmem:[%s10542 + $0x108] sm:$0xff] %vm2907, %v10539
      %10577 = vst.msk [vmem:[%s10542 + $0x110] sm:$0xff] %vm2907, %v10540
      %10578 = vst.msk [vmem:[%s10542 + $0x118] sm:$0xff] %vm2907, %v10541
      %s10579 = smul.u32 2, %s14
      %p10580 = scmp.lt.s32.totalorder %s10579, 3
      %s10581 = scalar_select %p10580, %s10579, 3
      %s10582 = smul.addr %s10581, 36
      %s10583 = smul.addr %s10582, 8
      %s10584 = scalar_lea.vmem %s3, %s10583
      // Predicated region
      $region33: #{basic_block_forward.1} parent=31 // pred_check
        %p10585 = pneg %p100
      $region34: #{basic_block_forward.1} parent=31 // pred_check_branch
        %10587 = sbr.rel (%p10585) target = $region36
      $region35: #{basic_block_forward.1} parent=31 // pred_region
        %s10588 = smul.u32 2, %s14
      $region36: #{basic_block_forward.1} parent=31 // pred_fallthru
        _
    $region32: #{basic_block_forward.1} parent=5 // pred_fallthru
      _
    %p10589 = scmp.le.s32.totalorder 2, %s9
    // Predicated region
    $region37: #{basic_block_forward.1} parent=5 // pred_check
      %p10590 = pneg %p10589
    $region38: #{basic_block_forward.1} parent=5 // pred_check_branch
      %10592 = sbr.rel (%p10590) target = $region40
    $region39: #{basic_block_forward.1} parent=5 // pred_region
      %s10593 = ssub.s32 %s9, 2
      // Predicated region
      $region41: #{basic_block_forward.1} parent=39 // pred_check
        %p10594 = pneg %p106
      $region42: #{basic_block_forward.1} parent=39 // pred_check_branch
        %10596 = sbr.rel (%p10594) target = $region44
      $region43: #{basic_block_forward.1} parent=39 // pred_region
        %s10597 = smul.u32 2, %s15
        %p10598 = scmp.lt.s32.totalorder %s10597, 3
        %s10599 = scalar_select %p10598, %s10597, 3
        %s10600 = smul.addr %s10599, 36
        %s10601 = smul.addr %s10600, 8
        %s10602 = scalar_lea.vmem %s3, %s10601
      $region44: #{basic_block_forward.1} parent=39 // pred_fallthru
        _
    $region40: #{basic_block_forward.1} parent=5 // pred_fallthru
      _
  $region6: #{basic_block_forward.1} parent=0 // loop_footer
    %s13 = sadd.s32 1, %s9
  $region7: #{basic_block_forward.1} parent=0 // loop_footer_branch
    %8 = sbr.rel target = $region3
  $region8: #{basic_block_forward.1} parent=0 // loop_exit
    _

</llo_original>
